<compile_context>
chip_gen: v7x
topology: tpu7x:2x2x1
jax: 0.10.0
libtpu: 0.0.40
codegen_flags: <defaults>
</compile_context>

<pallas_src>
import math
import numpy as np

import jax
import jax.numpy as jnp
from jax import lax
from jax.experimental import pallas as pl
from jax.experimental.pallas import tpu as pltpu


# ---------------------------------------------------------------------------
# Configuration: AdaptiveConvOut defaults at a small input resolution.
# ---------------------------------------------------------------------------
OBS_SHAPE = (4, 32, 32)          # (C, H, W) -- PyTorch NCHW convention
BATCH = 2
FEATURE_DIM = 32
NUM_FILTERS = 32
NUM_LAYERS = 4
CONV_OUT_SIZE = 35               # AdaptiveAvgPool2d target (module default)
ORIG_DIM = 35
KEEP_SIZE = True                 # -> nn.Upsample(scale=35/35) == identity
LN_EPS = 1e-5
STRIDES = (2, 1, 1, 1)
CHANS = (OBS_SHAPE[0], NUM_FILTERS, NUM_FILTERS, NUM_FILTERS, NUM_FILTERS)

SPATIAL = [OBS_SHAPE[1]]
for _s in STRIDES:
    SPATIAL.append((SPATIAL[-1] - 3) // _s + 1)          # [32, 15, 13, 11, 9]
OH = SPATIAL[1:]                                         # conv output heights
POOL_IN = SPATIAL[-1]                                    # 9
OUT_SPATIAL = ORIG_DIM if KEEP_SIZE else CONV_OUT_SIZE   # 35
HEAD_IN = NUM_FILTERS * OUT_SPATIAL * OUT_SPATIAL        # 32*35*35 = 39200


def _pad128(n):
    return ((n + 127) // 128) * 128


LANES_IN0 = OBS_SHAPE[2] * OBS_SHAPE[0]                  # 128: per-tap width, layer 0
CONV_LANES = [_pad128(OH[i] * CHANS[i + 1]) for i in range(NUM_LAYERS)]
# zero-padded lane width of each conv layer's output slab: [512, 512, 384, 384]


# ---------------------------------------------------------------------------
# Deterministic parameter initialization (shapes match the nn.Module).
# ---------------------------------------------------------------------------
def init_params(key):
    params = {}
    for i in range(NUM_LAYERS):
        key, k1, k2 = jax.random.split(key, 3)
        cin, cout = CHANS[i], CHANS[i + 1]
        params[f"conv{i}_w"] = (
            jax.random.normal(k1, (cout, cin, 3, 3), jnp.float32) / math.sqrt(cin * 9)
        )
        params[f"conv{i}_b"] = 0.1 * jax.random.normal(k2, (cout,), jnp.float32)
    key, k1, k2, k3, k4 = jax.random.split(key, 5)
    params["head_w"] = (
        jax.random.normal(k1, (FEATURE_DIM, HEAD_IN), jnp.float32) / math.sqrt(HEAD_IN)
    )
    params["head_b"] = 0.1 * jax.random.normal(k2, (FEATURE_DIM,), jnp.float32)
    params["ln_g"] = 1.0 + 0.1 * jax.random.normal(k3, (FEATURE_DIM,), jnp.float32)
    params["ln_b"] = 0.1 * jax.random.normal(k4, (FEATURE_DIM,), jnp.float32)
    return params


# ---------------------------------------------------------------------------
# Operator construction (numpy, setup-time glue).
# ---------------------------------------------------------------------------
def build_layer_operator(w, b, in_h, in_row_lanes, stride, out_row_lanes,
                         in_scale=1.0):
    """Conv2d(3x3, stride, VALID) on an (H, W*Cin) slab, taps merged along K:
         out = relu( [rows_kh0 | rows_kh1 | rows_kh2] @ T + b_row )
       T[kh*in_row_lanes + wi*cin + ci, ow*cout + co] = w[co, ci, kh, kw]*in_scale
       with wi = stride*ow + kw.  Lane widths are zero-padded to `*_row_lanes`
       (padded lanes carry exact zeros through ReLU and later layers)."""
    cout, cin, _, _ = w.shape
    oh = (in_h - 3) // stride + 1
    assert in_h * cin <= in_row_lanes and oh * cout <= out_row_lanes
    wk = np.asarray(w, np.float32).transpose(2, 3, 1, 0) * in_scale  # (kh,kw,cin,cout)
    T = np.zeros((3 * in_row_lanes, out_row_lanes), np.float32)
    for kh in range(3):
        base = kh * in_row_lanes
        for ow in range(oh):
            for kw in range(3):
                wi = stride * ow + kw
                T[base + wi * cin: base + (wi + 1) * cin,
                  ow * cout:(ow + 1) * cout] = wk[kh, kw]
    b_row = np.zeros((1, out_row_lanes), np.float32)
    b_row[0, :oh * cout] = np.tile(np.asarray(b, np.float32), oh)
    return T, b_row


def build_pool_matrix():
    """AdaptiveAvgPool2d((35,35)) + nearest Upsample(scale=35/35) folded into a
       single (OUT_SPATIAL, POOL_IN) matrix applied to rows and columns."""
    hin, P = POOL_IN, CONV_OUT_SIZE
    A = np.zeros((P, hin), np.float32)
    for i in range(P):                                   # PyTorch adaptive bins
        start = (i * hin) // P
        end = -(-((i + 1) * hin) // P)                   # ceil
        A[i, start:end] = 1.0 / (end - start)
    if not KEEP_SIZE:
        return A
    scale = ORIG_DIM / float(P)
    out = int(math.floor(P * scale))
    U = np.zeros((out, P), np.float32)                   # nearest upsample
    for o in range(out):
        U[o, min(int(o / scale), P - 1)] = 1.0
    return (U @ A).astype(np.float32)


def build_head_operator(head_w):
    """Fold pool + upsample + NCHW flatten + head Linear into a single
       contraction tensor G (POOL_IN, CONV_LANES[-1], F):
         z[f] = head_b[f] + sum_{r, k, c} a4[r, k*C + c] * G[r, k*C + c, f]."""
    M = build_pool_matrix()                                    # (S, POOL_IN)
    Cc, F, S = NUM_FILTERS, FEATURE_DIM, OUT_SPATIAL
    W4 = np.asarray(head_w, np.float32).reshape(F, Cc, S, S)   # [f, c, i, j]
    G = np.einsum("ir,jk,fcij->rkcf", M, M, W4)                # (r, k, c, f)
    G = G.reshape(POOL_IN, POOL_IN * Cc, F)
    Gp = np.zeros((POOL_IN, CONV_LANES[-1], F), np.float32)    # lane pad -> zeros
    Gp[:, :POOL_IN * Cc, :] = G
    return Gp


# ---------------------------------------------------------------------------
# Fused Pallas kernel: conv stack + pool/upsample/flatten/head + LN + tanh.
# ---------------------------------------------------------------------------
def fused_kernel(x_ref,
                 t0, b0, t1, b1, t2, b2, t3, b3,
                 g_ref, hb_ref, lng_ref, lnb_ref,
                 out_ref):
    # ----- layer 0 (stride 2): taps are contiguous slices of the row-pair
    #       packed input (lanes [even row | odd row], channels fastest) -------
    oh0 = OH[0]
    lhs = jnp.concatenate(
        [x_ref[0, 0:oh0, :],                    # taps kh=0 | kh=1  (rows 2o, 2o+1)
         x_ref[0, 1:oh0 + 1, 0:LANES_IN0]],     # tap  kh=2        (rows 2o+2)
        axis=1).astype(jnp.bfloat16)
    a = jnp.dot(lhs, t0[...], preferred_element_type=jnp.float32)
    a = jnp.maximum(a + b0[...], 0.0)           # bias + ReLU in f32

    # ----- layers 1..3 (stride 1): one merged-tap matmul each ---------------
    for t_ref, b_ref, oh in ((t1, b1, OH[1]), (t2, b2, OH[2]), (t3, b3, OH[3])):
        lhs = jnp.concatenate([a[0:oh], a[1:oh + 1], a[2:oh + 2]],
                              axis=1).astype(jnp.bfloat16)
        a = jnp.dot(lhs, t_ref[...], preferred_element_type=jnp.float32)
        a = jnp.maximum(a + b_ref[...], 0.0)

    # ----- adaptive pool + nearest upsample + NCHW flatten + head Linear,
    #       pre-folded into G at host setup (f32 for accuracy; tiny) ---------
    z = hb_ref[...]                              # (1, F) f32
    for r in range(OH[-1]):
        z = z + jnp.dot(a[r:r + 1, :], g_ref[r],
                        preferred_element_type=jnp.float32)

    # ----- LayerNorm + tanh -------------------------------------------------
    mu = jnp.mean(z, axis=-1, keepdims=True)
    var = jnp.mean((z - mu) ** 2, axis=-1, keepdims=True)
    y = (z - mu) * lax.rsqrt(var + LN_EPS)
    out_ref[0] = jnp.tanh(y * lng_ref[...] + lnb_ref[...])


# ---------------------------------------------------------------------------
# Wrapper
# ---------------------------------------------------------------------------
def _const_spec(shape):
    zeros = (0,) * len(shape)
    return pl.BlockSpec(shape, lambda n, _z=zeros: _z)


def adaptive_conv_out_forward(obs, params):
    N, C, H, W = obs.shape
    assert (C, H, W) == OBS_SHAPE
    assert STRIDES[0] == 2 and H % 2 == 0 and (W * C) % 128 == 0

    # NCHW -> row-pair packed slab (N, H/2, 2*W*C): lanes = [even row | odd row],
    # channels fastest.  Makes every stride-2 tap of layer 0 a contiguous slice.
    x = jnp.transpose(obs, (0, 2, 3, 1)).reshape(N, H // 2, 2 * W * C)

    ops = []
    in_lanes = LANES_IN0
    for i in range(NUM_LAYERS):
        scale = 1.0 / 255.0 if i == 0 else 1.0          # fold obs/255 into layer 0
        T, b_row = build_layer_operator(np.asarray(params[f"conv{i}_w"]),
                                        np.asarray(params[f"conv{i}_b"]),
                                        SPATIAL[i], in_lanes, STRIDES[i],
                                        CONV_LANES[i], scale)
        ops.append(jnp.asarray(T, jnp.bfloat16))        # bf16 MXU operand
        ops.append(jnp.asarray(b_row, jnp.float32))     # bias/ReLU stay f32
        in_lanes = CONV_LANES[i]
    G = build_head_operator(np.asarray(params["head_w"]))
    ops.append(jnp.asarray(G, jnp.float32))
    ops.append(jnp.asarray(params["head_b"], jnp.float32).reshape(1, FEATURE_DIM))
    ops.append(jnp.asarray(params["ln_g"], jnp.float32).reshape(1, FEATURE_DIM))
    ops.append(jnp.asarray(params["ln_b"], jnp.float32).reshape(1, FEATURE_DIM))

    in_specs = [pl.BlockSpec((1, H // 2, 2 * W * C), lambda n: (n, 0, 0))]
    in_specs += [_const_spec(op.shape) for op in ops]

    fn = pl.pallas_call(
        fused_kernel,
        out_shape=jax.ShapeDtypeStruct((N, 1, FEATURE_DIM), jnp.float32),
        grid=(N,),
        in_specs=in_specs,
        out_specs=pl.BlockSpec((1, 1, FEATURE_DIM), lambda n: (n, 0, 0)),
        compiler_params=pltpu.CompilerParams(dimension_semantics=("parallel",)),
    )
    return fn(x, *ops).reshape(N, FEATURE_DIM)


# ---------------------------------------------------------------------------
# Pure-JAX reference (mirrors the PyTorch forward exactly, all f32).
# ---------------------------------------------------------------------------
def reference_forward(obs, params):
    x = obs / 255.0
    for i in range(NUM_LAYERS):
        x = lax.conv_general_dilated(
            x, params[f"conv{i}_w"], (STRIDES[i], STRIDES[i]), "VALID",
            dimension_numbers=("NCHW", "OIHW", "NCHW"))
        x = jnp.maximum(x + params[f"conv{i}_b"][None, :, None, None], 0.0)
    Mj = jnp.asarray(build_pool_matrix())
    x = jnp.einsum("si,ncij,tj->ncst", Mj, x, Mj)         # adaptive pool + upsample
    h = x.reshape(x.shape[0], -1)
    z = h @ params["head_w"].T + params["head_b"][None, :]
    mu = z.mean(-1, keepdims=True)
    var = ((z - mu) ** 2).mean(-1, keepdims=True)
    y = (z - mu) / jnp.sqrt(var + LN_EPS) * params["ln_g"][None, :] + params["ln_b"][None, :]
    return jnp.tanh(y)


if __name__ == "__main__":
    key = jax.random.PRNGKey(0)
    key, pkey, okey = jax.random.split(key, 3)
    params = init_params(pkey)
    obs = jax.random.uniform(okey, (BATCH,) + OBS_SHAPE, jnp.float32, 0.0, 255.0)

    out = jax.block_until_ready(adaptive_conv_out_forward(obs, params))
    assert out.shape == (BATCH, FEATURE_DIM), out.shape

    ref = jax.block_until_ready(reference_forward(obs, params))
    # Tolerance sized for bf16 MXU operands in the conv stack (f32 accumulation,
    # f32 bias/ReLU/head/LN/tanh); the f32 reference is exact.
    np.testing.assert_allclose(np.asarray(out), np.asarray(ref), atol=3e-2, rtol=3e-2)

    # TODO(synk): detach flag, self.outputs dict logging, copy_conv_weights_from
    # and log() are training/bookkeeping utilities with no forward compute.
    print("KERNEL_OK")
</pallas_src>

<mosaic_0001>
module attributes {stable_mosaic.version = 11 : i64} {
  func.func @fused_kernel(%arg0: i32, %arg1: memref<1x16x256xf32, #tpu.memory_space<vmem>>, %arg2: memref<384x512xbf16, #tpu.memory_space<vmem>>, %arg3: memref<1x512xf32, #tpu.memory_space<vmem>>, %arg4: memref<1536x512xbf16, #tpu.memory_space<vmem>>, %arg5: memref<1x512xf32, #tpu.memory_space<vmem>>, %arg6: memref<1536x384xbf16, #tpu.memory_space<vmem>>, %arg7: memref<1x384xf32, #tpu.memory_space<vmem>>, %arg8: memref<1152x384xbf16, #tpu.memory_space<vmem>>, %arg9: memref<1x384xf32, #tpu.memory_space<vmem>>, %arg10: memref<9x384x32xf32, #tpu.memory_space<vmem>>, %arg11: memref<1x32xf32, #tpu.memory_space<vmem>>, %arg12: memref<1x32xf32, #tpu.memory_space<vmem>>, %arg13: memref<1x32xf32, #tpu.memory_space<vmem>>, %arg14: memref<1x1x32xf32, #tpu.memory_space<vmem>>) attributes {dimension_semantics = [#tpu.dimension_semantics<parallel>], iteration_bounds = array<i64: 2>, scalar_prefetch = 0 : i64, scratch_operands = 0 : i64, tpu.core_type = #tpu.core_type<tc>, window_params = [{transform_indices = @transform_0, window_bounds = array<i64: 1, 16, 256>}, {pipeline_mode = #tpu.pipeline_mode<synchronous>, transform_indices = @transform_1, window_bounds = array<i64: 384, 512>}, {pipeline_mode = #tpu.pipeline_mode<synchronous>, transform_indices = @transform_2, window_bounds = array<i64: 1, 512>}, {pipeline_mode = #tpu.pipeline_mode<synchronous>, transform_indices = @transform_3, window_bounds = array<i64: 1536, 512>}, {pipeline_mode = #tpu.pipeline_mode<synchronous>, transform_indices = @transform_4, window_bounds = array<i64: 1, 512>}, {pipeline_mode = #tpu.pipeline_mode<synchronous>, transform_indices = @transform_5, window_bounds = array<i64: 1536, 384>}, {pipeline_mode = #tpu.pipeline_mode<synchronous>, transform_indices = @transform_6, window_bounds = array<i64: 1, 384>}, {pipeline_mode = #tpu.pipeline_mode<synchronous>, transform_indices = @transform_7, window_bounds = array<i64: 1152, 384>}, {pipeline_mode = #tpu.pipeline_mode<synchronous>, transform_indices = @transform_8, window_bounds = array<i64: 1, 384>}, {pipeline_mode = #tpu.pipeline_mode<synchronous>, transform_indices = @transform_9, window_bounds = array<i64: 9, 384, 32>}, {pipeline_mode = #tpu.pipeline_mode<synchronous>, transform_indices = @transform_10, window_bounds = array<i64: 1, 32>}, {pipeline_mode = #tpu.pipeline_mode<synchronous>, transform_indices = @transform_11, window_bounds = array<i64: 1, 32>}, {pipeline_mode = #tpu.pipeline_mode<synchronous>, transform_indices = @transform_12, window_bounds = array<i64: 1, 32>}, {transform_indices = @transform_13, window_bounds = array<i64: 1, 1, 32>}]} {
    %c0 = arith.constant 0 : index
    %c0_0 = arith.constant 0 : index
    %c0_1 = arith.constant 0 : index
    %0 = vector.load %arg1[%c0, %c0_0, %c0_1] : memref<1x16x256xf32, #tpu.memory_space<vmem>>, vector<1x15x256xf32>
    %1 = vector.shape_cast %0 : vector<1x15x256xf32> to vector<15x256xf32>
    %c0_2 = arith.constant 0 : index
    %c1 = arith.constant 1 : index
    %c0_3 = arith.constant 0 : index
    %2 = vector.load %arg1[%c0_2, %c1, %c0_3] : memref<1x16x256xf32, #tpu.memory_space<vmem>>, vector<1x15x128xf32>
    %3 = vector.shape_cast %2 : vector<1x15x128xf32> to vector<15x128xf32>
    %4 = tpu.concatenate %1, %3 in 1 : vector<15x256xf32>, vector<15x128xf32> -> vector<15x384xf32>
    %5 = arith.truncf %4 : vector<15x384xf32> to vector<15x384xbf16>
    %c0_4 = arith.constant 0 : index
    %c0_5 = arith.constant 0 : index
    %6 = vector.load %arg2[%c0_4, %c0_5] : memref<384x512xbf16, #tpu.memory_space<vmem>>, vector<384x512xbf16>
    %cst = arith.constant dense<0.000000e+00> : vector<15x512xf32>
    %7 = tpu.matmul %5, %6, %cst {dimension_numbers = #tpu.dot_dimension_numbers<[1], [0], [0], [1], [0, 0, 1, 1], [], []>} : vector<15x384xbf16>, vector<384x512xbf16>, vector<15x512xf32> -> vector<15x512xf32>
    %c0_6 = arith.constant 0 : index
    %c0_7 = arith.constant 0 : index
    %8 = vector.load %arg3[%c0_6, %c0_7] : memref<1x512xf32, #tpu.memory_space<vmem>>, vector<1x512xf32>
    %9 = vector.broadcast %8 : vector<1x512xf32> to vector<15x512xf32>
    %10 = arith.addf %7, %9 : vector<15x512xf32>
    %cst_8 = arith.constant 0.000000e+00 : f32
    %11 = vector.broadcast %cst_8 : f32 to vector<15x512xf32>
    %12 = arith.maximumf %10, %11 : vector<15x512xf32>
    %13 = vector.extract_strided_slice %12 {offsets = [0, 0], sizes = [13, 512], strides = [1, 1]} : vector<15x512xf32> to vector<13x512xf32>
    %14 = vector.extract_strided_slice %12 {offsets = [1, 0], sizes = [13, 512], strides = [1, 1]} : vector<15x512xf32> to vector<13x512xf32>
    %15 = vector.extract_strided_slice %12 {offsets = [2, 0], sizes = [13, 512], strides = [1, 1]} : vector<15x512xf32> to vector<13x512xf32>
    %16 = tpu.concatenate %13, %14, %15 in 1 : vector<13x512xf32>, vector<13x512xf32>, vector<13x512xf32> -> vector<13x1536xf32>
    %17 = arith.truncf %16 : vector<13x1536xf32> to vector<13x1536xbf16>
    %c0_9 = arith.constant 0 : index
    %c0_10 = arith.constant 0 : index
    %18 = vector.load %arg4[%c0_9, %c0_10] : memref<1536x512xbf16, #tpu.memory_space<vmem>>, vector<1536x512xbf16>
    %cst_11 = arith.constant dense<0.000000e+00> : vector<13x512xf32>
    %19 = tpu.matmul %17, %18, %cst_11 {dimension_numbers = #tpu.dot_dimension_numbers<[1], [0], [0], [1], [0, 0, 1, 1], [], []>} : vector<13x1536xbf16>, vector<1536x512xbf16>, vector<13x512xf32> -> vector<13x512xf32>
    %c0_12 = arith.constant 0 : index
    %c0_13 = arith.constant 0 : index
    %20 = vector.load %arg5[%c0_12, %c0_13] : memref<1x512xf32, #tpu.memory_space<vmem>>, vector<1x512xf32>
    %21 = vector.broadcast %20 : vector<1x512xf32> to vector<13x512xf32>
    %22 = arith.addf %19, %21 : vector<13x512xf32>
    %cst_14 = arith.constant 0.000000e+00 : f32
    %23 = vector.broadcast %cst_14 : f32 to vector<13x512xf32>
    %24 = arith.maximumf %22, %23 : vector<13x512xf32>
    %25 = vector.extract_strided_slice %24 {offsets = [0, 0], sizes = [11, 512], strides = [1, 1]} : vector<13x512xf32> to vector<11x512xf32>
    %26 = vector.extract_strided_slice %24 {offsets = [1, 0], sizes = [11, 512], strides = [1, 1]} : vector<13x512xf32> to vector<11x512xf32>
    %27 = vector.extract_strided_slice %24 {offsets = [2, 0], sizes = [11, 512], strides = [1, 1]} : vector<13x512xf32> to vector<11x512xf32>
    %28 = tpu.concatenate %25, %26, %27 in 1 : vector<11x512xf32>, vector<11x512xf32>, vector<11x512xf32> -> vector<11x1536xf32>
    %29 = arith.truncf %28 : vector<11x1536xf32> to vector<11x1536xbf16>
    %c0_15 = arith.constant 0 : index
    %c0_16 = arith.constant 0 : index
    %30 = vector.load %arg6[%c0_15, %c0_16] : memref<1536x384xbf16, #tpu.memory_space<vmem>>, vector<1536x384xbf16>
    %cst_17 = arith.constant dense<0.000000e+00> : vector<11x384xf32>
    %31 = tpu.matmul %29, %30, %cst_17 {dimension_numbers = #tpu.dot_dimension_numbers<[1], [0], [0], [1], [0, 0, 1, 1], [], []>} : vector<11x1536xbf16>, vector<1536x384xbf16>, vector<11x384xf32> -> vector<11x384xf32>
    %c0_18 = arith.constant 0 : index
    %c0_19 = arith.constant 0 : index
    %32 = vector.load %arg7[%c0_18, %c0_19] : memref<1x384xf32, #tpu.memory_space<vmem>>, vector<1x384xf32>
    %33 = vector.broadcast %32 : vector<1x384xf32> to vector<11x384xf32>
    %34 = arith.addf %31, %33 : vector<11x384xf32>
    %cst_20 = arith.constant 0.000000e+00 : f32
    %35 = vector.broadcast %cst_20 : f32 to vector<11x384xf32>
    %36 = arith.maximumf %34, %35 : vector<11x384xf32>
    %37 = vector.extract_strided_slice %36 {offsets = [0, 0], sizes = [9, 384], strides = [1, 1]} : vector<11x384xf32> to vector<9x384xf32>
    %38 = vector.extract_strided_slice %36 {offsets = [1, 0], sizes = [9, 384], strides = [1, 1]} : vector<11x384xf32> to vector<9x384xf32>
    %39 = vector.extract_strided_slice %36 {offsets = [2, 0], sizes = [9, 384], strides = [1, 1]} : vector<11x384xf32> to vector<9x384xf32>
    %40 = tpu.concatenate %37, %38, %39 in 1 : vector<9x384xf32>, vector<9x384xf32>, vector<9x384xf32> -> vector<9x1152xf32>
    %41 = arith.truncf %40 : vector<9x1152xf32> to vector<9x1152xbf16>
    %c0_21 = arith.constant 0 : index
    %c0_22 = arith.constant 0 : index
    %42 = vector.load %arg8[%c0_21, %c0_22] : memref<1152x384xbf16, #tpu.memory_space<vmem>>, vector<1152x384xbf16>
    %cst_23 = arith.constant dense<0.000000e+00> : vector<9x384xf32>
    %43 = tpu.matmul %41, %42, %cst_23 {dimension_numbers = #tpu.dot_dimension_numbers<[1], [0], [0], [1], [0, 0, 1, 1], [], []>} : vector<9x1152xbf16>, vector<1152x384xbf16>, vector<9x384xf32> -> vector<9x384xf32>
    %c0_24 = arith.constant 0 : index
    %c0_25 = arith.constant 0 : index
    %44 = vector.load %arg9[%c0_24, %c0_25] : memref<1x384xf32, #tpu.memory_space<vmem>>, vector<1x384xf32>
    %45 = vector.broadcast %44 : vector<1x384xf32> to vector<9x384xf32>
    %46 = arith.addf %43, %45 : vector<9x384xf32>
    %cst_26 = arith.constant 0.000000e+00 : f32
    %47 = vector.broadcast %cst_26 : f32 to vector<9x384xf32>
    %48 = arith.maximumf %46, %47 : vector<9x384xf32>
    %c0_27 = arith.constant 0 : index
    %c0_28 = arith.constant 0 : index
    %49 = vector.load %arg11[%c0_27, %c0_28] : memref<1x32xf32, #tpu.memory_space<vmem>>, vector<1x32xf32>
    %50 = vector.extract_strided_slice %48 {offsets = [0, 0], sizes = [1, 384], strides = [1, 1]} : vector<9x384xf32> to vector<1x384xf32>
    %c0_29 = arith.constant 0 : index
    %c0_30 = arith.constant 0 : index
    %c0_31 = arith.constant 0 : index
    %51 = vector.load %arg10[%c0_29, %c0_30, %c0_31] : memref<9x384x32xf32, #tpu.memory_space<vmem>>, vector<1x384x32xf32>
    %52 = vector.shape_cast %51 : vector<1x384x32xf32> to vector<384x32xf32>
    %cst_32 = arith.constant dense<0.000000e+00> : vector<1x32xf32>
    %53 = tpu.matmul %50, %52, %cst_32 {dimension_numbers = #tpu.dot_dimension_numbers<[1], [0], [0], [1], [0, 0, 1, 1], [], []>} : vector<1x384xf32>, vector<384x32xf32>, vector<1x32xf32> -> vector<1x32xf32>
    %54 = arith.addf %49, %53 : vector<1x32xf32>
    %55 = vector.extract_strided_slice %48 {offsets = [1, 0], sizes = [1, 384], strides = [1, 1]} : vector<9x384xf32> to vector<1x384xf32>
    %c1_33 = arith.constant 1 : index
    %c0_34 = arith.constant 0 : index
    %c0_35 = arith.constant 0 : index
    %56 = vector.load %arg10[%c1_33, %c0_34, %c0_35] : memref<9x384x32xf32, #tpu.memory_space<vmem>>, vector<1x384x32xf32>
    %57 = vector.shape_cast %56 : vector<1x384x32xf32> to vector<384x32xf32>
    %cst_36 = arith.constant dense<0.000000e+00> : vector<1x32xf32>
    %58 = tpu.matmul %55, %57, %cst_36 {dimension_numbers = #tpu.dot_dimension_numbers<[1], [0], [0], [1], [0, 0, 1, 1], [], []>} : vector<1x384xf32>, vector<384x32xf32>, vector<1x32xf32> -> vector<1x32xf32>
    %59 = arith.addf %54, %58 : vector<1x32xf32>
    %60 = vector.extract_strided_slice %48 {offsets = [2, 0], sizes = [1, 384], strides = [1, 1]} : vector<9x384xf32> to vector<1x384xf32>
    %c2 = arith.constant 2 : index
    %c0_37 = arith.constant 0 : index
    %c0_38 = arith.constant 0 : index
    %61 = vector.load %arg10[%c2, %c0_37, %c0_38] : memref<9x384x32xf32, #tpu.memory_space<vmem>>, vector<1x384x32xf32>
    %62 = vector.shape_cast %61 : vector<1x384x32xf32> to vector<384x32xf32>
    %cst_39 = arith.constant dense<0.000000e+00> : vector<1x32xf32>
    %63 = tpu.matmul %60, %62, %cst_39 {dimension_numbers = #tpu.dot_dimension_numbers<[1], [0], [0], [1], [0, 0, 1, 1], [], []>} : vector<1x384xf32>, vector<384x32xf32>, vector<1x32xf32> -> vector<1x32xf32>
    %64 = arith.addf %59, %63 : vector<1x32xf32>
    %65 = vector.extract_strided_slice %48 {offsets = [3, 0], sizes = [1, 384], strides = [1, 1]} : vector<9x384xf32> to vector<1x384xf32>
    %c3 = arith.constant 3 : index
    %c0_40 = arith.constant 0 : index
    %c0_41 = arith.constant 0 : index
    %66 = vector.load %arg10[%c3, %c0_40, %c0_41] : memref<9x384x32xf32, #tpu.memory_space<vmem>>, vector<1x384x32xf32>
    %67 = vector.shape_cast %66 : vector<1x384x32xf32> to vector<384x32xf32>
    %cst_42 = arith.constant dense<0.000000e+00> : vector<1x32xf32>
    %68 = tpu.matmul %65, %67, %cst_42 {dimension_numbers = #tpu.dot_dimension_numbers<[1], [0], [0], [1], [0, 0, 1, 1], [], []>} : vector<1x384xf32>, vector<384x32xf32>, vector<1x32xf32> -> vector<1x32xf32>
    %69 = arith.addf %64, %68 : vector<1x32xf32>
    %70 = vector.extract_strided_slice %48 {offsets = [4, 0], sizes = [1, 384], strides = [1, 1]} : vector<9x384xf32> to vector<1x384xf32>
    %c4 = arith.constant 4 : index
    %c0_43 = arith.constant 0 : index
    %c0_44 = arith.constant 0 : index
    %71 = vector.load %arg10[%c4, %c0_43, %c0_44] : memref<9x384x32xf32, #tpu.memory_space<vmem>>, vector<1x384x32xf32>
    %72 = vector.shape_cast %71 : vector<1x384x32xf32> to vector<384x32xf32>
    %cst_45 = arith.constant dense<0.000000e+00> : vector<1x32xf32>
    %73 = tpu.matmul %70, %72, %cst_45 {dimension_numbers = #tpu.dot_dimension_numbers<[1], [0], [0], [1], [0, 0, 1, 1], [], []>} : vector<1x384xf32>, vector<384x32xf32>, vector<1x32xf32> -> vector<1x32xf32>
    %74 = arith.addf %69, %73 : vector<1x32xf32>
    %75 = vector.extract_strided_slice %48 {offsets = [5, 0], sizes = [1, 384], strides = [1, 1]} : vector<9x384xf32> to vector<1x384xf32>
    %c5 = arith.constant 5 : index
    %c0_46 = arith.constant 0 : index
    %c0_47 = arith.constant 0 : index
    %76 = vector.load %arg10[%c5, %c0_46, %c0_47] : memref<9x384x32xf32, #tpu.memory_space<vmem>>, vector<1x384x32xf32>
    %77 = vector.shape_cast %76 : vector<1x384x32xf32> to vector<384x32xf32>
    %cst_48 = arith.constant dense<0.000000e+00> : vector<1x32xf32>
    %78 = tpu.matmul %75, %77, %cst_48 {dimension_numbers = #tpu.dot_dimension_numbers<[1], [0], [0], [1], [0, 0, 1, 1], [], []>} : vector<1x384xf32>, vector<384x32xf32>, vector<1x32xf32> -> vector<1x32xf32>
    %79 = arith.addf %74, %78 : vector<1x32xf32>
    %80 = vector.extract_strided_slice %48 {offsets = [6, 0], sizes = [1, 384], strides = [1, 1]} : vector<9x384xf32> to vector<1x384xf32>
    %c6 = arith.constant 6 : index
    %c0_49 = arith.constant 0 : index
    %c0_50 = arith.constant 0 : index
    %81 = vector.load %arg10[%c6, %c0_49, %c0_50] : memref<9x384x32xf32, #tpu.memory_space<vmem>>, vector<1x384x32xf32>
    %82 = vector.shape_cast %81 : vector<1x384x32xf32> to vector<384x32xf32>
    %cst_51 = arith.constant dense<0.000000e+00> : vector<1x32xf32>
    %83 = tpu.matmul %80, %82, %cst_51 {dimension_numbers = #tpu.dot_dimension_numbers<[1], [0], [0], [1], [0, 0, 1, 1], [], []>} : vector<1x384xf32>, vector<384x32xf32>, vector<1x32xf32> -> vector<1x32xf32>
    %84 = arith.addf %79, %83 : vector<1x32xf32>
    %85 = vector.extract_strided_slice %48 {offsets = [7, 0], sizes = [1, 384], strides = [1, 1]} : vector<9x384xf32> to vector<1x384xf32>
    %c7 = arith.constant 7 : index
    %c0_52 = arith.constant 0 : index
    %c0_53 = arith.constant 0 : index
    %86 = vector.load %arg10[%c7, %c0_52, %c0_53] : memref<9x384x32xf32, #tpu.memory_space<vmem>>, vector<1x384x32xf32>
    %87 = vector.shape_cast %86 : vector<1x384x32xf32> to vector<384x32xf32>
    %cst_54 = arith.constant dense<0.000000e+00> : vector<1x32xf32>
    %88 = tpu.matmul %85, %87, %cst_54 {dimension_numbers = #tpu.dot_dimension_numbers<[1], [0], [0], [1], [0, 0, 1, 1], [], []>} : vector<1x384xf32>, vector<384x32xf32>, vector<1x32xf32> -> vector<1x32xf32>
    %89 = arith.addf %84, %88 : vector<1x32xf32>
    %90 = vector.extract_strided_slice %48 {offsets = [8, 0], sizes = [1, 384], strides = [1, 1]} : vector<9x384xf32> to vector<1x384xf32>
    %c8 = arith.constant 8 : index
    %c0_55 = arith.constant 0 : index
    %c0_56 = arith.constant 0 : index
    %91 = vector.load %arg10[%c8, %c0_55, %c0_56] : memref<9x384x32xf32, #tpu.memory_space<vmem>>, vector<1x384x32xf32>
    %92 = vector.shape_cast %91 : vector<1x384x32xf32> to vector<384x32xf32>
    %cst_57 = arith.constant dense<0.000000e+00> : vector<1x32xf32>
    %93 = tpu.matmul %90, %92, %cst_57 {dimension_numbers = #tpu.dot_dimension_numbers<[1], [0], [0], [1], [0, 0, 1, 1], [], []>} : vector<1x384xf32>, vector<384x32xf32>, vector<1x32xf32> -> vector<1x32xf32>
    %94 = arith.addf %89, %93 : vector<1x32xf32>
    %cst_58 = arith.constant dense<0.000000e+00> : vector<1xf32>
    %95 = vector.multi_reduction <add>, %94, %cst_58 [1] : vector<1x32xf32> to vector<1xf32>
    %96 = vector.shape_cast %95 : vector<1xf32> to vector<1x1xf32>
    %cst_59 = arith.constant 3.200000e+01 : f32
    %97 = vector.broadcast %cst_59 : f32 to vector<1x1xf32>
    %98 = arith.divf %96, %97 : vector<1x1xf32>
    %99 = vector.broadcast %98 : vector<1x1xf32> to vector<1x32xf32>
    %100 = arith.subf %94, %99 : vector<1x32xf32>
    %101 = arith.mulf %100, %100 : vector<1x32xf32>
    %cst_60 = arith.constant dense<0.000000e+00> : vector<1xf32>
    %102 = vector.multi_reduction <add>, %101, %cst_60 [1] : vector<1x32xf32> to vector<1xf32>
    %103 = vector.shape_cast %102 : vector<1xf32> to vector<1x1xf32>
    %cst_61 = arith.constant 3.200000e+01 : f32
    %104 = vector.broadcast %cst_61 : f32 to vector<1x1xf32>
    %105 = arith.divf %103, %104 : vector<1x1xf32>
    %106 = vector.broadcast %98 : vector<1x1xf32> to vector<1x32xf32>
    %107 = arith.subf %94, %106 : vector<1x32xf32>
    %cst_62 = arith.constant 9.99999974E-6 : f32
    %108 = vector.broadcast %cst_62 : f32 to vector<1x1xf32>
    %109 = arith.addf %105, %108 : vector<1x1xf32>
    %110 = math.rsqrt %109 : vector<1x1xf32>
    %111 = vector.broadcast %110 : vector<1x1xf32> to vector<1x32xf32>
    %112 = arith.mulf %107, %111 : vector<1x32xf32>
    %c0_63 = arith.constant 0 : index
    %c0_64 = arith.constant 0 : index
    %113 = vector.load %arg12[%c0_63, %c0_64] : memref<1x32xf32, #tpu.memory_space<vmem>>, vector<1x32xf32>
    %114 = arith.mulf %112, %113 : vector<1x32xf32>
    %c0_65 = arith.constant 0 : index
    %c0_66 = arith.constant 0 : index
    %115 = vector.load %arg13[%c0_65, %c0_66] : memref<1x32xf32, #tpu.memory_space<vmem>>, vector<1x32xf32>
    %116 = arith.addf %114, %115 : vector<1x32xf32>
    %117 = math.tanh %116 : vector<1x32xf32>
    %c0_67 = arith.constant 0 : index
    %c0_68 = arith.constant 0 : index
    %c0_69 = arith.constant 0 : index
    %118 = vector.load %arg14[%c0_67, %c0_68, %c0_69] : memref<1x1x32xf32, #tpu.memory_space<vmem>>, vector<1x1x32xf32>
    %119 = vector.shape_cast %118 : vector<1x1x32xf32> to vector<1x32xf32>
    %120 = vector.shape_cast %117 : vector<1x32xf32> to vector<1x1x32xf32>
    tpu.vector_store %arg14[%c0_67, %c0_68, %c0_69], %120 {strides = array<i32>} : memref<1x1x32xf32, #tpu.memory_space<vmem>>, vector<1x1x32xf32>,
    return
  }
  func.func @transform_0(%arg0: i32) -> (i32, i32, i32) {
    %c0_i32 = arith.constant 0 : i32
    %c0_i32_0 = arith.constant 0 : i32
    %c0_i32_1 = arith.constant 0 : i32
    return %arg0, %c0_i32, %c0_i32_0 : i32, i32, i32
  }
  func.func @transform_1(%arg0: i32) -> (i32, i32) {
    %c0_i32 = arith.constant 0 : i32
    %c0_i32_0 = arith.constant 0 : i32
    %c0_i32_1 = arith.constant 0 : i32
    return %c0_i32, %c0_i32_0 : i32, i32
  }
  func.func @transform_2(%arg0: i32) -> (i32, i32) {
    %c0_i32 = arith.constant 0 : i32
    %c0_i32_0 = arith.constant 0 : i32
    %c0_i32_1 = arith.constant 0 : i32
    return %c0_i32, %c0_i32_0 : i32, i32
  }
  func.func @transform_3(%arg0: i32) -> (i32, i32) {
    %c0_i32 = arith.constant 0 : i32
    %c0_i32_0 = arith.constant 0 : i32
    %c0_i32_1 = arith.constant 0 : i32
    return %c0_i32, %c0_i32_0 : i32, i32
  }
  func.func @transform_4(%arg0: i32) -> (i32, i32) {
    %c0_i32 = arith.constant 0 : i32
    %c0_i32_0 = arith.constant 0 : i32
    %c0_i32_1 = arith.constant 0 : i32
    return %c0_i32, %c0_i32_0 : i32, i32
  }
  func.func @transform_5(%arg0: i32) -> (i32, i32) {
    %c0_i32 = arith.constant 0 : i32
    %c0_i32_0 = arith.constant 0 : i32
    %c0_i32_1 = arith.constant 0 : i32
    return %c0_i32, %c0_i32_0 : i32, i32
  }
  func.func @transform_6(%arg0: i32) -> (i32, i32) {
    %c0_i32 = arith.constant 0 : i32
    %c0_i32_0 = arith.constant 0 : i32
    %c0_i32_1 = arith.constant 0 : i32
    return %c0_i32, %c0_i32_0 : i32, i32
  }
  func.func @transform_7(%arg0: i32) -> (i32, i32) {
    %c0_i32 = arith.constant 0 : i32
    %c0_i32_0 = arith.constant 0 : i32
    %c0_i32_1 = arith.constant 0 : i32
    return %c0_i32, %c0_i32_0 : i32, i32
  }
  func.func @transform_8(%arg0: i32) -> (i32, i32) {
    %c0_i32 = arith.constant 0 : i32
    %c0_i32_0 = arith.constant 0 : i32
    %c0_i32_1 = arith.constant 0 : i32
    return %c0_i32, %c0_i32_0 : i32, i32
  }
  func.func @transform_9(%arg0: i32) -> (i32, i32, i32) {
    %c0_i32 = arith.constant 0 : i32
    %c0_i32_0 = arith.constant 0 : i32
    %c0_i32_1 = arith.constant 0 : i32
    %c0_i32_2 = arith.constant 0 : i32
    return %c0_i32, %c0_i32_0, %c0_i32_1 : i32, i32, i32
  }
  func.func @transform_10(%arg0: i32) -> (i32, i32) {
    %c0_i32 = arith.constant 0 : i32
    %c0_i32_0 = arith.constant 0 : i32
    %c0_i32_1 = arith.constant 0 : i32
    return %c0_i32, %c0_i32_0 : i32, i32
  }
  func.func @transform_11(%arg0: i32) -> (i32, i32) {
    %c0_i32 = arith.constant 0 : i32
    %c0_i32_0 = arith.constant 0 : i32
    %c0_i32_1 = arith.constant 0 : i32
    return %c0_i32, %c0_i32_0 : i32, i32
  }
  func.func @transform_12(%arg0: i32) -> (i32, i32) {
    %c0_i32 = arith.constant 0 : i32
    %c0_i32_0 = arith.constant 0 : i32
    %c0_i32_1 = arith.constant 0 : i32
    return %c0_i32, %c0_i32_0 : i32, i32
  }
  func.func @transform_13(%arg0: i32) -> (i32, i32, i32) {
    %c0_i32 = arith.constant 0 : i32
    %c0_i32_0 = arith.constant 0 : i32
    %c0_i32_1 = arith.constant 0 : i32
    return %arg0, %c0_i32, %c0_i32_0 : i32, i32, i32
  }
}

</mosaic_0001>

<llo_original>
// kernel: tpu_custom_call.1
$region0: #{tpu_custom_call.1}
  #allocation0 [shape = 'u32[]', space=smem, size = 0x4, offset = 0x4, fixed_abs, tag = 'smem constant byte address 0x4 - core index']
  #allocation1 [shape = 'u32[144,128]{1,0:T(1,128)}', space=vmem, size = 0x12000, scoped, tag = 'internal scratch']
  %s0 = inlined_call_operand.vmem [shape: f32[2,16,256], index: 0, kind: input, shape index: {}]
  %s1 = inlined_call_operand.vmem [shape: bf16[384,512], index: 1, kind: input, shape index: {}]
  %s2 = inlined_call_operand.vmem [shape: f32[1,512], index: 2, kind: input, shape index: {}]
  %s3 = inlined_call_operand.vmem [shape: bf16[1536,512], index: 3, kind: input, shape index: {}]
  %s4 = inlined_call_operand.vmem [shape: f32[1,512], index: 4, kind: input, shape index: {}]
  %s5 = inlined_call_operand.hbm [shape: bf16[1536,384], index: 5, kind: input, shape index: {}]
  %s6 = inlined_call_operand.vmem [shape: f32[1,384], index: 6, kind: input, shape index: {}]
  %s7 = inlined_call_operand.hbm [shape: bf16[1152,384], index: 7, kind: input, shape index: {}]
  %s8 = inlined_call_operand.vmem [shape: f32[1,384], index: 8, kind: input, shape index: {}]
  %s9 = inlined_call_operand.vmem [shape: f32[9,384,32], index: 9, kind: input, shape index: {}]
  %s10 = inlined_call_operand.vmem [shape: f32[1,32], index: 10, kind: input, shape index: {}]
  %s11 = inlined_call_operand.vmem [shape: f32[1,32], index: 11, kind: input, shape index: {}]
  %s12 = inlined_call_operand.vmem [shape: f32[1,32], index: 12, kind: input, shape index: {}]
  %s13 = inlined_call_operand.hbm [shape: f32[2,1,32], index: 13, kind: output, shape index: {}]
  %s14 = sld [smem:[#allocation0]]
  $region93: #{tpu_custom_call.1} parent=0
    _
  %s16 = ssub.s32 1, %s14
  %s17 = scalar_select 0, %s16, %s14
  $region1: #{tpu_custom_call.1} parent=0
    #allocation2 [shape = 'u8[1179648]{0}', space=vmem, size = 0x120000, scoped, tag = 'input window, operand 5, single buffered']
    #allocation3 [shape = 's32[2]{0}', space=sflag, size = 0x8, scoped, tag = 'scoped memory for tpu_custom_call.1']
    #allocation4 [shape = 's32[2]{0}', space=sflag, size = 0x8, scoped, tag = 'scoped memory for tpu_custom_call.1']
    #allocation5 [shape = 'u8[884736]{0}', space=vmem, size = 0xd8000, scoped, tag = 'input window, operand 7, single buffered']
    #allocation6 [shape = 's32[1]{0}', space=sflag, size = 0x4, scoped, tag = 'scoped memory for tpu_custom_call.1']
    #allocation7 [shape = 'u8[1024]{0}', space=vmem, size = 0x400, scoped, tag = 'output window, operand 0']
    %18 = vsyncpa [#allocation3], 0
    %19 = vsyncpa [#allocation6], 0
    %20 = vsyncpa [#allocation4], 0
    %s21 = scalar_lea.sflag [#allocation4], 1
    %22 = vsyncpa %s21, 0
    loop: start=0, step=1, limit=4
    $region2: #{tpu_custom_call.1} parent=1 // loop_pre_header
      _
    $region3: #{tpu_custom_call.1} parent=1 // loop_header
      %s24 = sphi 0, %s28
      %p25 = scmp.ge.s32.totalorder %s24, 4
      %s34 = sphi 0, %s36
      %s37 = sphi 0, %s34
      %s38 = sphi 0, %s37
      %s54 = sphi 0, %s38
      %s58 = sphi 0, %s58
      %s60 = sphi 0, %s58
      %s61 = sphi 0, %s60
      %s75 = sphi 0, %s61
      %s79 = sphi 0, %s79
      %s81 = sphi 0, %s79
      %s82 = sphi 0, %s81
      %s96 = sphi 0, %s82
      %s100 = sphi 0, %s100
      %s102 = sphi 0, %s100
      %s103 = sphi 0, %s102
      %s117 = sphi 0, %s103
      %s121 = sphi 0, %s121
      %s123 = sphi 0, %s121
      %s124 = sphi 0, %s123
      %s138 = sphi 0, %s124
      %s142 = sphi 0, %s142
      %s144 = sphi 0, %s142
      %s145 = sphi 0, %s144
      %s159 = sphi 0, %s145
      %s163 = sphi 0, %s163
      %s165 = sphi 0, %s163
      %s166 = sphi 0, %s165
      %s180 = sphi 0, %s166
      %s184 = sphi 0, %s184
      %s186 = sphi 0, %s184
      %s187 = sphi 0, %s186
      %s201 = sphi 0, %s187
      %s205 = sphi 0, %s205
      %s207 = sphi 0, %s205
      %s208 = sphi 0, %s207
      %s222 = sphi 0, %s208
      %s226 = sphi 0, %s226
      %s228 = sphi 0, %s226
      %s229 = sphi 0, %s228
      %s243 = sphi 0, %s229
      %s247 = sphi 0, %s247
      %s249 = sphi 0, %s247
      %s250 = sphi 0, %s249
      %s264 = sphi 0, %s250
      %s268 = sphi 0, %s268
      %s270 = sphi 0, %s268
      %s271 = sphi 0, %s270
      %s285 = sphi 0, %s271
      %s289 = sphi 0, %s289
      %s291 = sphi 0, %s289
      %s292 = sphi 0, %s291
      %s306 = sphi 0, %s292
      %s312 = sphi 0, %s314
      %s315 = sphi 0, %s312
      %s316 = sphi 0, %s315
      %s332 = sphi 0, %s316
    $region4: #{tpu_custom_call.1} parent=1 // loop_header_branch
      %27 = sbr.rel (%p25) target = $region8
    $region5: #{tpu_custom_call.1} parent=1 // loop_body
      %s29 = ssub.s32 %s24, 1
      %s30 = ssub.s32 %s24, 2
      %s31 = sadd.s32 %s24, 1
      %s32 = ssub.s32 %s24, %s31
      %p33 = scmp.eq.s32.totalorder %s32, 0
      %s35 = sadd.s32 %s34, 1
      %s36 = scalar_select %p33, %s34, %s35
      %p39 = pneg %p33
      %p40 = scmp.eq.s32.totalorder %s24, 1
      %p41 = por %p39, %p40
      %p42 = scmp.ne.s32.totalorder %s34, %s37
      %p43 = scmp.eq.s32.totalorder %s24, 0
      %p44 = por %p42, %p43
      %p45 = scmp.ne.s32.totalorder %s34, %s37
      %p46 = scmp.eq.s32.totalorder %s29, 1
      %p47 = por %p45, %p46
      %p48 = scmp.ne.s32.totalorder %s37, %s38
      %p49 = scmp.eq.s32.totalorder %s29, 0
      %p50 = por %p48, %p49
      %p51 = scmp.ne.s32.totalorder %s37, %s38
      %p52 = scmp.eq.s32.totalorder %s30, 1
      %p53 = por %p51, %p52
      %p55 = scmp.ne.s32.totalorder %s38, %s54
      %p56 = scmp.eq.s32.totalorder %s30, 0
      %p57 = por %p55, %p56
      %s59 = sadd.s32 %s58, 1
      %p62 = scmp.eq.s32.totalorder %s24, 1
      %p63 = scmp.ne.s32.totalorder %s58, %s60
      %p64 = scmp.eq.s32.totalorder %s24, 0
      %p65 = por %p63, %p64
      %p66 = scmp.ne.s32.totalorder %s58, %s60
      %p67 = scmp.eq.s32.totalorder %s29, 1
      %p68 = por %p66, %p67
      %p69 = scmp.ne.s32.totalorder %s60, %s61
      %p70 = scmp.eq.s32.totalorder %s29, 0
      %p71 = por %p69, %p70
      %p72 = scmp.ne.s32.totalorder %s60, %s61
      %p73 = scmp.eq.s32.totalorder %s30, 1
      %p74 = por %p72, %p73
      %p76 = scmp.ne.s32.totalorder %s61, %s75
      %p77 = scmp.eq.s32.totalorder %s30, 0
      %p78 = por %p76, %p77
      %s80 = sadd.s32 %s79, 1
      %p83 = scmp.eq.s32.totalorder %s24, 1
      %p84 = scmp.ne.s32.totalorder %s79, %s81
      %p85 = scmp.eq.s32.totalorder %s24, 0
      %p86 = por %p84, %p85
      %p87 = scmp.ne.s32.totalorder %s79, %s81
      %p88 = scmp.eq.s32.totalorder %s29, 1
      %p89 = por %p87, %p88
      %p90 = scmp.ne.s32.totalorder %s81, %s82
      %p91 = scmp.eq.s32.totalorder %s29, 0
      %p92 = por %p90, %p91
      %p93 = scmp.ne.s32.totalorder %s81, %s82
      %p94 = scmp.eq.s32.totalorder %s30, 1
      %p95 = por %p93, %p94
      %p97 = scmp.ne.s32.totalorder %s82, %s96
      %p98 = scmp.eq.s32.totalorder %s30, 0
      %p99 = por %p97, %p98
      %s101 = sadd.s32 %s100, 1
      %p104 = scmp.eq.s32.totalorder %s24, 1
      %p105 = scmp.ne.s32.totalorder %s100, %s102
      %p106 = scmp.eq.s32.totalorder %s24, 0
      %p107 = por %p105, %p106
      %p108 = scmp.ne.s32.totalorder %s100, %s102
      %p109 = scmp.eq.s32.totalorder %s29, 1
      %p110 = por %p108, %p109
      %p111 = scmp.ne.s32.totalorder %s102, %s103
      %p112 = scmp.eq.s32.totalorder %s29, 0
      %p113 = por %p111, %p112
      %p114 = scmp.ne.s32.totalorder %s102, %s103
      %p115 = scmp.eq.s32.totalorder %s30, 1
      %p116 = por %p114, %p115
      %p118 = scmp.ne.s32.totalorder %s103, %s117
      %p119 = scmp.eq.s32.totalorder %s30, 0
      %p120 = por %p118, %p119
      %s122 = sadd.s32 %s121, 1
      %p125 = scmp.eq.s32.totalorder %s24, 1
      %p126 = scmp.ne.s32.totalorder %s121, %s123
      %p127 = scmp.eq.s32.totalorder %s24, 0
      %p128 = por %p126, %p127
      %p129 = scmp.ne.s32.totalorder %s121, %s123
      %p130 = scmp.eq.s32.totalorder %s29, 1
      %p131 = por %p129, %p130
      %p132 = scmp.ne.s32.totalorder %s123, %s124
      %p133 = scmp.eq.s32.totalorder %s29, 0
      %p134 = por %p132, %p133
      %p135 = scmp.ne.s32.totalorder %s123, %s124
      %p136 = scmp.eq.s32.totalorder %s30, 1
      %p137 = por %p135, %p136
      %p139 = scmp.ne.s32.totalorder %s124, %s138
      %p140 = scmp.eq.s32.totalorder %s30, 0
      %p141 = por %p139, %p140
      %s143 = sadd.s32 %s142, 1
      %p146 = scmp.eq.s32.totalorder %s24, 1
      %p147 = scmp.ne.s32.totalorder %s142, %s144
      %p148 = scmp.eq.s32.totalorder %s24, 0
      %p149 = por %p147, %p148
      %p150 = scmp.ne.s32.totalorder %s142, %s144
      %p151 = scmp.eq.s32.totalorder %s29, 1
      %p152 = por %p150, %p151
      %p153 = scmp.ne.s32.totalorder %s144, %s145
      %p154 = scmp.eq.s32.totalorder %s29, 0
      %p155 = por %p153, %p154
      %p156 = scmp.ne.s32.totalorder %s144, %s145
      %p157 = scmp.eq.s32.totalorder %s30, 1
      %p158 = por %p156, %p157
      %p160 = scmp.ne.s32.totalorder %s145, %s159
      %p161 = scmp.eq.s32.totalorder %s30, 0
      %p162 = por %p160, %p161
      %s164 = sadd.s32 %s163, 1
      %p167 = scmp.eq.s32.totalorder %s24, 1
      %p168 = scmp.ne.s32.totalorder %s163, %s165
      %p169 = scmp.eq.s32.totalorder %s24, 0
      %p170 = por %p168, %p169
      %p171 = scmp.ne.s32.totalorder %s163, %s165
      %p172 = scmp.eq.s32.totalorder %s29, 1
      %p173 = por %p171, %p172
      %p174 = scmp.ne.s32.totalorder %s165, %s166
      %p175 = scmp.eq.s32.totalorder %s29, 0
      %p176 = por %p174, %p175
      %p177 = scmp.ne.s32.totalorder %s165, %s166
      %p178 = scmp.eq.s32.totalorder %s30, 1
      %p179 = por %p177, %p178
      %p181 = scmp.ne.s32.totalorder %s166, %s180
      %p182 = scmp.eq.s32.totalorder %s30, 0
      %p183 = por %p181, %p182
      %s185 = sadd.s32 %s184, 1
      %p188 = scmp.eq.s32.totalorder %s24, 1
      %p189 = scmp.ne.s32.totalorder %s184, %s186
      %p190 = scmp.eq.s32.totalorder %s24, 0
      %p191 = por %p189, %p190
      %p192 = scmp.ne.s32.totalorder %s184, %s186
      %p193 = scmp.eq.s32.totalorder %s29, 1
      %p194 = por %p192, %p193
      %p195 = scmp.ne.s32.totalorder %s186, %s187
      %p196 = scmp.eq.s32.totalorder %s29, 0
      %p197 = por %p195, %p196
      %p198 = scmp.ne.s32.totalorder %s186, %s187
      %p199 = scmp.eq.s32.totalorder %s30, 1
      %p200 = por %p198, %p199
      %p202 = scmp.ne.s32.totalorder %s187, %s201
      %p203 = scmp.eq.s32.totalorder %s30, 0
      %p204 = por %p202, %p203
      %s206 = sadd.s32 %s205, 1
      %p209 = scmp.eq.s32.totalorder %s24, 1
      %p210 = scmp.ne.s32.totalorder %s205, %s207
      %p211 = scmp.eq.s32.totalorder %s24, 0
      %p212 = por %p210, %p211
      %p213 = scmp.ne.s32.totalorder %s205, %s207
      %p214 = scmp.eq.s32.totalorder %s29, 1
      %p215 = por %p213, %p214
      %p216 = scmp.ne.s32.totalorder %s207, %s208
      %p217 = scmp.eq.s32.totalorder %s29, 0
      %p218 = por %p216, %p217
      %p219 = scmp.ne.s32.totalorder %s207, %s208
      %p220 = scmp.eq.s32.totalorder %s30, 1
      %p221 = por %p219, %p220
      %p223 = scmp.ne.s32.totalorder %s208, %s222
      %p224 = scmp.eq.s32.totalorder %s30, 0
      %p225 = por %p223, %p224
      %s227 = sadd.s32 %s226, 1
      %p230 = scmp.eq.s32.totalorder %s24, 1
      %p231 = scmp.ne.s32.totalorder %s226, %s228
      %p232 = scmp.eq.s32.totalorder %s24, 0
      %p233 = por %p231, %p232
      %p234 = scmp.ne.s32.totalorder %s226, %s228
      %p235 = scmp.eq.s32.totalorder %s29, 1
      %p236 = por %p234, %p235
      %p237 = scmp.ne.s32.totalorder %s228, %s229
      %p238 = scmp.eq.s32.totalorder %s29, 0
      %p239 = por %p237, %p238
      %p240 = scmp.ne.s32.totalorder %s228, %s229
      %p241 = scmp.eq.s32.totalorder %s30, 1
      %p242 = por %p240, %p241
      %p244 = scmp.ne.s32.totalorder %s229, %s243
      %p245 = scmp.eq.s32.totalorder %s30, 0
      %p246 = por %p244, %p245
      %s248 = sadd.s32 %s247, 1
      %p251 = scmp.eq.s32.totalorder %s24, 1
      %p252 = scmp.ne.s32.totalorder %s247, %s249
      %p253 = scmp.eq.s32.totalorder %s24, 0
      %p254 = por %p252, %p253
      %p255 = scmp.ne.s32.totalorder %s247, %s249
      %p256 = scmp.eq.s32.totalorder %s29, 1
      %p257 = por %p255, %p256
      %p258 = scmp.ne.s32.totalorder %s249, %s250
      %p259 = scmp.eq.s32.totalorder %s29, 0
      %p260 = por %p258, %p259
      %p261 = scmp.ne.s32.totalorder %s249, %s250
      %p262 = scmp.eq.s32.totalorder %s30, 1
      %p263 = por %p261, %p262
      %p265 = scmp.ne.s32.totalorder %s250, %s264
      %p266 = scmp.eq.s32.totalorder %s30, 0
      %p267 = por %p265, %p266
      %s269 = sadd.s32 %s268, 1
      %p272 = scmp.eq.s32.totalorder %s24, 1
      %p273 = scmp.ne.s32.totalorder %s268, %s270
      %p274 = scmp.eq.s32.totalorder %s24, 0
      %p275 = por %p273, %p274
      %p276 = scmp.ne.s32.totalorder %s268, %s270
      %p277 = scmp.eq.s32.totalorder %s29, 1
      %p278 = por %p276, %p277
      %p279 = scmp.ne.s32.totalorder %s270, %s271
      %p280 = scmp.eq.s32.totalorder %s29, 0
      %p281 = por %p279, %p280
      %p282 = scmp.ne.s32.totalorder %s270, %s271
      %p283 = scmp.eq.s32.totalorder %s30, 1
      %p284 = por %p282, %p283
      %p286 = scmp.ne.s32.totalorder %s271, %s285
      %p287 = scmp.eq.s32.totalorder %s30, 0
      %p288 = por %p286, %p287
      %s290 = sadd.s32 %s289, 1
      %p293 = scmp.eq.s32.totalorder %s24, 1
      %p294 = scmp.ne.s32.totalorder %s289, %s291
      %p295 = scmp.eq.s32.totalorder %s24, 0
      %p296 = por %p294, %p295
      %p297 = scmp.ne.s32.totalorder %s289, %s291
      %p298 = scmp.eq.s32.totalorder %s29, 1
      %p299 = por %p297, %p298
      %p300 = scmp.ne.s32.totalorder %s291, %s292
      %p301 = scmp.eq.s32.totalorder %s29, 0
      %p302 = por %p300, %p301
      %p303 = scmp.ne.s32.totalorder %s291, %s292
      %p304 = scmp.eq.s32.totalorder %s30, 1
      %p305 = por %p303, %p304
      %p307 = scmp.ne.s32.totalorder %s292, %s306
      %p308 = scmp.eq.s32.totalorder %s30, 0
      %p309 = por %p307, %p308
      %s310 = ssub.s32 %s24, %s31
      %p311 = scmp.eq.s32.totalorder %s310, 0
      %s313 = sadd.s32 %s312, 1
      %s314 = scalar_select %p311, %s312, %s313
      %p317 = pneg %p311
      %p318 = scmp.eq.s32.totalorder %s24, 1
      %p319 = por %p317, %p318
      %p320 = scmp.ne.s32.totalorder %s312, %s315
      %p321 = scmp.eq.s32.totalorder %s24, 0
      %p322 = por %p320, %p321
      %p323 = scmp.ne.s32.totalorder %s312, %s315
      %p324 = scmp.eq.s32.totalorder %s29, 1
      %p325 = por %p323, %p324
      %p326 = scmp.ne.s32.totalorder %s315, %s316
      %p327 = scmp.eq.s32.totalorder %s29, 0
      %p328 = por %p326, %p327
      %p329 = scmp.ne.s32.totalorder %s315, %s316
      %p330 = scmp.eq.s32.totalorder %s30, 1
      %p331 = por %p329, %p330
      %p333 = scmp.ne.s32.totalorder %s316, %s332
      %p334 = scmp.eq.s32.totalorder %s30, 0
      %p335 = por %p333, %p334
      %p336 = scmp.le.s32.totalorder 1, %s24
      %p337 = scmp.lt.s32.totalorder %s24, 3
      %p338 = pnand %p336, %p337
      %p339 = pneg %p338
      // Predicated region
      $region9: #{tpu_custom_call.1} parent=5 // pred_check
        _
      $region10: #{tpu_custom_call.1} parent=5 // pred_check_branch
        %341 = sbr.rel (%p338) target = $region12
      $region11: #{tpu_custom_call.1} parent=5 // pred_region
        %s342 = ssub.s32 %s24, 1
        // Predicated region
        $region13: #{tpu_custom_call.1} parent=11 // pred_check
          %p343 = pneg %p71
        $region14: #{tpu_custom_call.1} parent=11 // pred_check_branch
          %345 = sbr.rel (%p343) target = $region16
        $region15: #{tpu_custom_call.1} parent=11 // pred_region
          _
        $region16: #{tpu_custom_call.1} parent=11 // pred_fallthru
          _
        // Predicated region
        $region17: #{tpu_custom_call.1} parent=11 // pred_check
          %p346 = pneg %p92
        $region18: #{tpu_custom_call.1} parent=11 // pred_check_branch
          %348 = sbr.rel (%p346) target = $region20
        $region19: #{tpu_custom_call.1} parent=11 // pred_region
          _
        $region20: #{tpu_custom_call.1} parent=11 // pred_fallthru
          _
        // Predicated region
        $region21: #{tpu_custom_call.1} parent=11 // pred_check
          %p349 = pneg %p113
        $region22: #{tpu_custom_call.1} parent=11 // pred_check_branch
          %351 = sbr.rel (%p349) target = $region24
        $region23: #{tpu_custom_call.1} parent=11 // pred_region
          _
        $region24: #{tpu_custom_call.1} parent=11 // pred_fallthru
          _
        // Predicated region
        $region25: #{tpu_custom_call.1} parent=11 // pred_check
          %p352 = pneg %p134
        $region26: #{tpu_custom_call.1} parent=11 // pred_check_branch
          %354 = sbr.rel (%p352) target = $region28
        $region27: #{tpu_custom_call.1} parent=11 // pred_region
          _
        $region28: #{tpu_custom_call.1} parent=11 // pred_fallthru
          _
        // Predicated region
        $region29: #{tpu_custom_call.1} parent=11 // pred_check
          %p355 = pneg %p155
        $region30: #{tpu_custom_call.1} parent=11 // pred_check_branch
          %357 = sbr.rel (%p355) target = $region32
        $region31: #{tpu_custom_call.1} parent=11 // pred_region
          %s359 = ssub.s32 36864, 36864
          %360 = vsyncadd [#allocation3], %s359
          %s361 = sshll.u32 [#allocation2], 4
          %s362 = int_to_ptr.vmem [resolvable:$true] %s361
          %367 = dma.hbm_to_vmem [thread:$0]  %s5, 36864, %s362, [#allocation3], 192, 192, 12
        $region32: #{tpu_custom_call.1} parent=11 // pred_fallthru
          _
        // Predicated region
        $region33: #{tpu_custom_call.1} parent=11 // pred_check
          %p368 = pneg %p176
        $region34: #{tpu_custom_call.1} parent=11 // pred_check_branch
          %370 = sbr.rel (%p368) target = $region36
        $region35: #{tpu_custom_call.1} parent=11 // pred_region
          _
        $region36: #{tpu_custom_call.1} parent=11 // pred_fallthru
          _
        // Predicated region
        $region37: #{tpu_custom_call.1} parent=11 // pred_check
          %p371 = pneg %p197
        $region38: #{tpu_custom_call.1} parent=11 // pred_check_branch
          %373 = sbr.rel (%p371) target = $region40
        $region39: #{tpu_custom_call.1} parent=11 // pred_region
          %s375 = ssub.s32 27648, 27648
          %376 = vsyncadd [#allocation6], %s375
          %s377 = sshll.u32 [#allocation5], 4
          %s378 = int_to_ptr.vmem [resolvable:$true] %s377
          %383 = dma.hbm_to_vmem [thread:$0]  %s7, 27648, %s378, [#allocation6], 192, 192, 12
        $region40: #{tpu_custom_call.1} parent=11 // pred_fallthru
          _
        // Predicated region
        $region41: #{tpu_custom_call.1} parent=11 // pred_check
          %p384 = pneg %p218
        $region42: #{tpu_custom_call.1} parent=11 // pred_check_branch
          %386 = sbr.rel (%p384) target = $region44
        $region43: #{tpu_custom_call.1} parent=11 // pred_region
          _
        $region44: #{tpu_custom_call.1} parent=11 // pred_fallthru
          _
        // Predicated region
        $region45: #{tpu_custom_call.1} parent=11 // pred_check
          %p387 = pneg %p239
        $region46: #{tpu_custom_call.1} parent=11 // pred_check_branch
          %389 = sbr.rel (%p387) target = $region48
        $region47: #{tpu_custom_call.1} parent=11 // pred_region
          _
        $region48: #{tpu_custom_call.1} parent=11 // pred_fallthru
          _
        // Predicated region
        $region49: #{tpu_custom_call.1} parent=11 // pred_check
          %p390 = pneg %p260
        $region50: #{tpu_custom_call.1} parent=11 // pred_check_branch
          %392 = sbr.rel (%p390) target = $region52
        $region51: #{tpu_custom_call.1} parent=11 // pred_region
          _
        $region52: #{tpu_custom_call.1} parent=11 // pred_fallthru
          _
        // Predicated region
        $region53: #{tpu_custom_call.1} parent=11 // pred_check
          %p393 = pneg %p281
        $region54: #{tpu_custom_call.1} parent=11 // pred_check_branch
          %395 = sbr.rel (%p393) target = $region56
        $region55: #{tpu_custom_call.1} parent=11 // pred_region
          _
        $region56: #{tpu_custom_call.1} parent=11 // pred_fallthru
          _
        // Predicated region
        $region57: #{tpu_custom_call.1} parent=11 // pred_check
          %p396 = pneg %p302
        $region58: #{tpu_custom_call.1} parent=11 // pred_check_branch
          %398 = sbr.rel (%p396) target = $region60
        $region59: #{tpu_custom_call.1} parent=11 // pred_region
          _
        $region60: #{tpu_custom_call.1} parent=11 // pred_fallthru
          _
      $region12: #{tpu_custom_call.1} parent=5 // pred_fallthru
        _
      %p399 = scmp.lt.s32.totalorder %s24, 2
      // Predicated region
      $region61: #{tpu_custom_call.1} parent=5 // pred_check
        %p400 = pneg %p399
      $region62: #{tpu_custom_call.1} parent=5 // pred_check_branch
        %402 = sbr.rel (%p400) target = $region64
      $region63: #{tpu_custom_call.1} parent=5 // pred_region
        // Predicated region
        $region65: #{tpu_custom_call.1} parent=63 // pred_check
          %p403 = pneg %p44
        $region66: #{tpu_custom_call.1} parent=63 // pred_check_branch
          %405 = sbr.rel (%p403) target = $region68
        $region67: #{tpu_custom_call.1} parent=63 // pred_region
          %p406 = scmp.lt.s32.totalorder %s24, 1
          %s407 = scalar_select %p406, %s24, 1
          %s408 = smul.addr %s407, 4
          %s409 = smul.addr %s408, 8
          %s410 = scalar_lea.vmem %s0, %s409
        $region68: #{tpu_custom_call.1} parent=63 // pred_fallthru
          _
      $region64: #{tpu_custom_call.1} parent=5 // pred_fallthru
        _
      %p411 = scmp.le.s32.totalorder 1, %s24
      %p412 = scmp.lt.s32.totalorder %s24, 3
      %p413 = pnand %p411, %p412
      %p414 = pneg %p413
      // Predicated region
      $region69: #{tpu_custom_call.1} parent=5 // pred_check
        _
      $region70: #{tpu_custom_call.1} parent=5 // pred_check_branch
        %416 = sbr.rel (%p413) target = $region72
      $region71: #{tpu_custom_call.1} parent=5 // pred_region
        %s417 = ssub.s32 %s24, 1
        // Predicated region
        $region73: #{tpu_custom_call.1} parent=71 // pred_check
          %p418 = pneg %p155
        $region74: #{tpu_custom_call.1} parent=71 // pred_check_branch
          %420 = sbr.rel (%p418) target = $region76
        $region75: #{tpu_custom_call.1} parent=71 // pred_region
          %421 = dma.done [#allocation3], 36864
        $region76: #{tpu_custom_call.1} parent=71 // pred_fallthru
          _
        // Predicated region
        $region77: #{tpu_custom_call.1} parent=71 // pred_check
          %p422 = pneg %p197
        $region78: #{tpu_custom_call.1} parent=71 // pred_check_branch
          %424 = sbr.rel (%p422) target = $region80
        $region79: #{tpu_custom_call.1} parent=71 // pred_region
          %425 = dma.done [#allocation6], 27648
        $region80: #{tpu_custom_call.1} parent=71 // pred_fallthru
          _
        %p426 = scmp.lt.s32.totalorder %s29, 1
        %s427 = scalar_select %p426, %s29, 1
        %s428 = smul.addr %s427, 4
        %s429 = smul.addr %s428, 8
        %s430 = scalar_lea.vmem %s0, %s429
        %p431 = pneg %p50
        %p432 = pneg %p47
        %p433 = pneg %p71
        %p434 = pneg %p68
        %p435 = pneg %p92
        %p436 = pneg %p89
        %p437 = pneg %p113
        %p438 = pneg %p110
        %p439 = pneg %p134
        %p440 = pneg %p131
        %p441 = pneg %p155
        %p442 = pneg %p152
        %p443 = pneg %p176
        %p444 = pneg %p173
        %p445 = pneg %p197
        %p446 = pneg %p194
        %p447 = pneg %p218
        %p448 = pneg %p215
        %p449 = pneg %p239
        %p450 = pneg %p236
        %p451 = pneg %p260
        %p452 = pneg %p257
        %p453 = pneg %p281
        %p454 = pneg %p278
        %p455 = pneg %p302
        %p456 = pneg %p299
        %p457 = pneg %p328
        %p458 = pneg %p325
        %s459 = sand.u32 %s315, 1
        %s460 = scalar_lea.sflag [#allocation4], %s459
        %s461 = sand.u32 %s315, 1
        %s462 = scalar_lea.vmem [#allocation7], %s461
        %p463 = scmp.lt.s32.totalorder %s29, 1
        %s464 = scalar_select %p463, %s29, 1
        %s465 = smul.addr %s464, 4
        %s466 = smul.addr %s465, 8
        %s467 = scalar_lea.vmem %s0, %s466
        %v469 = vld [vmem:[%s467] sm:$0xff]
        %v470 = vld [vmem:[%s467 + $0x8] sm:$0xff]
        %v471 = vld [vmem:[%s467 + $0x10] sm:$0x7f]
        %v472 = vld [vmem:[%s467 + $0x18] sm:$0x7f]
        %v473 = vld [vmem:[%s467] sm:$0xfe]
        %v474 = vld [vmem:[%s467 + $0x10] sm:$0xff]
        %vm477 = vcmask 1046528
        %v478 = vrot.slane %v473, 1
        %v479 = vrot.slane %v474, 1
        %v480 = vsel %vm477, %v478, %v479
        %v483 = vpack.c.bf16 %v471, %v469
        %v484 = vpack.c.bf16 %v472, %v470
        %v485 = vpack.c.bf16 %v479, %v480
        %v486 = vld [vmem:[%s1] sm:$0xff]
        %v487 = vld [vmem:[%s1 + $0x8] sm:$0xff]
        %v488 = vld [vmem:[%s1 + $0x10] sm:$0xff]
        %v489 = vld [vmem:[%s1 + $0x18] sm:$0xff]
        %v490 = vld [vmem:[%s1 + $0x20] sm:$0xff]
        %v491 = vld [vmem:[%s1 + $0x28] sm:$0xff]
        %v492 = vld [vmem:[%s1 + $0x30] sm:$0xff]
        %v493 = vld [vmem:[%s1 + $0x38] sm:$0xff]
        %v494 = vld [vmem:[%s1 + $0x40] sm:$0xff]
        %v495 = vld [vmem:[%s1 + $0x48] sm:$0xff]
        %v496 = vld [vmem:[%s1 + $0x50] sm:$0xff]
        %v497 = vld [vmem:[%s1 + $0x58] sm:$0xff]
        %v498 = vld [vmem:[%s1 + $0x60] sm:$0xff]
        %v499 = vld [vmem:[%s1 + $0x68] sm:$0xff]
        %v500 = vld [vmem:[%s1 + $0x70] sm:$0xff]
        %v501 = vld [vmem:[%s1 + $0x78] sm:$0xff]
        %v502 = vld [vmem:[%s1 + $0x80] sm:$0xff]
        %v503 = vld [vmem:[%s1 + $0x88] sm:$0xff]
        %v504 = vld [vmem:[%s1 + $0x90] sm:$0xff]
        %v505 = vld [vmem:[%s1 + $0x98] sm:$0xff]
        %v506 = vld [vmem:[%s1 + $0xa0] sm:$0xff]
        %v507 = vld [vmem:[%s1 + $0xa8] sm:$0xff]
        %v508 = vld [vmem:[%s1 + $0xb0] sm:$0xff]
        %v509 = vld [vmem:[%s1 + $0xb8] sm:$0xff]
        %v510 = vld [vmem:[%s1 + $0xc0] sm:$0xff]
        %v511 = vld [vmem:[%s1 + $0xc8] sm:$0xff]
        %v512 = vld [vmem:[%s1 + $0xd0] sm:$0xff]
        %v513 = vld [vmem:[%s1 + $0xd8] sm:$0xff]
        %v514 = vld [vmem:[%s1 + $0xe0] sm:$0xff]
        %v515 = vld [vmem:[%s1 + $0xe8] sm:$0xff]
        %v516 = vld [vmem:[%s1 + $0xf0] sm:$0xff]
        %v517 = vld [vmem:[%s1 + $0xf8] sm:$0xff]
        %v518 = vld [vmem:[%s1 + $0x100] sm:$0xff]
        %v519 = vld [vmem:[%s1 + $0x108] sm:$0xff]
        %v520 = vld [vmem:[%s1 + $0x110] sm:$0xff]
        %v521 = vld [vmem:[%s1 + $0x118] sm:$0xff]
        %v522 = vld [vmem:[%s1 + $0x120] sm:$0xff]
        %v523 = vld [vmem:[%s1 + $0x128] sm:$0xff]
        %v524 = vld [vmem:[%s1 + $0x130] sm:$0xff]
        %v525 = vld [vmem:[%s1 + $0x138] sm:$0xff]
        %v526 = vld [vmem:[%s1 + $0x140] sm:$0xff]
        %v527 = vld [vmem:[%s1 + $0x148] sm:$0xff]
        %v528 = vld [vmem:[%s1 + $0x150] sm:$0xff]
        %v529 = vld [vmem:[%s1 + $0x158] sm:$0xff]
        %v530 = vld [vmem:[%s1 + $0x160] sm:$0xff]
        %v531 = vld [vmem:[%s1 + $0x168] sm:$0xff]
        %v532 = vld [vmem:[%s1 + $0x170] sm:$0xff]
        %v533 = vld [vmem:[%s1 + $0x178] sm:$0xff]
        %v534 = vld [vmem:[%s1 + $0x180] sm:$0xff]
        %v535 = vld [vmem:[%s1 + $0x188] sm:$0xff]
        %v536 = vld [vmem:[%s1 + $0x190] sm:$0xff]
        %v537 = vld [vmem:[%s1 + $0x198] sm:$0xff]
        %v538 = vld [vmem:[%s1 + $0x1a0] sm:$0xff]
        %v539 = vld [vmem:[%s1 + $0x1a8] sm:$0xff]
        %v540 = vld [vmem:[%s1 + $0x1b0] sm:$0xff]
        %v541 = vld [vmem:[%s1 + $0x1b8] sm:$0xff]
        %v542 = vld [vmem:[%s1 + $0x1c0] sm:$0xff]
        %v543 = vld [vmem:[%s1 + $0x1c8] sm:$0xff]
        %v544 = vld [vmem:[%s1 + $0x1d0] sm:$0xff]
        %v545 = vld [vmem:[%s1 + $0x1d8] sm:$0xff]
        %v546 = vld [vmem:[%s1 + $0x1e0] sm:$0xff]
        %v547 = vld [vmem:[%s1 + $0x1e8] sm:$0xff]
        %v548 = vld [vmem:[%s1 + $0x1f0] sm:$0xff]
        %v549 = vld [vmem:[%s1 + $0x1f8] sm:$0xff]
        %v550 = vld [vmem:[%s1 + $0x200] sm:$0xff]
        %v551 = vld [vmem:[%s1 + $0x208] sm:$0xff]
        %v552 = vld [vmem:[%s1 + $0x210] sm:$0xff]
        %v553 = vld [vmem:[%s1 + $0x218] sm:$0xff]
        %v554 = vld [vmem:[%s1 + $0x220] sm:$0xff]
        %v555 = vld [vmem:[%s1 + $0x228] sm:$0xff]
        %v556 = vld [vmem:[%s1 + $0x230] sm:$0xff]
        %v557 = vld [vmem:[%s1 + $0x238] sm:$0xff]
        %v558 = vld [vmem:[%s1 + $0x240] sm:$0xff]
        %v559 = vld [vmem:[%s1 + $0x248] sm:$0xff]
        %v560 = vld [vmem:[%s1 + $0x250] sm:$0xff]
        %v561 = vld [vmem:[%s1 + $0x258] sm:$0xff]
        %v562 = vld [vmem:[%s1 + $0x260] sm:$0xff]
        %v563 = vld [vmem:[%s1 + $0x268] sm:$0xff]
        %v564 = vld [vmem:[%s1 + $0x270] sm:$0xff]
        %v565 = vld [vmem:[%s1 + $0x278] sm:$0xff]
        %v566 = vld [vmem:[%s1 + $0x280] sm:$0xff]
        %v567 = vld [vmem:[%s1 + $0x288] sm:$0xff]
        %v568 = vld [vmem:[%s1 + $0x290] sm:$0xff]
        %v569 = vld [vmem:[%s1 + $0x298] sm:$0xff]
        %v570 = vld [vmem:[%s1 + $0x2a0] sm:$0xff]
        %v571 = vld [vmem:[%s1 + $0x2a8] sm:$0xff]
        %v572 = vld [vmem:[%s1 + $0x2b0] sm:$0xff]
        %v573 = vld [vmem:[%s1 + $0x2b8] sm:$0xff]
        %v574 = vld [vmem:[%s1 + $0x2c0] sm:$0xff]
        %v575 = vld [vmem:[%s1 + $0x2c8] sm:$0xff]
        %v576 = vld [vmem:[%s1 + $0x2d0] sm:$0xff]
        %v577 = vld [vmem:[%s1 + $0x2d8] sm:$0xff]
        %v578 = vld [vmem:[%s1 + $0x2e0] sm:$0xff]
        %v579 = vld [vmem:[%s1 + $0x2e8] sm:$0xff]
        %v580 = vld [vmem:[%s1 + $0x2f0] sm:$0xff]
        %v581 = vld [vmem:[%s1 + $0x2f8] sm:$0xff]
        %v582 = vld [vmem:[%s2] sm:$0xf]
        %v584 = vlaneseq
        %v585 = vshrl.u32 %v584, 7
        %v586 = vsub.s32 0, %v585
        %v587 = vrot.slane %v582, %v586
        %v588 = vlaneseq
        %v589 = vshrl.u32 %v588, 7
        %v590 = vsub.s32 1, %v589
        %v591 = vrot.slane %v582, %v590
        %v592 = vlaneseq
        %v593 = vshrl.u32 %v592, 7
        %v594 = vsub.s32 2, %v593
        %v595 = vrot.slane %v582, %v594
        %v596 = vlaneseq
        %v597 = vshrl.u32 %v596, 7
        %v598 = vsub.s32 3, %v597
        %v599 = vrot.slane %v582, %v598
        %v700 = vunpack.c.l.b16 %v486
        %v701 = vunpack.c.h.b16 %v486
        %v702 = vunpack.c.l.b16 %v487
        %v703 = vunpack.c.h.b16 %v487
        %v704 = vunpack.c.l.b16 %v488
        %v705 = vunpack.c.h.b16 %v488
        %v706 = vunpack.c.l.b16 %v489
        %v707 = vunpack.c.h.b16 %v489
        %v708 = vunpack.c.l.b16 %v490
        %v709 = vunpack.c.h.b16 %v490
        %v710 = vunpack.c.l.b16 %v491
        %v711 = vunpack.c.h.b16 %v491
        %v712 = vunpack.c.l.b16 %v492
        %v713 = vunpack.c.h.b16 %v492
        %v714 = vunpack.c.l.b16 %v493
        %v715 = vunpack.c.h.b16 %v493
        %v716 = vunpack.c.l.b16 %v494
        %v717 = vunpack.c.h.b16 %v494
        %v718 = vunpack.c.l.b16 %v495
        %v719 = vunpack.c.h.b16 %v495
        %v720 = vunpack.c.l.b16 %v496
        %v721 = vunpack.c.h.b16 %v496
        %v722 = vunpack.c.l.b16 %v497
        %v723 = vunpack.c.h.b16 %v497
        %v724 = vunpack.c.l.b16 %v498
        %v725 = vunpack.c.h.b16 %v498
        %v726 = vunpack.c.l.b16 %v499
        %v727 = vunpack.c.h.b16 %v499
        %v728 = vunpack.c.l.b16 %v500
        %v729 = vunpack.c.h.b16 %v500
        %v730 = vunpack.c.l.b16 %v501
        %v731 = vunpack.c.h.b16 %v501
        %v732 = vunpack.c.l.b16 %v502
        %v733 = vunpack.c.h.b16 %v502
        %v734 = vunpack.c.l.b16 %v503
        %v735 = vunpack.c.h.b16 %v503
        %v736 = vunpack.c.l.b16 %v504
        %v737 = vunpack.c.h.b16 %v504
        %v738 = vunpack.c.l.b16 %v505
        %v739 = vunpack.c.h.b16 %v505
        %v740 = vunpack.c.l.b16 %v506
        %v741 = vunpack.c.h.b16 %v506
        %v742 = vunpack.c.l.b16 %v507
        %v743 = vunpack.c.h.b16 %v507
        %v744 = vunpack.c.l.b16 %v508
        %v745 = vunpack.c.h.b16 %v508
        %v746 = vunpack.c.l.b16 %v509
        %v747 = vunpack.c.h.b16 %v509
        %v748 = vunpack.c.l.b16 %v510
        %v749 = vunpack.c.h.b16 %v510
        %v750 = vunpack.c.l.b16 %v511
        %v751 = vunpack.c.h.b16 %v511
        %v752 = vunpack.c.l.b16 %v512
        %v753 = vunpack.c.h.b16 %v512
        %v754 = vunpack.c.l.b16 %v513
        %v755 = vunpack.c.h.b16 %v513
        %v756 = vunpack.c.l.b16 %v514
        %v757 = vunpack.c.h.b16 %v514
        %v758 = vunpack.c.l.b16 %v515
        %v759 = vunpack.c.h.b16 %v515
        %v760 = vunpack.c.l.b16 %v516
        %v761 = vunpack.c.h.b16 %v516
        %v762 = vunpack.c.l.b16 %v517
        %v763 = vunpack.c.h.b16 %v517
        %v764 = vunpack.c.l.b16 %v518
        %v765 = vunpack.c.h.b16 %v518
        %v766 = vunpack.c.l.b16 %v519
        %v767 = vunpack.c.h.b16 %v519
        %v768 = vunpack.c.l.b16 %v520
        %v769 = vunpack.c.h.b16 %v520
        %v770 = vunpack.c.l.b16 %v521
        %v771 = vunpack.c.h.b16 %v521
        %v772 = vunpack.c.l.b16 %v522
        %v773 = vunpack.c.h.b16 %v522
        %v774 = vunpack.c.l.b16 %v523
        %v775 = vunpack.c.h.b16 %v523
        %v776 = vunpack.c.l.b16 %v524
        %v777 = vunpack.c.h.b16 %v524
        %v778 = vunpack.c.l.b16 %v525
        %v779 = vunpack.c.h.b16 %v525
        %v780 = vunpack.c.l.b16 %v526
        %v781 = vunpack.c.h.b16 %v526
        %v782 = vunpack.c.l.b16 %v527
        %v783 = vunpack.c.h.b16 %v527
        %v784 = vunpack.c.l.b16 %v528
        %v785 = vunpack.c.h.b16 %v528
        %v786 = vunpack.c.l.b16 %v529
        %v787 = vunpack.c.h.b16 %v529
        %v788 = vunpack.c.l.b16 %v530
        %v789 = vunpack.c.h.b16 %v530
        %v790 = vunpack.c.l.b16 %v531
        %v791 = vunpack.c.h.b16 %v531
        %v792 = vunpack.c.l.b16 %v532
        %v793 = vunpack.c.h.b16 %v532
        %v794 = vunpack.c.l.b16 %v533
        %v795 = vunpack.c.h.b16 %v533
        %v796 = vunpack.c.l.b16 %v534
        %v797 = vunpack.c.h.b16 %v534
        %v798 = vunpack.c.l.b16 %v535
        %v799 = vunpack.c.h.b16 %v535
        %v800 = vunpack.c.l.b16 %v536
        %v801 = vunpack.c.h.b16 %v536
        %v802 = vunpack.c.l.b16 %v537
        %v803 = vunpack.c.h.b16 %v537
        %v804 = vunpack.c.l.b16 %v538
        %v805 = vunpack.c.h.b16 %v538
        %v806 = vunpack.c.l.b16 %v539
        %v807 = vunpack.c.h.b16 %v539
        %v808 = vunpack.c.l.b16 %v540
        %v809 = vunpack.c.h.b16 %v540
        %v810 = vunpack.c.l.b16 %v541
        %v811 = vunpack.c.h.b16 %v541
        %v812 = vunpack.c.l.b16 %v542
        %v813 = vunpack.c.h.b16 %v542
        %v814 = vunpack.c.l.b16 %v543
        %v815 = vunpack.c.h.b16 %v543
        %v816 = vunpack.c.l.b16 %v544
        %v817 = vunpack.c.h.b16 %v544
        %v818 = vunpack.c.l.b16 %v545
        %v819 = vunpack.c.h.b16 %v545
        %v820 = vunpack.c.l.b16 %v546
        %v821 = vunpack.c.h.b16 %v546
        %v822 = vunpack.c.l.b16 %v547
        %v823 = vunpack.c.h.b16 %v547
        %v824 = vunpack.c.l.b16 %v548
        %v825 = vunpack.c.h.b16 %v548
        %v826 = vunpack.c.l.b16 %v549
        %v827 = vunpack.c.h.b16 %v549
        %v828 = vunpack.c.l.b16 %v550
        %v829 = vunpack.c.h.b16 %v550
        %v830 = vunpack.c.l.b16 %v551
        %v831 = vunpack.c.h.b16 %v551
        %v832 = vunpack.c.l.b16 %v552
        %v833 = vunpack.c.h.b16 %v552
        %v834 = vunpack.c.l.b16 %v553
        %v835 = vunpack.c.h.b16 %v553
        %v836 = vunpack.c.l.b16 %v554
        %v837 = vunpack.c.h.b16 %v554
        %v838 = vunpack.c.l.b16 %v555
        %v839 = vunpack.c.h.b16 %v555
        %v840 = vunpack.c.l.b16 %v556
        %v841 = vunpack.c.h.b16 %v556
        %v842 = vunpack.c.l.b16 %v557
        %v843 = vunpack.c.h.b16 %v557
        %v844 = vunpack.c.l.b16 %v558
        %v845 = vunpack.c.h.b16 %v558
        %v846 = vunpack.c.l.b16 %v559
        %v847 = vunpack.c.h.b16 %v559
        %v848 = vunpack.c.l.b16 %v560
        %v849 = vunpack.c.h.b16 %v560
        %v850 = vunpack.c.l.b16 %v561
        %v851 = vunpack.c.h.b16 %v561
        %v852 = vunpack.c.l.b16 %v562
        %v853 = vunpack.c.h.b16 %v562
        %v854 = vunpack.c.l.b16 %v563
        %v855 = vunpack.c.h.b16 %v563
        %v856 = vunpack.c.l.b16 %v564
        %v857 = vunpack.c.h.b16 %v564
        %v858 = vunpack.c.l.b16 %v565
        %v859 = vunpack.c.h.b16 %v565
        %v860 = vunpack.c.l.b16 %v566
        %v861 = vunpack.c.h.b16 %v566
        %v862 = vunpack.c.l.b16 %v567
        %v863 = vunpack.c.h.b16 %v567
        %v864 = vunpack.c.l.b16 %v568
        %v865 = vunpack.c.h.b16 %v568
        %v866 = vunpack.c.l.b16 %v569
        %v867 = vunpack.c.h.b16 %v569
        %v868 = vunpack.c.l.b16 %v570
        %v869 = vunpack.c.h.b16 %v570
        %v870 = vunpack.c.l.b16 %v571
        %v871 = vunpack.c.h.b16 %v571
        %v872 = vunpack.c.l.b16 %v572
        %v873 = vunpack.c.h.b16 %v572
        %v874 = vunpack.c.l.b16 %v573
        %v875 = vunpack.c.h.b16 %v573
        %v876 = vunpack.c.l.b16 %v574
        %v877 = vunpack.c.h.b16 %v574
        %v878 = vunpack.c.l.b16 %v575
        %v879 = vunpack.c.h.b16 %v575
        %v880 = vunpack.c.l.b16 %v576
        %v881 = vunpack.c.h.b16 %v576
        %v882 = vunpack.c.l.b16 %v577
        %v883 = vunpack.c.h.b16 %v577
        %v884 = vunpack.c.l.b16 %v578
        %v885 = vunpack.c.h.b16 %v578
        %v886 = vunpack.c.l.b16 %v579
        %v887 = vunpack.c.h.b16 %v579
        %v888 = vunpack.c.l.b16 %v580
        %v889 = vunpack.c.h.b16 %v580
        %v890 = vunpack.c.l.b16 %v581
        %v891 = vunpack.c.h.b16 %v581
        %v892 = vpack.c.b16 %v704, %v700
        %v893 = vpack.c.b16 %v705, %v701
        %v894 = vpack.c.b16 %v706, %v702
        %v895 = vpack.c.b16 %v707, %v703
        %v896 = vpack.c.b16 %v712, %v708
        %v897 = vpack.c.b16 %v713, %v709
        %v898 = vpack.c.b16 %v714, %v710
        %v899 = vpack.c.b16 %v715, %v711
        %v900 = vpack.c.b16 %v720, %v716
        %v901 = vpack.c.b16 %v721, %v717
        %v902 = vpack.c.b16 %v722, %v718
        %v903 = vpack.c.b16 %v723, %v719
        %v904 = vpack.c.b16 %v728, %v724
        %v905 = vpack.c.b16 %v729, %v725
        %v906 = vpack.c.b16 %v730, %v726
        %v907 = vpack.c.b16 %v731, %v727
        %v908 = vpack.c.b16 %v736, %v732
        %v909 = vpack.c.b16 %v737, %v733
        %v910 = vpack.c.b16 %v738, %v734
        %v911 = vpack.c.b16 %v739, %v735
        %v912 = vpack.c.b16 %v744, %v740
        %v913 = vpack.c.b16 %v745, %v741
        %v914 = vpack.c.b16 %v746, %v742
        %v915 = vpack.c.b16 %v747, %v743
        %v916 = vpack.c.b16 %v752, %v748
        %v917 = vpack.c.b16 %v753, %v749
        %v918 = vpack.c.b16 %v754, %v750
        %v919 = vpack.c.b16 %v755, %v751
        %v920 = vpack.c.b16 %v760, %v756
        %v921 = vpack.c.b16 %v761, %v757
        %v922 = vpack.c.b16 %v762, %v758
        %v923 = vpack.c.b16 %v763, %v759
        %v924 = vpack.c.b16 %v768, %v764
        %v925 = vpack.c.b16 %v769, %v765
        %v926 = vpack.c.b16 %v770, %v766
        %v927 = vpack.c.b16 %v771, %v767
        %v928 = vpack.c.b16 %v776, %v772
        %v929 = vpack.c.b16 %v777, %v773
        %v930 = vpack.c.b16 %v778, %v774
        %v931 = vpack.c.b16 %v779, %v775
        %v932 = vpack.c.b16 %v784, %v780
        %v933 = vpack.c.b16 %v785, %v781
        %v934 = vpack.c.b16 %v786, %v782
        %v935 = vpack.c.b16 %v787, %v783
        %v936 = vpack.c.b16 %v792, %v788
        %v937 = vpack.c.b16 %v793, %v789
        %v938 = vpack.c.b16 %v794, %v790
        %v939 = vpack.c.b16 %v795, %v791
        %v940 = vpack.c.b16 %v800, %v796
        %v941 = vpack.c.b16 %v801, %v797
        %v942 = vpack.c.b16 %v802, %v798
        %v943 = vpack.c.b16 %v803, %v799
        %v944 = vpack.c.b16 %v808, %v804
        %v945 = vpack.c.b16 %v809, %v805
        %v946 = vpack.c.b16 %v810, %v806
        %v947 = vpack.c.b16 %v811, %v807
        %v948 = vpack.c.b16 %v816, %v812
        %v949 = vpack.c.b16 %v817, %v813
        %v950 = vpack.c.b16 %v818, %v814
        %v951 = vpack.c.b16 %v819, %v815
        %v952 = vpack.c.b16 %v824, %v820
        %v953 = vpack.c.b16 %v825, %v821
        %v954 = vpack.c.b16 %v826, %v822
        %v955 = vpack.c.b16 %v827, %v823
        %v956 = vpack.c.b16 %v832, %v828
        %v957 = vpack.c.b16 %v833, %v829
        %v958 = vpack.c.b16 %v834, %v830
        %v959 = vpack.c.b16 %v835, %v831
        %v960 = vpack.c.b16 %v840, %v836
        %v961 = vpack.c.b16 %v841, %v837
        %v962 = vpack.c.b16 %v842, %v838
        %v963 = vpack.c.b16 %v843, %v839
        %v964 = vpack.c.b16 %v848, %v844
        %v965 = vpack.c.b16 %v849, %v845
        %v966 = vpack.c.b16 %v850, %v846
        %v967 = vpack.c.b16 %v851, %v847
        %v968 = vpack.c.b16 %v856, %v852
        %v969 = vpack.c.b16 %v857, %v853
        %v970 = vpack.c.b16 %v858, %v854
        %v971 = vpack.c.b16 %v859, %v855
        %v972 = vpack.c.b16 %v864, %v860
        %v973 = vpack.c.b16 %v865, %v861
        %v974 = vpack.c.b16 %v866, %v862
        %v975 = vpack.c.b16 %v867, %v863
        %v976 = vpack.c.b16 %v872, %v868
        %v977 = vpack.c.b16 %v873, %v869
        %v978 = vpack.c.b16 %v874, %v870
        %v979 = vpack.c.b16 %v875, %v871
        %v980 = vpack.c.b16 %v880, %v876
        %v981 = vpack.c.b16 %v881, %v877
        %v982 = vpack.c.b16 %v882, %v878
        %v983 = vpack.c.b16 %v883, %v879
        %v984 = vpack.c.b16 %v888, %v884
        %v985 = vpack.c.b16 %v889, %v885
        %v986 = vpack.c.b16 %v890, %v886
        %v987 = vpack.c.b16 %v891, %v887
        %1084 = vmatprep.subr.bf16.mxu0 %v893
        %1085 = vmatpush1.bf16.msra.mxu0 %v892
        %1086 = vmatprep.subr.bf16.mxu0 %v897
        %1087 = vmatpush1.bf16.msra.mxu0 %v896
        %1088 = vmatprep.subr.bf16.mxu0 %v901
        %1089 = vmatpush1.bf16.msra.mxu0 %v900
        %1090 = vmatprep.subr.bf16.mxu0 %v905
        %1091 = vmatpush1.bf16.msra.mxu0 %v904
        %1092 = vmatprep.subr.bf16.mxu0 %v909
        %1093 = vmatpush1.bf16.msra.mxu0 %v908
        %1094 = vmatprep.subr.bf16.mxu0 %v913
        %1095 = vmatpush1.bf16.msra.mxu0 %v912
        %1096 = vmatprep.subr.bf16.mxu0 %v917
        %1097 = vmatpush1.bf16.msra.mxu0 %v916
        %1098 = vmatprep.subr.bf16.mxu0 %v921
        %1099 = vmatpush1.bf16.msra.mxu0 %v920
        %1100 = vmatprep.subr.bf16.mxu0 %v925
        %1101 = vmatpush1.bf16.msra.mxu0 %v924
        %1102 = vmatprep.subr.bf16.mxu0 %v929
        %1103 = vmatpush1.bf16.msra.mxu0 %v928
        %1104 = vmatprep.subr.bf16.mxu0 %v933
        %1105 = vmatpush1.bf16.msra.mxu0 %v932
        %1106 = vmatprep.subr.bf16.mxu0 %v937
        %1107 = vmatpush1.bf16.msra.mxu0 %v936
        %1108 = vmatprep.subr.bf16.mxu0 %v941
        %1109 = vmatpush1.bf16.msra.mxu0 %v940
        %1110 = vmatprep.subr.bf16.mxu0 %v945
        %1111 = vmatpush1.bf16.msra.mxu0 %v944
        %1112 = vmatprep.subr.bf16.mxu0 %v949
        %1113 = vmatpush1.bf16.msra.mxu0 %v948
        %1114 = vmatprep.subr.bf16.mxu0 %v953
        %1115 = vmatpush1.bf16.msra.mxu0 %v952
        %1116 = vmatprep.mubr.bf16.mxu0 %v484
        %1117 = vmatmul.mubr.bf16.gmra.mrb[0].mxu0 %v483
        %v1118 = vpop.f32.mrb[0].mxu0
        %v1119 = vadd.f32 %v587, %v1118
        %v1120 = vpop.f32.mrb[0].mxu0
        %v1121 = vadd.f32 %v591, %v1120
        %v1122 = vpop.f32.mrb[0].mxu0
        %v1123 = vadd.f32 %v587, %v1122
        %v1124 = vpop.f32.mrb[0].mxu0
        %v1125 = vadd.f32 %v591, %v1124
        %1126 = vdwg.mxu0
        %1127 = vmatprep.subr.bf16.mxu0 %v957
        %1128 = vmatpush1.bf16.msra.mxu0 %v956
        %1129 = vmatprep.subr.bf16.mxu0 %v961
        %1130 = vmatpush1.bf16.msra.mxu0 %v960
        %1131 = vmatprep.subr.bf16.mxu0 %v965
        %1132 = vmatpush1.bf16.msra.mxu0 %v964
        %1133 = vmatprep.subr.bf16.mxu0 %v969
        %1134 = vmatpush1.bf16.msra.mxu0 %v968
        %1135 = vmatprep.subr.bf16.mxu0 %v973
        %1136 = vmatpush1.bf16.msra.mxu0 %v972
        %1137 = vmatprep.subr.bf16.mxu0 %v977
        %1138 = vmatpush1.bf16.msra.mxu0 %v976
        %1139 = vmatprep.subr.bf16.mxu0 %v981
        %1140 = vmatpush1.bf16.msra.mxu0 %v980
        %1141 = vmatprep.subr.bf16.mxu0 %v985
        %1142 = vmatpush1.bf16.msra.mxu0 %v984
        %1143 = vmatprep.subr.bf16.mxu0 0
        %1144 = vmatpush1.bf16.msra.mxu0 0
        %1145 = vmatprep.subr.bf16.mxu0 0
        %1146 = vmatpush1.bf16.msra.mxu0 0
        %1147 = vmatprep.subr.bf16.mxu0 0
        %1148 = vmatpush1.bf16.msra.mxu0 0
        %1149 = vmatprep.subr.bf16.mxu0 0
        %1150 = vmatpush1.bf16.msra.mxu0 0
        %1151 = vmatprep.subr.bf16.mxu0 0
        %1152 = vmatpush1.bf16.msra.mxu0 0
        %1153 = vmatprep.subr.bf16.mxu0 0
        %1154 = vmatpush1.bf16.msra.mxu0 0
        %1155 = vmatprep.subr.bf16.mxu0 0
        %1156 = vmatpush1.bf16.msra.mxu0 0
        %1157 = vmatprep.subr.bf16.mxu0 0
        %1158 = vmatpush1.bf16.msra.mxu0 0
        %1159 = vmatprep.mubr.bf16.mxu0 0
        %1160 = vmatmul.mubr.bf16.gmra.mrb[0].mxu0 %v485
        %v1161 = vpop.f32.mrb[0].mxu0
        %v1162 = vadd.f32 %v1119, %v1161
        %v1163 = vpop.f32.mrb[0].mxu0
        %v1164 = vadd.f32 %v1121, %v1163
        %v1165 = vpop.f32.mrb[0].mxu0
        %v1166 = vadd.f32 %v1123, %v1165
        %v1167 = vpop.f32.mrb[0].mxu0
        %v1168 = vadd.f32 %v1125, %v1167
        %1169 = vdwg.mxu0
        %1170 = vmatprep.subr.bf16.mxu0 %v895
        %1171 = vmatpush1.bf16.msra.mxu0 %v894
        %1172 = vmatprep.subr.bf16.mxu0 %v899
        %1173 = vmatpush1.bf16.msra.mxu0 %v898
        %1174 = vmatprep.subr.bf16.mxu0 %v903
        %1175 = vmatpush1.bf16.msra.mxu0 %v902
        %1176 = vmatprep.subr.bf16.mxu0 %v907
        %1177 = vmatpush1.bf16.msra.mxu0 %v906
        %1178 = vmatprep.subr.bf16.mxu0 %v911
        %1179 = vmatpush1.bf16.msra.mxu0 %v910
        %1180 = vmatprep.subr.bf16.mxu0 %v915
        %1181 = vmatpush1.bf16.msra.mxu0 %v914
        %1182 = vmatprep.subr.bf16.mxu0 %v919
        %1183 = vmatpush1.bf16.msra.mxu0 %v918
        %1184 = vmatprep.subr.bf16.mxu0 %v923
        %1185 = vmatpush1.bf16.msra.mxu0 %v922
        %1186 = vmatprep.subr.bf16.mxu0 %v927
        %1187 = vmatpush1.bf16.msra.mxu0 %v926
        %1188 = vmatprep.subr.bf16.mxu0 %v931
        %1189 = vmatpush1.bf16.msra.mxu0 %v930
        %1190 = vmatprep.subr.bf16.mxu0 %v935
        %1191 = vmatpush1.bf16.msra.mxu0 %v934
        %1192 = vmatprep.subr.bf16.mxu0 %v939
        %1193 = vmatpush1.bf16.msra.mxu0 %v938
        %1194 = vmatprep.subr.bf16.mxu0 %v943
        %1195 = vmatpush1.bf16.msra.mxu0 %v942
        %1196 = vmatprep.subr.bf16.mxu0 %v947
        %1197 = vmatpush1.bf16.msra.mxu0 %v946
        %1198 = vmatprep.subr.bf16.mxu0 %v951
        %1199 = vmatpush1.bf16.msra.mxu0 %v950
        %1200 = vmatprep.subr.bf16.mxu0 %v955
        %1201 = vmatpush1.bf16.msra.mxu0 %v954
        %1202 = vmatprep.mubr.bf16.mxu0 %v484
        %1203 = vmatmul.mubr.bf16.gmra.mrb[0].mxu0 %v483
        %v1204 = vpop.f32.mrb[0].mxu0
        %v1205 = vadd.f32 %v595, %v1204
        %v1206 = vpop.f32.mrb[0].mxu0
        %v1207 = vadd.f32 %v599, %v1206
        %v1208 = vpop.f32.mrb[0].mxu0
        %v1209 = vadd.f32 %v595, %v1208
        %v1210 = vpop.f32.mrb[0].mxu0
        %v1211 = vadd.f32 %v599, %v1210
        %1212 = vdwg.mxu0
        %1213 = vmatprep.subr.bf16.mxu0 %v959
        %1214 = vmatpush1.bf16.msra.mxu0 %v958
        %1215 = vmatprep.subr.bf16.mxu0 %v963
        %1216 = vmatpush1.bf16.msra.mxu0 %v962
        %1217 = vmatprep.subr.bf16.mxu0 %v967
        %1218 = vmatpush1.bf16.msra.mxu0 %v966
        %1219 = vmatprep.subr.bf16.mxu0 %v971
        %1220 = vmatpush1.bf16.msra.mxu0 %v970
        %1221 = vmatprep.subr.bf16.mxu0 %v975
        %1222 = vmatpush1.bf16.msra.mxu0 %v974
        %1223 = vmatprep.subr.bf16.mxu0 %v979
        %1224 = vmatpush1.bf16.msra.mxu0 %v978
        %1225 = vmatprep.subr.bf16.mxu0 %v983
        %1226 = vmatpush1.bf16.msra.mxu0 %v982
        %1227 = vmatprep.subr.bf16.mxu0 %v987
        %1228 = vmatpush1.bf16.msra.mxu0 %v986
        %1229 = vmatprep.subr.bf16.mxu0 0
        %1230 = vmatpush1.bf16.msra.mxu0 0
        %1231 = vmatprep.subr.bf16.mxu0 0
        %1232 = vmatpush1.bf16.msra.mxu0 0
        %1233 = vmatprep.subr.bf16.mxu0 0
        %1234 = vmatpush1.bf16.msra.mxu0 0
        %1235 = vmatprep.subr.bf16.mxu0 0
        %1236 = vmatpush1.bf16.msra.mxu0 0
        %1237 = vmatprep.subr.bf16.mxu0 0
        %1238 = vmatpush1.bf16.msra.mxu0 0
        %1239 = vmatprep.subr.bf16.mxu0 0
        %1240 = vmatpush1.bf16.msra.mxu0 0
        %1241 = vmatprep.subr.bf16.mxu0 0
        %1242 = vmatpush1.bf16.msra.mxu0 0
        %1243 = vmatprep.subr.bf16.mxu0 0
        %1244 = vmatpush1.bf16.msra.mxu0 0
        %1245 = vmatprep.mubr.bf16.mxu0 0
        %1246 = vmatmul.mubr.bf16.gmra.mrb[0].mxu0 %v485
        %v1247 = vpop.f32.mrb[0].mxu0
        %v1248 = vadd.f32 %v1205, %v1247
        %v1249 = vpop.f32.mrb[0].mxu0
        %v1250 = vadd.f32 %v1207, %v1249
        %v1251 = vpop.f32.mrb[0].mxu0
        %v1252 = vadd.f32 %v1209, %v1251
        %v1253 = vpop.f32.mrb[0].mxu0
        %v1254 = vadd.f32 %v1211, %v1253
        %1255 = vdwg.mxu0
        %v1256 = vmax.f32 %v1162, 0.0
        %v1257 = vmax.f32 %v1164, 0.0
        %v1258 = vmax.f32 %v1248, 0.0
        %v1259 = vmax.f32 %v1250, 0.0
        %v1260 = vmax.f32 %v1166, 0.0
        %v1261 = vmax.f32 %v1168, 0.0
        %v1262 = vmax.f32 %v1252, 0.0
        %v1263 = vmax.f32 %v1254, 0.0
        %v1272 = vrot.slane %v1256, 1
        %v1273 = vrot.slane %v1260, 1
        %v1274 = vsel %vm477, %v1272, %v1273
        %v1275 = vrot.slane %v1257, 1
        %v1276 = vrot.slane %v1261, 1
        %v1277 = vsel %vm477, %v1275, %v1276
        %v1278 = vrot.slane %v1258, 1
        %v1279 = vrot.slane %v1262, 1
        %v1280 = vsel %vm477, %v1278, %v1279
        %v1281 = vrot.slane %v1259, 1
        %v1282 = vrot.slane %v1263, 1
        %v1283 = vsel %vm477, %v1281, %v1282
        %vm1292 = vcmask 1045504
        %v1293 = vrot.slane %v1256, 2
        %v1294 = vrot.slane %v1260, 2
        %v1295 = vsel %vm1292, %v1293, %v1294
        %v1296 = vrot.slane %v1257, 2
        %v1297 = vrot.slane %v1261, 2
        %v1298 = vsel %vm1292, %v1296, %v1297
        %v1299 = vrot.slane %v1258, 2
        %v1300 = vrot.slane %v1262, 2
        %v1301 = vsel %vm1292, %v1299, %v1300
        %v1302 = vrot.slane %v1259, 2
        %v1303 = vrot.slane %v1263, 2
        %v1304 = vsel %vm1292, %v1302, %v1303
        %v1313 = vpack.c.bf16 %v1260, %v1256
        %v1314 = vpack.c.bf16 %v1261, %v1257
        %v1315 = vpack.c.bf16 %v1262, %v1258
        %v1316 = vpack.c.bf16 %v1263, %v1259
        %v1317 = vpack.c.bf16 %v1273, %v1274
        %v1318 = vpack.c.bf16 %v1276, %v1277
        %v1319 = vpack.c.bf16 %v1279, %v1280
        %v1320 = vpack.c.bf16 %v1282, %v1283
        %v1321 = vpack.c.bf16 %v1294, %v1295
        %v1322 = vpack.c.bf16 %v1297, %v1298
        %v1323 = vpack.c.bf16 %v1300, %v1301
        %v1324 = vpack.c.bf16 %v1303, %v1304
        %v1325 = vld [vmem:[%s3] sm:$0xff]
        %v1326 = vld [vmem:[%s3 + $0x8] sm:$0xff]
        %v1327 = vld [vmem:[%s3 + $0x10] sm:$0xff]
        %v1328 = vld [vmem:[%s3 + $0x18] sm:$0xff]
        %v1329 = vld [vmem:[%s3 + $0x20] sm:$0xff]
        %v1330 = vld [vmem:[%s3 + $0x28] sm:$0xff]
        %v1331 = vld [vmem:[%s3 + $0x30] sm:$0xff]
        %v1332 = vld [vmem:[%s3 + $0x38] sm:$0xff]
        %v1333 = vld [vmem:[%s3 + $0x40] sm:$0xff]
        %v1334 = vld [vmem:[%s3 + $0x48] sm:$0xff]
        %v1335 = vld [vmem:[%s3 + $0x50] sm:$0xff]
        %v1336 = vld [vmem:[%s3 + $0x58] sm:$0xff]
        %v1337 = vld [vmem:[%s3 + $0x60] sm:$0xff]
        %v1338 = vld [vmem:[%s3 + $0x68] sm:$0xff]
        %v1339 = vld [vmem:[%s3 + $0x70] sm:$0xff]
        %v1340 = vld [vmem:[%s3 + $0x78] sm:$0xff]
        %v1341 = vld [vmem:[%s3 + $0x80] sm:$0xff]
        %v1342 = vld [vmem:[%s3 + $0x88] sm:$0xff]
        %v1343 = vld [vmem:[%s3 + $0x90] sm:$0xff]
        %v1344 = vld [vmem:[%s3 + $0x98] sm:$0xff]
        %v1345 = vld [vmem:[%s3 + $0xa0] sm:$0xff]
        %v1346 = vld [vmem:[%s3 + $0xa8] sm:$0xff]
        %v1347 = vld [vmem:[%s3 + $0xb0] sm:$0xff]
        %v1348 = vld [vmem:[%s3 + $0xb8] sm:$0xff]
        %v1349 = vld [vmem:[%s3 + $0xc0] sm:$0xff]
        %v1350 = vld [vmem:[%s3 + $0xc8] sm:$0xff]
        %v1351 = vld [vmem:[%s3 + $0xd0] sm:$0xff]
        %v1352 = vld [vmem:[%s3 + $0xd8] sm:$0xff]
        %v1353 = vld [vmem:[%s3 + $0xe0] sm:$0xff]
        %v1354 = vld [vmem:[%s3 + $0xe8] sm:$0xff]
        %v1355 = vld [vmem:[%s3 + $0xf0] sm:$0xff]
        %v1356 = vld [vmem:[%s3 + $0xf8] sm:$0xff]
        %v1357 = vld [vmem:[%s3 + $0x100] sm:$0xff]
        %v1358 = vld [vmem:[%s3 + $0x108] sm:$0xff]
        %v1359 = vld [vmem:[%s3 + $0x110] sm:$0xff]
        %v1360 = vld [vmem:[%s3 + $0x118] sm:$0xff]
        %v1361 = vld [vmem:[%s3 + $0x120] sm:$0xff]
        %v1362 = vld [vmem:[%s3 + $0x128] sm:$0xff]
        %v1363 = vld [vmem:[%s3 + $0x130] sm:$0xff]
        %v1364 = vld [vmem:[%s3 + $0x138] sm:$0xff]
        %v1365 = vld [vmem:[%s3 + $0x140] sm:$0xff]
        %v1366 = vld [vmem:[%s3 + $0x148] sm:$0xff]
        %v1367 = vld [vmem:[%s3 + $0x150] sm:$0xff]
        %v1368 = vld [vmem:[%s3 + $0x158] sm:$0xff]
        %v1369 = vld [vmem:[%s3 + $0x160] sm:$0xff]
        %v1370 = vld [vmem:[%s3 + $0x168] sm:$0xff]
        %v1371 = vld [vmem:[%s3 + $0x170] sm:$0xff]
        %v1372 = vld [vmem:[%s3 + $0x178] sm:$0xff]
        %v1373 = vld [vmem:[%s3 + $0x180] sm:$0xff]
        %v1374 = vld [vmem:[%s3 + $0x188] sm:$0xff]
        %v1375 = vld [vmem:[%s3 + $0x190] sm:$0xff]
        %v1376 = vld [vmem:[%s3 + $0x198] sm:$0xff]
        %v1377 = vld [vmem:[%s3 + $0x1a0] sm:$0xff]
        %v1378 = vld [vmem:[%s3 + $0x1a8] sm:$0xff]
        %v1379 = vld [vmem:[%s3 + $0x1b0] sm:$0xff]
        %v1380 = vld [vmem:[%s3 + $0x1b8] sm:$0xff]
        %v1381 = vld [vmem:[%s3 + $0x1c0] sm:$0xff]
        %v1382 = vld [vmem:[%s3 + $0x1c8] sm:$0xff]
        %v1383 = vld [vmem:[%s3 + $0x1d0] sm:$0xff]
        %v1384 = vld [vmem:[%s3 + $0x1d8] sm:$0xff]
        %v1385 = vld [vmem:[%s3 + $0x1e0] sm:$0xff]
        %v1386 = vld [vmem:[%s3 + $0x1e8] sm:$0xff]
        %v1387 = vld [vmem:[%s3 + $0x1f0] sm:$0xff]
        %v1388 = vld [vmem:[%s3 + $0x1f8] sm:$0xff]
        %v1389 = vld [vmem:[%s3 + $0x200] sm:$0xff]
        %v1390 = vld [vmem:[%s3 + $0x208] sm:$0xff]
        %v1391 = vld [vmem:[%s3 + $0x210] sm:$0xff]
        %v1392 = vld [vmem:[%s3 + $0x218] sm:$0xff]
        %v1393 = vld [vmem:[%s3 + $0x220] sm:$0xff]
        %v1394 = vld [vmem:[%s3 + $0x228] sm:$0xff]
        %v1395 = vld [vmem:[%s3 + $0x230] sm:$0xff]
        %v1396 = vld [vmem:[%s3 + $0x238] sm:$0xff]
        %v1397 = vld [vmem:[%s3 + $0x240] sm:$0xff]
        %v1398 = vld [vmem:[%s3 + $0x248] sm:$0xff]
        %v1399 = vld [vmem:[%s3 + $0x250] sm:$0xff]
        %v1400 = vld [vmem:[%s3 + $0x258] sm:$0xff]
        %v1401 = vld [vmem:[%s3 + $0x260] sm:$0xff]
        %v1402 = vld [vmem:[%s3 + $0x268] sm:$0xff]
        %v1403 = vld [vmem:[%s3 + $0x270] sm:$0xff]
        %v1404 = vld [vmem:[%s3 + $0x278] sm:$0xff]
        %v1405 = vld [vmem:[%s3 + $0x280] sm:$0xff]
        %v1406 = vld [vmem:[%s3 + $0x288] sm:$0xff]
        %v1407 = vld [vmem:[%s3 + $0x290] sm:$0xff]
        %v1408 = vld [vmem:[%s3 + $0x298] sm:$0xff]
        %v1409 = vld [vmem:[%s3 + $0x2a0] sm:$0xff]
        %v1410 = vld [vmem:[%s3 + $0x2a8] sm:$0xff]
        %v1411 = vld [vmem:[%s3 + $0x2b0] sm:$0xff]
        %v1412 = vld [vmem:[%s3 + $0x2b8] sm:$0xff]
        %v1413 = vld [vmem:[%s3 + $0x2c0] sm:$0xff]
        %v1414 = vld [vmem:[%s3 + $0x2c8] sm:$0xff]
        %v1415 = vld [vmem:[%s3 + $0x2d0] sm:$0xff]
        %v1416 = vld [vmem:[%s3 + $0x2d8] sm:$0xff]
        %v1417 = vld [vmem:[%s3 + $0x2e0] sm:$0xff]
        %v1418 = vld [vmem:[%s3 + $0x2e8] sm:$0xff]
        %v1419 = vld [vmem:[%s3 + $0x2f0] sm:$0xff]
        %v1420 = vld [vmem:[%s3 + $0x2f8] sm:$0xff]
        %v1421 = vld [vmem:[%s3 + $0x300] sm:$0xff]
        %v1422 = vld [vmem:[%s3 + $0x308] sm:$0xff]
        %v1423 = vld [vmem:[%s3 + $0x310] sm:$0xff]
        %v1424 = vld [vmem:[%s3 + $0x318] sm:$0xff]
        %v1425 = vld [vmem:[%s3 + $0x320] sm:$0xff]
        %v1426 = vld [vmem:[%s3 + $0x328] sm:$0xff]
        %v1427 = vld [vmem:[%s3 + $0x330] sm:$0xff]
        %v1428 = vld [vmem:[%s3 + $0x338] sm:$0xff]
        %v1429 = vld [vmem:[%s3 + $0x340] sm:$0xff]
        %v1430 = vld [vmem:[%s3 + $0x348] sm:$0xff]
        %v1431 = vld [vmem:[%s3 + $0x350] sm:$0xff]
        %v1432 = vld [vmem:[%s3 + $0x358] sm:$0xff]
        %v1433 = vld [vmem:[%s3 + $0x360] sm:$0xff]
        %v1434 = vld [vmem:[%s3 + $0x368] sm:$0xff]
        %v1435 = vld [vmem:[%s3 + $0x370] sm:$0xff]
        %v1436 = vld [vmem:[%s3 + $0x378] sm:$0xff]
        %v1437 = vld [vmem:[%s3 + $0x380] sm:$0xff]
        %v1438 = vld [vmem:[%s3 + $0x388] sm:$0xff]
        %v1439 = vld [vmem:[%s3 + $0x390] sm:$0xff]
        %v1440 = vld [vmem:[%s3 + $0x398] sm:$0xff]
        %v1441 = vld [vmem:[%s3 + $0x3a0] sm:$0xff]
        %v1442 = vld [vmem:[%s3 + $0x3a8] sm:$0xff]
        %v1443 = vld [vmem:[%s3 + $0x3b0] sm:$0xff]
        %v1444 = vld [vmem:[%s3 + $0x3b8] sm:$0xff]
        %v1445 = vld [vmem:[%s3 + $0x3c0] sm:$0xff]
        %v1446 = vld [vmem:[%s3 + $0x3c8] sm:$0xff]
        %v1447 = vld [vmem:[%s3 + $0x3d0] sm:$0xff]
        %v1448 = vld [vmem:[%s3 + $0x3d8] sm:$0xff]
        %v1449 = vld [vmem:[%s3 + $0x3e0] sm:$0xff]
        %v1450 = vld [vmem:[%s3 + $0x3e8] sm:$0xff]
        %v1451 = vld [vmem:[%s3 + $0x3f0] sm:$0xff]
        %v1452 = vld [vmem:[%s3 + $0x3f8] sm:$0xff]
        %v1453 = vld [vmem:[%s3 + $0x400] sm:$0xff]
        %v1454 = vld [vmem:[%s3 + $0x408] sm:$0xff]
        %v1455 = vld [vmem:[%s3 + $0x410] sm:$0xff]
        %v1456 = vld [vmem:[%s3 + $0x418] sm:$0xff]
        %v1457 = vld [vmem:[%s3 + $0x420] sm:$0xff]
        %v1458 = vld [vmem:[%s3 + $0x428] sm:$0xff]
        %v1459 = vld [vmem:[%s3 + $0x430] sm:$0xff]
        %v1460 = vld [vmem:[%s3 + $0x438] sm:$0xff]
        %v1461 = vld [vmem:[%s3 + $0x440] sm:$0xff]
        %v1462 = vld [vmem:[%s3 + $0x448] sm:$0xff]
        %v1463 = vld [vmem:[%s3 + $0x450] sm:$0xff]
        %v1464 = vld [vmem:[%s3 + $0x458] sm:$0xff]
        %v1465 = vld [vmem:[%s3 + $0x460] sm:$0xff]
        %v1466 = vld [vmem:[%s3 + $0x468] sm:$0xff]
        %v1467 = vld [vmem:[%s3 + $0x470] sm:$0xff]
        %v1468 = vld [vmem:[%s3 + $0x478] sm:$0xff]
        %v1469 = vld [vmem:[%s3 + $0x480] sm:$0xff]
        %v1470 = vld [vmem:[%s3 + $0x488] sm:$0xff]
        %v1471 = vld [vmem:[%s3 + $0x490] sm:$0xff]
        %v1472 = vld [vmem:[%s3 + $0x498] sm:$0xff]
        %v1473 = vld [vmem:[%s3 + $0x4a0] sm:$0xff]
        %v1474 = vld [vmem:[%s3 + $0x4a8] sm:$0xff]
        %v1475 = vld [vmem:[%s3 + $0x4b0] sm:$0xff]
        %v1476 = vld [vmem:[%s3 + $0x4b8] sm:$0xff]
        %v1477 = vld [vmem:[%s3 + $0x4c0] sm:$0xff]
        %v1478 = vld [vmem:[%s3 + $0x4c8] sm:$0xff]
        %v1479 = vld [vmem:[%s3 + $0x4d0] sm:$0xff]
        %v1480 = vld [vmem:[%s3 + $0x4d8] sm:$0xff]
        %v1481 = vld [vmem:[%s3 + $0x4e0] sm:$0xff]
        %v1482 = vld [vmem:[%s3 + $0x4e8] sm:$0xff]
        %v1483 = vld [vmem:[%s3 + $0x4f0] sm:$0xff]
        %v1484 = vld [vmem:[%s3 + $0x4f8] sm:$0xff]
        %v1485 = vld [vmem:[%s3 + $0x500] sm:$0xff]
        %v1486 = vld [vmem:[%s3 + $0x508] sm:$0xff]
        %v1487 = vld [vmem:[%s3 + $0x510] sm:$0xff]
        %v1488 = vld [vmem:[%s3 + $0x518] sm:$0xff]
        %v1489 = vld [vmem:[%s3 + $0x520] sm:$0xff]
        %v1490 = vld [vmem:[%s3 + $0x528] sm:$0xff]
        %v1491 = vld [vmem:[%s3 + $0x530] sm:$0xff]
        %v1492 = vld [vmem:[%s3 + $0x538] sm:$0xff]
        %v1493 = vld [vmem:[%s3 + $0x540] sm:$0xff]
        %v1494 = vld [vmem:[%s3 + $0x548] sm:$0xff]
        %v1495 = vld [vmem:[%s3 + $0x550] sm:$0xff]
        %v1496 = vld [vmem:[%s3 + $0x558] sm:$0xff]
        %v1497 = vld [vmem:[%s3 + $0x560] sm:$0xff]
        %v1498 = vld [vmem:[%s3 + $0x568] sm:$0xff]
        %v1499 = vld [vmem:[%s3 + $0x570] sm:$0xff]
        %v1500 = vld [vmem:[%s3 + $0x578] sm:$0xff]
        %v1501 = vld [vmem:[%s3 + $0x580] sm:$0xff]
        %v1502 = vld [vmem:[%s3 + $0x588] sm:$0xff]
        %v1503 = vld [vmem:[%s3 + $0x590] sm:$0xff]
        %v1504 = vld [vmem:[%s3 + $0x598] sm:$0xff]
        %v1505 = vld [vmem:[%s3 + $0x5a0] sm:$0xff]
        %v1506 = vld [vmem:[%s3 + $0x5a8] sm:$0xff]
        %v1507 = vld [vmem:[%s3 + $0x5b0] sm:$0xff]
        %v1508 = vld [vmem:[%s3 + $0x5b8] sm:$0xff]
        %v1509 = vld [vmem:[%s3 + $0x5c0] sm:$0xff]
        %v1510 = vld [vmem:[%s3 + $0x5c8] sm:$0xff]
        %v1511 = vld [vmem:[%s3 + $0x5d0] sm:$0xff]
        %v1512 = vld [vmem:[%s3 + $0x5d8] sm:$0xff]
        %v1513 = vld [vmem:[%s3 + $0x5e0] sm:$0xff]
        %v1514 = vld [vmem:[%s3 + $0x5e8] sm:$0xff]
        %v1515 = vld [vmem:[%s3 + $0x5f0] sm:$0xff]
        %v1516 = vld [vmem:[%s3 + $0x5f8] sm:$0xff]
        %v1517 = vld [vmem:[%s3 + $0x600] sm:$0xff]
        %v1518 = vld [vmem:[%s3 + $0x608] sm:$0xff]
        %v1519 = vld [vmem:[%s3 + $0x610] sm:$0xff]
        %v1520 = vld [vmem:[%s3 + $0x618] sm:$0xff]
        %v1521 = vld [vmem:[%s3 + $0x620] sm:$0xff]
        %v1522 = vld [vmem:[%s3 + $0x628] sm:$0xff]
        %v1523 = vld [vmem:[%s3 + $0x630] sm:$0xff]
        %v1524 = vld [vmem:[%s3 + $0x638] sm:$0xff]
        %v1525 = vld [vmem:[%s3 + $0x640] sm:$0xff]
        %v1526 = vld [vmem:[%s3 + $0x648] sm:$0xff]
        %v1527 = vld [vmem:[%s3 + $0x650] sm:$0xff]
        %v1528 = vld [vmem:[%s3 + $0x658] sm:$0xff]
        %v1529 = vld [vmem:[%s3 + $0x660] sm:$0xff]
        %v1530 = vld [vmem:[%s3 + $0x668] sm:$0xff]
        %v1531 = vld [vmem:[%s3 + $0x670] sm:$0xff]
        %v1532 = vld [vmem:[%s3 + $0x678] sm:$0xff]
        %v1533 = vld [vmem:[%s3 + $0x680] sm:$0xff]
        %v1534 = vld [vmem:[%s3 + $0x688] sm:$0xff]
        %v1535 = vld [vmem:[%s3 + $0x690] sm:$0xff]
        %v1536 = vld [vmem:[%s3 + $0x698] sm:$0xff]
        %v1537 = vld [vmem:[%s3 + $0x6a0] sm:$0xff]
        %v1538 = vld [vmem:[%s3 + $0x6a8] sm:$0xff]
        %v1539 = vld [vmem:[%s3 + $0x6b0] sm:$0xff]
        %v1540 = vld [vmem:[%s3 + $0x6b8] sm:$0xff]
        %v1541 = vld [vmem:[%s3 + $0x6c0] sm:$0xff]
        %v1542 = vld [vmem:[%s3 + $0x6c8] sm:$0xff]
        %v1543 = vld [vmem:[%s3 + $0x6d0] sm:$0xff]
        %v1544 = vld [vmem:[%s3 + $0x6d8] sm:$0xff]
        %v1545 = vld [vmem:[%s3 + $0x6e0] sm:$0xff]
        %v1546 = vld [vmem:[%s3 + $0x6e8] sm:$0xff]
        %v1547 = vld [vmem:[%s3 + $0x6f0] sm:$0xff]
        %v1548 = vld [vmem:[%s3 + $0x6f8] sm:$0xff]
        %v1549 = vld [vmem:[%s3 + $0x700] sm:$0xff]
        %v1550 = vld [vmem:[%s3 + $0x708] sm:$0xff]
        %v1551 = vld [vmem:[%s3 + $0x710] sm:$0xff]
        %v1552 = vld [vmem:[%s3 + $0x718] sm:$0xff]
        %v1553 = vld [vmem:[%s3 + $0x720] sm:$0xff]
        %v1554 = vld [vmem:[%s3 + $0x728] sm:$0xff]
        %v1555 = vld [vmem:[%s3 + $0x730] sm:$0xff]
        %v1556 = vld [vmem:[%s3 + $0x738] sm:$0xff]
        %v1557 = vld [vmem:[%s3 + $0x740] sm:$0xff]
        %v1558 = vld [vmem:[%s3 + $0x748] sm:$0xff]
        %v1559 = vld [vmem:[%s3 + $0x750] sm:$0xff]
        %v1560 = vld [vmem:[%s3 + $0x758] sm:$0xff]
        %v1561 = vld [vmem:[%s3 + $0x760] sm:$0xff]
        %v1562 = vld [vmem:[%s3 + $0x768] sm:$0xff]
        %v1563 = vld [vmem:[%s3 + $0x770] sm:$0xff]
        %v1564 = vld [vmem:[%s3 + $0x778] sm:$0xff]
        %v1565 = vld [vmem:[%s3 + $0x780] sm:$0xff]
        %v1566 = vld [vmem:[%s3 + $0x788] sm:$0xff]
        %v1567 = vld [vmem:[%s3 + $0x790] sm:$0xff]
        %v1568 = vld [vmem:[%s3 + $0x798] sm:$0xff]
        %v1569 = vld [vmem:[%s3 + $0x7a0] sm:$0xff]
        %v1570 = vld [vmem:[%s3 + $0x7a8] sm:$0xff]
        %v1571 = vld [vmem:[%s3 + $0x7b0] sm:$0xff]
        %v1572 = vld [vmem:[%s3 + $0x7b8] sm:$0xff]
        %v1573 = vld [vmem:[%s3 + $0x7c0] sm:$0xff]
        %v1574 = vld [vmem:[%s3 + $0x7c8] sm:$0xff]
        %v1575 = vld [vmem:[%s3 + $0x7d0] sm:$0xff]
        %v1576 = vld [vmem:[%s3 + $0x7d8] sm:$0xff]
        %v1577 = vld [vmem:[%s3 + $0x7e0] sm:$0xff]
        %v1578 = vld [vmem:[%s3 + $0x7e8] sm:$0xff]
        %v1579 = vld [vmem:[%s3 + $0x7f0] sm:$0xff]
        %v1580 = vld [vmem:[%s3 + $0x7f8] sm:$0xff]
        %v1581 = vld [vmem:[%s3 + $0x800] sm:$0xff]
        %v1582 = vld [vmem:[%s3 + $0x808] sm:$0xff]
        %v1583 = vld [vmem:[%s3 + $0x810] sm:$0xff]
        %v1584 = vld [vmem:[%s3 + $0x818] sm:$0xff]
        %v1585 = vld [vmem:[%s3 + $0x820] sm:$0xff]
        %v1586 = vld [vmem:[%s3 + $0x828] sm:$0xff]
        %v1587 = vld [vmem:[%s3 + $0x830] sm:$0xff]
        %v1588 = vld [vmem:[%s3 + $0x838] sm:$0xff]
        %v1589 = vld [vmem:[%s3 + $0x840] sm:$0xff]
        %v1590 = vld [vmem:[%s3 + $0x848] sm:$0xff]
        %v1591 = vld [vmem:[%s3 + $0x850] sm:$0xff]
        %v1592 = vld [vmem:[%s3 + $0x858] sm:$0xff]
        %v1593 = vld [vmem:[%s3 + $0x860] sm:$0xff]
        %v1594 = vld [vmem:[%s3 + $0x868] sm:$0xff]
        %v1595 = vld [vmem:[%s3 + $0x870] sm:$0xff]
        %v1596 = vld [vmem:[%s3 + $0x878] sm:$0xff]
        %v1597 = vld [vmem:[%s3 + $0x880] sm:$0xff]
        %v1598 = vld [vmem:[%s3 + $0x888] sm:$0xff]
        %v1599 = vld [vmem:[%s3 + $0x890] sm:$0xff]
        %v1600 = vld [vmem:[%s3 + $0x898] sm:$0xff]
        %v1601 = vld [vmem:[%s3 + $0x8a0] sm:$0xff]
        %v1602 = vld [vmem:[%s3 + $0x8a8] sm:$0xff]
        %v1603 = vld [vmem:[%s3 + $0x8b0] sm:$0xff]
        %v1604 = vld [vmem:[%s3 + $0x8b8] sm:$0xff]
        %v1605 = vld [vmem:[%s3 + $0x8c0] sm:$0xff]
        %v1606 = vld [vmem:[%s3 + $0x8c8] sm:$0xff]
        %v1607 = vld [vmem:[%s3 + $0x8d0] sm:$0xff]
        %v1608 = vld [vmem:[%s3 + $0x8d8] sm:$0xff]
        %v1609 = vld [vmem:[%s3 + $0x8e0] sm:$0xff]
        %v1610 = vld [vmem:[%s3 + $0x8e8] sm:$0xff]
        %v1611 = vld [vmem:[%s3 + $0x8f0] sm:$0xff]
        %v1612 = vld [vmem:[%s3 + $0x8f8] sm:$0xff]
        %v1613 = vld [vmem:[%s3 + $0x900] sm:$0xff]
        %v1614 = vld [vmem:[%s3 + $0x908] sm:$0xff]
        %v1615 = vld [vmem:[%s3 + $0x910] sm:$0xff]
        %v1616 = vld [vmem:[%s3 + $0x918] sm:$0xff]
        %v1617 = vld [vmem:[%s3 + $0x920] sm:$0xff]
        %v1618 = vld [vmem:[%s3 + $0x928] sm:$0xff]
        %v1619 = vld [vmem:[%s3 + $0x930] sm:$0xff]
        %v1620 = vld [vmem:[%s3 + $0x938] sm:$0xff]
        %v1621 = vld [vmem:[%s3 + $0x940] sm:$0xff]
        %v1622 = vld [vmem:[%s3 + $0x948] sm:$0xff]
        %v1623 = vld [vmem:[%s3 + $0x950] sm:$0xff]
        %v1624 = vld [vmem:[%s3 + $0x958] sm:$0xff]
        %v1625 = vld [vmem:[%s3 + $0x960] sm:$0xff]
        %v1626 = vld [vmem:[%s3 + $0x968] sm:$0xff]
        %v1627 = vld [vmem:[%s3 + $0x970] sm:$0xff]
        %v1628 = vld [vmem:[%s3 + $0x978] sm:$0xff]
        %v1629 = vld [vmem:[%s3 + $0x980] sm:$0xff]
        %v1630 = vld [vmem:[%s3 + $0x988] sm:$0xff]
        %v1631 = vld [vmem:[%s3 + $0x990] sm:$0xff]
        %v1632 = vld [vmem:[%s3 + $0x998] sm:$0xff]
        %v1633 = vld [vmem:[%s3 + $0x9a0] sm:$0xff]
        %v1634 = vld [vmem:[%s3 + $0x9a8] sm:$0xff]
        %v1635 = vld [vmem:[%s3 + $0x9b0] sm:$0xff]
        %v1636 = vld [vmem:[%s3 + $0x9b8] sm:$0xff]
        %v1637 = vld [vmem:[%s3 + $0x9c0] sm:$0xff]
        %v1638 = vld [vmem:[%s3 + $0x9c8] sm:$0xff]
        %v1639 = vld [vmem:[%s3 + $0x9d0] sm:$0xff]
        %v1640 = vld [vmem:[%s3 + $0x9d8] sm:$0xff]
        %v1641 = vld [vmem:[%s3 + $0x9e0] sm:$0xff]
        %v1642 = vld [vmem:[%s3 + $0x9e8] sm:$0xff]
        %v1643 = vld [vmem:[%s3 + $0x9f0] sm:$0xff]
        %v1644 = vld [vmem:[%s3 + $0x9f8] sm:$0xff]
        %v1645 = vld [vmem:[%s3 + $0xa00] sm:$0xff]
        %v1646 = vld [vmem:[%s3 + $0xa08] sm:$0xff]
        %v1647 = vld [vmem:[%s3 + $0xa10] sm:$0xff]
        %v1648 = vld [vmem:[%s3 + $0xa18] sm:$0xff]
        %v1649 = vld [vmem:[%s3 + $0xa20] sm:$0xff]
        %v1650 = vld [vmem:[%s3 + $0xa28] sm:$0xff]
        %v1651 = vld [vmem:[%s3 + $0xa30] sm:$0xff]
        %v1652 = vld [vmem:[%s3 + $0xa38] sm:$0xff]
        %v1653 = vld [vmem:[%s3 + $0xa40] sm:$0xff]
        %v1654 = vld [vmem:[%s3 + $0xa48] sm:$0xff]
        %v1655 = vld [vmem:[%s3 + $0xa50] sm:$0xff]
        %v1656 = vld [vmem:[%s3 + $0xa58] sm:$0xff]
        %v1657 = vld [vmem:[%s3 + $0xa60] sm:$0xff]
        %v1658 = vld [vmem:[%s3 + $0xa68] sm:$0xff]
        %v1659 = vld [vmem:[%s3 + $0xa70] sm:$0xff]
        %v1660 = vld [vmem:[%s3 + $0xa78] sm:$0xff]
        %v1661 = vld [vmem:[%s3 + $0xa80] sm:$0xff]
        %v1662 = vld [vmem:[%s3 + $0xa88] sm:$0xff]
        %v1663 = vld [vmem:[%s3 + $0xa90] sm:$0xff]
        %v1664 = vld [vmem:[%s3 + $0xa98] sm:$0xff]
        %v1665 = vld [vmem:[%s3 + $0xaa0] sm:$0xff]
        %v1666 = vld [vmem:[%s3 + $0xaa8] sm:$0xff]
        %v1667 = vld [vmem:[%s3 + $0xab0] sm:$0xff]
        %v1668 = vld [vmem:[%s3 + $0xab8] sm:$0xff]
        %v1669 = vld [vmem:[%s3 + $0xac0] sm:$0xff]
        %v1670 = vld [vmem:[%s3 + $0xac8] sm:$0xff]
        %v1671 = vld [vmem:[%s3 + $0xad0] sm:$0xff]
        %v1672 = vld [vmem:[%s3 + $0xad8] sm:$0xff]
        %v1673 = vld [vmem:[%s3 + $0xae0] sm:$0xff]
        %v1674 = vld [vmem:[%s3 + $0xae8] sm:$0xff]
        %v1675 = vld [vmem:[%s3 + $0xaf0] sm:$0xff]
        %v1676 = vld [vmem:[%s3 + $0xaf8] sm:$0xff]
        %v1677 = vld [vmem:[%s3 + $0xb00] sm:$0xff]
        %v1678 = vld [vmem:[%s3 + $0xb08] sm:$0xff]
        %v1679 = vld [vmem:[%s3 + $0xb10] sm:$0xff]
        %v1680 = vld [vmem:[%s3 + $0xb18] sm:$0xff]
        %v1681 = vld [vmem:[%s3 + $0xb20] sm:$0xff]
        %v1682 = vld [vmem:[%s3 + $0xb28] sm:$0xff]
        %v1683 = vld [vmem:[%s3 + $0xb30] sm:$0xff]
        %v1684 = vld [vmem:[%s3 + $0xb38] sm:$0xff]
        %v1685 = vld [vmem:[%s3 + $0xb40] sm:$0xff]
        %v1686 = vld [vmem:[%s3 + $0xb48] sm:$0xff]
        %v1687 = vld [vmem:[%s3 + $0xb50] sm:$0xff]
        %v1688 = vld [vmem:[%s3 + $0xb58] sm:$0xff]
        %v1689 = vld [vmem:[%s3 + $0xb60] sm:$0xff]
        %v1690 = vld [vmem:[%s3 + $0xb68] sm:$0xff]
        %v1691 = vld [vmem:[%s3 + $0xb70] sm:$0xff]
        %v1692 = vld [vmem:[%s3 + $0xb78] sm:$0xff]
        %v1693 = vld [vmem:[%s3 + $0xb80] sm:$0xff]
        %v1694 = vld [vmem:[%s3 + $0xb88] sm:$0xff]
        %v1695 = vld [vmem:[%s3 + $0xb90] sm:$0xff]
        %v1696 = vld [vmem:[%s3 + $0xb98] sm:$0xff]
        %v1697 = vld [vmem:[%s3 + $0xba0] sm:$0xff]
        %v1698 = vld [vmem:[%s3 + $0xba8] sm:$0xff]
        %v1699 = vld [vmem:[%s3 + $0xbb0] sm:$0xff]
        %v1700 = vld [vmem:[%s3 + $0xbb8] sm:$0xff]
        %v1701 = vld [vmem:[%s3 + $0xbc0] sm:$0xff]
        %v1702 = vld [vmem:[%s3 + $0xbc8] sm:$0xff]
        %v1703 = vld [vmem:[%s3 + $0xbd0] sm:$0xff]
        %v1704 = vld [vmem:[%s3 + $0xbd8] sm:$0xff]
        %v1705 = vld [vmem:[%s3 + $0xbe0] sm:$0xff]
        %v1706 = vld [vmem:[%s3 + $0xbe8] sm:$0xff]
        %v1707 = vld [vmem:[%s3 + $0xbf0] sm:$0xff]
        %v1708 = vld [vmem:[%s3 + $0xbf8] sm:$0xff]
        %v1709 = vld [vmem:[%s4] sm:$0xf]
        %v1711 = vlaneseq
        %v1712 = vshrl.u32 %v1711, 7
        %v1713 = vsub.s32 0, %v1712
        %v1714 = vrot.slane %v1709, %v1713
        %v1715 = vlaneseq
        %v1716 = vshrl.u32 %v1715, 7
        %v1717 = vsub.s32 1, %v1716
        %v1718 = vrot.slane %v1709, %v1717
        %v1719 = vlaneseq
        %v1720 = vshrl.u32 %v1719, 7
        %v1721 = vsub.s32 2, %v1720
        %v1722 = vrot.slane %v1709, %v1721
        %v1723 = vlaneseq
        %v1724 = vshrl.u32 %v1723, 7
        %v1725 = vsub.s32 3, %v1724
        %v1726 = vrot.slane %v1709, %v1725
        %v2115 = vunpack.c.l.b16 %v1325
        %v2116 = vunpack.c.h.b16 %v1325
        %v2117 = vunpack.c.l.b16 %v1326
        %v2118 = vunpack.c.h.b16 %v1326
        %v2119 = vunpack.c.l.b16 %v1327
        %v2120 = vunpack.c.h.b16 %v1327
        %v2121 = vunpack.c.l.b16 %v1328
        %v2122 = vunpack.c.h.b16 %v1328
        %v2123 = vunpack.c.l.b16 %v1329
        %v2124 = vunpack.c.h.b16 %v1329
        %v2125 = vunpack.c.l.b16 %v1330
        %v2126 = vunpack.c.h.b16 %v1330
        %v2127 = vunpack.c.l.b16 %v1331
        %v2128 = vunpack.c.h.b16 %v1331
        %v2129 = vunpack.c.l.b16 %v1332
        %v2130 = vunpack.c.h.b16 %v1332
        %v2131 = vunpack.c.l.b16 %v1333
        %v2132 = vunpack.c.h.b16 %v1333
        %v2133 = vunpack.c.l.b16 %v1334
        %v2134 = vunpack.c.h.b16 %v1334
        %v2135 = vunpack.c.l.b16 %v1335
        %v2136 = vunpack.c.h.b16 %v1335
        %v2137 = vunpack.c.l.b16 %v1336
        %v2138 = vunpack.c.h.b16 %v1336
        %v2139 = vunpack.c.l.b16 %v1337
        %v2140 = vunpack.c.h.b16 %v1337
        %v2141 = vunpack.c.l.b16 %v1338
        %v2142 = vunpack.c.h.b16 %v1338
        %v2143 = vunpack.c.l.b16 %v1339
        %v2144 = vunpack.c.h.b16 %v1339
        %v2145 = vunpack.c.l.b16 %v1340
        %v2146 = vunpack.c.h.b16 %v1340
        %v2147 = vunpack.c.l.b16 %v1341
        %v2148 = vunpack.c.h.b16 %v1341
        %v2149 = vunpack.c.l.b16 %v1342
        %v2150 = vunpack.c.h.b16 %v1342
        %v2151 = vunpack.c.l.b16 %v1343
        %v2152 = vunpack.c.h.b16 %v1343
        %v2153 = vunpack.c.l.b16 %v1344
        %v2154 = vunpack.c.h.b16 %v1344
        %v2155 = vunpack.c.l.b16 %v1345
        %v2156 = vunpack.c.h.b16 %v1345
        %v2157 = vunpack.c.l.b16 %v1346
        %v2158 = vunpack.c.h.b16 %v1346
        %v2159 = vunpack.c.l.b16 %v1347
        %v2160 = vunpack.c.h.b16 %v1347
        %v2161 = vunpack.c.l.b16 %v1348
        %v2162 = vunpack.c.h.b16 %v1348
        %v2163 = vunpack.c.l.b16 %v1349
        %v2164 = vunpack.c.h.b16 %v1349
        %v2165 = vunpack.c.l.b16 %v1350
        %v2166 = vunpack.c.h.b16 %v1350
        %v2167 = vunpack.c.l.b16 %v1351
        %v2168 = vunpack.c.h.b16 %v1351
        %v2169 = vunpack.c.l.b16 %v1352
        %v2170 = vunpack.c.h.b16 %v1352
        %v2171 = vunpack.c.l.b16 %v1353
        %v2172 = vunpack.c.h.b16 %v1353
        %v2173 = vunpack.c.l.b16 %v1354
        %v2174 = vunpack.c.h.b16 %v1354
        %v2175 = vunpack.c.l.b16 %v1355
        %v2176 = vunpack.c.h.b16 %v1355
        %v2177 = vunpack.c.l.b16 %v1356
        %v2178 = vunpack.c.h.b16 %v1356
        %v2179 = vunpack.c.l.b16 %v1357
        %v2180 = vunpack.c.h.b16 %v1357
        %v2181 = vunpack.c.l.b16 %v1358
        %v2182 = vunpack.c.h.b16 %v1358
        %v2183 = vunpack.c.l.b16 %v1359
        %v2184 = vunpack.c.h.b16 %v1359
        %v2185 = vunpack.c.l.b16 %v1360
        %v2186 = vunpack.c.h.b16 %v1360
        %v2187 = vunpack.c.l.b16 %v1361
        %v2188 = vunpack.c.h.b16 %v1361
        %v2189 = vunpack.c.l.b16 %v1362
        %v2190 = vunpack.c.h.b16 %v1362
        %v2191 = vunpack.c.l.b16 %v1363
        %v2192 = vunpack.c.h.b16 %v1363
        %v2193 = vunpack.c.l.b16 %v1364
        %v2194 = vunpack.c.h.b16 %v1364
        %v2195 = vunpack.c.l.b16 %v1365
        %v2196 = vunpack.c.h.b16 %v1365
        %v2197 = vunpack.c.l.b16 %v1366
        %v2198 = vunpack.c.h.b16 %v1366
        %v2199 = vunpack.c.l.b16 %v1367
        %v2200 = vunpack.c.h.b16 %v1367
        %v2201 = vunpack.c.l.b16 %v1368
        %v2202 = vunpack.c.h.b16 %v1368
        %v2203 = vunpack.c.l.b16 %v1369
        %v2204 = vunpack.c.h.b16 %v1369
        %v2205 = vunpack.c.l.b16 %v1370
        %v2206 = vunpack.c.h.b16 %v1370
        %v2207 = vunpack.c.l.b16 %v1371
        %v2208 = vunpack.c.h.b16 %v1371
        %v2209 = vunpack.c.l.b16 %v1372
        %v2210 = vunpack.c.h.b16 %v1372
        %v2211 = vunpack.c.l.b16 %v1373
        %v2212 = vunpack.c.h.b16 %v1373
        %v2213 = vunpack.c.l.b16 %v1374
        %v2214 = vunpack.c.h.b16 %v1374
        %v2215 = vunpack.c.l.b16 %v1375
        %v2216 = vunpack.c.h.b16 %v1375
        %v2217 = vunpack.c.l.b16 %v1376
        %v2218 = vunpack.c.h.b16 %v1376
        %v2219 = vunpack.c.l.b16 %v1377
        %v2220 = vunpack.c.h.b16 %v1377
        %v2221 = vunpack.c.l.b16 %v1378
        %v2222 = vunpack.c.h.b16 %v1378
        %v2223 = vunpack.c.l.b16 %v1379
        %v2224 = vunpack.c.h.b16 %v1379
        %v2225 = vunpack.c.l.b16 %v1380
        %v2226 = vunpack.c.h.b16 %v1380
        %v2227 = vunpack.c.l.b16 %v1381
        %v2228 = vunpack.c.h.b16 %v1381
        %v2229 = vunpack.c.l.b16 %v1382
        %v2230 = vunpack.c.h.b16 %v1382
        %v2231 = vunpack.c.l.b16 %v1383
        %v2232 = vunpack.c.h.b16 %v1383
        %v2233 = vunpack.c.l.b16 %v1384
        %v2234 = vunpack.c.h.b16 %v1384
        %v2235 = vunpack.c.l.b16 %v1385
        %v2236 = vunpack.c.h.b16 %v1385
        %v2237 = vunpack.c.l.b16 %v1386
        %v2238 = vunpack.c.h.b16 %v1386
        %v2239 = vunpack.c.l.b16 %v1387
        %v2240 = vunpack.c.h.b16 %v1387
        %v2241 = vunpack.c.l.b16 %v1388
        %v2242 = vunpack.c.h.b16 %v1388
        %v2243 = vunpack.c.l.b16 %v1389
        %v2244 = vunpack.c.h.b16 %v1389
        %v2245 = vunpack.c.l.b16 %v1390
        %v2246 = vunpack.c.h.b16 %v1390
        %v2247 = vunpack.c.l.b16 %v1391
        %v2248 = vunpack.c.h.b16 %v1391
        %v2249 = vunpack.c.l.b16 %v1392
        %v2250 = vunpack.c.h.b16 %v1392
        %v2251 = vunpack.c.l.b16 %v1393
        %v2252 = vunpack.c.h.b16 %v1393
        %v2253 = vunpack.c.l.b16 %v1394
        %v2254 = vunpack.c.h.b16 %v1394
        %v2255 = vunpack.c.l.b16 %v1395
        %v2256 = vunpack.c.h.b16 %v1395
        %v2257 = vunpack.c.l.b16 %v1396
        %v2258 = vunpack.c.h.b16 %v1396
        %v2259 = vunpack.c.l.b16 %v1397
        %v2260 = vunpack.c.h.b16 %v1397
        %v2261 = vunpack.c.l.b16 %v1398
        %v2262 = vunpack.c.h.b16 %v1398
        %v2263 = vunpack.c.l.b16 %v1399
        %v2264 = vunpack.c.h.b16 %v1399
        %v2265 = vunpack.c.l.b16 %v1400
        %v2266 = vunpack.c.h.b16 %v1400
        %v2267 = vunpack.c.l.b16 %v1401
        %v2268 = vunpack.c.h.b16 %v1401
        %v2269 = vunpack.c.l.b16 %v1402
        %v2270 = vunpack.c.h.b16 %v1402
        %v2271 = vunpack.c.l.b16 %v1403
        %v2272 = vunpack.c.h.b16 %v1403
        %v2273 = vunpack.c.l.b16 %v1404
        %v2274 = vunpack.c.h.b16 %v1404
        %v2275 = vunpack.c.l.b16 %v1405
        %v2276 = vunpack.c.h.b16 %v1405
        %v2277 = vunpack.c.l.b16 %v1406
        %v2278 = vunpack.c.h.b16 %v1406
        %v2279 = vunpack.c.l.b16 %v1407
        %v2280 = vunpack.c.h.b16 %v1407
        %v2281 = vunpack.c.l.b16 %v1408
        %v2282 = vunpack.c.h.b16 %v1408
        %v2283 = vunpack.c.l.b16 %v1409
        %v2284 = vunpack.c.h.b16 %v1409
        %v2285 = vunpack.c.l.b16 %v1410
        %v2286 = vunpack.c.h.b16 %v1410
        %v2287 = vunpack.c.l.b16 %v1411
        %v2288 = vunpack.c.h.b16 %v1411
        %v2289 = vunpack.c.l.b16 %v1412
        %v2290 = vunpack.c.h.b16 %v1412
        %v2291 = vunpack.c.l.b16 %v1413
        %v2292 = vunpack.c.h.b16 %v1413
        %v2293 = vunpack.c.l.b16 %v1414
        %v2294 = vunpack.c.h.b16 %v1414
        %v2295 = vunpack.c.l.b16 %v1415
        %v2296 = vunpack.c.h.b16 %v1415
        %v2297 = vunpack.c.l.b16 %v1416
        %v2298 = vunpack.c.h.b16 %v1416
        %v2299 = vunpack.c.l.b16 %v1417
        %v2300 = vunpack.c.h.b16 %v1417
        %v2301 = vunpack.c.l.b16 %v1418
        %v2302 = vunpack.c.h.b16 %v1418
        %v2303 = vunpack.c.l.b16 %v1419
        %v2304 = vunpack.c.h.b16 %v1419
        %v2305 = vunpack.c.l.b16 %v1420
        %v2306 = vunpack.c.h.b16 %v1420
        %v2307 = vunpack.c.l.b16 %v1421
        %v2308 = vunpack.c.h.b16 %v1421
        %v2309 = vunpack.c.l.b16 %v1422
        %v2310 = vunpack.c.h.b16 %v1422
        %v2311 = vunpack.c.l.b16 %v1423
        %v2312 = vunpack.c.h.b16 %v1423
        %v2313 = vunpack.c.l.b16 %v1424
        %v2314 = vunpack.c.h.b16 %v1424
        %v2315 = vunpack.c.l.b16 %v1425
        %v2316 = vunpack.c.h.b16 %v1425
        %v2317 = vunpack.c.l.b16 %v1426
        %v2318 = vunpack.c.h.b16 %v1426
        %v2319 = vunpack.c.l.b16 %v1427
        %v2320 = vunpack.c.h.b16 %v1427
        %v2321 = vunpack.c.l.b16 %v1428
        %v2322 = vunpack.c.h.b16 %v1428
        %v2323 = vunpack.c.l.b16 %v1429
        %v2324 = vunpack.c.h.b16 %v1429
        %v2325 = vunpack.c.l.b16 %v1430
        %v2326 = vunpack.c.h.b16 %v1430
        %v2327 = vunpack.c.l.b16 %v1431
        %v2328 = vunpack.c.h.b16 %v1431
        %v2329 = vunpack.c.l.b16 %v1432
        %v2330 = vunpack.c.h.b16 %v1432
        %v2331 = vunpack.c.l.b16 %v1433
        %v2332 = vunpack.c.h.b16 %v1433
        %v2333 = vunpack.c.l.b16 %v1434
        %v2334 = vunpack.c.h.b16 %v1434
        %v2335 = vunpack.c.l.b16 %v1435
        %v2336 = vunpack.c.h.b16 %v1435
        %v2337 = vunpack.c.l.b16 %v1436
        %v2338 = vunpack.c.h.b16 %v1436
        %v2339 = vunpack.c.l.b16 %v1437
        %v2340 = vunpack.c.h.b16 %v1437
        %v2341 = vunpack.c.l.b16 %v1438
        %v2342 = vunpack.c.h.b16 %v1438
        %v2343 = vunpack.c.l.b16 %v1439
        %v2344 = vunpack.c.h.b16 %v1439
        %v2345 = vunpack.c.l.b16 %v1440
        %v2346 = vunpack.c.h.b16 %v1440
        %v2347 = vunpack.c.l.b16 %v1441
        %v2348 = vunpack.c.h.b16 %v1441
        %v2349 = vunpack.c.l.b16 %v1442
        %v2350 = vunpack.c.h.b16 %v1442
        %v2351 = vunpack.c.l.b16 %v1443
        %v2352 = vunpack.c.h.b16 %v1443
        %v2353 = vunpack.c.l.b16 %v1444
        %v2354 = vunpack.c.h.b16 %v1444
        %v2355 = vunpack.c.l.b16 %v1445
        %v2356 = vunpack.c.h.b16 %v1445
        %v2357 = vunpack.c.l.b16 %v1446
        %v2358 = vunpack.c.h.b16 %v1446
        %v2359 = vunpack.c.l.b16 %v1447
        %v2360 = vunpack.c.h.b16 %v1447
        %v2361 = vunpack.c.l.b16 %v1448
        %v2362 = vunpack.c.h.b16 %v1448
        %v2363 = vunpack.c.l.b16 %v1449
        %v2364 = vunpack.c.h.b16 %v1449
        %v2365 = vunpack.c.l.b16 %v1450
        %v2366 = vunpack.c.h.b16 %v1450
        %v2367 = vunpack.c.l.b16 %v1451
        %v2368 = vunpack.c.h.b16 %v1451
        %v2369 = vunpack.c.l.b16 %v1452
        %v2370 = vunpack.c.h.b16 %v1452
        %v2371 = vunpack.c.l.b16 %v1453
        %v2372 = vunpack.c.h.b16 %v1453
        %v2373 = vunpack.c.l.b16 %v1454
        %v2374 = vunpack.c.h.b16 %v1454
        %v2375 = vunpack.c.l.b16 %v1455
        %v2376 = vunpack.c.h.b16 %v1455
        %v2377 = vunpack.c.l.b16 %v1456
        %v2378 = vunpack.c.h.b16 %v1456
        %v2379 = vunpack.c.l.b16 %v1457
        %v2380 = vunpack.c.h.b16 %v1457
        %v2381 = vunpack.c.l.b16 %v1458
        %v2382 = vunpack.c.h.b16 %v1458
        %v2383 = vunpack.c.l.b16 %v1459
        %v2384 = vunpack.c.h.b16 %v1459
        %v2385 = vunpack.c.l.b16 %v1460
        %v2386 = vunpack.c.h.b16 %v1460
        %v2387 = vunpack.c.l.b16 %v1461
        %v2388 = vunpack.c.h.b16 %v1461
        %v2389 = vunpack.c.l.b16 %v1462
        %v2390 = vunpack.c.h.b16 %v1462
        %v2391 = vunpack.c.l.b16 %v1463
        %v2392 = vunpack.c.h.b16 %v1463
        %v2393 = vunpack.c.l.b16 %v1464
        %v2394 = vunpack.c.h.b16 %v1464
        %v2395 = vunpack.c.l.b16 %v1465
        %v2396 = vunpack.c.h.b16 %v1465
        %v2397 = vunpack.c.l.b16 %v1466
        %v2398 = vunpack.c.h.b16 %v1466
        %v2399 = vunpack.c.l.b16 %v1467
        %v2400 = vunpack.c.h.b16 %v1467
        %v2401 = vunpack.c.l.b16 %v1468
        %v2402 = vunpack.c.h.b16 %v1468
        %v2403 = vunpack.c.l.b16 %v1469
        %v2404 = vunpack.c.h.b16 %v1469
        %v2405 = vunpack.c.l.b16 %v1470
        %v2406 = vunpack.c.h.b16 %v1470
        %v2407 = vunpack.c.l.b16 %v1471
        %v2408 = vunpack.c.h.b16 %v1471
        %v2409 = vunpack.c.l.b16 %v1472
        %v2410 = vunpack.c.h.b16 %v1472
        %v2411 = vunpack.c.l.b16 %v1473
        %v2412 = vunpack.c.h.b16 %v1473
        %v2413 = vunpack.c.l.b16 %v1474
        %v2414 = vunpack.c.h.b16 %v1474
        %v2415 = vunpack.c.l.b16 %v1475
        %v2416 = vunpack.c.h.b16 %v1475
        %v2417 = vunpack.c.l.b16 %v1476
        %v2418 = vunpack.c.h.b16 %v1476
        %v2419 = vunpack.c.l.b16 %v1477
        %v2420 = vunpack.c.h.b16 %v1477
        %v2421 = vunpack.c.l.b16 %v1478
        %v2422 = vunpack.c.h.b16 %v1478
        %v2423 = vunpack.c.l.b16 %v1479
        %v2424 = vunpack.c.h.b16 %v1479
        %v2425 = vunpack.c.l.b16 %v1480
        %v2426 = vunpack.c.h.b16 %v1480
        %v2427 = vunpack.c.l.b16 %v1481
        %v2428 = vunpack.c.h.b16 %v1481
        %v2429 = vunpack.c.l.b16 %v1482
        %v2430 = vunpack.c.h.b16 %v1482
        %v2431 = vunpack.c.l.b16 %v1483
        %v2432 = vunpack.c.h.b16 %v1483
        %v2433 = vunpack.c.l.b16 %v1484
        %v2434 = vunpack.c.h.b16 %v1484
        %v2435 = vunpack.c.l.b16 %v1485
        %v2436 = vunpack.c.h.b16 %v1485
        %v2437 = vunpack.c.l.b16 %v1486
        %v2438 = vunpack.c.h.b16 %v1486
        %v2439 = vunpack.c.l.b16 %v1487
        %v2440 = vunpack.c.h.b16 %v1487
        %v2441 = vunpack.c.l.b16 %v1488
        %v2442 = vunpack.c.h.b16 %v1488
        %v2443 = vunpack.c.l.b16 %v1489
        %v2444 = vunpack.c.h.b16 %v1489
        %v2445 = vunpack.c.l.b16 %v1490
        %v2446 = vunpack.c.h.b16 %v1490
        %v2447 = vunpack.c.l.b16 %v1491
        %v2448 = vunpack.c.h.b16 %v1491
        %v2449 = vunpack.c.l.b16 %v1492
        %v2450 = vunpack.c.h.b16 %v1492
        %v2451 = vunpack.c.l.b16 %v1493
        %v2452 = vunpack.c.h.b16 %v1493
        %v2453 = vunpack.c.l.b16 %v1494
        %v2454 = vunpack.c.h.b16 %v1494
        %v2455 = vunpack.c.l.b16 %v1495
        %v2456 = vunpack.c.h.b16 %v1495
        %v2457 = vunpack.c.l.b16 %v1496
        %v2458 = vunpack.c.h.b16 %v1496
        %v2459 = vunpack.c.l.b16 %v1497
        %v2460 = vunpack.c.h.b16 %v1497
        %v2461 = vunpack.c.l.b16 %v1498
        %v2462 = vunpack.c.h.b16 %v1498
        %v2463 = vunpack.c.l.b16 %v1499
        %v2464 = vunpack.c.h.b16 %v1499
        %v2465 = vunpack.c.l.b16 %v1500
        %v2466 = vunpack.c.h.b16 %v1500
        %v2467 = vunpack.c.l.b16 %v1501
        %v2468 = vunpack.c.h.b16 %v1501
        %v2469 = vunpack.c.l.b16 %v1502
        %v2470 = vunpack.c.h.b16 %v1502
        %v2471 = vunpack.c.l.b16 %v1503
        %v2472 = vunpack.c.h.b16 %v1503
        %v2473 = vunpack.c.l.b16 %v1504
        %v2474 = vunpack.c.h.b16 %v1504
        %v2475 = vunpack.c.l.b16 %v1505
        %v2476 = vunpack.c.h.b16 %v1505
        %v2477 = vunpack.c.l.b16 %v1506
        %v2478 = vunpack.c.h.b16 %v1506
        %v2479 = vunpack.c.l.b16 %v1507
        %v2480 = vunpack.c.h.b16 %v1507
        %v2481 = vunpack.c.l.b16 %v1508
        %v2482 = vunpack.c.h.b16 %v1508
        %v2483 = vunpack.c.l.b16 %v1509
        %v2484 = vunpack.c.h.b16 %v1509
        %v2485 = vunpack.c.l.b16 %v1510
        %v2486 = vunpack.c.h.b16 %v1510
        %v2487 = vunpack.c.l.b16 %v1511
        %v2488 = vunpack.c.h.b16 %v1511
        %v2489 = vunpack.c.l.b16 %v1512
        %v2490 = vunpack.c.h.b16 %v1512
        %v2491 = vunpack.c.l.b16 %v1513
        %v2492 = vunpack.c.h.b16 %v1513
        %v2493 = vunpack.c.l.b16 %v1514
        %v2494 = vunpack.c.h.b16 %v1514
        %v2495 = vunpack.c.l.b16 %v1515
        %v2496 = vunpack.c.h.b16 %v1515
        %v2497 = vunpack.c.l.b16 %v1516
        %v2498 = vunpack.c.h.b16 %v1516
        %v2499 = vunpack.c.l.b16 %v1517
        %v2500 = vunpack.c.h.b16 %v1517
        %v2501 = vunpack.c.l.b16 %v1518
        %v2502 = vunpack.c.h.b16 %v1518
        %v2503 = vunpack.c.l.b16 %v1519
        %v2504 = vunpack.c.h.b16 %v1519
        %v2505 = vunpack.c.l.b16 %v1520
        %v2506 = vunpack.c.h.b16 %v1520
        %v2507 = vunpack.c.l.b16 %v1521
        %v2508 = vunpack.c.h.b16 %v1521
        %v2509 = vunpack.c.l.b16 %v1522
        %v2510 = vunpack.c.h.b16 %v1522
        %v2511 = vunpack.c.l.b16 %v1523
        %v2512 = vunpack.c.h.b16 %v1523
        %v2513 = vunpack.c.l.b16 %v1524
        %v2514 = vunpack.c.h.b16 %v1524
        %v2515 = vunpack.c.l.b16 %v1525
        %v2516 = vunpack.c.h.b16 %v1525
        %v2517 = vunpack.c.l.b16 %v1526
        %v2518 = vunpack.c.h.b16 %v1526
        %v2519 = vunpack.c.l.b16 %v1527
        %v2520 = vunpack.c.h.b16 %v1527
        %v2521 = vunpack.c.l.b16 %v1528
        %v2522 = vunpack.c.h.b16 %v1528
        %v2523 = vunpack.c.l.b16 %v1529
        %v2524 = vunpack.c.h.b16 %v1529
        %v2525 = vunpack.c.l.b16 %v1530
        %v2526 = vunpack.c.h.b16 %v1530
        %v2527 = vunpack.c.l.b16 %v1531
        %v2528 = vunpack.c.h.b16 %v1531
        %v2529 = vunpack.c.l.b16 %v1532
        %v2530 = vunpack.c.h.b16 %v1532
        %v2531 = vunpack.c.l.b16 %v1533
        %v2532 = vunpack.c.h.b16 %v1533
        %v2533 = vunpack.c.l.b16 %v1534
        %v2534 = vunpack.c.h.b16 %v1534
        %v2535 = vunpack.c.l.b16 %v1535
        %v2536 = vunpack.c.h.b16 %v1535
        %v2537 = vunpack.c.l.b16 %v1536
        %v2538 = vunpack.c.h.b16 %v1536
        %v2539 = vunpack.c.l.b16 %v1537
        %v2540 = vunpack.c.h.b16 %v1537
        %v2541 = vunpack.c.l.b16 %v1538
        %v2542 = vunpack.c.h.b16 %v1538
        %v2543 = vunpack.c.l.b16 %v1539
        %v2544 = vunpack.c.h.b16 %v1539
        %v2545 = vunpack.c.l.b16 %v1540
        %v2546 = vunpack.c.h.b16 %v1540
        %v2547 = vunpack.c.l.b16 %v1541
        %v2548 = vunpack.c.h.b16 %v1541
        %v2549 = vunpack.c.l.b16 %v1542
        %v2550 = vunpack.c.h.b16 %v1542
        %v2551 = vunpack.c.l.b16 %v1543
        %v2552 = vunpack.c.h.b16 %v1543
        %v2553 = vunpack.c.l.b16 %v1544
        %v2554 = vunpack.c.h.b16 %v1544
        %v2555 = vunpack.c.l.b16 %v1545
        %v2556 = vunpack.c.h.b16 %v1545
        %v2557 = vunpack.c.l.b16 %v1546
        %v2558 = vunpack.c.h.b16 %v1546
        %v2559 = vunpack.c.l.b16 %v1547
        %v2560 = vunpack.c.h.b16 %v1547
        %v2561 = vunpack.c.l.b16 %v1548
        %v2562 = vunpack.c.h.b16 %v1548
        %v2563 = vunpack.c.l.b16 %v1549
        %v2564 = vunpack.c.h.b16 %v1549
        %v2565 = vunpack.c.l.b16 %v1550
        %v2566 = vunpack.c.h.b16 %v1550
        %v2567 = vunpack.c.l.b16 %v1551
        %v2568 = vunpack.c.h.b16 %v1551
        %v2569 = vunpack.c.l.b16 %v1552
        %v2570 = vunpack.c.h.b16 %v1552
        %v2571 = vunpack.c.l.b16 %v1553
        %v2572 = vunpack.c.h.b16 %v1553
        %v2573 = vunpack.c.l.b16 %v1554
        %v2574 = vunpack.c.h.b16 %v1554
        %v2575 = vunpack.c.l.b16 %v1555
        %v2576 = vunpack.c.h.b16 %v1555
        %v2577 = vunpack.c.l.b16 %v1556
        %v2578 = vunpack.c.h.b16 %v1556
        %v2579 = vunpack.c.l.b16 %v1557
        %v2580 = vunpack.c.h.b16 %v1557
        %v2581 = vunpack.c.l.b16 %v1558
        %v2582 = vunpack.c.h.b16 %v1558
        %v2583 = vunpack.c.l.b16 %v1559
        %v2584 = vunpack.c.h.b16 %v1559
        %v2585 = vunpack.c.l.b16 %v1560
        %v2586 = vunpack.c.h.b16 %v1560
        %v2587 = vunpack.c.l.b16 %v1561
        %v2588 = vunpack.c.h.b16 %v1561
        %v2589 = vunpack.c.l.b16 %v1562
        %v2590 = vunpack.c.h.b16 %v1562
        %v2591 = vunpack.c.l.b16 %v1563
        %v2592 = vunpack.c.h.b16 %v1563
        %v2593 = vunpack.c.l.b16 %v1564
        %v2594 = vunpack.c.h.b16 %v1564
        %v2595 = vunpack.c.l.b16 %v1565
        %v2596 = vunpack.c.h.b16 %v1565
        %v2597 = vunpack.c.l.b16 %v1566
        %v2598 = vunpack.c.h.b16 %v1566
        %v2599 = vunpack.c.l.b16 %v1567
        %v2600 = vunpack.c.h.b16 %v1567
        %v2601 = vunpack.c.l.b16 %v1568
        %v2602 = vunpack.c.h.b16 %v1568
        %v2603 = vunpack.c.l.b16 %v1569
        %v2604 = vunpack.c.h.b16 %v1569
        %v2605 = vunpack.c.l.b16 %v1570
        %v2606 = vunpack.c.h.b16 %v1570
        %v2607 = vunpack.c.l.b16 %v1571
        %v2608 = vunpack.c.h.b16 %v1571
        %v2609 = vunpack.c.l.b16 %v1572
        %v2610 = vunpack.c.h.b16 %v1572
        %v2611 = vunpack.c.l.b16 %v1573
        %v2612 = vunpack.c.h.b16 %v1573
        %v2613 = vunpack.c.l.b16 %v1574
        %v2614 = vunpack.c.h.b16 %v1574
        %v2615 = vunpack.c.l.b16 %v1575
        %v2616 = vunpack.c.h.b16 %v1575
        %v2617 = vunpack.c.l.b16 %v1576
        %v2618 = vunpack.c.h.b16 %v1576
        %v2619 = vunpack.c.l.b16 %v1577
        %v2620 = vunpack.c.h.b16 %v1577
        %v2621 = vunpack.c.l.b16 %v1578
        %v2622 = vunpack.c.h.b16 %v1578
        %v2623 = vunpack.c.l.b16 %v1579
        %v2624 = vunpack.c.h.b16 %v1579
        %v2625 = vunpack.c.l.b16 %v1580
        %v2626 = vunpack.c.h.b16 %v1580
        %v2627 = vunpack.c.l.b16 %v1581
        %v2628 = vunpack.c.h.b16 %v1581
        %v2629 = vunpack.c.l.b16 %v1582
        %v2630 = vunpack.c.h.b16 %v1582
        %v2631 = vunpack.c.l.b16 %v1583
        %v2632 = vunpack.c.h.b16 %v1583
        %v2633 = vunpack.c.l.b16 %v1584
        %v2634 = vunpack.c.h.b16 %v1584
        %v2635 = vunpack.c.l.b16 %v1585
        %v2636 = vunpack.c.h.b16 %v1585
        %v2637 = vunpack.c.l.b16 %v1586
        %v2638 = vunpack.c.h.b16 %v1586
        %v2639 = vunpack.c.l.b16 %v1587
        %v2640 = vunpack.c.h.b16 %v1587
        %v2641 = vunpack.c.l.b16 %v1588
        %v2642 = vunpack.c.h.b16 %v1588
        %v2643 = vunpack.c.l.b16 %v1589
        %v2644 = vunpack.c.h.b16 %v1589
        %v2645 = vunpack.c.l.b16 %v1590
        %v2646 = vunpack.c.h.b16 %v1590
        %v2647 = vunpack.c.l.b16 %v1591
        %v2648 = vunpack.c.h.b16 %v1591
        %v2649 = vunpack.c.l.b16 %v1592
        %v2650 = vunpack.c.h.b16 %v1592
        %v2651 = vunpack.c.l.b16 %v1593
        %v2652 = vunpack.c.h.b16 %v1593
        %v2653 = vunpack.c.l.b16 %v1594
        %v2654 = vunpack.c.h.b16 %v1594
        %v2655 = vunpack.c.l.b16 %v1595
        %v2656 = vunpack.c.h.b16 %v1595
        %v2657 = vunpack.c.l.b16 %v1596
        %v2658 = vunpack.c.h.b16 %v1596
        %v2659 = vunpack.c.l.b16 %v1597
        %v2660 = vunpack.c.h.b16 %v1597
        %v2661 = vunpack.c.l.b16 %v1598
        %v2662 = vunpack.c.h.b16 %v1598
        %v2663 = vunpack.c.l.b16 %v1599
        %v2664 = vunpack.c.h.b16 %v1599
        %v2665 = vunpack.c.l.b16 %v1600
        %v2666 = vunpack.c.h.b16 %v1600
        %v2667 = vunpack.c.l.b16 %v1601
        %v2668 = vunpack.c.h.b16 %v1601
        %v2669 = vunpack.c.l.b16 %v1602
        %v2670 = vunpack.c.h.b16 %v1602
        %v2671 = vunpack.c.l.b16 %v1603
        %v2672 = vunpack.c.h.b16 %v1603
        %v2673 = vunpack.c.l.b16 %v1604
        %v2674 = vunpack.c.h.b16 %v1604
        %v2675 = vunpack.c.l.b16 %v1605
        %v2676 = vunpack.c.h.b16 %v1605
        %v2677 = vunpack.c.l.b16 %v1606
        %v2678 = vunpack.c.h.b16 %v1606
        %v2679 = vunpack.c.l.b16 %v1607
        %v2680 = vunpack.c.h.b16 %v1607
        %v2681 = vunpack.c.l.b16 %v1608
        %v2682 = vunpack.c.h.b16 %v1608
        %v2683 = vunpack.c.l.b16 %v1609
        %v2684 = vunpack.c.h.b16 %v1609
        %v2685 = vunpack.c.l.b16 %v1610
        %v2686 = vunpack.c.h.b16 %v1610
        %v2687 = vunpack.c.l.b16 %v1611
        %v2688 = vunpack.c.h.b16 %v1611
        %v2689 = vunpack.c.l.b16 %v1612
        %v2690 = vunpack.c.h.b16 %v1612
        %v2691 = vunpack.c.l.b16 %v1613
        %v2692 = vunpack.c.h.b16 %v1613
        %v2693 = vunpack.c.l.b16 %v1614
        %v2694 = vunpack.c.h.b16 %v1614
        %v2695 = vunpack.c.l.b16 %v1615
        %v2696 = vunpack.c.h.b16 %v1615
        %v2697 = vunpack.c.l.b16 %v1616
        %v2698 = vunpack.c.h.b16 %v1616
        %v2699 = vunpack.c.l.b16 %v1617
        %v2700 = vunpack.c.h.b16 %v1617
        %v2701 = vunpack.c.l.b16 %v1618
        %v2702 = vunpack.c.h.b16 %v1618
        %v2703 = vunpack.c.l.b16 %v1619
        %v2704 = vunpack.c.h.b16 %v1619
        %v2705 = vunpack.c.l.b16 %v1620
        %v2706 = vunpack.c.h.b16 %v1620
        %v2707 = vunpack.c.l.b16 %v1621
        %v2708 = vunpack.c.h.b16 %v1621
        %v2709 = vunpack.c.l.b16 %v1622
        %v2710 = vunpack.c.h.b16 %v1622
        %v2711 = vunpack.c.l.b16 %v1623
        %v2712 = vunpack.c.h.b16 %v1623
        %v2713 = vunpack.c.l.b16 %v1624
        %v2714 = vunpack.c.h.b16 %v1624
        %v2715 = vunpack.c.l.b16 %v1625
        %v2716 = vunpack.c.h.b16 %v1625
        %v2717 = vunpack.c.l.b16 %v1626
        %v2718 = vunpack.c.h.b16 %v1626
        %v2719 = vunpack.c.l.b16 %v1627
        %v2720 = vunpack.c.h.b16 %v1627
        %v2721 = vunpack.c.l.b16 %v1628
        %v2722 = vunpack.c.h.b16 %v1628
        %v2723 = vunpack.c.l.b16 %v1629
        %v2724 = vunpack.c.h.b16 %v1629
        %v2725 = vunpack.c.l.b16 %v1630
        %v2726 = vunpack.c.h.b16 %v1630
        %v2727 = vunpack.c.l.b16 %v1631
        %v2728 = vunpack.c.h.b16 %v1631
        %v2729 = vunpack.c.l.b16 %v1632
        %v2730 = vunpack.c.h.b16 %v1632
        %v2731 = vunpack.c.l.b16 %v1633
        %v2732 = vunpack.c.h.b16 %v1633
        %v2733 = vunpack.c.l.b16 %v1634
        %v2734 = vunpack.c.h.b16 %v1634
        %v2735 = vunpack.c.l.b16 %v1635
        %v2736 = vunpack.c.h.b16 %v1635
        %v2737 = vunpack.c.l.b16 %v1636
        %v2738 = vunpack.c.h.b16 %v1636
        %v2739 = vunpack.c.l.b16 %v1637
        %v2740 = vunpack.c.h.b16 %v1637
        %v2741 = vunpack.c.l.b16 %v1638
        %v2742 = vunpack.c.h.b16 %v1638
        %v2743 = vunpack.c.l.b16 %v1639
        %v2744 = vunpack.c.h.b16 %v1639
        %v2745 = vunpack.c.l.b16 %v1640
        %v2746 = vunpack.c.h.b16 %v1640
        %v2747 = vunpack.c.l.b16 %v1641
        %v2748 = vunpack.c.h.b16 %v1641
        %v2749 = vunpack.c.l.b16 %v1642
        %v2750 = vunpack.c.h.b16 %v1642
        %v2751 = vunpack.c.l.b16 %v1643
        %v2752 = vunpack.c.h.b16 %v1643
        %v2753 = vunpack.c.l.b16 %v1644
        %v2754 = vunpack.c.h.b16 %v1644
        %v2755 = vunpack.c.l.b16 %v1645
        %v2756 = vunpack.c.h.b16 %v1645
        %v2757 = vunpack.c.l.b16 %v1646
        %v2758 = vunpack.c.h.b16 %v1646
        %v2759 = vunpack.c.l.b16 %v1647
        %v2760 = vunpack.c.h.b16 %v1647
        %v2761 = vunpack.c.l.b16 %v1648
        %v2762 = vunpack.c.h.b16 %v1648
        %v2763 = vunpack.c.l.b16 %v1649
        %v2764 = vunpack.c.h.b16 %v1649
        %v2765 = vunpack.c.l.b16 %v1650
        %v2766 = vunpack.c.h.b16 %v1650
        %v2767 = vunpack.c.l.b16 %v1651
        %v2768 = vunpack.c.h.b16 %v1651
        %v2769 = vunpack.c.l.b16 %v1652
        %v2770 = vunpack.c.h.b16 %v1652
        %v2771 = vunpack.c.l.b16 %v1653
        %v2772 = vunpack.c.h.b16 %v1653
        %v2773 = vunpack.c.l.b16 %v1654
        %v2774 = vunpack.c.h.b16 %v1654
        %v2775 = vunpack.c.l.b16 %v1655
        %v2776 = vunpack.c.h.b16 %v1655
        %v2777 = vunpack.c.l.b16 %v1656
        %v2778 = vunpack.c.h.b16 %v1656
        %v2779 = vunpack.c.l.b16 %v1657
        %v2780 = vunpack.c.h.b16 %v1657
        %v2781 = vunpack.c.l.b16 %v1658
        %v2782 = vunpack.c.h.b16 %v1658
        %v2783 = vunpack.c.l.b16 %v1659
        %v2784 = vunpack.c.h.b16 %v1659
        %v2785 = vunpack.c.l.b16 %v1660
        %v2786 = vunpack.c.h.b16 %v1660
        %v2787 = vunpack.c.l.b16 %v1661
        %v2788 = vunpack.c.h.b16 %v1661
        %v2789 = vunpack.c.l.b16 %v1662
        %v2790 = vunpack.c.h.b16 %v1662
        %v2791 = vunpack.c.l.b16 %v1663
        %v2792 = vunpack.c.h.b16 %v1663
        %v2793 = vunpack.c.l.b16 %v1664
        %v2794 = vunpack.c.h.b16 %v1664
        %v2795 = vunpack.c.l.b16 %v1665
        %v2796 = vunpack.c.h.b16 %v1665
        %v2797 = vunpack.c.l.b16 %v1666
        %v2798 = vunpack.c.h.b16 %v1666
        %v2799 = vunpack.c.l.b16 %v1667
        %v2800 = vunpack.c.h.b16 %v1667
        %v2801 = vunpack.c.l.b16 %v1668
        %v2802 = vunpack.c.h.b16 %v1668
        %v2803 = vunpack.c.l.b16 %v1669
        %v2804 = vunpack.c.h.b16 %v1669
        %v2805 = vunpack.c.l.b16 %v1670
        %v2806 = vunpack.c.h.b16 %v1670
        %v2807 = vunpack.c.l.b16 %v1671
        %v2808 = vunpack.c.h.b16 %v1671
        %v2809 = vunpack.c.l.b16 %v1672
        %v2810 = vunpack.c.h.b16 %v1672
        %v2811 = vunpack.c.l.b16 %v1673
        %v2812 = vunpack.c.h.b16 %v1673
        %v2813 = vunpack.c.l.b16 %v1674
        %v2814 = vunpack.c.h.b16 %v1674
        %v2815 = vunpack.c.l.b16 %v1675
        %v2816 = vunpack.c.h.b16 %v1675
        %v2817 = vunpack.c.l.b16 %v1676
        %v2818 = vunpack.c.h.b16 %v1676
        %v2819 = vunpack.c.l.b16 %v1677
        %v2820 = vunpack.c.h.b16 %v1677
        %v2821 = vunpack.c.l.b16 %v1678
        %v2822 = vunpack.c.h.b16 %v1678
        %v2823 = vunpack.c.l.b16 %v1679
        %v2824 = vunpack.c.h.b16 %v1679
        %v2825 = vunpack.c.l.b16 %v1680
        %v2826 = vunpack.c.h.b16 %v1680
        %v2827 = vunpack.c.l.b16 %v1681
        %v2828 = vunpack.c.h.b16 %v1681
        %v2829 = vunpack.c.l.b16 %v1682
        %v2830 = vunpack.c.h.b16 %v1682
        %v2831 = vunpack.c.l.b16 %v1683
        %v2832 = vunpack.c.h.b16 %v1683
        %v2833 = vunpack.c.l.b16 %v1684
        %v2834 = vunpack.c.h.b16 %v1684
        %v2835 = vunpack.c.l.b16 %v1685
        %v2836 = vunpack.c.h.b16 %v1685
        %v2837 = vunpack.c.l.b16 %v1686
        %v2838 = vunpack.c.h.b16 %v1686
        %v2839 = vunpack.c.l.b16 %v1687
        %v2840 = vunpack.c.h.b16 %v1687
        %v2841 = vunpack.c.l.b16 %v1688
        %v2842 = vunpack.c.h.b16 %v1688
        %v2843 = vunpack.c.l.b16 %v1689
        %v2844 = vunpack.c.h.b16 %v1689
        %v2845 = vunpack.c.l.b16 %v1690
        %v2846 = vunpack.c.h.b16 %v1690
        %v2847 = vunpack.c.l.b16 %v1691
        %v2848 = vunpack.c.h.b16 %v1691
        %v2849 = vunpack.c.l.b16 %v1692
        %v2850 = vunpack.c.h.b16 %v1692
        %v2851 = vunpack.c.l.b16 %v1693
        %v2852 = vunpack.c.h.b16 %v1693
        %v2853 = vunpack.c.l.b16 %v1694
        %v2854 = vunpack.c.h.b16 %v1694
        %v2855 = vunpack.c.l.b16 %v1695
        %v2856 = vunpack.c.h.b16 %v1695
        %v2857 = vunpack.c.l.b16 %v1696
        %v2858 = vunpack.c.h.b16 %v1696
        %v2859 = vunpack.c.l.b16 %v1697
        %v2860 = vunpack.c.h.b16 %v1697
        %v2861 = vunpack.c.l.b16 %v1698
        %v2862 = vunpack.c.h.b16 %v1698
        %v2863 = vunpack.c.l.b16 %v1699
        %v2864 = vunpack.c.h.b16 %v1699
        %v2865 = vunpack.c.l.b16 %v1700
        %v2866 = vunpack.c.h.b16 %v1700
        %v2867 = vunpack.c.l.b16 %v1701
        %v2868 = vunpack.c.h.b16 %v1701
        %v2869 = vunpack.c.l.b16 %v1702
        %v2870 = vunpack.c.h.b16 %v1702
        %v2871 = vunpack.c.l.b16 %v1703
        %v2872 = vunpack.c.h.b16 %v1703
        %v2873 = vunpack.c.l.b16 %v1704
        %v2874 = vunpack.c.h.b16 %v1704
        %v2875 = vunpack.c.l.b16 %v1705
        %v2876 = vunpack.c.h.b16 %v1705
        %v2877 = vunpack.c.l.b16 %v1706
        %v2878 = vunpack.c.h.b16 %v1706
        %v2879 = vunpack.c.l.b16 %v1707
        %v2880 = vunpack.c.h.b16 %v1707
        %v2881 = vunpack.c.l.b16 %v1708
        %v2882 = vunpack.c.h.b16 %v1708
        %v2883 = vpack.c.b16 %v2119, %v2115
        %v2884 = vpack.c.b16 %v2120, %v2116
        %v2885 = vpack.c.b16 %v2121, %v2117
        %v2886 = vpack.c.b16 %v2122, %v2118
        %v2887 = vpack.c.b16 %v2127, %v2123
        %v2888 = vpack.c.b16 %v2128, %v2124
        %v2889 = vpack.c.b16 %v2129, %v2125
        %v2890 = vpack.c.b16 %v2130, %v2126
        %v2891 = vpack.c.b16 %v2135, %v2131
        %v2892 = vpack.c.b16 %v2136, %v2132
        %v2893 = vpack.c.b16 %v2137, %v2133
        %v2894 = vpack.c.b16 %v2138, %v2134
        %v2895 = vpack.c.b16 %v2143, %v2139
        %v2896 = vpack.c.b16 %v2144, %v2140
        %v2897 = vpack.c.b16 %v2145, %v2141
        %v2898 = vpack.c.b16 %v2146, %v2142
        %v2899 = vpack.c.b16 %v2151, %v2147
        %v2900 = vpack.c.b16 %v2152, %v2148
        %v2901 = vpack.c.b16 %v2153, %v2149
        %v2902 = vpack.c.b16 %v2154, %v2150
        %v2903 = vpack.c.b16 %v2159, %v2155
        %v2904 = vpack.c.b16 %v2160, %v2156
        %v2905 = vpack.c.b16 %v2161, %v2157
        %v2906 = vpack.c.b16 %v2162, %v2158
        %v2907 = vpack.c.b16 %v2167, %v2163
        %v2908 = vpack.c.b16 %v2168, %v2164
        %v2909 = vpack.c.b16 %v2169, %v2165
        %v2910 = vpack.c.b16 %v2170, %v2166
        %v2911 = vpack.c.b16 %v2175, %v2171
        %v2912 = vpack.c.b16 %v2176, %v2172
        %v2913 = vpack.c.b16 %v2177, %v2173
        %v2914 = vpack.c.b16 %v2178, %v2174
        %v2915 = vpack.c.b16 %v2183, %v2179
        %v2916 = vpack.c.b16 %v2184, %v2180
        %v2917 = vpack.c.b16 %v2185, %v2181
        %v2918 = vpack.c.b16 %v2186, %v2182
        %v2919 = vpack.c.b16 %v2191, %v2187
        %v2920 = vpack.c.b16 %v2192, %v2188
        %v2921 = vpack.c.b16 %v2193, %v2189
        %v2922 = vpack.c.b16 %v2194, %v2190
        %v2923 = vpack.c.b16 %v2199, %v2195
        %v2924 = vpack.c.b16 %v2200, %v2196
        %v2925 = vpack.c.b16 %v2201, %v2197
        %v2926 = vpack.c.b16 %v2202, %v2198
        %v2927 = vpack.c.b16 %v2207, %v2203
        %v2928 = vpack.c.b16 %v2208, %v2204
        %v2929 = vpack.c.b16 %v2209, %v2205
        %v2930 = vpack.c.b16 %v2210, %v2206
        %v2931 = vpack.c.b16 %v2215, %v2211
        %v2932 = vpack.c.b16 %v2216, %v2212
        %v2933 = vpack.c.b16 %v2217, %v2213
        %v2934 = vpack.c.b16 %v2218, %v2214
        %v2935 = vpack.c.b16 %v2223, %v2219
        %v2936 = vpack.c.b16 %v2224, %v2220
        %v2937 = vpack.c.b16 %v2225, %v2221
        %v2938 = vpack.c.b16 %v2226, %v2222
        %v2939 = vpack.c.b16 %v2231, %v2227
        %v2940 = vpack.c.b16 %v2232, %v2228
        %v2941 = vpack.c.b16 %v2233, %v2229
        %v2942 = vpack.c.b16 %v2234, %v2230
        %v2943 = vpack.c.b16 %v2239, %v2235
        %v2944 = vpack.c.b16 %v2240, %v2236
        %v2945 = vpack.c.b16 %v2241, %v2237
        %v2946 = vpack.c.b16 %v2242, %v2238
        %v2947 = vpack.c.b16 %v2247, %v2243
        %v2948 = vpack.c.b16 %v2248, %v2244
        %v2949 = vpack.c.b16 %v2249, %v2245
        %v2950 = vpack.c.b16 %v2250, %v2246
        %v2951 = vpack.c.b16 %v2255, %v2251
        %v2952 = vpack.c.b16 %v2256, %v2252
        %v2953 = vpack.c.b16 %v2257, %v2253
        %v2954 = vpack.c.b16 %v2258, %v2254
        %v2955 = vpack.c.b16 %v2263, %v2259
        %v2956 = vpack.c.b16 %v2264, %v2260
        %v2957 = vpack.c.b16 %v2265, %v2261
        %v2958 = vpack.c.b16 %v2266, %v2262
        %v2959 = vpack.c.b16 %v2271, %v2267
        %v2960 = vpack.c.b16 %v2272, %v2268
        %v2961 = vpack.c.b16 %v2273, %v2269
        %v2962 = vpack.c.b16 %v2274, %v2270
        %v2963 = vpack.c.b16 %v2279, %v2275
        %v2964 = vpack.c.b16 %v2280, %v2276
        %v2965 = vpack.c.b16 %v2281, %v2277
        %v2966 = vpack.c.b16 %v2282, %v2278
        %v2967 = vpack.c.b16 %v2287, %v2283
        %v2968 = vpack.c.b16 %v2288, %v2284
        %v2969 = vpack.c.b16 %v2289, %v2285
        %v2970 = vpack.c.b16 %v2290, %v2286
        %v2971 = vpack.c.b16 %v2295, %v2291
        %v2972 = vpack.c.b16 %v2296, %v2292
        %v2973 = vpack.c.b16 %v2297, %v2293
        %v2974 = vpack.c.b16 %v2298, %v2294
        %v2975 = vpack.c.b16 %v2303, %v2299
        %v2976 = vpack.c.b16 %v2304, %v2300
        %v2977 = vpack.c.b16 %v2305, %v2301
        %v2978 = vpack.c.b16 %v2306, %v2302
        %v2979 = vpack.c.b16 %v2311, %v2307
        %v2980 = vpack.c.b16 %v2312, %v2308
        %v2981 = vpack.c.b16 %v2313, %v2309
        %v2982 = vpack.c.b16 %v2314, %v2310
        %v2983 = vpack.c.b16 %v2319, %v2315
        %v2984 = vpack.c.b16 %v2320, %v2316
        %v2985 = vpack.c.b16 %v2321, %v2317
        %v2986 = vpack.c.b16 %v2322, %v2318
        %v2987 = vpack.c.b16 %v2327, %v2323
        %v2988 = vpack.c.b16 %v2328, %v2324
        %v2989 = vpack.c.b16 %v2329, %v2325
        %v2990 = vpack.c.b16 %v2330, %v2326
        %v2991 = vpack.c.b16 %v2335, %v2331
        %v2992 = vpack.c.b16 %v2336, %v2332
        %v2993 = vpack.c.b16 %v2337, %v2333
        %v2994 = vpack.c.b16 %v2338, %v2334
        %v2995 = vpack.c.b16 %v2343, %v2339
        %v2996 = vpack.c.b16 %v2344, %v2340
        %v2997 = vpack.c.b16 %v2345, %v2341
        %v2998 = vpack.c.b16 %v2346, %v2342
        %v2999 = vpack.c.b16 %v2351, %v2347
        %v3000 = vpack.c.b16 %v2352, %v2348
        %v3001 = vpack.c.b16 %v2353, %v2349
        %v3002 = vpack.c.b16 %v2354, %v2350
        %v3003 = vpack.c.b16 %v2359, %v2355
        %v3004 = vpack.c.b16 %v2360, %v2356
        %v3005 = vpack.c.b16 %v2361, %v2357
        %v3006 = vpack.c.b16 %v2362, %v2358
        %v3007 = vpack.c.b16 %v2367, %v2363
        %v3008 = vpack.c.b16 %v2368, %v2364
        %v3009 = vpack.c.b16 %v2369, %v2365
        %v3010 = vpack.c.b16 %v2370, %v2366
        %v3011 = vpack.c.b16 %v2375, %v2371
        %v3012 = vpack.c.b16 %v2376, %v2372
        %v3013 = vpack.c.b16 %v2377, %v2373
        %v3014 = vpack.c.b16 %v2378, %v2374
        %v3015 = vpack.c.b16 %v2383, %v2379
        %v3016 = vpack.c.b16 %v2384, %v2380
        %v3017 = vpack.c.b16 %v2385, %v2381
        %v3018 = vpack.c.b16 %v2386, %v2382
        %v3019 = vpack.c.b16 %v2391, %v2387
        %v3020 = vpack.c.b16 %v2392, %v2388
        %v3021 = vpack.c.b16 %v2393, %v2389
        %v3022 = vpack.c.b16 %v2394, %v2390
        %v3023 = vpack.c.b16 %v2399, %v2395
        %v3024 = vpack.c.b16 %v2400, %v2396
        %v3025 = vpack.c.b16 %v2401, %v2397
        %v3026 = vpack.c.b16 %v2402, %v2398
        %v3027 = vpack.c.b16 %v2407, %v2403
        %v3028 = vpack.c.b16 %v2408, %v2404
        %v3029 = vpack.c.b16 %v2409, %v2405
        %v3030 = vpack.c.b16 %v2410, %v2406
        %v3031 = vpack.c.b16 %v2415, %v2411
        %v3032 = vpack.c.b16 %v2416, %v2412
        %v3033 = vpack.c.b16 %v2417, %v2413
        %v3034 = vpack.c.b16 %v2418, %v2414
        %v3035 = vpack.c.b16 %v2423, %v2419
        %v3036 = vpack.c.b16 %v2424, %v2420
        %v3037 = vpack.c.b16 %v2425, %v2421
        %v3038 = vpack.c.b16 %v2426, %v2422
        %v3039 = vpack.c.b16 %v2431, %v2427
        %v3040 = vpack.c.b16 %v2432, %v2428
        %v3041 = vpack.c.b16 %v2433, %v2429
        %v3042 = vpack.c.b16 %v2434, %v2430
        %v3043 = vpack.c.b16 %v2439, %v2435
        %v3044 = vpack.c.b16 %v2440, %v2436
        %v3045 = vpack.c.b16 %v2441, %v2437
        %v3046 = vpack.c.b16 %v2442, %v2438
        %v3047 = vpack.c.b16 %v2447, %v2443
        %v3048 = vpack.c.b16 %v2448, %v2444
        %v3049 = vpack.c.b16 %v2449, %v2445
        %v3050 = vpack.c.b16 %v2450, %v2446
        %v3051 = vpack.c.b16 %v2455, %v2451
        %v3052 = vpack.c.b16 %v2456, %v2452
        %v3053 = vpack.c.b16 %v2457, %v2453
        %v3054 = vpack.c.b16 %v2458, %v2454
        %v3055 = vpack.c.b16 %v2463, %v2459
        %v3056 = vpack.c.b16 %v2464, %v2460
        %v3057 = vpack.c.b16 %v2465, %v2461
        %v3058 = vpack.c.b16 %v2466, %v2462
        %v3059 = vpack.c.b16 %v2471, %v2467
        %v3060 = vpack.c.b16 %v2472, %v2468
        %v3061 = vpack.c.b16 %v2473, %v2469
        %v3062 = vpack.c.b16 %v2474, %v2470
        %v3063 = vpack.c.b16 %v2479, %v2475
        %v3064 = vpack.c.b16 %v2480, %v2476
        %v3065 = vpack.c.b16 %v2481, %v2477
        %v3066 = vpack.c.b16 %v2482, %v2478
        %v3067 = vpack.c.b16 %v2487, %v2483
        %v3068 = vpack.c.b16 %v2488, %v2484
        %v3069 = vpack.c.b16 %v2489, %v2485
        %v3070 = vpack.c.b16 %v2490, %v2486
        %v3071 = vpack.c.b16 %v2495, %v2491
        %v3072 = vpack.c.b16 %v2496, %v2492
        %v3073 = vpack.c.b16 %v2497, %v2493
        %v3074 = vpack.c.b16 %v2498, %v2494
        %v3075 = vpack.c.b16 %v2503, %v2499
        %v3076 = vpack.c.b16 %v2504, %v2500
        %v3077 = vpack.c.b16 %v2505, %v2501
        %v3078 = vpack.c.b16 %v2506, %v2502
        %v3079 = vpack.c.b16 %v2511, %v2507
        %v3080 = vpack.c.b16 %v2512, %v2508
        %v3081 = vpack.c.b16 %v2513, %v2509
        %v3082 = vpack.c.b16 %v2514, %v2510
        %v3083 = vpack.c.b16 %v2519, %v2515
        %v3084 = vpack.c.b16 %v2520, %v2516
        %v3085 = vpack.c.b16 %v2521, %v2517
        %v3086 = vpack.c.b16 %v2522, %v2518
        %v3087 = vpack.c.b16 %v2527, %v2523
        %v3088 = vpack.c.b16 %v2528, %v2524
        %v3089 = vpack.c.b16 %v2529, %v2525
        %v3090 = vpack.c.b16 %v2530, %v2526
        %v3091 = vpack.c.b16 %v2535, %v2531
        %v3092 = vpack.c.b16 %v2536, %v2532
        %v3093 = vpack.c.b16 %v2537, %v2533
        %v3094 = vpack.c.b16 %v2538, %v2534
        %v3095 = vpack.c.b16 %v2543, %v2539
        %v3096 = vpack.c.b16 %v2544, %v2540
        %v3097 = vpack.c.b16 %v2545, %v2541
        %v3098 = vpack.c.b16 %v2546, %v2542
        %v3099 = vpack.c.b16 %v2551, %v2547
        %v3100 = vpack.c.b16 %v2552, %v2548
        %v3101 = vpack.c.b16 %v2553, %v2549
        %v3102 = vpack.c.b16 %v2554, %v2550
        %v3103 = vpack.c.b16 %v2559, %v2555
        %v3104 = vpack.c.b16 %v2560, %v2556
        %v3105 = vpack.c.b16 %v2561, %v2557
        %v3106 = vpack.c.b16 %v2562, %v2558
        %v3107 = vpack.c.b16 %v2567, %v2563
        %v3108 = vpack.c.b16 %v2568, %v2564
        %v3109 = vpack.c.b16 %v2569, %v2565
        %v3110 = vpack.c.b16 %v2570, %v2566
        %v3111 = vpack.c.b16 %v2575, %v2571
        %v3112 = vpack.c.b16 %v2576, %v2572
        %v3113 = vpack.c.b16 %v2577, %v2573
        %v3114 = vpack.c.b16 %v2578, %v2574
        %v3115 = vpack.c.b16 %v2583, %v2579
        %v3116 = vpack.c.b16 %v2584, %v2580
        %v3117 = vpack.c.b16 %v2585, %v2581
        %v3118 = vpack.c.b16 %v2586, %v2582
        %v3119 = vpack.c.b16 %v2591, %v2587
        %v3120 = vpack.c.b16 %v2592, %v2588
        %v3121 = vpack.c.b16 %v2593, %v2589
        %v3122 = vpack.c.b16 %v2594, %v2590
        %v3123 = vpack.c.b16 %v2599, %v2595
        %v3124 = vpack.c.b16 %v2600, %v2596
        %v3125 = vpack.c.b16 %v2601, %v2597
        %v3126 = vpack.c.b16 %v2602, %v2598
        %v3127 = vpack.c.b16 %v2607, %v2603
        %v3128 = vpack.c.b16 %v2608, %v2604
        %v3129 = vpack.c.b16 %v2609, %v2605
        %v3130 = vpack.c.b16 %v2610, %v2606
        %v3131 = vpack.c.b16 %v2615, %v2611
        %v3132 = vpack.c.b16 %v2616, %v2612
        %v3133 = vpack.c.b16 %v2617, %v2613
        %v3134 = vpack.c.b16 %v2618, %v2614
        %v3135 = vpack.c.b16 %v2623, %v2619
        %v3136 = vpack.c.b16 %v2624, %v2620
        %v3137 = vpack.c.b16 %v2625, %v2621
        %v3138 = vpack.c.b16 %v2626, %v2622
        %v3139 = vpack.c.b16 %v2631, %v2627
        %v3140 = vpack.c.b16 %v2632, %v2628
        %v3141 = vpack.c.b16 %v2633, %v2629
        %v3142 = vpack.c.b16 %v2634, %v2630
        %v3143 = vpack.c.b16 %v2639, %v2635
        %v3144 = vpack.c.b16 %v2640, %v2636
        %v3145 = vpack.c.b16 %v2641, %v2637
        %v3146 = vpack.c.b16 %v2642, %v2638
        %v3147 = vpack.c.b16 %v2647, %v2643
        %v3148 = vpack.c.b16 %v2648, %v2644
        %v3149 = vpack.c.b16 %v2649, %v2645
        %v3150 = vpack.c.b16 %v2650, %v2646
        %v3151 = vpack.c.b16 %v2655, %v2651
        %v3152 = vpack.c.b16 %v2656, %v2652
        %v3153 = vpack.c.b16 %v2657, %v2653
        %v3154 = vpack.c.b16 %v2658, %v2654
        %v3155 = vpack.c.b16 %v2663, %v2659
        %v3156 = vpack.c.b16 %v2664, %v2660
        %v3157 = vpack.c.b16 %v2665, %v2661
        %v3158 = vpack.c.b16 %v2666, %v2662
        %v3159 = vpack.c.b16 %v2671, %v2667
        %v3160 = vpack.c.b16 %v2672, %v2668
        %v3161 = vpack.c.b16 %v2673, %v2669
        %v3162 = vpack.c.b16 %v2674, %v2670
        %v3163 = vpack.c.b16 %v2679, %v2675
        %v3164 = vpack.c.b16 %v2680, %v2676
        %v3165 = vpack.c.b16 %v2681, %v2677
        %v3166 = vpack.c.b16 %v2682, %v2678
        %v3167 = vpack.c.b16 %v2687, %v2683
        %v3168 = vpack.c.b16 %v2688, %v2684
        %v3169 = vpack.c.b16 %v2689, %v2685
        %v3170 = vpack.c.b16 %v2690, %v2686
        %v3171 = vpack.c.b16 %v2695, %v2691
        %v3172 = vpack.c.b16 %v2696, %v2692
        %v3173 = vpack.c.b16 %v2697, %v2693
        %v3174 = vpack.c.b16 %v2698, %v2694
        %v3175 = vpack.c.b16 %v2703, %v2699
        %v3176 = vpack.c.b16 %v2704, %v2700
        %v3177 = vpack.c.b16 %v2705, %v2701
        %v3178 = vpack.c.b16 %v2706, %v2702
        %v3179 = vpack.c.b16 %v2711, %v2707
        %v3180 = vpack.c.b16 %v2712, %v2708
        %v3181 = vpack.c.b16 %v2713, %v2709
        %v3182 = vpack.c.b16 %v2714, %v2710
        %v3183 = vpack.c.b16 %v2719, %v2715
        %v3184 = vpack.c.b16 %v2720, %v2716
        %v3185 = vpack.c.b16 %v2721, %v2717
        %v3186 = vpack.c.b16 %v2722, %v2718
        %v3187 = vpack.c.b16 %v2727, %v2723
        %v3188 = vpack.c.b16 %v2728, %v2724
        %v3189 = vpack.c.b16 %v2729, %v2725
        %v3190 = vpack.c.b16 %v2730, %v2726
        %v3191 = vpack.c.b16 %v2735, %v2731
        %v3192 = vpack.c.b16 %v2736, %v2732
        %v3193 = vpack.c.b16 %v2737, %v2733
        %v3194 = vpack.c.b16 %v2738, %v2734
        %v3195 = vpack.c.b16 %v2743, %v2739
        %v3196 = vpack.c.b16 %v2744, %v2740
        %v3197 = vpack.c.b16 %v2745, %v2741
        %v3198 = vpack.c.b16 %v2746, %v2742
        %v3199 = vpack.c.b16 %v2751, %v2747
        %v3200 = vpack.c.b16 %v2752, %v2748
        %v3201 = vpack.c.b16 %v2753, %v2749
        %v3202 = vpack.c.b16 %v2754, %v2750
        %v3203 = vpack.c.b16 %v2759, %v2755
        %v3204 = vpack.c.b16 %v2760, %v2756
        %v3205 = vpack.c.b16 %v2761, %v2757
        %v3206 = vpack.c.b16 %v2762, %v2758
        %v3207 = vpack.c.b16 %v2767, %v2763
        %v3208 = vpack.c.b16 %v2768, %v2764
        %v3209 = vpack.c.b16 %v2769, %v2765
        %v3210 = vpack.c.b16 %v2770, %v2766
        %v3211 = vpack.c.b16 %v2775, %v2771
        %v3212 = vpack.c.b16 %v2776, %v2772
        %v3213 = vpack.c.b16 %v2777, %v2773
        %v3214 = vpack.c.b16 %v2778, %v2774
        %v3215 = vpack.c.b16 %v2783, %v2779
        %v3216 = vpack.c.b16 %v2784, %v2780
        %v3217 = vpack.c.b16 %v2785, %v2781
        %v3218 = vpack.c.b16 %v2786, %v2782
        %v3219 = vpack.c.b16 %v2791, %v2787
        %v3220 = vpack.c.b16 %v2792, %v2788
        %v3221 = vpack.c.b16 %v2793, %v2789
        %v3222 = vpack.c.b16 %v2794, %v2790
        %v3223 = vpack.c.b16 %v2799, %v2795
        %v3224 = vpack.c.b16 %v2800, %v2796
        %v3225 = vpack.c.b16 %v2801, %v2797
        %v3226 = vpack.c.b16 %v2802, %v2798
        %v3227 = vpack.c.b16 %v2807, %v2803
        %v3228 = vpack.c.b16 %v2808, %v2804
        %v3229 = vpack.c.b16 %v2809, %v2805
        %v3230 = vpack.c.b16 %v2810, %v2806
        %v3231 = vpack.c.b16 %v2815, %v2811
        %v3232 = vpack.c.b16 %v2816, %v2812
        %v3233 = vpack.c.b16 %v2817, %v2813
        %v3234 = vpack.c.b16 %v2818, %v2814
        %v3235 = vpack.c.b16 %v2823, %v2819
        %v3236 = vpack.c.b16 %v2824, %v2820
        %v3237 = vpack.c.b16 %v2825, %v2821
        %v3238 = vpack.c.b16 %v2826, %v2822
        %v3239 = vpack.c.b16 %v2831, %v2827
        %v3240 = vpack.c.b16 %v2832, %v2828
        %v3241 = vpack.c.b16 %v2833, %v2829
        %v3242 = vpack.c.b16 %v2834, %v2830
        %v3243 = vpack.c.b16 %v2839, %v2835
        %v3244 = vpack.c.b16 %v2840, %v2836
        %v3245 = vpack.c.b16 %v2841, %v2837
        %v3246 = vpack.c.b16 %v2842, %v2838
        %v3247 = vpack.c.b16 %v2847, %v2843
        %v3248 = vpack.c.b16 %v2848, %v2844
        %v3249 = vpack.c.b16 %v2849, %v2845
        %v3250 = vpack.c.b16 %v2850, %v2846
        %v3251 = vpack.c.b16 %v2855, %v2851
        %v3252 = vpack.c.b16 %v2856, %v2852
        %v3253 = vpack.c.b16 %v2857, %v2853
        %v3254 = vpack.c.b16 %v2858, %v2854
        %v3255 = vpack.c.b16 %v2863, %v2859
        %v3256 = vpack.c.b16 %v2864, %v2860
        %v3257 = vpack.c.b16 %v2865, %v2861
        %v3258 = vpack.c.b16 %v2866, %v2862
        %v3259 = vpack.c.b16 %v2871, %v2867
        %v3260 = vpack.c.b16 %v2872, %v2868
        %v3261 = vpack.c.b16 %v2873, %v2869
        %v3262 = vpack.c.b16 %v2874, %v2870
        %v3263 = vpack.c.b16 %v2879, %v2875
        %v3264 = vpack.c.b16 %v2880, %v2876
        %v3265 = vpack.c.b16 %v2881, %v2877
        %v3266 = vpack.c.b16 %v2882, %v2878
        %3651 = vmatprep.subr.bf16.mxu0 %v2884
        %3652 = vmatpush1.bf16.msra.mxu0 %v2883
        %3653 = vmatprep.subr.bf16.mxu0 %v2888
        %3654 = vmatpush1.bf16.msra.mxu0 %v2887
        %3655 = vmatprep.subr.bf16.mxu0 %v2892
        %3656 = vmatpush1.bf16.msra.mxu0 %v2891
        %3657 = vmatprep.subr.bf16.mxu0 %v2896
        %3658 = vmatpush1.bf16.msra.mxu0 %v2895
        %3659 = vmatprep.subr.bf16.mxu0 %v2900
        %3660 = vmatpush1.bf16.msra.mxu0 %v2899
        %3661 = vmatprep.subr.bf16.mxu0 %v2904
        %3662 = vmatpush1.bf16.msra.mxu0 %v2903
        %3663 = vmatprep.subr.bf16.mxu0 %v2908
        %3664 = vmatpush1.bf16.msra.mxu0 %v2907
        %3665 = vmatprep.subr.bf16.mxu0 %v2912
        %3666 = vmatpush1.bf16.msra.mxu0 %v2911
        %3667 = vmatprep.subr.bf16.mxu0 %v2916
        %3668 = vmatpush1.bf16.msra.mxu0 %v2915
        %3669 = vmatprep.subr.bf16.mxu0 %v2920
        %3670 = vmatpush1.bf16.msra.mxu0 %v2919
        %3671 = vmatprep.subr.bf16.mxu0 %v2924
        %3672 = vmatpush1.bf16.msra.mxu0 %v2923
        %3673 = vmatprep.subr.bf16.mxu0 %v2928
        %3674 = vmatpush1.bf16.msra.mxu0 %v2927
        %3675 = vmatprep.subr.bf16.mxu0 %v2932
        %3676 = vmatpush1.bf16.msra.mxu0 %v2931
        %3677 = vmatprep.subr.bf16.mxu0 %v2936
        %3678 = vmatpush1.bf16.msra.mxu0 %v2935
        %3679 = vmatprep.subr.bf16.mxu0 %v2940
        %3680 = vmatpush1.bf16.msra.mxu0 %v2939
        %3681 = vmatprep.subr.bf16.mxu0 %v2944
        %3682 = vmatpush1.bf16.msra.mxu0 %v2943
        %3683 = vmatprep.mubr.bf16.mxu0 %v1314
        %3684 = vmatmul.mubr.bf16.gmra.mrb[0].mxu0 %v1313
        %v3685 = vpop.f32.mrb[0].mxu0
        %v3686 = vadd.f32 %v1714, %v3685
        %v3687 = vpop.f32.mrb[0].mxu0
        %v3688 = vadd.f32 %v1718, %v3687
        %v3689 = vpop.f32.mrb[0].mxu0
        %v3690 = vadd.f32 %v1714, %v3689
        %v3691 = vpop.f32.mrb[0].mxu0
        %v3692 = vadd.f32 %v1718, %v3691
        %3693 = vdwg.mxu0
        %3694 = vmatprep.subr.bf16.mxu0 %v2948
        %3695 = vmatpush1.bf16.msra.mxu0 %v2947
        %3696 = vmatprep.subr.bf16.mxu0 %v2952
        %3697 = vmatpush1.bf16.msra.mxu0 %v2951
        %3698 = vmatprep.subr.bf16.mxu0 %v2956
        %3699 = vmatpush1.bf16.msra.mxu0 %v2955
        %3700 = vmatprep.subr.bf16.mxu0 %v2960
        %3701 = vmatpush1.bf16.msra.mxu0 %v2959
        %3702 = vmatprep.subr.bf16.mxu0 %v2964
        %3703 = vmatpush1.bf16.msra.mxu0 %v2963
        %3704 = vmatprep.subr.bf16.mxu0 %v2968
        %3705 = vmatpush1.bf16.msra.mxu0 %v2967
        %3706 = vmatprep.subr.bf16.mxu0 %v2972
        %3707 = vmatpush1.bf16.msra.mxu0 %v2971
        %3708 = vmatprep.subr.bf16.mxu0 %v2976
        %3709 = vmatpush1.bf16.msra.mxu0 %v2975
        %3710 = vmatprep.subr.bf16.mxu0 %v2980
        %3711 = vmatpush1.bf16.msra.mxu0 %v2979
        %3712 = vmatprep.subr.bf16.mxu0 %v2984
        %3713 = vmatpush1.bf16.msra.mxu0 %v2983
        %3714 = vmatprep.subr.bf16.mxu0 %v2988
        %3715 = vmatpush1.bf16.msra.mxu0 %v2987
        %3716 = vmatprep.subr.bf16.mxu0 %v2992
        %3717 = vmatpush1.bf16.msra.mxu0 %v2991
        %3718 = vmatprep.subr.bf16.mxu0 %v2996
        %3719 = vmatpush1.bf16.msra.mxu0 %v2995
        %3720 = vmatprep.subr.bf16.mxu0 %v3000
        %3721 = vmatpush1.bf16.msra.mxu0 %v2999
        %3722 = vmatprep.subr.bf16.mxu0 %v3004
        %3723 = vmatpush1.bf16.msra.mxu0 %v3003
        %3724 = vmatprep.subr.bf16.mxu0 %v3008
        %3725 = vmatpush1.bf16.msra.mxu0 %v3007
        %3726 = vmatprep.mubr.bf16.mxu0 %v1316
        %3727 = vmatmul.mubr.bf16.gmra.mrb[0].mxu0 %v1315
        %v3728 = vpop.f32.mrb[0].mxu0
        %v3729 = vadd.f32 %v3686, %v3728
        %v3730 = vpop.f32.mrb[0].mxu0
        %v3731 = vadd.f32 %v3688, %v3730
        %v3732 = vpop.f32.mrb[0].mxu0
        %v3733 = vadd.f32 %v3690, %v3732
        %v3734 = vpop.f32.mrb[0].mxu0
        %v3735 = vadd.f32 %v3692, %v3734
        %3736 = vdwg.mxu0
        %3737 = vmatprep.subr.bf16.mxu0 %v3012
        %3738 = vmatpush1.bf16.msra.mxu0 %v3011
        %3739 = vmatprep.subr.bf16.mxu0 %v3016
        %3740 = vmatpush1.bf16.msra.mxu0 %v3015
        %3741 = vmatprep.subr.bf16.mxu0 %v3020
        %3742 = vmatpush1.bf16.msra.mxu0 %v3019
        %3743 = vmatprep.subr.bf16.mxu0 %v3024
        %3744 = vmatpush1.bf16.msra.mxu0 %v3023
        %3745 = vmatprep.subr.bf16.mxu0 %v3028
        %3746 = vmatpush1.bf16.msra.mxu0 %v3027
        %3747 = vmatprep.subr.bf16.mxu0 %v3032
        %3748 = vmatpush1.bf16.msra.mxu0 %v3031
        %3749 = vmatprep.subr.bf16.mxu0 %v3036
        %3750 = vmatpush1.bf16.msra.mxu0 %v3035
        %3751 = vmatprep.subr.bf16.mxu0 %v3040
        %3752 = vmatpush1.bf16.msra.mxu0 %v3039
        %3753 = vmatprep.subr.bf16.mxu0 %v3044
        %3754 = vmatpush1.bf16.msra.mxu0 %v3043
        %3755 = vmatprep.subr.bf16.mxu0 %v3048
        %3756 = vmatpush1.bf16.msra.mxu0 %v3047
        %3757 = vmatprep.subr.bf16.mxu0 %v3052
        %3758 = vmatpush1.bf16.msra.mxu0 %v3051
        %3759 = vmatprep.subr.bf16.mxu0 %v3056
        %3760 = vmatpush1.bf16.msra.mxu0 %v3055
        %3761 = vmatprep.subr.bf16.mxu0 %v3060
        %3762 = vmatpush1.bf16.msra.mxu0 %v3059
        %3763 = vmatprep.subr.bf16.mxu0 %v3064
        %3764 = vmatpush1.bf16.msra.mxu0 %v3063
        %3765 = vmatprep.subr.bf16.mxu0 %v3068
        %3766 = vmatpush1.bf16.msra.mxu0 %v3067
        %3767 = vmatprep.subr.bf16.mxu0 %v3072
        %3768 = vmatpush1.bf16.msra.mxu0 %v3071
        %3769 = vmatprep.mubr.bf16.mxu0 %v1318
        %3770 = vmatmul.mubr.bf16.gmra.mrb[0].mxu0 %v1317
        %v3771 = vpop.f32.mrb[0].mxu0
        %v3772 = vadd.f32 %v3729, %v3771
        %v3773 = vpop.f32.mrb[0].mxu0
        %v3774 = vadd.f32 %v3731, %v3773
        %v3775 = vpop.f32.mrb[0].mxu0
        %v3776 = vadd.f32 %v3733, %v3775
        %v3777 = vpop.f32.mrb[0].mxu0
        %v3778 = vadd.f32 %v3735, %v3777
        %3779 = vdwg.mxu0
        %3780 = vmatprep.subr.bf16.mxu0 %v3076
        %3781 = vmatpush1.bf16.msra.mxu0 %v3075
        %3782 = vmatprep.subr.bf16.mxu0 %v3080
        %3783 = vmatpush1.bf16.msra.mxu0 %v3079
        %3784 = vmatprep.subr.bf16.mxu0 %v3084
        %3785 = vmatpush1.bf16.msra.mxu0 %v3083
        %3786 = vmatprep.subr.bf16.mxu0 %v3088
        %3787 = vmatpush1.bf16.msra.mxu0 %v3087
        %3788 = vmatprep.subr.bf16.mxu0 %v3092
        %3789 = vmatpush1.bf16.msra.mxu0 %v3091
        %3790 = vmatprep.subr.bf16.mxu0 %v3096
        %3791 = vmatpush1.bf16.msra.mxu0 %v3095
        %3792 = vmatprep.subr.bf16.mxu0 %v3100
        %3793 = vmatpush1.bf16.msra.mxu0 %v3099
        %3794 = vmatprep.subr.bf16.mxu0 %v3104
        %3795 = vmatpush1.bf16.msra.mxu0 %v3103
        %3796 = vmatprep.subr.bf16.mxu0 %v3108
        %3797 = vmatpush1.bf16.msra.mxu0 %v3107
        %3798 = vmatprep.subr.bf16.mxu0 %v3112
        %3799 = vmatpush1.bf16.msra.mxu0 %v3111
        %3800 = vmatprep.subr.bf16.mxu0 %v3116
        %3801 = vmatpush1.bf16.msra.mxu0 %v3115
        %3802 = vmatprep.subr.bf16.mxu0 %v3120
        %3803 = vmatpush1.bf16.msra.mxu0 %v3119
        %3804 = vmatprep.subr.bf16.mxu0 %v3124
        %3805 = vmatpush1.bf16.msra.mxu0 %v3123
        %3806 = vmatprep.subr.bf16.mxu0 %v3128
        %3807 = vmatpush1.bf16.msra.mxu0 %v3127
        %3808 = vmatprep.subr.bf16.mxu0 %v3132
        %3809 = vmatpush1.bf16.msra.mxu0 %v3131
        %3810 = vmatprep.subr.bf16.mxu0 %v3136
        %3811 = vmatpush1.bf16.msra.mxu0 %v3135
        %3812 = vmatprep.mubr.bf16.mxu0 %v1320
        %3813 = vmatmul.mubr.bf16.gmra.mrb[0].mxu0 %v1319
        %v3814 = vpop.f32.mrb[0].mxu0
        %v3815 = vadd.f32 %v3772, %v3814
        %v3816 = vpop.f32.mrb[0].mxu0
        %v3817 = vadd.f32 %v3774, %v3816
        %v3818 = vpop.f32.mrb[0].mxu0
        %v3819 = vadd.f32 %v3776, %v3818
        %v3820 = vpop.f32.mrb[0].mxu0
        %v3821 = vadd.f32 %v3778, %v3820
        %3822 = vdwg.mxu0
        %3823 = vmatprep.subr.bf16.mxu0 %v3140
        %3824 = vmatpush1.bf16.msra.mxu0 %v3139
        %3825 = vmatprep.subr.bf16.mxu0 %v3144
        %3826 = vmatpush1.bf16.msra.mxu0 %v3143
        %3827 = vmatprep.subr.bf16.mxu0 %v3148
        %3828 = vmatpush1.bf16.msra.mxu0 %v3147
        %3829 = vmatprep.subr.bf16.mxu0 %v3152
        %3830 = vmatpush1.bf16.msra.mxu0 %v3151
        %3831 = vmatprep.subr.bf16.mxu0 %v3156
        %3832 = vmatpush1.bf16.msra.mxu0 %v3155
        %3833 = vmatprep.subr.bf16.mxu0 %v3160
        %3834 = vmatpush1.bf16.msra.mxu0 %v3159
        %3835 = vmatprep.subr.bf16.mxu0 %v3164
        %3836 = vmatpush1.bf16.msra.mxu0 %v3163
        %3837 = vmatprep.subr.bf16.mxu0 %v3168
        %3838 = vmatpush1.bf16.msra.mxu0 %v3167
        %3839 = vmatprep.subr.bf16.mxu0 %v3172
        %3840 = vmatpush1.bf16.msra.mxu0 %v3171
        %3841 = vmatprep.subr.bf16.mxu0 %v3176
        %3842 = vmatpush1.bf16.msra.mxu0 %v3175
        %3843 = vmatprep.subr.bf16.mxu0 %v3180
        %3844 = vmatpush1.bf16.msra.mxu0 %v3179
        %3845 = vmatprep.subr.bf16.mxu0 %v3184
        %3846 = vmatpush1.bf16.msra.mxu0 %v3183
        %3847 = vmatprep.subr.bf16.mxu0 %v3188
        %3848 = vmatpush1.bf16.msra.mxu0 %v3187
        %3849 = vmatprep.subr.bf16.mxu0 %v3192
        %3850 = vmatpush1.bf16.msra.mxu0 %v3191
        %3851 = vmatprep.subr.bf16.mxu0 %v3196
        %3852 = vmatpush1.bf16.msra.mxu0 %v3195
        %3853 = vmatprep.subr.bf16.mxu0 %v3200
        %3854 = vmatpush1.bf16.msra.mxu0 %v3199
        %3855 = vmatprep.mubr.bf16.mxu0 %v1322
        %3856 = vmatmul.mubr.bf16.gmra.mrb[0].mxu0 %v1321
        %v3857 = vpop.f32.mrb[0].mxu0
        %v3858 = vadd.f32 %v3815, %v3857
        %v3859 = vpop.f32.mrb[0].mxu0
        %v3860 = vadd.f32 %v3817, %v3859
        %v3861 = vpop.f32.mrb[0].mxu0
        %v3862 = vadd.f32 %v3819, %v3861
        %v3863 = vpop.f32.mrb[0].mxu0
        %v3864 = vadd.f32 %v3821, %v3863
        %3865 = vdwg.mxu0
        %3866 = vmatprep.subr.bf16.mxu0 %v3204
        %3867 = vmatpush1.bf16.msra.mxu0 %v3203
        %3868 = vmatprep.subr.bf16.mxu0 %v3208
        %3869 = vmatpush1.bf16.msra.mxu0 %v3207
        %3870 = vmatprep.subr.bf16.mxu0 %v3212
        %3871 = vmatpush1.bf16.msra.mxu0 %v3211
        %3872 = vmatprep.subr.bf16.mxu0 %v3216
        %3873 = vmatpush1.bf16.msra.mxu0 %v3215
        %3874 = vmatprep.subr.bf16.mxu0 %v3220
        %3875 = vmatpush1.bf16.msra.mxu0 %v3219
        %3876 = vmatprep.subr.bf16.mxu0 %v3224
        %3877 = vmatpush1.bf16.msra.mxu0 %v3223
        %3878 = vmatprep.subr.bf16.mxu0 %v3228
        %3879 = vmatpush1.bf16.msra.mxu0 %v3227
        %3880 = vmatprep.subr.bf16.mxu0 %v3232
        %3881 = vmatpush1.bf16.msra.mxu0 %v3231
        %3882 = vmatprep.subr.bf16.mxu0 %v3236
        %3883 = vmatpush1.bf16.msra.mxu0 %v3235
        %3884 = vmatprep.subr.bf16.mxu0 %v3240
        %3885 = vmatpush1.bf16.msra.mxu0 %v3239
        %3886 = vmatprep.subr.bf16.mxu0 %v3244
        %3887 = vmatpush1.bf16.msra.mxu0 %v3243
        %3888 = vmatprep.subr.bf16.mxu0 %v3248
        %3889 = vmatpush1.bf16.msra.mxu0 %v3247
        %3890 = vmatprep.subr.bf16.mxu0 %v3252
        %3891 = vmatpush1.bf16.msra.mxu0 %v3251
        %3892 = vmatprep.subr.bf16.mxu0 %v3256
        %3893 = vmatpush1.bf16.msra.mxu0 %v3255
        %3894 = vmatprep.subr.bf16.mxu0 %v3260
        %3895 = vmatpush1.bf16.msra.mxu0 %v3259
        %3896 = vmatprep.subr.bf16.mxu0 %v3264
        %3897 = vmatpush1.bf16.msra.mxu0 %v3263
        %3898 = vmatprep.mubr.bf16.mxu0 %v1324
        %3899 = vmatmul.mubr.bf16.gmra.mrb[0].mxu0 %v1323
        %v3900 = vpop.f32.mrb[0].mxu0
        %v3901 = vadd.f32 %v3858, %v3900
        %v3902 = vpop.f32.mrb[0].mxu0
        %v3903 = vadd.f32 %v3860, %v3902
        %v3904 = vpop.f32.mrb[0].mxu0
        %v3905 = vadd.f32 %v3862, %v3904
        %v3906 = vpop.f32.mrb[0].mxu0
        %v3907 = vadd.f32 %v3864, %v3906
        %3908 = vdwg.mxu0
        %3909 = vmatprep.subr.bf16.mxu0 %v2886
        %3910 = vmatpush1.bf16.msra.mxu0 %v2885
        %3911 = vmatprep.subr.bf16.mxu0 %v2890
        %3912 = vmatpush1.bf16.msra.mxu0 %v2889
        %3913 = vmatprep.subr.bf16.mxu0 %v2894
        %3914 = vmatpush1.bf16.msra.mxu0 %v2893
        %3915 = vmatprep.subr.bf16.mxu0 %v2898
        %3916 = vmatpush1.bf16.msra.mxu0 %v2897
        %3917 = vmatprep.subr.bf16.mxu0 %v2902
        %3918 = vmatpush1.bf16.msra.mxu0 %v2901
        %3919 = vmatprep.subr.bf16.mxu0 %v2906
        %3920 = vmatpush1.bf16.msra.mxu0 %v2905
        %3921 = vmatprep.subr.bf16.mxu0 %v2910
        %3922 = vmatpush1.bf16.msra.mxu0 %v2909
        %3923 = vmatprep.subr.bf16.mxu0 %v2914
        %3924 = vmatpush1.bf16.msra.mxu0 %v2913
        %3925 = vmatprep.subr.bf16.mxu0 %v2918
        %3926 = vmatpush1.bf16.msra.mxu0 %v2917
        %3927 = vmatprep.subr.bf16.mxu0 %v2922
        %3928 = vmatpush1.bf16.msra.mxu0 %v2921
        %3929 = vmatprep.subr.bf16.mxu0 %v2926
        %3930 = vmatpush1.bf16.msra.mxu0 %v2925
        %3931 = vmatprep.subr.bf16.mxu0 %v2930
        %3932 = vmatpush1.bf16.msra.mxu0 %v2929
        %3933 = vmatprep.subr.bf16.mxu0 %v2934
        %3934 = vmatpush1.bf16.msra.mxu0 %v2933
        %3935 = vmatprep.subr.bf16.mxu0 %v2938
        %3936 = vmatpush1.bf16.msra.mxu0 %v2937
        %3937 = vmatprep.subr.bf16.mxu0 %v2942
        %3938 = vmatpush1.bf16.msra.mxu0 %v2941
        %3939 = vmatprep.subr.bf16.mxu0 %v2946
        %3940 = vmatpush1.bf16.msra.mxu0 %v2945
        %3941 = vmatprep.mubr.bf16.mxu0 %v1314
        %3942 = vmatmul.mubr.bf16.gmra.mrb[0].mxu0 %v1313
        %v3943 = vpop.f32.mrb[0].mxu0
        %v3944 = vadd.f32 %v1722, %v3943
        %v3945 = vpop.f32.mrb[0].mxu0
        %v3946 = vadd.f32 %v1726, %v3945
        %v3947 = vpop.f32.mrb[0].mxu0
        %v3948 = vadd.f32 %v1722, %v3947
        %v3949 = vpop.f32.mrb[0].mxu0
        %v3950 = vadd.f32 %v1726, %v3949
        %3951 = vdwg.mxu0
        %3952 = vmatprep.subr.bf16.mxu0 %v2950
        %3953 = vmatpush1.bf16.msra.mxu0 %v2949
        %3954 = vmatprep.subr.bf16.mxu0 %v2954
        %3955 = vmatpush1.bf16.msra.mxu0 %v2953
        %3956 = vmatprep.subr.bf16.mxu0 %v2958
        %3957 = vmatpush1.bf16.msra.mxu0 %v2957
        %3958 = vmatprep.subr.bf16.mxu0 %v2962
        %3959 = vmatpush1.bf16.msra.mxu0 %v2961
        %3960 = vmatprep.subr.bf16.mxu0 %v2966
        %3961 = vmatpush1.bf16.msra.mxu0 %v2965
        %3962 = vmatprep.subr.bf16.mxu0 %v2970
        %3963 = vmatpush1.bf16.msra.mxu0 %v2969
        %3964 = vmatprep.subr.bf16.mxu0 %v2974
        %3965 = vmatpush1.bf16.msra.mxu0 %v2973
        %3966 = vmatprep.subr.bf16.mxu0 %v2978
        %3967 = vmatpush1.bf16.msra.mxu0 %v2977
        %3968 = vmatprep.subr.bf16.mxu0 %v2982
        %3969 = vmatpush1.bf16.msra.mxu0 %v2981
        %3970 = vmatprep.subr.bf16.mxu0 %v2986
        %3971 = vmatpush1.bf16.msra.mxu0 %v2985
        %3972 = vmatprep.subr.bf16.mxu0 %v2990
        %3973 = vmatpush1.bf16.msra.mxu0 %v2989
        %3974 = vmatprep.subr.bf16.mxu0 %v2994
        %3975 = vmatpush1.bf16.msra.mxu0 %v2993
        %3976 = vmatprep.subr.bf16.mxu0 %v2998
        %3977 = vmatpush1.bf16.msra.mxu0 %v2997
        %3978 = vmatprep.subr.bf16.mxu0 %v3002
        %3979 = vmatpush1.bf16.msra.mxu0 %v3001
        %3980 = vmatprep.subr.bf16.mxu0 %v3006
        %3981 = vmatpush1.bf16.msra.mxu0 %v3005
        %3982 = vmatprep.subr.bf16.mxu0 %v3010
        %3983 = vmatpush1.bf16.msra.mxu0 %v3009
        %3984 = vmatprep.mubr.bf16.mxu0 %v1316
        %3985 = vmatmul.mubr.bf16.gmra.mrb[0].mxu0 %v1315
        %v3986 = vpop.f32.mrb[0].mxu0
        %v3987 = vadd.f32 %v3944, %v3986
        %v3988 = vpop.f32.mrb[0].mxu0
        %v3989 = vadd.f32 %v3946, %v3988
        %v3990 = vpop.f32.mrb[0].mxu0
        %v3991 = vadd.f32 %v3948, %v3990
        %v3992 = vpop.f32.mrb[0].mxu0
        %v3993 = vadd.f32 %v3950, %v3992
        %3994 = vdwg.mxu0
        %3995 = vmatprep.subr.bf16.mxu0 %v3014
        %3996 = vmatpush1.bf16.msra.mxu0 %v3013
        %3997 = vmatprep.subr.bf16.mxu0 %v3018
        %3998 = vmatpush1.bf16.msra.mxu0 %v3017
        %3999 = vmatprep.subr.bf16.mxu0 %v3022
        %4000 = vmatpush1.bf16.msra.mxu0 %v3021
        %4001 = vmatprep.subr.bf16.mxu0 %v3026
        %4002 = vmatpush1.bf16.msra.mxu0 %v3025
        %4003 = vmatprep.subr.bf16.mxu0 %v3030
        %4004 = vmatpush1.bf16.msra.mxu0 %v3029
        %4005 = vmatprep.subr.bf16.mxu0 %v3034
        %4006 = vmatpush1.bf16.msra.mxu0 %v3033
        %4007 = vmatprep.subr.bf16.mxu0 %v3038
        %4008 = vmatpush1.bf16.msra.mxu0 %v3037
        %4009 = vmatprep.subr.bf16.mxu0 %v3042
        %4010 = vmatpush1.bf16.msra.mxu0 %v3041
        %4011 = vmatprep.subr.bf16.mxu0 %v3046
        %4012 = vmatpush1.bf16.msra.mxu0 %v3045
        %4013 = vmatprep.subr.bf16.mxu0 %v3050
        %4014 = vmatpush1.bf16.msra.mxu0 %v3049
        %4015 = vmatprep.subr.bf16.mxu0 %v3054
        %4016 = vmatpush1.bf16.msra.mxu0 %v3053
        %4017 = vmatprep.subr.bf16.mxu0 %v3058
        %4018 = vmatpush1.bf16.msra.mxu0 %v3057
        %4019 = vmatprep.subr.bf16.mxu0 %v3062
        %4020 = vmatpush1.bf16.msra.mxu0 %v3061
        %4021 = vmatprep.subr.bf16.mxu0 %v3066
        %4022 = vmatpush1.bf16.msra.mxu0 %v3065
        %4023 = vmatprep.subr.bf16.mxu0 %v3070
        %4024 = vmatpush1.bf16.msra.mxu0 %v3069
        %4025 = vmatprep.subr.bf16.mxu0 %v3074
        %4026 = vmatpush1.bf16.msra.mxu0 %v3073
        %4027 = vmatprep.mubr.bf16.mxu0 %v1318
        %4028 = vmatmul.mubr.bf16.gmra.mrb[0].mxu0 %v1317
        %v4029 = vpop.f32.mrb[0].mxu0
        %v4030 = vadd.f32 %v3987, %v4029
        %v4031 = vpop.f32.mrb[0].mxu0
        %v4032 = vadd.f32 %v3989, %v4031
        %v4033 = vpop.f32.mrb[0].mxu0
        %v4034 = vadd.f32 %v3991, %v4033
        %v4035 = vpop.f32.mrb[0].mxu0
        %v4036 = vadd.f32 %v3993, %v4035
        %4037 = vdwg.mxu0
        %4038 = vmatprep.subr.bf16.mxu0 %v3078
        %4039 = vmatpush1.bf16.msra.mxu0 %v3077
        %4040 = vmatprep.subr.bf16.mxu0 %v3082
        %4041 = vmatpush1.bf16.msra.mxu0 %v3081
        %4042 = vmatprep.subr.bf16.mxu0 %v3086
        %4043 = vmatpush1.bf16.msra.mxu0 %v3085
        %4044 = vmatprep.subr.bf16.mxu0 %v3090
        %4045 = vmatpush1.bf16.msra.mxu0 %v3089
        %4046 = vmatprep.subr.bf16.mxu0 %v3094
        %4047 = vmatpush1.bf16.msra.mxu0 %v3093
        %4048 = vmatprep.subr.bf16.mxu0 %v3098
        %4049 = vmatpush1.bf16.msra.mxu0 %v3097
        %4050 = vmatprep.subr.bf16.mxu0 %v3102
        %4051 = vmatpush1.bf16.msra.mxu0 %v3101
        %4052 = vmatprep.subr.bf16.mxu0 %v3106
        %4053 = vmatpush1.bf16.msra.mxu0 %v3105
        %4054 = vmatprep.subr.bf16.mxu0 %v3110
        %4055 = vmatpush1.bf16.msra.mxu0 %v3109
        %4056 = vmatprep.subr.bf16.mxu0 %v3114
        %4057 = vmatpush1.bf16.msra.mxu0 %v3113
        %4058 = vmatprep.subr.bf16.mxu0 %v3118
        %4059 = vmatpush1.bf16.msra.mxu0 %v3117
        %4060 = vmatprep.subr.bf16.mxu0 %v3122
        %4061 = vmatpush1.bf16.msra.mxu0 %v3121
        %4062 = vmatprep.subr.bf16.mxu0 %v3126
        %4063 = vmatpush1.bf16.msra.mxu0 %v3125
        %4064 = vmatprep.subr.bf16.mxu0 %v3130
        %4065 = vmatpush1.bf16.msra.mxu0 %v3129
        %4066 = vmatprep.subr.bf16.mxu0 %v3134
        %4067 = vmatpush1.bf16.msra.mxu0 %v3133
        %4068 = vmatprep.subr.bf16.mxu0 %v3138
        %4069 = vmatpush1.bf16.msra.mxu0 %v3137
        %4070 = vmatprep.mubr.bf16.mxu0 %v1320
        %4071 = vmatmul.mubr.bf16.gmra.mrb[0].mxu0 %v1319
        %v4072 = vpop.f32.mrb[0].mxu0
        %v4073 = vadd.f32 %v4030, %v4072
        %v4074 = vpop.f32.mrb[0].mxu0
        %v4075 = vadd.f32 %v4032, %v4074
        %v4076 = vpop.f32.mrb[0].mxu0
        %v4077 = vadd.f32 %v4034, %v4076
        %v4078 = vpop.f32.mrb[0].mxu0
        %v4079 = vadd.f32 %v4036, %v4078
        %4080 = vdwg.mxu0
        %4081 = vmatprep.subr.bf16.mxu0 %v3142
        %4082 = vmatpush1.bf16.msra.mxu0 %v3141
        %4083 = vmatprep.subr.bf16.mxu0 %v3146
        %4084 = vmatpush1.bf16.msra.mxu0 %v3145
        %4085 = vmatprep.subr.bf16.mxu0 %v3150
        %4086 = vmatpush1.bf16.msra.mxu0 %v3149
        %4087 = vmatprep.subr.bf16.mxu0 %v3154
        %4088 = vmatpush1.bf16.msra.mxu0 %v3153
        %4089 = vmatprep.subr.bf16.mxu0 %v3158
        %4090 = vmatpush1.bf16.msra.mxu0 %v3157
        %4091 = vmatprep.subr.bf16.mxu0 %v3162
        %4092 = vmatpush1.bf16.msra.mxu0 %v3161
        %4093 = vmatprep.subr.bf16.mxu0 %v3166
        %4094 = vmatpush1.bf16.msra.mxu0 %v3165
        %4095 = vmatprep.subr.bf16.mxu0 %v3170
        %4096 = vmatpush1.bf16.msra.mxu0 %v3169
        %4097 = vmatprep.subr.bf16.mxu0 %v3174
        %4098 = vmatpush1.bf16.msra.mxu0 %v3173
        %4099 = vmatprep.subr.bf16.mxu0 %v3178
        %4100 = vmatpush1.bf16.msra.mxu0 %v3177
        %4101 = vmatprep.subr.bf16.mxu0 %v3182
        %4102 = vmatpush1.bf16.msra.mxu0 %v3181
        %4103 = vmatprep.subr.bf16.mxu0 %v3186
        %4104 = vmatpush1.bf16.msra.mxu0 %v3185
        %4105 = vmatprep.subr.bf16.mxu0 %v3190
        %4106 = vmatpush1.bf16.msra.mxu0 %v3189
        %4107 = vmatprep.subr.bf16.mxu0 %v3194
        %4108 = vmatpush1.bf16.msra.mxu0 %v3193
        %4109 = vmatprep.subr.bf16.mxu0 %v3198
        %4110 = vmatpush1.bf16.msra.mxu0 %v3197
        %4111 = vmatprep.subr.bf16.mxu0 %v3202
        %4112 = vmatpush1.bf16.msra.mxu0 %v3201
        %4113 = vmatprep.mubr.bf16.mxu0 %v1322
        %4114 = vmatmul.mubr.bf16.gmra.mrb[0].mxu0 %v1321
        %v4115 = vpop.f32.mrb[0].mxu0
        %v4116 = vadd.f32 %v4073, %v4115
        %v4117 = vpop.f32.mrb[0].mxu0
        %v4118 = vadd.f32 %v4075, %v4117
        %v4119 = vpop.f32.mrb[0].mxu0
        %v4120 = vadd.f32 %v4077, %v4119
        %v4121 = vpop.f32.mrb[0].mxu0
        %v4122 = vadd.f32 %v4079, %v4121
        %4123 = vdwg.mxu0
        %4124 = vmatprep.subr.bf16.mxu0 %v3206
        %4125 = vmatpush1.bf16.msra.mxu0 %v3205
        %4126 = vmatprep.subr.bf16.mxu0 %v3210
        %4127 = vmatpush1.bf16.msra.mxu0 %v3209
        %4128 = vmatprep.subr.bf16.mxu0 %v3214
        %4129 = vmatpush1.bf16.msra.mxu0 %v3213
        %4130 = vmatprep.subr.bf16.mxu0 %v3218
        %4131 = vmatpush1.bf16.msra.mxu0 %v3217
        %4132 = vmatprep.subr.bf16.mxu0 %v3222
        %4133 = vmatpush1.bf16.msra.mxu0 %v3221
        %4134 = vmatprep.subr.bf16.mxu0 %v3226
        %4135 = vmatpush1.bf16.msra.mxu0 %v3225
        %4136 = vmatprep.subr.bf16.mxu0 %v3230
        %4137 = vmatpush1.bf16.msra.mxu0 %v3229
        %4138 = vmatprep.subr.bf16.mxu0 %v3234
        %4139 = vmatpush1.bf16.msra.mxu0 %v3233
        %4140 = vmatprep.subr.bf16.mxu0 %v3238
        %4141 = vmatpush1.bf16.msra.mxu0 %v3237
        %4142 = vmatprep.subr.bf16.mxu0 %v3242
        %4143 = vmatpush1.bf16.msra.mxu0 %v3241
        %4144 = vmatprep.subr.bf16.mxu0 %v3246
        %4145 = vmatpush1.bf16.msra.mxu0 %v3245
        %4146 = vmatprep.subr.bf16.mxu0 %v3250
        %4147 = vmatpush1.bf16.msra.mxu0 %v3249
        %4148 = vmatprep.subr.bf16.mxu0 %v3254
        %4149 = vmatpush1.bf16.msra.mxu0 %v3253
        %4150 = vmatprep.subr.bf16.mxu0 %v3258
        %4151 = vmatpush1.bf16.msra.mxu0 %v3257
        %4152 = vmatprep.subr.bf16.mxu0 %v3262
        %4153 = vmatpush1.bf16.msra.mxu0 %v3261
        %4154 = vmatprep.subr.bf16.mxu0 %v3266
        %4155 = vmatpush1.bf16.msra.mxu0 %v3265
        %4156 = vmatprep.mubr.bf16.mxu0 %v1324
        %4157 = vmatmul.mubr.bf16.gmra.mrb[0].mxu0 %v1323
        %v4158 = vpop.f32.mrb[0].mxu0
        %v4159 = vadd.f32 %v4116, %v4158
        %v4160 = vpop.f32.mrb[0].mxu0
        %v4161 = vadd.f32 %v4118, %v4160
        %v4162 = vpop.f32.mrb[0].mxu0
        %v4163 = vadd.f32 %v4120, %v4162
        %v4164 = vpop.f32.mrb[0].mxu0
        %v4165 = vadd.f32 %v4122, %v4164
        %4166 = vdwg.mxu0
        %v4167 = vmax.f32 %v3901, 0.0
        %v4168 = vmax.f32 %v3903, 0.0
        %v4169 = vmax.f32 %v4159, 0.0
        %v4170 = vmax.f32 %v4161, 0.0
        %v4171 = vmax.f32 %v3905, 0.0
        %v4172 = vmax.f32 %v3907, 0.0
        %v4173 = vmax.f32 %v4163, 0.0
        %v4174 = vmax.f32 %v4165, 0.0
        %v4183 = vrot.slane %v4167, 1
        %v4184 = vrot.slane %v4171, 1
        %v4185 = vsel %vm477, %v4183, %v4184
        %v4186 = vrot.slane %v4168, 1
        %v4187 = vrot.slane %v4172, 1
        %v4188 = vsel %vm477, %v4186, %v4187
        %v4189 = vrot.slane %v4169, 1
        %v4190 = vrot.slane %v4173, 1
        %v4191 = vsel %vm477, %v4189, %v4190
        %v4192 = vrot.slane %v4170, 1
        %v4193 = vrot.slane %v4174, 1
        %v4194 = vsel %vm477, %v4192, %v4193
        %v4203 = vrot.slane %v4167, 2
        %v4204 = vrot.slane %v4171, 2
        %v4205 = vsel %vm1292, %v4203, %v4204
        %v4206 = vrot.slane %v4168, 2
        %v4207 = vrot.slane %v4172, 2
        %v4208 = vsel %vm1292, %v4206, %v4207
        %v4209 = vrot.slane %v4169, 2
        %v4210 = vrot.slane %v4173, 2
        %v4211 = vsel %vm1292, %v4209, %v4210
        %v4212 = vrot.slane %v4170, 2
        %v4213 = vrot.slane %v4174, 2
        %v4214 = vsel %vm1292, %v4212, %v4213
        %v4223 = vpack.c.bf16 %v4171, %v4167
        %v4224 = vpack.c.bf16 %v4172, %v4168
        %v4225 = vpack.c.bf16 %v4173, %v4169
        %v4226 = vpack.c.bf16 %v4174, %v4170
        %v4227 = vpack.c.bf16 %v4184, %v4185
        %v4228 = vpack.c.bf16 %v4187, %v4188
        %v4229 = vpack.c.bf16 %v4190, %v4191
        %v4230 = vpack.c.bf16 %v4193, %v4194
        %v4231 = vpack.c.bf16 %v4204, %v4205
        %v4232 = vpack.c.bf16 %v4207, %v4208
        %v4233 = vpack.c.bf16 %v4210, %v4211
        %v4234 = vpack.c.bf16 %v4213, %v4214
        %v4235 = vld [vmem:[#allocation2] sm:$0xff]
        %v4236 = vld [vmem:[#allocation2 + $0x8] sm:$0xf]
        %v4237 = vld [vmem:[#allocation2 + $0xc] sm:$0xff]
        %v4238 = vld [vmem:[#allocation2 + $0x14] sm:$0xf]
        %v4239 = vld [vmem:[#allocation2 + $0x18] sm:$0xff]
        %v4240 = vld [vmem:[#allocation2 + $0x20] sm:$0xf]
        %v4241 = vld [vmem:[#allocation2 + $0x24] sm:$0xff]
        %v4242 = vld [vmem:[#allocation2 + $0x2c] sm:$0xf]
        %v4243 = vld [vmem:[#allocation2 + $0x30] sm:$0xff]
        %v4244 = vld [vmem:[#allocation2 + $0x38] sm:$0xf]
        %v4245 = vld [vmem:[#allocation2 + $0x3c] sm:$0xff]
        %v4246 = vld [vmem:[#allocation2 + $0x44] sm:$0xf]
        %v4247 = vld [vmem:[#allocation2 + $0x48] sm:$0xff]
        %v4248 = vld [vmem:[#allocation2 + $0x50] sm:$0xf]
        %v4249 = vld [vmem:[#allocation2 + $0x54] sm:$0xff]
        %v4250 = vld [vmem:[#allocation2 + $0x5c] sm:$0xf]
        %v4251 = vld [vmem:[#allocation2 + $0x60] sm:$0xff]
        %v4252 = vld [vmem:[#allocation2 + $0x68] sm:$0xf]
        %v4253 = vld [vmem:[#allocation2 + $0x6c] sm:$0xff]
        %v4254 = vld [vmem:[#allocation2 + $0x74] sm:$0xf]
        %v4255 = vld [vmem:[#allocation2 + $0x78] sm:$0xff]
        %v4256 = vld [vmem:[#allocation2 + $0x80] sm:$0xf]
        %v4257 = vld [vmem:[#allocation2 + $0x84] sm:$0xff]
        %v4258 = vld [vmem:[#allocation2 + $0x8c] sm:$0xf]
        %v4259 = vld [vmem:[#allocation2 + $0x90] sm:$0xff]
        %v4260 = vld [vmem:[#allocation2 + $0x98] sm:$0xf]
        %v4261 = vld [vmem:[#allocation2 + $0x9c] sm:$0xff]
        %v4262 = vld [vmem:[#allocation2 + $0xa4] sm:$0xf]
        %v4263 = vld [vmem:[#allocation2 + $0xa8] sm:$0xff]
        %v4264 = vld [vmem:[#allocation2 + $0xb0] sm:$0xf]
        %v4265 = vld [vmem:[#allocation2 + $0xb4] sm:$0xff]
        %v4266 = vld [vmem:[#allocation2 + $0xbc] sm:$0xf]
        %v4267 = vld [vmem:[#allocation2 + $0xc0] sm:$0xff]
        %v4268 = vld [vmem:[#allocation2 + $0xc8] sm:$0xf]
        %v4269 = vld [vmem:[#allocation2 + $0xcc] sm:$0xff]
        %v4270 = vld [vmem:[#allocation2 + $0xd4] sm:$0xf]
        %v4271 = vld [vmem:[#allocation2 + $0xd8] sm:$0xff]
        %v4272 = vld [vmem:[#allocation2 + $0xe0] sm:$0xf]
        %v4273 = vld [vmem:[#allocation2 + $0xe4] sm:$0xff]
        %v4274 = vld [vmem:[#allocation2 + $0xec] sm:$0xf]
        %v4275 = vld [vmem:[#allocation2 + $0xf0] sm:$0xff]
        %v4276 = vld [vmem:[#allocation2 + $0xf8] sm:$0xf]
        %v4277 = vld [vmem:[#allocation2 + $0xfc] sm:$0xff]
        %v4278 = vld [vmem:[#allocation2 + $0x104] sm:$0xf]
        %v4279 = vld [vmem:[#allocation2 + $0x108] sm:$0xff]
        %v4280 = vld [vmem:[#allocation2 + $0x110] sm:$0xf]
        %v4281 = vld [vmem:[#allocation2 + $0x114] sm:$0xff]
        %v4282 = vld [vmem:[#allocation2 + $0x11c] sm:$0xf]
        %v4283 = vld [vmem:[#allocation2 + $0x120] sm:$0xff]
        %v4284 = vld [vmem:[#allocation2 + $0x128] sm:$0xf]
        %v4285 = vld [vmem:[#allocation2 + $0x12c] sm:$0xff]
        %v4286 = vld [vmem:[#allocation2 + $0x134] sm:$0xf]
        %v4287 = vld [vmem:[#allocation2 + $0x138] sm:$0xff]
        %v4288 = vld [vmem:[#allocation2 + $0x140] sm:$0xf]
        %v4289 = vld [vmem:[#allocation2 + $0x144] sm:$0xff]
        %v4290 = vld [vmem:[#allocation2 + $0x14c] sm:$0xf]
        %v4291 = vld [vmem:[#allocation2 + $0x150] sm:$0xff]
        %v4292 = vld [vmem:[#allocation2 + $0x158] sm:$0xf]
        %v4293 = vld [vmem:[#allocation2 + $0x15c] sm:$0xff]
        %v4294 = vld [vmem:[#allocation2 + $0x164] sm:$0xf]
        %v4295 = vld [vmem:[#allocation2 + $0x168] sm:$0xff]
        %v4296 = vld [vmem:[#allocation2 + $0x170] sm:$0xf]
        %v4297 = vld [vmem:[#allocation2 + $0x174] sm:$0xff]
        %v4298 = vld [vmem:[#allocation2 + $0x17c] sm:$0xf]
        %v4299 = vld [vmem:[#allocation2 + $0x180] sm:$0xff]
        %v4300 = vld [vmem:[#allocation2 + $0x188] sm:$0xf]
        %v4301 = vld [vmem:[#allocation2 + $0x18c] sm:$0xff]
        %v4302 = vld [vmem:[#allocation2 + $0x194] sm:$0xf]
        %v4303 = vld [vmem:[#allocation2 + $0x198] sm:$0xff]
        %v4304 = vld [vmem:[#allocation2 + $0x1a0] sm:$0xf]
        %v4305 = vld [vmem:[#allocation2 + $0x1a4] sm:$0xff]
        %v4306 = vld [vmem:[#allocation2 + $0x1ac] sm:$0xf]
        %v4307 = vld [vmem:[#allocation2 + $0x1b0] sm:$0xff]
        %v4308 = vld [vmem:[#allocation2 + $0x1b8] sm:$0xf]
        %v4309 = vld [vmem:[#allocation2 + $0x1bc] sm:$0xff]
        %v4310 = vld [vmem:[#allocation2 + $0x1c4] sm:$0xf]
        %v4311 = vld [vmem:[#allocation2 + $0x1c8] sm:$0xff]
        %v4312 = vld [vmem:[#allocation2 + $0x1d0] sm:$0xf]
        %v4313 = vld [vmem:[#allocation2 + $0x1d4] sm:$0xff]
        %v4314 = vld [vmem:[#allocation2 + $0x1dc] sm:$0xf]
        %v4315 = vld [vmem:[#allocation2 + $0x1e0] sm:$0xff]
        %v4316 = vld [vmem:[#allocation2 + $0x1e8] sm:$0xf]
        %v4317 = vld [vmem:[#allocation2 + $0x1ec] sm:$0xff]
        %v4318 = vld [vmem:[#allocation2 + $0x1f4] sm:$0xf]
        %v4319 = vld [vmem:[#allocation2 + $0x1f8] sm:$0xff]
        %v4320 = vld [vmem:[#allocation2 + $0x200] sm:$0xf]
        %v4321 = vld [vmem:[#allocation2 + $0x204] sm:$0xff]
        %v4322 = vld [vmem:[#allocation2 + $0x20c] sm:$0xf]
        %v4323 = vld [vmem:[#allocation2 + $0x210] sm:$0xff]
        %v4324 = vld [vmem:[#allocation2 + $0x218] sm:$0xf]
        %v4325 = vld [vmem:[#allocation2 + $0x21c] sm:$0xff]
        %v4326 = vld [vmem:[#allocation2 + $0x224] sm:$0xf]
        %v4327 = vld [vmem:[#allocation2 + $0x228] sm:$0xff]
        %v4328 = vld [vmem:[#allocation2 + $0x230] sm:$0xf]
        %v4329 = vld [vmem:[#allocation2 + $0x234] sm:$0xff]
        %v4330 = vld [vmem:[#allocation2 + $0x23c] sm:$0xf]
        %v4331 = vld [vmem:[#allocation2 + $0x240] sm:$0xff]
        %v4332 = vld [vmem:[#allocation2 + $0x248] sm:$0xf]
        %v4333 = vld [vmem:[#allocation2 + $0x24c] sm:$0xff]
        %v4334 = vld [vmem:[#allocation2 + $0x254] sm:$0xf]
        %v4335 = vld [vmem:[#allocation2 + $0x258] sm:$0xff]
        %v4336 = vld [vmem:[#allocation2 + $0x260] sm:$0xf]
        %v4337 = vld [vmem:[#allocation2 + $0x264] sm:$0xff]
        %v4338 = vld [vmem:[#allocation2 + $0x26c] sm:$0xf]
        %v4339 = vld [vmem:[#allocation2 + $0x270] sm:$0xff]
        %v4340 = vld [vmem:[#allocation2 + $0x278] sm:$0xf]
        %v4341 = vld [vmem:[#allocation2 + $0x27c] sm:$0xff]
        %v4342 = vld [vmem:[#allocation2 + $0x284] sm:$0xf]
        %v4343 = vld [vmem:[#allocation2 + $0x288] sm:$0xff]
        %v4344 = vld [vmem:[#allocation2 + $0x290] sm:$0xf]
        %v4345 = vld [vmem:[#allocation2 + $0x294] sm:$0xff]
        %v4346 = vld [vmem:[#allocation2 + $0x29c] sm:$0xf]
        %v4347 = vld [vmem:[#allocation2 + $0x2a0] sm:$0xff]
        %v4348 = vld [vmem:[#allocation2 + $0x2a8] sm:$0xf]
        %v4349 = vld [vmem:[#allocation2 + $0x2ac] sm:$0xff]
        %v4350 = vld [vmem:[#allocation2 + $0x2b4] sm:$0xf]
        %v4351 = vld [vmem:[#allocation2 + $0x2b8] sm:$0xff]
        %v4352 = vld [vmem:[#allocation2 + $0x2c0] sm:$0xf]
        %v4353 = vld [vmem:[#allocation2 + $0x2c4] sm:$0xff]
        %v4354 = vld [vmem:[#allocation2 + $0x2cc] sm:$0xf]
        %v4355 = vld [vmem:[#allocation2 + $0x2d0] sm:$0xff]
        %v4356 = vld [vmem:[#allocation2 + $0x2d8] sm:$0xf]
        %v4357 = vld [vmem:[#allocation2 + $0x2dc] sm:$0xff]
        %v4358 = vld [vmem:[#allocation2 + $0x2e4] sm:$0xf]
        %v4359 = vld [vmem:[#allocation2 + $0x2e8] sm:$0xff]
        %v4360 = vld [vmem:[#allocation2 + $0x2f0] sm:$0xf]
        %v4361 = vld [vmem:[#allocation2 + $0x2f4] sm:$0xff]
        %v4362 = vld [vmem:[#allocation2 + $0x2fc] sm:$0xf]
        %v4363 = vld [vmem:[#allocation2 + $0x300] sm:$0xff]
        %v4364 = vld [vmem:[#allocation2 + $0x308] sm:$0xf]
        %v4365 = vld [vmem:[#allocation2 + $0x30c] sm:$0xff]
        %v4366 = vld [vmem:[#allocation2 + $0x314] sm:$0xf]
        %v4367 = vld [vmem:[#allocation2 + $0x318] sm:$0xff]
        %v4368 = vld [vmem:[#allocation2 + $0x320] sm:$0xf]
        %v4369 = vld [vmem:[#allocation2 + $0x324] sm:$0xff]
        %v4370 = vld [vmem:[#allocation2 + $0x32c] sm:$0xf]
        %v4371 = vld [vmem:[#allocation2 + $0x330] sm:$0xff]
        %v4372 = vld [vmem:[#allocation2 + $0x338] sm:$0xf]
        %v4373 = vld [vmem:[#allocation2 + $0x33c] sm:$0xff]
        %v4374 = vld [vmem:[#allocation2 + $0x344] sm:$0xf]
        %v4375 = vld [vmem:[#allocation2 + $0x348] sm:$0xff]
        %v4376 = vld [vmem:[#allocation2 + $0x350] sm:$0xf]
        %v4377 = vld [vmem:[#allocation2 + $0x354] sm:$0xff]
        %v4378 = vld [vmem:[#allocation2 + $0x35c] sm:$0xf]
        %v4379 = vld [vmem:[#allocation2 + $0x360] sm:$0xff]
        %v4380 = vld [vmem:[#allocation2 + $0x368] sm:$0xf]
        %v4381 = vld [vmem:[#allocation2 + $0x36c] sm:$0xff]
        %v4382 = vld [vmem:[#allocation2 + $0x374] sm:$0xf]
        %v4383 = vld [vmem:[#allocation2 + $0x378] sm:$0xff]
        %v4384 = vld [vmem:[#allocation2 + $0x380] sm:$0xf]
        %v4385 = vld [vmem:[#allocation2 + $0x384] sm:$0xff]
        %v4386 = vld [vmem:[#allocation2 + $0x38c] sm:$0xf]
        %v4387 = vld [vmem:[#allocation2 + $0x390] sm:$0xff]
        %v4388 = vld [vmem:[#allocation2 + $0x398] sm:$0xf]
        %v4389 = vld [vmem:[#allocation2 + $0x39c] sm:$0xff]
        %v4390 = vld [vmem:[#allocation2 + $0x3a4] sm:$0xf]
        %v4391 = vld [vmem:[#allocation2 + $0x3a8] sm:$0xff]
        %v4392 = vld [vmem:[#allocation2 + $0x3b0] sm:$0xf]
        %v4393 = vld [vmem:[#allocation2 + $0x3b4] sm:$0xff]
        %v4394 = vld [vmem:[#allocation2 + $0x3bc] sm:$0xf]
        %v4395 = vld [vmem:[#allocation2 + $0x3c0] sm:$0xff]
        %v4396 = vld [vmem:[#allocation2 + $0x3c8] sm:$0xf]
        %v4397 = vld [vmem:[#allocation2 + $0x3cc] sm:$0xff]
        %v4398 = vld [vmem:[#allocation2 + $0x3d4] sm:$0xf]
        %v4399 = vld [vmem:[#allocation2 + $0x3d8] sm:$0xff]
        %v4400 = vld [vmem:[#allocation2 + $0x3e0] sm:$0xf]
        %v4401 = vld [vmem:[#allocation2 + $0x3e4] sm:$0xff]
        %v4402 = vld [vmem:[#allocation2 + $0x3ec] sm:$0xf]
        %v4403 = vld [vmem:[#allocation2 + $0x3f0] sm:$0xff]
        %v4404 = vld [vmem:[#allocation2 + $0x3f8] sm:$0xf]
        %v4405 = vld [vmem:[#allocation2 + $0x3fc] sm:$0xff]
        %v4406 = vld [vmem:[#allocation2 + $0x404] sm:$0xf]
        %v4407 = vld [vmem:[#allocation2 + $0x408] sm:$0xff]
        %v4408 = vld [vmem:[#allocation2 + $0x410] sm:$0xf]
        %v4409 = vld [vmem:[#allocation2 + $0x414] sm:$0xff]
        %v4410 = vld [vmem:[#allocation2 + $0x41c] sm:$0xf]
        %v4411 = vld [vmem:[#allocation2 + $0x420] sm:$0xff]
        %v4412 = vld [vmem:[#allocation2 + $0x428] sm:$0xf]
        %v4413 = vld [vmem:[#allocation2 + $0x42c] sm:$0xff]
        %v4414 = vld [vmem:[#allocation2 + $0x434] sm:$0xf]
        %v4415 = vld [vmem:[#allocation2 + $0x438] sm:$0xff]
        %v4416 = vld [vmem:[#allocation2 + $0x440] sm:$0xf]
        %v4417 = vld [vmem:[#allocation2 + $0x444] sm:$0xff]
        %v4418 = vld [vmem:[#allocation2 + $0x44c] sm:$0xf]
        %v4419 = vld [vmem:[#allocation2 + $0x450] sm:$0xff]
        %v4420 = vld [vmem:[#allocation2 + $0x458] sm:$0xf]
        %v4421 = vld [vmem:[#allocation2 + $0x45c] sm:$0xff]
        %v4422 = vld [vmem:[#allocation2 + $0x464] sm:$0xf]
        %v4423 = vld [vmem:[#allocation2 + $0x468] sm:$0xff]
        %v4424 = vld [vmem:[#allocation2 + $0x470] sm:$0xf]
        %v4425 = vld [vmem:[#allocation2 + $0x474] sm:$0xff]
        %v4426 = vld [vmem:[#allocation2 + $0x47c] sm:$0xf]
        %v4427 = vld [vmem:[#allocation2 + $0x480] sm:$0xff]
        %v4428 = vld [vmem:[#allocation2 + $0x488] sm:$0xf]
        %v4429 = vld [vmem:[#allocation2 + $0x48c] sm:$0xff]
        %v4430 = vld [vmem:[#allocation2 + $0x494] sm:$0xf]
        %v4431 = vld [vmem:[#allocation2 + $0x498] sm:$0xff]
        %v4432 = vld [vmem:[#allocation2 + $0x4a0] sm:$0xf]
        %v4433 = vld [vmem:[#allocation2 + $0x4a4] sm:$0xff]
        %v4434 = vld [vmem:[#allocation2 + $0x4ac] sm:$0xf]
        %v4435 = vld [vmem:[#allocation2 + $0x4b0] sm:$0xff]
        %v4436 = vld [vmem:[#allocation2 + $0x4b8] sm:$0xf]
        %v4437 = vld [vmem:[#allocation2 + $0x4bc] sm:$0xff]
        %v4438 = vld [vmem:[#allocation2 + $0x4c4] sm:$0xf]
        %v4439 = vld [vmem:[#allocation2 + $0x4c8] sm:$0xff]
        %v4440 = vld [vmem:[#allocation2 + $0x4d0] sm:$0xf]
        %v4441 = vld [vmem:[#allocation2 + $0x4d4] sm:$0xff]
        %v4442 = vld [vmem:[#allocation2 + $0x4dc] sm:$0xf]
        %v4443 = vld [vmem:[#allocation2 + $0x4e0] sm:$0xff]
        %v4444 = vld [vmem:[#allocation2 + $0x4e8] sm:$0xf]
        %v4445 = vld [vmem:[#allocation2 + $0x4ec] sm:$0xff]
        %v4446 = vld [vmem:[#allocation2 + $0x4f4] sm:$0xf]
        %v4447 = vld [vmem:[#allocation2 + $0x4f8] sm:$0xff]
        %v4448 = vld [vmem:[#allocation2 + $0x500] sm:$0xf]
        %v4449 = vld [vmem:[#allocation2 + $0x504] sm:$0xff]
        %v4450 = vld [vmem:[#allocation2 + $0x50c] sm:$0xf]
        %v4451 = vld [vmem:[#allocation2 + $0x510] sm:$0xff]
        %v4452 = vld [vmem:[#allocation2 + $0x518] sm:$0xf]
        %v4453 = vld [vmem:[#allocation2 + $0x51c] sm:$0xff]
        %v4454 = vld [vmem:[#allocation2 + $0x524] sm:$0xf]
        %v4455 = vld [vmem:[#allocation2 + $0x528] sm:$0xff]
        %v4456 = vld [vmem:[#allocation2 + $0x530] sm:$0xf]
        %v4457 = vld [vmem:[#allocation2 + $0x534] sm:$0xff]
        %v4458 = vld [vmem:[#allocation2 + $0x53c] sm:$0xf]
        %v4459 = vld [vmem:[#allocation2 + $0x540] sm:$0xff]
        %v4460 = vld [vmem:[#allocation2 + $0x548] sm:$0xf]
        %v4461 = vld [vmem:[#allocation2 + $0x54c] sm:$0xff]
        %v4462 = vld [vmem:[#allocation2 + $0x554] sm:$0xf]
        %v4463 = vld [vmem:[#allocation2 + $0x558] sm:$0xff]
        %v4464 = vld [vmem:[#allocation2 + $0x560] sm:$0xf]
        %v4465 = vld [vmem:[#allocation2 + $0x564] sm:$0xff]
        %v4466 = vld [vmem:[#allocation2 + $0x56c] sm:$0xf]
        %v4467 = vld [vmem:[#allocation2 + $0x570] sm:$0xff]
        %v4468 = vld [vmem:[#allocation2 + $0x578] sm:$0xf]
        %v4469 = vld [vmem:[#allocation2 + $0x57c] sm:$0xff]
        %v4470 = vld [vmem:[#allocation2 + $0x584] sm:$0xf]
        %v4471 = vld [vmem:[#allocation2 + $0x588] sm:$0xff]
        %v4472 = vld [vmem:[#allocation2 + $0x590] sm:$0xf]
        %v4473 = vld [vmem:[#allocation2 + $0x594] sm:$0xff]
        %v4474 = vld [vmem:[#allocation2 + $0x59c] sm:$0xf]
        %v4475 = vld [vmem:[#allocation2 + $0x5a0] sm:$0xff]
        %v4476 = vld [vmem:[#allocation2 + $0x5a8] sm:$0xf]
        %v4477 = vld [vmem:[#allocation2 + $0x5ac] sm:$0xff]
        %v4478 = vld [vmem:[#allocation2 + $0x5b4] sm:$0xf]
        %v4479 = vld [vmem:[#allocation2 + $0x5b8] sm:$0xff]
        %v4480 = vld [vmem:[#allocation2 + $0x5c0] sm:$0xf]
        %v4481 = vld [vmem:[#allocation2 + $0x5c4] sm:$0xff]
        %v4482 = vld [vmem:[#allocation2 + $0x5cc] sm:$0xf]
        %v4483 = vld [vmem:[#allocation2 + $0x5d0] sm:$0xff]
        %v4484 = vld [vmem:[#allocation2 + $0x5d8] sm:$0xf]
        %v4485 = vld [vmem:[#allocation2 + $0x5dc] sm:$0xff]
        %v4486 = vld [vmem:[#allocation2 + $0x5e4] sm:$0xf]
        %v4487 = vld [vmem:[#allocation2 + $0x5e8] sm:$0xff]
        %v4488 = vld [vmem:[#allocation2 + $0x5f0] sm:$0xf]
        %v4489 = vld [vmem:[#allocation2 + $0x5f4] sm:$0xff]
        %v4490 = vld [vmem:[#allocation2 + $0x5fc] sm:$0xf]
        %v4491 = vld [vmem:[#allocation2 + $0x600] sm:$0xff]
        %v4492 = vld [vmem:[#allocation2 + $0x608] sm:$0xf]
        %v4493 = vld [vmem:[#allocation2 + $0x60c] sm:$0xff]
        %v4494 = vld [vmem:[#allocation2 + $0x614] sm:$0xf]
        %v4495 = vld [vmem:[#allocation2 + $0x618] sm:$0xff]
        %v4496 = vld [vmem:[#allocation2 + $0x620] sm:$0xf]
        %v4497 = vld [vmem:[#allocation2 + $0x624] sm:$0xff]
        %v4498 = vld [vmem:[#allocation2 + $0x62c] sm:$0xf]
        %v4499 = vld [vmem:[#allocation2 + $0x630] sm:$0xff]
        %v4500 = vld [vmem:[#allocation2 + $0x638] sm:$0xf]
        %v4501 = vld [vmem:[#allocation2 + $0x63c] sm:$0xff]
        %v4502 = vld [vmem:[#allocation2 + $0x644] sm:$0xf]
        %v4503 = vld [vmem:[#allocation2 + $0x648] sm:$0xff]
        %v4504 = vld [vmem:[#allocation2 + $0x650] sm:$0xf]
        %v4505 = vld [vmem:[#allocation2 + $0x654] sm:$0xff]
        %v4506 = vld [vmem:[#allocation2 + $0x65c] sm:$0xf]
        %v4507 = vld [vmem:[#allocation2 + $0x660] sm:$0xff]
        %v4508 = vld [vmem:[#allocation2 + $0x668] sm:$0xf]
        %v4509 = vld [vmem:[#allocation2 + $0x66c] sm:$0xff]
        %v4510 = vld [vmem:[#allocation2 + $0x674] sm:$0xf]
        %v4511 = vld [vmem:[#allocation2 + $0x678] sm:$0xff]
        %v4512 = vld [vmem:[#allocation2 + $0x680] sm:$0xf]
        %v4513 = vld [vmem:[#allocation2 + $0x684] sm:$0xff]
        %v4514 = vld [vmem:[#allocation2 + $0x68c] sm:$0xf]
        %v4515 = vld [vmem:[#allocation2 + $0x690] sm:$0xff]
        %v4516 = vld [vmem:[#allocation2 + $0x698] sm:$0xf]
        %v4517 = vld [vmem:[#allocation2 + $0x69c] sm:$0xff]
        %v4518 = vld [vmem:[#allocation2 + $0x6a4] sm:$0xf]
        %v4519 = vld [vmem:[#allocation2 + $0x6a8] sm:$0xff]
        %v4520 = vld [vmem:[#allocation2 + $0x6b0] sm:$0xf]
        %v4521 = vld [vmem:[#allocation2 + $0x6b4] sm:$0xff]
        %v4522 = vld [vmem:[#allocation2 + $0x6bc] sm:$0xf]
        %v4523 = vld [vmem:[#allocation2 + $0x6c0] sm:$0xff]
        %v4524 = vld [vmem:[#allocation2 + $0x6c8] sm:$0xf]
        %v4525 = vld [vmem:[#allocation2 + $0x6cc] sm:$0xff]
        %v4526 = vld [vmem:[#allocation2 + $0x6d4] sm:$0xf]
        %v4527 = vld [vmem:[#allocation2 + $0x6d8] sm:$0xff]
        %v4528 = vld [vmem:[#allocation2 + $0x6e0] sm:$0xf]
        %v4529 = vld [vmem:[#allocation2 + $0x6e4] sm:$0xff]
        %v4530 = vld [vmem:[#allocation2 + $0x6ec] sm:$0xf]
        %v4531 = vld [vmem:[#allocation2 + $0x6f0] sm:$0xff]
        %v4532 = vld [vmem:[#allocation2 + $0x6f8] sm:$0xf]
        %v4533 = vld [vmem:[#allocation2 + $0x6fc] sm:$0xff]
        %v4534 = vld [vmem:[#allocation2 + $0x704] sm:$0xf]
        %v4535 = vld [vmem:[#allocation2 + $0x708] sm:$0xff]
        %v4536 = vld [vmem:[#allocation2 + $0x710] sm:$0xf]
        %v4537 = vld [vmem:[#allocation2 + $0x714] sm:$0xff]
        %v4538 = vld [vmem:[#allocation2 + $0x71c] sm:$0xf]
        %v4539 = vld [vmem:[#allocation2 + $0x720] sm:$0xff]
        %v4540 = vld [vmem:[#allocation2 + $0x728] sm:$0xf]
        %v4541 = vld [vmem:[#allocation2 + $0x72c] sm:$0xff]
        %v4542 = vld [vmem:[#allocation2 + $0x734] sm:$0xf]
        %v4543 = vld [vmem:[#allocation2 + $0x738] sm:$0xff]
        %v4544 = vld [vmem:[#allocation2 + $0x740] sm:$0xf]
        %v4545 = vld [vmem:[#allocation2 + $0x744] sm:$0xff]
        %v4546 = vld [vmem:[#allocation2 + $0x74c] sm:$0xf]
        %v4547 = vld [vmem:[#allocation2 + $0x750] sm:$0xff]
        %v4548 = vld [vmem:[#allocation2 + $0x758] sm:$0xf]
        %v4549 = vld [vmem:[#allocation2 + $0x75c] sm:$0xff]
        %v4550 = vld [vmem:[#allocation2 + $0x764] sm:$0xf]
        %v4551 = vld [vmem:[#allocation2 + $0x768] sm:$0xff]
        %v4552 = vld [vmem:[#allocation2 + $0x770] sm:$0xf]
        %v4553 = vld [vmem:[#allocation2 + $0x774] sm:$0xff]
        %v4554 = vld [vmem:[#allocation2 + $0x77c] sm:$0xf]
        %v4555 = vld [vmem:[#allocation2 + $0x780] sm:$0xff]
        %v4556 = vld [vmem:[#allocation2 + $0x788] sm:$0xf]
        %v4557 = vld [vmem:[#allocation2 + $0x78c] sm:$0xff]
        %v4558 = vld [vmem:[#allocation2 + $0x794] sm:$0xf]
        %v4559 = vld [vmem:[#allocation2 + $0x798] sm:$0xff]
        %v4560 = vld [vmem:[#allocation2 + $0x7a0] sm:$0xf]
        %v4561 = vld [vmem:[#allocation2 + $0x7a4] sm:$0xff]
        %v4562 = vld [vmem:[#allocation2 + $0x7ac] sm:$0xf]
        %v4563 = vld [vmem:[#allocation2 + $0x7b0] sm:$0xff]
        %v4564 = vld [vmem:[#allocation2 + $0x7b8] sm:$0xf]
        %v4565 = vld [vmem:[#allocation2 + $0x7bc] sm:$0xff]
        %v4566 = vld [vmem:[#allocation2 + $0x7c4] sm:$0xf]
        %v4567 = vld [vmem:[#allocation2 + $0x7c8] sm:$0xff]
        %v4568 = vld [vmem:[#allocation2 + $0x7d0] sm:$0xf]
        %v4569 = vld [vmem:[#allocation2 + $0x7d4] sm:$0xff]
        %v4570 = vld [vmem:[#allocation2 + $0x7dc] sm:$0xf]
        %v4571 = vld [vmem:[#allocation2 + $0x7e0] sm:$0xff]
        %v4572 = vld [vmem:[#allocation2 + $0x7e8] sm:$0xf]
        %v4573 = vld [vmem:[#allocation2 + $0x7ec] sm:$0xff]
        %v4574 = vld [vmem:[#allocation2 + $0x7f4] sm:$0xf]
        %v4575 = vld [vmem:[#allocation2 + $0x7f8] sm:$0xff]
        %v4576 = vld [vmem:[#allocation2 + $0x800] sm:$0xf]
        %v4577 = vld [vmem:[#allocation2 + $0x804] sm:$0xff]
        %v4578 = vld [vmem:[#allocation2 + $0x80c] sm:$0xf]
        %v4579 = vld [vmem:[#allocation2 + $0x810] sm:$0xff]
        %v4580 = vld [vmem:[#allocation2 + $0x818] sm:$0xf]
        %v4581 = vld [vmem:[#allocation2 + $0x81c] sm:$0xff]
        %v4582 = vld [vmem:[#allocation2 + $0x824] sm:$0xf]
        %v4583 = vld [vmem:[#allocation2 + $0x828] sm:$0xff]
        %v4584 = vld [vmem:[#allocation2 + $0x830] sm:$0xf]
        %v4585 = vld [vmem:[#allocation2 + $0x834] sm:$0xff]
        %v4586 = vld [vmem:[#allocation2 + $0x83c] sm:$0xf]
        %v4587 = vld [vmem:[#allocation2 + $0x840] sm:$0xff]
        %v4588 = vld [vmem:[#allocation2 + $0x848] sm:$0xf]
        %v4589 = vld [vmem:[#allocation2 + $0x84c] sm:$0xff]
        %v4590 = vld [vmem:[#allocation2 + $0x854] sm:$0xf]
        %v4591 = vld [vmem:[#allocation2 + $0x858] sm:$0xff]
        %v4592 = vld [vmem:[#allocation2 + $0x860] sm:$0xf]
        %v4593 = vld [vmem:[#allocation2 + $0x864] sm:$0xff]
        %v4594 = vld [vmem:[#allocation2 + $0x86c] sm:$0xf]
        %v4595 = vld [vmem:[#allocation2 + $0x870] sm:$0xff]
        %v4596 = vld [vmem:[#allocation2 + $0x878] sm:$0xf]
        %v4597 = vld [vmem:[#allocation2 + $0x87c] sm:$0xff]
        %v4598 = vld [vmem:[#allocation2 + $0x884] sm:$0xf]
        %v4599 = vld [vmem:[#allocation2 + $0x888] sm:$0xff]
        %v4600 = vld [vmem:[#allocation2 + $0x890] sm:$0xf]
        %v4601 = vld [vmem:[#allocation2 + $0x894] sm:$0xff]
        %v4602 = vld [vmem:[#allocation2 + $0x89c] sm:$0xf]
        %v4603 = vld [vmem:[#allocation2 + $0x8a0] sm:$0xff]
        %v4604 = vld [vmem:[#allocation2 + $0x8a8] sm:$0xf]
        %v4605 = vld [vmem:[#allocation2 + $0x8ac] sm:$0xff]
        %v4606 = vld [vmem:[#allocation2 + $0x8b4] sm:$0xf]
        %v4607 = vld [vmem:[#allocation2 + $0x8b8] sm:$0xff]
        %v4608 = vld [vmem:[#allocation2 + $0x8c0] sm:$0xf]
        %v4609 = vld [vmem:[#allocation2 + $0x8c4] sm:$0xff]
        %v4610 = vld [vmem:[#allocation2 + $0x8cc] sm:$0xf]
        %v4611 = vld [vmem:[#allocation2 + $0x8d0] sm:$0xff]
        %v4612 = vld [vmem:[#allocation2 + $0x8d8] sm:$0xf]
        %v4613 = vld [vmem:[#allocation2 + $0x8dc] sm:$0xff]
        %v4614 = vld [vmem:[#allocation2 + $0x8e4] sm:$0xf]
        %v4615 = vld [vmem:[#allocation2 + $0x8e8] sm:$0xff]
        %v4616 = vld [vmem:[#allocation2 + $0x8f0] sm:$0xf]
        %v4617 = vld [vmem:[#allocation2 + $0x8f4] sm:$0xff]
        %v4618 = vld [vmem:[#allocation2 + $0x8fc] sm:$0xf]
        %v4619 = vld [vmem:[%s6] sm:$0x7]
        %v4621 = vlaneseq
        %v4622 = vshrl.u32 %v4621, 7
        %v4623 = vsub.s32 0, %v4622
        %v4624 = vrot.slane %v4619, %v4623
        %v4625 = vlaneseq
        %v4626 = vshrl.u32 %v4625, 7
        %v4627 = vsub.s32 1, %v4626
        %v4628 = vrot.slane %v4619, %v4627
        %v4629 = vlaneseq
        %v4630 = vshrl.u32 %v4629, 7
        %v4631 = vsub.s32 2, %v4630
        %v4632 = vrot.slane %v4619, %v4631
        %v5020 = vunpack.c.l.b16 %v4235
        %v5021 = vunpack.c.h.b16 %v4235
        %v5022 = vunpack.c.l.b16 %v4236
        %v5023 = vunpack.c.l.b16 %v4237
        %v5024 = vunpack.c.h.b16 %v4237
        %v5025 = vunpack.c.l.b16 %v4238
        %v5026 = vunpack.c.l.b16 %v4239
        %v5027 = vunpack.c.h.b16 %v4239
        %v5028 = vunpack.c.l.b16 %v4240
        %v5029 = vunpack.c.l.b16 %v4241
        %v5030 = vunpack.c.h.b16 %v4241
        %v5031 = vunpack.c.l.b16 %v4242
        %v5032 = vunpack.c.l.b16 %v4243
        %v5033 = vunpack.c.h.b16 %v4243
        %v5034 = vunpack.c.l.b16 %v4244
        %v5035 = vunpack.c.l.b16 %v4245
        %v5036 = vunpack.c.h.b16 %v4245
        %v5037 = vunpack.c.l.b16 %v4246
        %v5038 = vunpack.c.l.b16 %v4247
        %v5039 = vunpack.c.h.b16 %v4247
        %v5040 = vunpack.c.l.b16 %v4248
        %v5041 = vunpack.c.l.b16 %v4249
        %v5042 = vunpack.c.h.b16 %v4249
        %v5043 = vunpack.c.l.b16 %v4250
        %v5044 = vunpack.c.l.b16 %v4251
        %v5045 = vunpack.c.h.b16 %v4251
        %v5046 = vunpack.c.l.b16 %v4252
        %v5047 = vunpack.c.l.b16 %v4253
        %v5048 = vunpack.c.h.b16 %v4253
        %v5049 = vunpack.c.l.b16 %v4254
        %v5050 = vunpack.c.l.b16 %v4255
        %v5051 = vunpack.c.h.b16 %v4255
        %v5052 = vunpack.c.l.b16 %v4256
        %v5053 = vunpack.c.l.b16 %v4257
        %v5054 = vunpack.c.h.b16 %v4257
        %v5055 = vunpack.c.l.b16 %v4258
        %v5056 = vunpack.c.l.b16 %v4259
        %v5057 = vunpack.c.h.b16 %v4259
        %v5058 = vunpack.c.l.b16 %v4260
        %v5059 = vunpack.c.l.b16 %v4261
        %v5060 = vunpack.c.h.b16 %v4261
        %v5061 = vunpack.c.l.b16 %v4262
        %v5062 = vunpack.c.l.b16 %v4263
        %v5063 = vunpack.c.h.b16 %v4263
        %v5064 = vunpack.c.l.b16 %v4264
        %v5065 = vunpack.c.l.b16 %v4265
        %v5066 = vunpack.c.h.b16 %v4265
        %v5067 = vunpack.c.l.b16 %v4266
        %v5068 = vunpack.c.l.b16 %v4267
        %v5069 = vunpack.c.h.b16 %v4267
        %v5070 = vunpack.c.l.b16 %v4268
        %v5071 = vunpack.c.l.b16 %v4269
        %v5072 = vunpack.c.h.b16 %v4269
        %v5073 = vunpack.c.l.b16 %v4270
        %v5074 = vunpack.c.l.b16 %v4271
        %v5075 = vunpack.c.h.b16 %v4271
        %v5076 = vunpack.c.l.b16 %v4272
        %v5077 = vunpack.c.l.b16 %v4273
        %v5078 = vunpack.c.h.b16 %v4273
        %v5079 = vunpack.c.l.b16 %v4274
        %v5080 = vunpack.c.l.b16 %v4275
        %v5081 = vunpack.c.h.b16 %v4275
        %v5082 = vunpack.c.l.b16 %v4276
        %v5083 = vunpack.c.l.b16 %v4277
        %v5084 = vunpack.c.h.b16 %v4277
        %v5085 = vunpack.c.l.b16 %v4278
        %v5086 = vunpack.c.l.b16 %v4279
        %v5087 = vunpack.c.h.b16 %v4279
        %v5088 = vunpack.c.l.b16 %v4280
        %v5089 = vunpack.c.l.b16 %v4281
        %v5090 = vunpack.c.h.b16 %v4281
        %v5091 = vunpack.c.l.b16 %v4282
        %v5092 = vunpack.c.l.b16 %v4283
        %v5093 = vunpack.c.h.b16 %v4283
        %v5094 = vunpack.c.l.b16 %v4284
        %v5095 = vunpack.c.l.b16 %v4285
        %v5096 = vunpack.c.h.b16 %v4285
        %v5097 = vunpack.c.l.b16 %v4286
        %v5098 = vunpack.c.l.b16 %v4287
        %v5099 = vunpack.c.h.b16 %v4287
        %v5100 = vunpack.c.l.b16 %v4288
        %v5101 = vunpack.c.l.b16 %v4289
        %v5102 = vunpack.c.h.b16 %v4289
        %v5103 = vunpack.c.l.b16 %v4290
        %v5104 = vunpack.c.l.b16 %v4291
        %v5105 = vunpack.c.h.b16 %v4291
        %v5106 = vunpack.c.l.b16 %v4292
        %v5107 = vunpack.c.l.b16 %v4293
        %v5108 = vunpack.c.h.b16 %v4293
        %v5109 = vunpack.c.l.b16 %v4294
        %v5110 = vunpack.c.l.b16 %v4295
        %v5111 = vunpack.c.h.b16 %v4295
        %v5112 = vunpack.c.l.b16 %v4296
        %v5113 = vunpack.c.l.b16 %v4297
        %v5114 = vunpack.c.h.b16 %v4297
        %v5115 = vunpack.c.l.b16 %v4298
        %v5116 = vunpack.c.l.b16 %v4299
        %v5117 = vunpack.c.h.b16 %v4299
        %v5118 = vunpack.c.l.b16 %v4300
        %v5119 = vunpack.c.l.b16 %v4301
        %v5120 = vunpack.c.h.b16 %v4301
        %v5121 = vunpack.c.l.b16 %v4302
        %v5122 = vunpack.c.l.b16 %v4303
        %v5123 = vunpack.c.h.b16 %v4303
        %v5124 = vunpack.c.l.b16 %v4304
        %v5125 = vunpack.c.l.b16 %v4305
        %v5126 = vunpack.c.h.b16 %v4305
        %v5127 = vunpack.c.l.b16 %v4306
        %v5128 = vunpack.c.l.b16 %v4307
        %v5129 = vunpack.c.h.b16 %v4307
        %v5130 = vunpack.c.l.b16 %v4308
        %v5131 = vunpack.c.l.b16 %v4309
        %v5132 = vunpack.c.h.b16 %v4309
        %v5133 = vunpack.c.l.b16 %v4310
        %v5134 = vunpack.c.l.b16 %v4311
        %v5135 = vunpack.c.h.b16 %v4311
        %v5136 = vunpack.c.l.b16 %v4312
        %v5137 = vunpack.c.l.b16 %v4313
        %v5138 = vunpack.c.h.b16 %v4313
        %v5139 = vunpack.c.l.b16 %v4314
        %v5140 = vunpack.c.l.b16 %v4315
        %v5141 = vunpack.c.h.b16 %v4315
        %v5142 = vunpack.c.l.b16 %v4316
        %v5143 = vunpack.c.l.b16 %v4317
        %v5144 = vunpack.c.h.b16 %v4317
        %v5145 = vunpack.c.l.b16 %v4318
        %v5146 = vunpack.c.l.b16 %v4319
        %v5147 = vunpack.c.h.b16 %v4319
        %v5148 = vunpack.c.l.b16 %v4320
        %v5149 = vunpack.c.l.b16 %v4321
        %v5150 = vunpack.c.h.b16 %v4321
        %v5151 = vunpack.c.l.b16 %v4322
        %v5152 = vunpack.c.l.b16 %v4323
        %v5153 = vunpack.c.h.b16 %v4323
        %v5154 = vunpack.c.l.b16 %v4324
        %v5155 = vunpack.c.l.b16 %v4325
        %v5156 = vunpack.c.h.b16 %v4325
        %v5157 = vunpack.c.l.b16 %v4326
        %v5158 = vunpack.c.l.b16 %v4327
        %v5159 = vunpack.c.h.b16 %v4327
        %v5160 = vunpack.c.l.b16 %v4328
        %v5161 = vunpack.c.l.b16 %v4329
        %v5162 = vunpack.c.h.b16 %v4329
        %v5163 = vunpack.c.l.b16 %v4330
        %v5164 = vunpack.c.l.b16 %v4331
        %v5165 = vunpack.c.h.b16 %v4331
        %v5166 = vunpack.c.l.b16 %v4332
        %v5167 = vunpack.c.l.b16 %v4333
        %v5168 = vunpack.c.h.b16 %v4333
        %v5169 = vunpack.c.l.b16 %v4334
        %v5170 = vunpack.c.l.b16 %v4335
        %v5171 = vunpack.c.h.b16 %v4335
        %v5172 = vunpack.c.l.b16 %v4336
        %v5173 = vunpack.c.l.b16 %v4337
        %v5174 = vunpack.c.h.b16 %v4337
        %v5175 = vunpack.c.l.b16 %v4338
        %v5176 = vunpack.c.l.b16 %v4339
        %v5177 = vunpack.c.h.b16 %v4339
        %v5178 = vunpack.c.l.b16 %v4340
        %v5179 = vunpack.c.l.b16 %v4341
        %v5180 = vunpack.c.h.b16 %v4341
        %v5181 = vunpack.c.l.b16 %v4342
        %v5182 = vunpack.c.l.b16 %v4343
        %v5183 = vunpack.c.h.b16 %v4343
        %v5184 = vunpack.c.l.b16 %v4344
        %v5185 = vunpack.c.l.b16 %v4345
        %v5186 = vunpack.c.h.b16 %v4345
        %v5187 = vunpack.c.l.b16 %v4346
        %v5188 = vunpack.c.l.b16 %v4347
        %v5189 = vunpack.c.h.b16 %v4347
        %v5190 = vunpack.c.l.b16 %v4348
        %v5191 = vunpack.c.l.b16 %v4349
        %v5192 = vunpack.c.h.b16 %v4349
        %v5193 = vunpack.c.l.b16 %v4350
        %v5194 = vunpack.c.l.b16 %v4351
        %v5195 = vunpack.c.h.b16 %v4351
        %v5196 = vunpack.c.l.b16 %v4352
        %v5197 = vunpack.c.l.b16 %v4353
        %v5198 = vunpack.c.h.b16 %v4353
        %v5199 = vunpack.c.l.b16 %v4354
        %v5200 = vunpack.c.l.b16 %v4355
        %v5201 = vunpack.c.h.b16 %v4355
        %v5202 = vunpack.c.l.b16 %v4356
        %v5203 = vunpack.c.l.b16 %v4357
        %v5204 = vunpack.c.h.b16 %v4357
        %v5205 = vunpack.c.l.b16 %v4358
        %v5206 = vunpack.c.l.b16 %v4359
        %v5207 = vunpack.c.h.b16 %v4359
        %v5208 = vunpack.c.l.b16 %v4360
        %v5209 = vunpack.c.l.b16 %v4361
        %v5210 = vunpack.c.h.b16 %v4361
        %v5211 = vunpack.c.l.b16 %v4362
        %v5212 = vunpack.c.l.b16 %v4363
        %v5213 = vunpack.c.h.b16 %v4363
        %v5214 = vunpack.c.l.b16 %v4364
        %v5215 = vunpack.c.l.b16 %v4365
        %v5216 = vunpack.c.h.b16 %v4365
        %v5217 = vunpack.c.l.b16 %v4366
        %v5218 = vunpack.c.l.b16 %v4367
        %v5219 = vunpack.c.h.b16 %v4367
        %v5220 = vunpack.c.l.b16 %v4368
        %v5221 = vunpack.c.l.b16 %v4369
        %v5222 = vunpack.c.h.b16 %v4369
        %v5223 = vunpack.c.l.b16 %v4370
        %v5224 = vunpack.c.l.b16 %v4371
        %v5225 = vunpack.c.h.b16 %v4371
        %v5226 = vunpack.c.l.b16 %v4372
        %v5227 = vunpack.c.l.b16 %v4373
        %v5228 = vunpack.c.h.b16 %v4373
        %v5229 = vunpack.c.l.b16 %v4374
        %v5230 = vunpack.c.l.b16 %v4375
        %v5231 = vunpack.c.h.b16 %v4375
        %v5232 = vunpack.c.l.b16 %v4376
        %v5233 = vunpack.c.l.b16 %v4377
        %v5234 = vunpack.c.h.b16 %v4377
        %v5235 = vunpack.c.l.b16 %v4378
        %v5236 = vunpack.c.l.b16 %v4379
        %v5237 = vunpack.c.h.b16 %v4379
        %v5238 = vunpack.c.l.b16 %v4380
        %v5239 = vunpack.c.l.b16 %v4381
        %v5240 = vunpack.c.h.b16 %v4381
        %v5241 = vunpack.c.l.b16 %v4382
        %v5242 = vunpack.c.l.b16 %v4383
        %v5243 = vunpack.c.h.b16 %v4383
        %v5244 = vunpack.c.l.b16 %v4384
        %v5245 = vunpack.c.l.b16 %v4385
        %v5246 = vunpack.c.h.b16 %v4385
        %v5247 = vunpack.c.l.b16 %v4386
        %v5248 = vunpack.c.l.b16 %v4387
        %v5249 = vunpack.c.h.b16 %v4387
        %v5250 = vunpack.c.l.b16 %v4388
        %v5251 = vunpack.c.l.b16 %v4389
        %v5252 = vunpack.c.h.b16 %v4389
        %v5253 = vunpack.c.l.b16 %v4390
        %v5254 = vunpack.c.l.b16 %v4391
        %v5255 = vunpack.c.h.b16 %v4391
        %v5256 = vunpack.c.l.b16 %v4392
        %v5257 = vunpack.c.l.b16 %v4393
        %v5258 = vunpack.c.h.b16 %v4393
        %v5259 = vunpack.c.l.b16 %v4394
        %v5260 = vunpack.c.l.b16 %v4395
        %v5261 = vunpack.c.h.b16 %v4395
        %v5262 = vunpack.c.l.b16 %v4396
        %v5263 = vunpack.c.l.b16 %v4397
        %v5264 = vunpack.c.h.b16 %v4397
        %v5265 = vunpack.c.l.b16 %v4398
        %v5266 = vunpack.c.l.b16 %v4399
        %v5267 = vunpack.c.h.b16 %v4399
        %v5268 = vunpack.c.l.b16 %v4400
        %v5269 = vunpack.c.l.b16 %v4401
        %v5270 = vunpack.c.h.b16 %v4401
        %v5271 = vunpack.c.l.b16 %v4402
        %v5272 = vunpack.c.l.b16 %v4403
        %v5273 = vunpack.c.h.b16 %v4403
        %v5274 = vunpack.c.l.b16 %v4404
        %v5275 = vunpack.c.l.b16 %v4405
        %v5276 = vunpack.c.h.b16 %v4405
        %v5277 = vunpack.c.l.b16 %v4406
        %v5278 = vunpack.c.l.b16 %v4407
        %v5279 = vunpack.c.h.b16 %v4407
        %v5280 = vunpack.c.l.b16 %v4408
        %v5281 = vunpack.c.l.b16 %v4409
        %v5282 = vunpack.c.h.b16 %v4409
        %v5283 = vunpack.c.l.b16 %v4410
        %v5284 = vunpack.c.l.b16 %v4411
        %v5285 = vunpack.c.h.b16 %v4411
        %v5286 = vunpack.c.l.b16 %v4412
        %v5287 = vunpack.c.l.b16 %v4413
        %v5288 = vunpack.c.h.b16 %v4413
        %v5289 = vunpack.c.l.b16 %v4414
        %v5290 = vunpack.c.l.b16 %v4415
        %v5291 = vunpack.c.h.b16 %v4415
        %v5292 = vunpack.c.l.b16 %v4416
        %v5293 = vunpack.c.l.b16 %v4417
        %v5294 = vunpack.c.h.b16 %v4417
        %v5295 = vunpack.c.l.b16 %v4418
        %v5296 = vunpack.c.l.b16 %v4419
        %v5297 = vunpack.c.h.b16 %v4419
        %v5298 = vunpack.c.l.b16 %v4420
        %v5299 = vunpack.c.l.b16 %v4421
        %v5300 = vunpack.c.h.b16 %v4421
        %v5301 = vunpack.c.l.b16 %v4422
        %v5302 = vunpack.c.l.b16 %v4423
        %v5303 = vunpack.c.h.b16 %v4423
        %v5304 = vunpack.c.l.b16 %v4424
        %v5305 = vunpack.c.l.b16 %v4425
        %v5306 = vunpack.c.h.b16 %v4425
        %v5307 = vunpack.c.l.b16 %v4426
        %v5308 = vunpack.c.l.b16 %v4427
        %v5309 = vunpack.c.h.b16 %v4427
        %v5310 = vunpack.c.l.b16 %v4428
        %v5311 = vunpack.c.l.b16 %v4429
        %v5312 = vunpack.c.h.b16 %v4429
        %v5313 = vunpack.c.l.b16 %v4430
        %v5314 = vunpack.c.l.b16 %v4431
        %v5315 = vunpack.c.h.b16 %v4431
        %v5316 = vunpack.c.l.b16 %v4432
        %v5317 = vunpack.c.l.b16 %v4433
        %v5318 = vunpack.c.h.b16 %v4433
        %v5319 = vunpack.c.l.b16 %v4434
        %v5320 = vunpack.c.l.b16 %v4435
        %v5321 = vunpack.c.h.b16 %v4435
        %v5322 = vunpack.c.l.b16 %v4436
        %v5323 = vunpack.c.l.b16 %v4437
        %v5324 = vunpack.c.h.b16 %v4437
        %v5325 = vunpack.c.l.b16 %v4438
        %v5326 = vunpack.c.l.b16 %v4439
        %v5327 = vunpack.c.h.b16 %v4439
        %v5328 = vunpack.c.l.b16 %v4440
        %v5329 = vunpack.c.l.b16 %v4441
        %v5330 = vunpack.c.h.b16 %v4441
        %v5331 = vunpack.c.l.b16 %v4442
        %v5332 = vunpack.c.l.b16 %v4443
        %v5333 = vunpack.c.h.b16 %v4443
        %v5334 = vunpack.c.l.b16 %v4444
        %v5335 = vunpack.c.l.b16 %v4445
        %v5336 = vunpack.c.h.b16 %v4445
        %v5337 = vunpack.c.l.b16 %v4446
        %v5338 = vunpack.c.l.b16 %v4447
        %v5339 = vunpack.c.h.b16 %v4447
        %v5340 = vunpack.c.l.b16 %v4448
        %v5341 = vunpack.c.l.b16 %v4449
        %v5342 = vunpack.c.h.b16 %v4449
        %v5343 = vunpack.c.l.b16 %v4450
        %v5344 = vunpack.c.l.b16 %v4451
        %v5345 = vunpack.c.h.b16 %v4451
        %v5346 = vunpack.c.l.b16 %v4452
        %v5347 = vunpack.c.l.b16 %v4453
        %v5348 = vunpack.c.h.b16 %v4453
        %v5349 = vunpack.c.l.b16 %v4454
        %v5350 = vunpack.c.l.b16 %v4455
        %v5351 = vunpack.c.h.b16 %v4455
        %v5352 = vunpack.c.l.b16 %v4456
        %v5353 = vunpack.c.l.b16 %v4457
        %v5354 = vunpack.c.h.b16 %v4457
        %v5355 = vunpack.c.l.b16 %v4458
        %v5356 = vunpack.c.l.b16 %v4459
        %v5357 = vunpack.c.h.b16 %v4459
        %v5358 = vunpack.c.l.b16 %v4460
        %v5359 = vunpack.c.l.b16 %v4461
        %v5360 = vunpack.c.h.b16 %v4461
        %v5361 = vunpack.c.l.b16 %v4462
        %v5362 = vunpack.c.l.b16 %v4463
        %v5363 = vunpack.c.h.b16 %v4463
        %v5364 = vunpack.c.l.b16 %v4464
        %v5365 = vunpack.c.l.b16 %v4465
        %v5366 = vunpack.c.h.b16 %v4465
        %v5367 = vunpack.c.l.b16 %v4466
        %v5368 = vunpack.c.l.b16 %v4467
        %v5369 = vunpack.c.h.b16 %v4467
        %v5370 = vunpack.c.l.b16 %v4468
        %v5371 = vunpack.c.l.b16 %v4469
        %v5372 = vunpack.c.h.b16 %v4469
        %v5373 = vunpack.c.l.b16 %v4470
        %v5374 = vunpack.c.l.b16 %v4471
        %v5375 = vunpack.c.h.b16 %v4471
        %v5376 = vunpack.c.l.b16 %v4472
        %v5377 = vunpack.c.l.b16 %v4473
        %v5378 = vunpack.c.h.b16 %v4473
        %v5379 = vunpack.c.l.b16 %v4474
        %v5380 = vunpack.c.l.b16 %v4475
        %v5381 = vunpack.c.h.b16 %v4475
        %v5382 = vunpack.c.l.b16 %v4476
        %v5383 = vunpack.c.l.b16 %v4477
        %v5384 = vunpack.c.h.b16 %v4477
        %v5385 = vunpack.c.l.b16 %v4478
        %v5386 = vunpack.c.l.b16 %v4479
        %v5387 = vunpack.c.h.b16 %v4479
        %v5388 = vunpack.c.l.b16 %v4480
        %v5389 = vunpack.c.l.b16 %v4481
        %v5390 = vunpack.c.h.b16 %v4481
        %v5391 = vunpack.c.l.b16 %v4482
        %v5392 = vunpack.c.l.b16 %v4483
        %v5393 = vunpack.c.h.b16 %v4483
        %v5394 = vunpack.c.l.b16 %v4484
        %v5395 = vunpack.c.l.b16 %v4485
        %v5396 = vunpack.c.h.b16 %v4485
        %v5397 = vunpack.c.l.b16 %v4486
        %v5398 = vunpack.c.l.b16 %v4487
        %v5399 = vunpack.c.h.b16 %v4487
        %v5400 = vunpack.c.l.b16 %v4488
        %v5401 = vunpack.c.l.b16 %v4489
        %v5402 = vunpack.c.h.b16 %v4489
        %v5403 = vunpack.c.l.b16 %v4490
        %v5404 = vunpack.c.l.b16 %v4491
        %v5405 = vunpack.c.h.b16 %v4491
        %v5406 = vunpack.c.l.b16 %v4492
        %v5407 = vunpack.c.l.b16 %v4493
        %v5408 = vunpack.c.h.b16 %v4493
        %v5409 = vunpack.c.l.b16 %v4494
        %v5410 = vunpack.c.l.b16 %v4495
        %v5411 = vunpack.c.h.b16 %v4495
        %v5412 = vunpack.c.l.b16 %v4496
        %v5413 = vunpack.c.l.b16 %v4497
        %v5414 = vunpack.c.h.b16 %v4497
        %v5415 = vunpack.c.l.b16 %v4498
        %v5416 = vunpack.c.l.b16 %v4499
        %v5417 = vunpack.c.h.b16 %v4499
        %v5418 = vunpack.c.l.b16 %v4500
        %v5419 = vunpack.c.l.b16 %v4501
        %v5420 = vunpack.c.h.b16 %v4501
        %v5421 = vunpack.c.l.b16 %v4502
        %v5422 = vunpack.c.l.b16 %v4503
        %v5423 = vunpack.c.h.b16 %v4503
        %v5424 = vunpack.c.l.b16 %v4504
        %v5425 = vunpack.c.l.b16 %v4505
        %v5426 = vunpack.c.h.b16 %v4505
        %v5427 = vunpack.c.l.b16 %v4506
        %v5428 = vunpack.c.l.b16 %v4507
        %v5429 = vunpack.c.h.b16 %v4507
        %v5430 = vunpack.c.l.b16 %v4508
        %v5431 = vunpack.c.l.b16 %v4509
        %v5432 = vunpack.c.h.b16 %v4509
        %v5433 = vunpack.c.l.b16 %v4510
        %v5434 = vunpack.c.l.b16 %v4511
        %v5435 = vunpack.c.h.b16 %v4511
        %v5436 = vunpack.c.l.b16 %v4512
        %v5437 = vunpack.c.l.b16 %v4513
        %v5438 = vunpack.c.h.b16 %v4513
        %v5439 = vunpack.c.l.b16 %v4514
        %v5440 = vunpack.c.l.b16 %v4515
        %v5441 = vunpack.c.h.b16 %v4515
        %v5442 = vunpack.c.l.b16 %v4516
        %v5443 = vunpack.c.l.b16 %v4517
        %v5444 = vunpack.c.h.b16 %v4517
        %v5445 = vunpack.c.l.b16 %v4518
        %v5446 = vunpack.c.l.b16 %v4519
        %v5447 = vunpack.c.h.b16 %v4519
        %v5448 = vunpack.c.l.b16 %v4520
        %v5449 = vunpack.c.l.b16 %v4521
        %v5450 = vunpack.c.h.b16 %v4521
        %v5451 = vunpack.c.l.b16 %v4522
        %v5452 = vunpack.c.l.b16 %v4523
        %v5453 = vunpack.c.h.b16 %v4523
        %v5454 = vunpack.c.l.b16 %v4524
        %v5455 = vunpack.c.l.b16 %v4525
        %v5456 = vunpack.c.h.b16 %v4525
        %v5457 = vunpack.c.l.b16 %v4526
        %v5458 = vunpack.c.l.b16 %v4527
        %v5459 = vunpack.c.h.b16 %v4527
        %v5460 = vunpack.c.l.b16 %v4528
        %v5461 = vunpack.c.l.b16 %v4529
        %v5462 = vunpack.c.h.b16 %v4529
        %v5463 = vunpack.c.l.b16 %v4530
        %v5464 = vunpack.c.l.b16 %v4531
        %v5465 = vunpack.c.h.b16 %v4531
        %v5466 = vunpack.c.l.b16 %v4532
        %v5467 = vunpack.c.l.b16 %v4533
        %v5468 = vunpack.c.h.b16 %v4533
        %v5469 = vunpack.c.l.b16 %v4534
        %v5470 = vunpack.c.l.b16 %v4535
        %v5471 = vunpack.c.h.b16 %v4535
        %v5472 = vunpack.c.l.b16 %v4536
        %v5473 = vunpack.c.l.b16 %v4537
        %v5474 = vunpack.c.h.b16 %v4537
        %v5475 = vunpack.c.l.b16 %v4538
        %v5476 = vunpack.c.l.b16 %v4539
        %v5477 = vunpack.c.h.b16 %v4539
        %v5478 = vunpack.c.l.b16 %v4540
        %v5479 = vunpack.c.l.b16 %v4541
        %v5480 = vunpack.c.h.b16 %v4541
        %v5481 = vunpack.c.l.b16 %v4542
        %v5482 = vunpack.c.l.b16 %v4543
        %v5483 = vunpack.c.h.b16 %v4543
        %v5484 = vunpack.c.l.b16 %v4544
        %v5485 = vunpack.c.l.b16 %v4545
        %v5486 = vunpack.c.h.b16 %v4545
        %v5487 = vunpack.c.l.b16 %v4546
        %v5488 = vunpack.c.l.b16 %v4547
        %v5489 = vunpack.c.h.b16 %v4547
        %v5490 = vunpack.c.l.b16 %v4548
        %v5491 = vunpack.c.l.b16 %v4549
        %v5492 = vunpack.c.h.b16 %v4549
        %v5493 = vunpack.c.l.b16 %v4550
        %v5494 = vunpack.c.l.b16 %v4551
        %v5495 = vunpack.c.h.b16 %v4551
        %v5496 = vunpack.c.l.b16 %v4552
        %v5497 = vunpack.c.l.b16 %v4553
        %v5498 = vunpack.c.h.b16 %v4553
        %v5499 = vunpack.c.l.b16 %v4554
        %v5500 = vunpack.c.l.b16 %v4555
        %v5501 = vunpack.c.h.b16 %v4555
        %v5502 = vunpack.c.l.b16 %v4556
        %v5503 = vunpack.c.l.b16 %v4557
        %v5504 = vunpack.c.h.b16 %v4557
        %v5505 = vunpack.c.l.b16 %v4558
        %v5506 = vunpack.c.l.b16 %v4559
        %v5507 = vunpack.c.h.b16 %v4559
        %v5508 = vunpack.c.l.b16 %v4560
        %v5509 = vunpack.c.l.b16 %v4561
        %v5510 = vunpack.c.h.b16 %v4561
        %v5511 = vunpack.c.l.b16 %v4562
        %v5512 = vunpack.c.l.b16 %v4563
        %v5513 = vunpack.c.h.b16 %v4563
        %v5514 = vunpack.c.l.b16 %v4564
        %v5515 = vunpack.c.l.b16 %v4565
        %v5516 = vunpack.c.h.b16 %v4565
        %v5517 = vunpack.c.l.b16 %v4566
        %v5518 = vunpack.c.l.b16 %v4567
        %v5519 = vunpack.c.h.b16 %v4567
        %v5520 = vunpack.c.l.b16 %v4568
        %v5521 = vunpack.c.l.b16 %v4569
        %v5522 = vunpack.c.h.b16 %v4569
        %v5523 = vunpack.c.l.b16 %v4570
        %v5524 = vunpack.c.l.b16 %v4571
        %v5525 = vunpack.c.h.b16 %v4571
        %v5526 = vunpack.c.l.b16 %v4572
        %v5527 = vunpack.c.l.b16 %v4573
        %v5528 = vunpack.c.h.b16 %v4573
        %v5529 = vunpack.c.l.b16 %v4574
        %v5530 = vunpack.c.l.b16 %v4575
        %v5531 = vunpack.c.h.b16 %v4575
        %v5532 = vunpack.c.l.b16 %v4576
        %v5533 = vunpack.c.l.b16 %v4577
        %v5534 = vunpack.c.h.b16 %v4577
        %v5535 = vunpack.c.l.b16 %v4578
        %v5536 = vunpack.c.l.b16 %v4579
        %v5537 = vunpack.c.h.b16 %v4579
        %v5538 = vunpack.c.l.b16 %v4580
        %v5539 = vunpack.c.l.b16 %v4581
        %v5540 = vunpack.c.h.b16 %v4581
        %v5541 = vunpack.c.l.b16 %v4582
        %v5542 = vunpack.c.l.b16 %v4583
        %v5543 = vunpack.c.h.b16 %v4583
        %v5544 = vunpack.c.l.b16 %v4584
        %v5545 = vunpack.c.l.b16 %v4585
        %v5546 = vunpack.c.h.b16 %v4585
        %v5547 = vunpack.c.l.b16 %v4586
        %v5548 = vunpack.c.l.b16 %v4587
        %v5549 = vunpack.c.h.b16 %v4587
        %v5550 = vunpack.c.l.b16 %v4588
        %v5551 = vunpack.c.l.b16 %v4589
        %v5552 = vunpack.c.h.b16 %v4589
        %v5553 = vunpack.c.l.b16 %v4590
        %v5554 = vunpack.c.l.b16 %v4591
        %v5555 = vunpack.c.h.b16 %v4591
        %v5556 = vunpack.c.l.b16 %v4592
        %v5557 = vunpack.c.l.b16 %v4593
        %v5558 = vunpack.c.h.b16 %v4593
        %v5559 = vunpack.c.l.b16 %v4594
        %v5560 = vunpack.c.l.b16 %v4595
        %v5561 = vunpack.c.h.b16 %v4595
        %v5562 = vunpack.c.l.b16 %v4596
        %v5563 = vunpack.c.l.b16 %v4597
        %v5564 = vunpack.c.h.b16 %v4597
        %v5565 = vunpack.c.l.b16 %v4598
        %v5566 = vunpack.c.l.b16 %v4599
        %v5567 = vunpack.c.h.b16 %v4599
        %v5568 = vunpack.c.l.b16 %v4600
        %v5569 = vunpack.c.l.b16 %v4601
        %v5570 = vunpack.c.h.b16 %v4601
        %v5571 = vunpack.c.l.b16 %v4602
        %v5572 = vunpack.c.l.b16 %v4603
        %v5573 = vunpack.c.h.b16 %v4603
        %v5574 = vunpack.c.l.b16 %v4604
        %v5575 = vunpack.c.l.b16 %v4605
        %v5576 = vunpack.c.h.b16 %v4605
        %v5577 = vunpack.c.l.b16 %v4606
        %v5578 = vunpack.c.l.b16 %v4607
        %v5579 = vunpack.c.h.b16 %v4607
        %v5580 = vunpack.c.l.b16 %v4608
        %v5581 = vunpack.c.l.b16 %v4609
        %v5582 = vunpack.c.h.b16 %v4609
        %v5583 = vunpack.c.l.b16 %v4610
        %v5584 = vunpack.c.l.b16 %v4611
        %v5585 = vunpack.c.h.b16 %v4611
        %v5586 = vunpack.c.l.b16 %v4612
        %v5587 = vunpack.c.l.b16 %v4613
        %v5588 = vunpack.c.h.b16 %v4613
        %v5589 = vunpack.c.l.b16 %v4614
        %v5590 = vunpack.c.l.b16 %v4615
        %v5591 = vunpack.c.h.b16 %v4615
        %v5592 = vunpack.c.l.b16 %v4616
        %v5593 = vunpack.c.l.b16 %v4617
        %v5594 = vunpack.c.h.b16 %v4617
        %v5595 = vunpack.c.l.b16 %v4618
        %v5596 = vpack.c.b16 %v5023, %v5020
        %v5597 = vpack.c.b16 %v5024, %v5021
        %v5598 = vpack.c.b16 %v5025, %v5022
        %v5599 = vpack.c.b16 %v5029, %v5026
        %v5600 = vpack.c.b16 %v5030, %v5027
        %v5601 = vpack.c.b16 %v5031, %v5028
        %v5602 = vpack.c.b16 %v5035, %v5032
        %v5603 = vpack.c.b16 %v5036, %v5033
        %v5604 = vpack.c.b16 %v5037, %v5034
        %v5605 = vpack.c.b16 %v5041, %v5038
        %v5606 = vpack.c.b16 %v5042, %v5039
        %v5607 = vpack.c.b16 %v5043, %v5040
        %v5608 = vpack.c.b16 %v5047, %v5044
        %v5609 = vpack.c.b16 %v5048, %v5045
        %v5610 = vpack.c.b16 %v5049, %v5046
        %v5611 = vpack.c.b16 %v5053, %v5050
        %v5612 = vpack.c.b16 %v5054, %v5051
        %v5613 = vpack.c.b16 %v5055, %v5052
        %v5614 = vpack.c.b16 %v5059, %v5056
        %v5615 = vpack.c.b16 %v5060, %v5057
        %v5616 = vpack.c.b16 %v5061, %v5058
        %v5617 = vpack.c.b16 %v5065, %v5062
        %v5618 = vpack.c.b16 %v5066, %v5063
        %v5619 = vpack.c.b16 %v5067, %v5064
        %v5620 = vpack.c.b16 %v5071, %v5068
        %v5621 = vpack.c.b16 %v5072, %v5069
        %v5622 = vpack.c.b16 %v5073, %v5070
        %v5623 = vpack.c.b16 %v5077, %v5074
        %v5624 = vpack.c.b16 %v5078, %v5075
        %v5625 = vpack.c.b16 %v5079, %v5076
        %v5626 = vpack.c.b16 %v5083, %v5080
        %v5627 = vpack.c.b16 %v5084, %v5081
        %v5628 = vpack.c.b16 %v5085, %v5082
        %v5629 = vpack.c.b16 %v5089, %v5086
        %v5630 = vpack.c.b16 %v5090, %v5087
        %v5631 = vpack.c.b16 %v5091, %v5088
        %v5632 = vpack.c.b16 %v5095, %v5092
        %v5633 = vpack.c.b16 %v5096, %v5093
        %v5634 = vpack.c.b16 %v5097, %v5094
        %v5635 = vpack.c.b16 %v5101, %v5098
        %v5636 = vpack.c.b16 %v5102, %v5099
        %v5637 = vpack.c.b16 %v5103, %v5100
        %v5638 = vpack.c.b16 %v5107, %v5104
        %v5639 = vpack.c.b16 %v5108, %v5105
        %v5640 = vpack.c.b16 %v5109, %v5106
        %v5641 = vpack.c.b16 %v5113, %v5110
        %v5642 = vpack.c.b16 %v5114, %v5111
        %v5643 = vpack.c.b16 %v5115, %v5112
        %v5644 = vpack.c.b16 %v5119, %v5116
        %v5645 = vpack.c.b16 %v5120, %v5117
        %v5646 = vpack.c.b16 %v5121, %v5118
        %v5647 = vpack.c.b16 %v5125, %v5122
        %v5648 = vpack.c.b16 %v5126, %v5123
        %v5649 = vpack.c.b16 %v5127, %v5124
        %v5650 = vpack.c.b16 %v5131, %v5128
        %v5651 = vpack.c.b16 %v5132, %v5129
        %v5652 = vpack.c.b16 %v5133, %v5130
        %v5653 = vpack.c.b16 %v5137, %v5134
        %v5654 = vpack.c.b16 %v5138, %v5135
        %v5655 = vpack.c.b16 %v5139, %v5136
        %v5656 = vpack.c.b16 %v5143, %v5140
        %v5657 = vpack.c.b16 %v5144, %v5141
        %v5658 = vpack.c.b16 %v5145, %v5142
        %v5659 = vpack.c.b16 %v5149, %v5146
        %v5660 = vpack.c.b16 %v5150, %v5147
        %v5661 = vpack.c.b16 %v5151, %v5148
        %v5662 = vpack.c.b16 %v5155, %v5152
        %v5663 = vpack.c.b16 %v5156, %v5153
        %v5664 = vpack.c.b16 %v5157, %v5154
        %v5665 = vpack.c.b16 %v5161, %v5158
        %v5666 = vpack.c.b16 %v5162, %v5159
        %v5667 = vpack.c.b16 %v5163, %v5160
        %v5668 = vpack.c.b16 %v5167, %v5164
        %v5669 = vpack.c.b16 %v5168, %v5165
        %v5670 = vpack.c.b16 %v5169, %v5166
        %v5671 = vpack.c.b16 %v5173, %v5170
        %v5672 = vpack.c.b16 %v5174, %v5171
        %v5673 = vpack.c.b16 %v5175, %v5172
        %v5674 = vpack.c.b16 %v5179, %v5176
        %v5675 = vpack.c.b16 %v5180, %v5177
        %v5676 = vpack.c.b16 %v5181, %v5178
        %v5677 = vpack.c.b16 %v5185, %v5182
        %v5678 = vpack.c.b16 %v5186, %v5183
        %v5679 = vpack.c.b16 %v5187, %v5184
        %v5680 = vpack.c.b16 %v5191, %v5188
        %v5681 = vpack.c.b16 %v5192, %v5189
        %v5682 = vpack.c.b16 %v5193, %v5190
        %v5683 = vpack.c.b16 %v5197, %v5194
        %v5684 = vpack.c.b16 %v5198, %v5195
        %v5685 = vpack.c.b16 %v5199, %v5196
        %v5686 = vpack.c.b16 %v5203, %v5200
        %v5687 = vpack.c.b16 %v5204, %v5201
        %v5688 = vpack.c.b16 %v5205, %v5202
        %v5689 = vpack.c.b16 %v5209, %v5206
        %v5690 = vpack.c.b16 %v5210, %v5207
        %v5691 = vpack.c.b16 %v5211, %v5208
        %v5692 = vpack.c.b16 %v5215, %v5212
        %v5693 = vpack.c.b16 %v5216, %v5213
        %v5694 = vpack.c.b16 %v5217, %v5214
        %v5695 = vpack.c.b16 %v5221, %v5218
        %v5696 = vpack.c.b16 %v5222, %v5219
        %v5697 = vpack.c.b16 %v5223, %v5220
        %v5698 = vpack.c.b16 %v5227, %v5224
        %v5699 = vpack.c.b16 %v5228, %v5225
        %v5700 = vpack.c.b16 %v5229, %v5226
        %v5701 = vpack.c.b16 %v5233, %v5230
        %v5702 = vpack.c.b16 %v5234, %v5231
        %v5703 = vpack.c.b16 %v5235, %v5232
        %v5704 = vpack.c.b16 %v5239, %v5236
        %v5705 = vpack.c.b16 %v5240, %v5237
        %v5706 = vpack.c.b16 %v5241, %v5238
        %v5707 = vpack.c.b16 %v5245, %v5242
        %v5708 = vpack.c.b16 %v5246, %v5243
        %v5709 = vpack.c.b16 %v5247, %v5244
        %v5710 = vpack.c.b16 %v5251, %v5248
        %v5711 = vpack.c.b16 %v5252, %v5249
        %v5712 = vpack.c.b16 %v5253, %v5250
        %v5713 = vpack.c.b16 %v5257, %v5254
        %v5714 = vpack.c.b16 %v5258, %v5255
        %v5715 = vpack.c.b16 %v5259, %v5256
        %v5716 = vpack.c.b16 %v5263, %v5260
        %v5717 = vpack.c.b16 %v5264, %v5261
        %v5718 = vpack.c.b16 %v5265, %v5262
        %v5719 = vpack.c.b16 %v5269, %v5266
        %v5720 = vpack.c.b16 %v5270, %v5267
        %v5721 = vpack.c.b16 %v5271, %v5268
        %v5722 = vpack.c.b16 %v5275, %v5272
        %v5723 = vpack.c.b16 %v5276, %v5273
        %v5724 = vpack.c.b16 %v5277, %v5274
        %v5725 = vpack.c.b16 %v5281, %v5278
        %v5726 = vpack.c.b16 %v5282, %v5279
        %v5727 = vpack.c.b16 %v5283, %v5280
        %v5728 = vpack.c.b16 %v5287, %v5284
        %v5729 = vpack.c.b16 %v5288, %v5285
        %v5730 = vpack.c.b16 %v5289, %v5286
        %v5731 = vpack.c.b16 %v5293, %v5290
        %v5732 = vpack.c.b16 %v5294, %v5291
        %v5733 = vpack.c.b16 %v5295, %v5292
        %v5734 = vpack.c.b16 %v5299, %v5296
        %v5735 = vpack.c.b16 %v5300, %v5297
        %v5736 = vpack.c.b16 %v5301, %v5298
        %v5737 = vpack.c.b16 %v5305, %v5302
        %v5738 = vpack.c.b16 %v5306, %v5303
        %v5739 = vpack.c.b16 %v5307, %v5304
        %v5740 = vpack.c.b16 %v5311, %v5308
        %v5741 = vpack.c.b16 %v5312, %v5309
        %v5742 = vpack.c.b16 %v5313, %v5310
        %v5743 = vpack.c.b16 %v5317, %v5314
        %v5744 = vpack.c.b16 %v5318, %v5315
        %v5745 = vpack.c.b16 %v5319, %v5316
        %v5746 = vpack.c.b16 %v5323, %v5320
        %v5747 = vpack.c.b16 %v5324, %v5321
        %v5748 = vpack.c.b16 %v5325, %v5322
        %v5749 = vpack.c.b16 %v5329, %v5326
        %v5750 = vpack.c.b16 %v5330, %v5327
        %v5751 = vpack.c.b16 %v5331, %v5328
        %v5752 = vpack.c.b16 %v5335, %v5332
        %v5753 = vpack.c.b16 %v5336, %v5333
        %v5754 = vpack.c.b16 %v5337, %v5334
        %v5755 = vpack.c.b16 %v5341, %v5338
        %v5756 = vpack.c.b16 %v5342, %v5339
        %v5757 = vpack.c.b16 %v5343, %v5340
        %v5758 = vpack.c.b16 %v5347, %v5344
        %v5759 = vpack.c.b16 %v5348, %v5345
        %v5760 = vpack.c.b16 %v5349, %v5346
        %v5761 = vpack.c.b16 %v5353, %v5350
        %v5762 = vpack.c.b16 %v5354, %v5351
        %v5763 = vpack.c.b16 %v5355, %v5352
        %v5764 = vpack.c.b16 %v5359, %v5356
        %v5765 = vpack.c.b16 %v5360, %v5357
        %v5766 = vpack.c.b16 %v5361, %v5358
        %v5767 = vpack.c.b16 %v5365, %v5362
        %v5768 = vpack.c.b16 %v5366, %v5363
        %v5769 = vpack.c.b16 %v5367, %v5364
        %v5770 = vpack.c.b16 %v5371, %v5368
        %v5771 = vpack.c.b16 %v5372, %v5369
        %v5772 = vpack.c.b16 %v5373, %v5370
        %v5773 = vpack.c.b16 %v5377, %v5374
        %v5774 = vpack.c.b16 %v5378, %v5375
        %v5775 = vpack.c.b16 %v5379, %v5376
        %v5776 = vpack.c.b16 %v5383, %v5380
        %v5777 = vpack.c.b16 %v5384, %v5381
        %v5778 = vpack.c.b16 %v5385, %v5382
        %v5779 = vpack.c.b16 %v5389, %v5386
        %v5780 = vpack.c.b16 %v5390, %v5387
        %v5781 = vpack.c.b16 %v5391, %v5388
        %v5782 = vpack.c.b16 %v5395, %v5392
        %v5783 = vpack.c.b16 %v5396, %v5393
        %v5784 = vpack.c.b16 %v5397, %v5394
        %v5785 = vpack.c.b16 %v5401, %v5398
        %v5786 = vpack.c.b16 %v5402, %v5399
        %v5787 = vpack.c.b16 %v5403, %v5400
        %v5788 = vpack.c.b16 %v5407, %v5404
        %v5789 = vpack.c.b16 %v5408, %v5405
        %v5790 = vpack.c.b16 %v5409, %v5406
        %v5791 = vpack.c.b16 %v5413, %v5410
        %v5792 = vpack.c.b16 %v5414, %v5411
        %v5793 = vpack.c.b16 %v5415, %v5412
        %v5794 = vpack.c.b16 %v5419, %v5416
        %v5795 = vpack.c.b16 %v5420, %v5417
        %v5796 = vpack.c.b16 %v5421, %v5418
        %v5797 = vpack.c.b16 %v5425, %v5422
        %v5798 = vpack.c.b16 %v5426, %v5423
        %v5799 = vpack.c.b16 %v5427, %v5424
        %v5800 = vpack.c.b16 %v5431, %v5428
        %v5801 = vpack.c.b16 %v5432, %v5429
        %v5802 = vpack.c.b16 %v5433, %v5430
        %v5803 = vpack.c.b16 %v5437, %v5434
        %v5804 = vpack.c.b16 %v5438, %v5435
        %v5805 = vpack.c.b16 %v5439, %v5436
        %v5806 = vpack.c.b16 %v5443, %v5440
        %v5807 = vpack.c.b16 %v5444, %v5441
        %v5808 = vpack.c.b16 %v5445, %v5442
        %v5809 = vpack.c.b16 %v5449, %v5446
        %v5810 = vpack.c.b16 %v5450, %v5447
        %v5811 = vpack.c.b16 %v5451, %v5448
        %v5812 = vpack.c.b16 %v5455, %v5452
        %v5813 = vpack.c.b16 %v5456, %v5453
        %v5814 = vpack.c.b16 %v5457, %v5454
        %v5815 = vpack.c.b16 %v5461, %v5458
        %v5816 = vpack.c.b16 %v5462, %v5459
        %v5817 = vpack.c.b16 %v5463, %v5460
        %v5818 = vpack.c.b16 %v5467, %v5464
        %v5819 = vpack.c.b16 %v5468, %v5465
        %v5820 = vpack.c.b16 %v5469, %v5466
        %v5821 = vpack.c.b16 %v5473, %v5470
        %v5822 = vpack.c.b16 %v5474, %v5471
        %v5823 = vpack.c.b16 %v5475, %v5472
        %v5824 = vpack.c.b16 %v5479, %v5476
        %v5825 = vpack.c.b16 %v5480, %v5477
        %v5826 = vpack.c.b16 %v5481, %v5478
        %v5827 = vpack.c.b16 %v5485, %v5482
        %v5828 = vpack.c.b16 %v5486, %v5483
        %v5829 = vpack.c.b16 %v5487, %v5484
        %v5830 = vpack.c.b16 %v5491, %v5488
        %v5831 = vpack.c.b16 %v5492, %v5489
        %v5832 = vpack.c.b16 %v5493, %v5490
        %v5833 = vpack.c.b16 %v5497, %v5494
        %v5834 = vpack.c.b16 %v5498, %v5495
        %v5835 = vpack.c.b16 %v5499, %v5496
        %v5836 = vpack.c.b16 %v5503, %v5500
        %v5837 = vpack.c.b16 %v5504, %v5501
        %v5838 = vpack.c.b16 %v5505, %v5502
        %v5839 = vpack.c.b16 %v5509, %v5506
        %v5840 = vpack.c.b16 %v5510, %v5507
        %v5841 = vpack.c.b16 %v5511, %v5508
        %v5842 = vpack.c.b16 %v5515, %v5512
        %v5843 = vpack.c.b16 %v5516, %v5513
        %v5844 = vpack.c.b16 %v5517, %v5514
        %v5845 = vpack.c.b16 %v5521, %v5518
        %v5846 = vpack.c.b16 %v5522, %v5519
        %v5847 = vpack.c.b16 %v5523, %v5520
        %v5848 = vpack.c.b16 %v5527, %v5524
        %v5849 = vpack.c.b16 %v5528, %v5525
        %v5850 = vpack.c.b16 %v5529, %v5526
        %v5851 = vpack.c.b16 %v5533, %v5530
        %v5852 = vpack.c.b16 %v5534, %v5531
        %v5853 = vpack.c.b16 %v5535, %v5532
        %v5854 = vpack.c.b16 %v5539, %v5536
        %v5855 = vpack.c.b16 %v5540, %v5537
        %v5856 = vpack.c.b16 %v5541, %v5538
        %v5857 = vpack.c.b16 %v5545, %v5542
        %v5858 = vpack.c.b16 %v5546, %v5543
        %v5859 = vpack.c.b16 %v5547, %v5544
        %v5860 = vpack.c.b16 %v5551, %v5548
        %v5861 = vpack.c.b16 %v5552, %v5549
        %v5862 = vpack.c.b16 %v5553, %v5550
        %v5863 = vpack.c.b16 %v5557, %v5554
        %v5864 = vpack.c.b16 %v5558, %v5555
        %v5865 = vpack.c.b16 %v5559, %v5556
        %v5866 = vpack.c.b16 %v5563, %v5560
        %v5867 = vpack.c.b16 %v5564, %v5561
        %v5868 = vpack.c.b16 %v5565, %v5562
        %v5869 = vpack.c.b16 %v5569, %v5566
        %v5870 = vpack.c.b16 %v5570, %v5567
        %v5871 = vpack.c.b16 %v5571, %v5568
        %v5872 = vpack.c.b16 %v5575, %v5572
        %v5873 = vpack.c.b16 %v5576, %v5573
        %v5874 = vpack.c.b16 %v5577, %v5574
        %v5875 = vpack.c.b16 %v5581, %v5578
        %v5876 = vpack.c.b16 %v5582, %v5579
        %v5877 = vpack.c.b16 %v5583, %v5580
        %v5878 = vpack.c.b16 %v5587, %v5584
        %v5879 = vpack.c.b16 %v5588, %v5585
        %v5880 = vpack.c.b16 %v5589, %v5586
        %v5881 = vpack.c.b16 %v5593, %v5590
        %v5882 = vpack.c.b16 %v5594, %v5591
        %v5883 = vpack.c.b16 %v5595, %v5592
        %6172 = vmatprep.subr.bf16.mxu0 %v5597
        %6173 = vmatpush1.bf16.msra.mxu0 %v5596
        %6174 = vmatprep.subr.bf16.mxu0 %v5600
        %6175 = vmatpush1.bf16.msra.mxu0 %v5599
        %6176 = vmatprep.subr.bf16.mxu0 %v5603
        %6177 = vmatpush1.bf16.msra.mxu0 %v5602
        %6178 = vmatprep.subr.bf16.mxu0 %v5606
        %6179 = vmatpush1.bf16.msra.mxu0 %v5605
        %6180 = vmatprep.subr.bf16.mxu0 %v5609
        %6181 = vmatpush1.bf16.msra.mxu0 %v5608
        %6182 = vmatprep.subr.bf16.mxu0 %v5612
        %6183 = vmatpush1.bf16.msra.mxu0 %v5611
        %6184 = vmatprep.subr.bf16.mxu0 %v5615
        %6185 = vmatpush1.bf16.msra.mxu0 %v5614
        %6186 = vmatprep.subr.bf16.mxu0 %v5618
        %6187 = vmatpush1.bf16.msra.mxu0 %v5617
        %6188 = vmatprep.subr.bf16.mxu0 %v5621
        %6189 = vmatpush1.bf16.msra.mxu0 %v5620
        %6190 = vmatprep.subr.bf16.mxu0 %v5624
        %6191 = vmatpush1.bf16.msra.mxu0 %v5623
        %6192 = vmatprep.subr.bf16.mxu0 %v5627
        %6193 = vmatpush1.bf16.msra.mxu0 %v5626
        %6194 = vmatprep.subr.bf16.mxu0 %v5630
        %6195 = vmatpush1.bf16.msra.mxu0 %v5629
        %6196 = vmatprep.subr.bf16.mxu0 %v5633
        %6197 = vmatpush1.bf16.msra.mxu0 %v5632
        %6198 = vmatprep.subr.bf16.mxu0 %v5636
        %6199 = vmatpush1.bf16.msra.mxu0 %v5635
        %6200 = vmatprep.subr.bf16.mxu0 %v5639
        %6201 = vmatpush1.bf16.msra.mxu0 %v5638
        %6202 = vmatprep.subr.bf16.mxu0 %v5642
        %6203 = vmatpush1.bf16.msra.mxu0 %v5641
        %6204 = vmatprep.mubr.bf16.mxu0 %v4224
        %6205 = vmatmul.mubr.bf16.gmra.mrb[0].mxu0 %v4223
        %v6206 = vpop.f32.mrb[0].mxu0
        %v6207 = vadd.f32 %v4624, %v6206
        %v6208 = vpop.f32.mrb[0].mxu0
        %v6209 = vadd.f32 %v4628, %v6208
        %v6210 = vpop.f32.mrb[0].mxu0
        %v6211 = vadd.f32 %v4624, %v6210
        %v6212 = vpop.f32.mrb[0].mxu0
        %v6213 = vadd.f32 %v4628, %v6212
        %6214 = vdwg.mxu0
        %6215 = vmatprep.subr.bf16.mxu0 %v5645
        %6216 = vmatpush1.bf16.msra.mxu0 %v5644
        %6217 = vmatprep.subr.bf16.mxu0 %v5648
        %6218 = vmatpush1.bf16.msra.mxu0 %v5647
        %6219 = vmatprep.subr.bf16.mxu0 %v5651
        %6220 = vmatpush1.bf16.msra.mxu0 %v5650
        %6221 = vmatprep.subr.bf16.mxu0 %v5654
        %6222 = vmatpush1.bf16.msra.mxu0 %v5653
        %6223 = vmatprep.subr.bf16.mxu0 %v5657
        %6224 = vmatpush1.bf16.msra.mxu0 %v5656
        %6225 = vmatprep.subr.bf16.mxu0 %v5660
        %6226 = vmatpush1.bf16.msra.mxu0 %v5659
        %6227 = vmatprep.subr.bf16.mxu0 %v5663
        %6228 = vmatpush1.bf16.msra.mxu0 %v5662
        %6229 = vmatprep.subr.bf16.mxu0 %v5666
        %6230 = vmatpush1.bf16.msra.mxu0 %v5665
        %6231 = vmatprep.subr.bf16.mxu0 %v5669
        %6232 = vmatpush1.bf16.msra.mxu0 %v5668
        %6233 = vmatprep.subr.bf16.mxu0 %v5672
        %6234 = vmatpush1.bf16.msra.mxu0 %v5671
        %6235 = vmatprep.subr.bf16.mxu0 %v5675
        %6236 = vmatpush1.bf16.msra.mxu0 %v5674
        %6237 = vmatprep.subr.bf16.mxu0 %v5678
        %6238 = vmatpush1.bf16.msra.mxu0 %v5677
        %6239 = vmatprep.subr.bf16.mxu0 %v5681
        %6240 = vmatpush1.bf16.msra.mxu0 %v5680
        %6241 = vmatprep.subr.bf16.mxu0 %v5684
        %6242 = vmatpush1.bf16.msra.mxu0 %v5683
        %6243 = vmatprep.subr.bf16.mxu0 %v5687
        %6244 = vmatpush1.bf16.msra.mxu0 %v5686
        %6245 = vmatprep.subr.bf16.mxu0 %v5690
        %6246 = vmatpush1.bf16.msra.mxu0 %v5689
        %6247 = vmatprep.mubr.bf16.mxu0 %v4226
        %6248 = vmatmul.mubr.bf16.gmra.mrb[0].mxu0 %v4225
        %v6249 = vpop.f32.mrb[0].mxu0
        %v6250 = vadd.f32 %v6207, %v6249
        %v6251 = vpop.f32.mrb[0].mxu0
        %v6252 = vadd.f32 %v6209, %v6251
        %v6253 = vpop.f32.mrb[0].mxu0
        %v6254 = vadd.f32 %v6211, %v6253
        %v6255 = vpop.f32.mrb[0].mxu0
        %v6256 = vadd.f32 %v6213, %v6255
        %6257 = vdwg.mxu0
        %6258 = vmatprep.subr.bf16.mxu0 %v5693
        %6259 = vmatpush1.bf16.msra.mxu0 %v5692
        %6260 = vmatprep.subr.bf16.mxu0 %v5696
        %6261 = vmatpush1.bf16.msra.mxu0 %v5695
        %6262 = vmatprep.subr.bf16.mxu0 %v5699
        %6263 = vmatpush1.bf16.msra.mxu0 %v5698
        %6264 = vmatprep.subr.bf16.mxu0 %v5702
        %6265 = vmatpush1.bf16.msra.mxu0 %v5701
        %6266 = vmatprep.subr.bf16.mxu0 %v5705
        %6267 = vmatpush1.bf16.msra.mxu0 %v5704
        %6268 = vmatprep.subr.bf16.mxu0 %v5708
        %6269 = vmatpush1.bf16.msra.mxu0 %v5707
        %6270 = vmatprep.subr.bf16.mxu0 %v5711
        %6271 = vmatpush1.bf16.msra.mxu0 %v5710
        %6272 = vmatprep.subr.bf16.mxu0 %v5714
        %6273 = vmatpush1.bf16.msra.mxu0 %v5713
        %6274 = vmatprep.subr.bf16.mxu0 %v5717
        %6275 = vmatpush1.bf16.msra.mxu0 %v5716
        %6276 = vmatprep.subr.bf16.mxu0 %v5720
        %6277 = vmatpush1.bf16.msra.mxu0 %v5719
        %6278 = vmatprep.subr.bf16.mxu0 %v5723
        %6279 = vmatpush1.bf16.msra.mxu0 %v5722
        %6280 = vmatprep.subr.bf16.mxu0 %v5726
        %6281 = vmatpush1.bf16.msra.mxu0 %v5725
        %6282 = vmatprep.subr.bf16.mxu0 %v5729
        %6283 = vmatpush1.bf16.msra.mxu0 %v5728
        %6284 = vmatprep.subr.bf16.mxu0 %v5732
        %6285 = vmatpush1.bf16.msra.mxu0 %v5731
        %6286 = vmatprep.subr.bf16.mxu0 %v5735
        %6287 = vmatpush1.bf16.msra.mxu0 %v5734
        %6288 = vmatprep.subr.bf16.mxu0 %v5738
        %6289 = vmatpush1.bf16.msra.mxu0 %v5737
        %6290 = vmatprep.mubr.bf16.mxu0 %v4228
        %6291 = vmatmul.mubr.bf16.gmra.mrb[0].mxu0 %v4227
        %v6292 = vpop.f32.mrb[0].mxu0
        %v6293 = vadd.f32 %v6250, %v6292
        %v6294 = vpop.f32.mrb[0].mxu0
        %v6295 = vadd.f32 %v6252, %v6294
        %v6296 = vpop.f32.mrb[0].mxu0
        %v6297 = vadd.f32 %v6254, %v6296
        %v6298 = vpop.f32.mrb[0].mxu0
        %v6299 = vadd.f32 %v6256, %v6298
        %6300 = vdwg.mxu0
        %6301 = vmatprep.subr.bf16.mxu0 %v5741
        %6302 = vmatpush1.bf16.msra.mxu0 %v5740
        %6303 = vmatprep.subr.bf16.mxu0 %v5744
        %6304 = vmatpush1.bf16.msra.mxu0 %v5743
        %6305 = vmatprep.subr.bf16.mxu0 %v5747
        %6306 = vmatpush1.bf16.msra.mxu0 %v5746
        %6307 = vmatprep.subr.bf16.mxu0 %v5750
        %6308 = vmatpush1.bf16.msra.mxu0 %v5749
        %6309 = vmatprep.subr.bf16.mxu0 %v5753
        %6310 = vmatpush1.bf16.msra.mxu0 %v5752
        %6311 = vmatprep.subr.bf16.mxu0 %v5756
        %6312 = vmatpush1.bf16.msra.mxu0 %v5755
        %6313 = vmatprep.subr.bf16.mxu0 %v5759
        %6314 = vmatpush1.bf16.msra.mxu0 %v5758
        %6315 = vmatprep.subr.bf16.mxu0 %v5762
        %6316 = vmatpush1.bf16.msra.mxu0 %v5761
        %6317 = vmatprep.subr.bf16.mxu0 %v5765
        %6318 = vmatpush1.bf16.msra.mxu0 %v5764
        %6319 = vmatprep.subr.bf16.mxu0 %v5768
        %6320 = vmatpush1.bf16.msra.mxu0 %v5767
        %6321 = vmatprep.subr.bf16.mxu0 %v5771
        %6322 = vmatpush1.bf16.msra.mxu0 %v5770
        %6323 = vmatprep.subr.bf16.mxu0 %v5774
        %6324 = vmatpush1.bf16.msra.mxu0 %v5773
        %6325 = vmatprep.subr.bf16.mxu0 %v5777
        %6326 = vmatpush1.bf16.msra.mxu0 %v5776
        %6327 = vmatprep.subr.bf16.mxu0 %v5780
        %6328 = vmatpush1.bf16.msra.mxu0 %v5779
        %6329 = vmatprep.subr.bf16.mxu0 %v5783
        %6330 = vmatpush1.bf16.msra.mxu0 %v5782
        %6331 = vmatprep.subr.bf16.mxu0 %v5786
        %6332 = vmatpush1.bf16.msra.mxu0 %v5785
        %6333 = vmatprep.mubr.bf16.mxu0 %v4230
        %6334 = vmatmul.mubr.bf16.gmra.mrb[0].mxu0 %v4229
        %v6335 = vpop.f32.mrb[0].mxu0
        %v6336 = vadd.f32 %v6293, %v6335
        %v6337 = vpop.f32.mrb[0].mxu0
        %v6338 = vadd.f32 %v6295, %v6337
        %v6339 = vpop.f32.mrb[0].mxu0
        %v6340 = vadd.f32 %v6297, %v6339
        %v6341 = vpop.f32.mrb[0].mxu0
        %v6342 = vadd.f32 %v6299, %v6341
        %6343 = vdwg.mxu0
        %6344 = vmatprep.subr.bf16.mxu0 %v5789
        %6345 = vmatpush1.bf16.msra.mxu0 %v5788
        %6346 = vmatprep.subr.bf16.mxu0 %v5792
        %6347 = vmatpush1.bf16.msra.mxu0 %v5791
        %6348 = vmatprep.subr.bf16.mxu0 %v5795
        %6349 = vmatpush1.bf16.msra.mxu0 %v5794
        %6350 = vmatprep.subr.bf16.mxu0 %v5798
        %6351 = vmatpush1.bf16.msra.mxu0 %v5797
        %6352 = vmatprep.subr.bf16.mxu0 %v5801
        %6353 = vmatpush1.bf16.msra.mxu0 %v5800
        %6354 = vmatprep.subr.bf16.mxu0 %v5804
        %6355 = vmatpush1.bf16.msra.mxu0 %v5803
        %6356 = vmatprep.subr.bf16.mxu0 %v5807
        %6357 = vmatpush1.bf16.msra.mxu0 %v5806
        %6358 = vmatprep.subr.bf16.mxu0 %v5810
        %6359 = vmatpush1.bf16.msra.mxu0 %v5809
        %6360 = vmatprep.subr.bf16.mxu0 %v5813
        %6361 = vmatpush1.bf16.msra.mxu0 %v5812
        %6362 = vmatprep.subr.bf16.mxu0 %v5816
        %6363 = vmatpush1.bf16.msra.mxu0 %v5815
        %6364 = vmatprep.subr.bf16.mxu0 %v5819
        %6365 = vmatpush1.bf16.msra.mxu0 %v5818
        %6366 = vmatprep.subr.bf16.mxu0 %v5822
        %6367 = vmatpush1.bf16.msra.mxu0 %v5821
        %6368 = vmatprep.subr.bf16.mxu0 %v5825
        %6369 = vmatpush1.bf16.msra.mxu0 %v5824
        %6370 = vmatprep.subr.bf16.mxu0 %v5828
        %6371 = vmatpush1.bf16.msra.mxu0 %v5827
        %6372 = vmatprep.subr.bf16.mxu0 %v5831
        %6373 = vmatpush1.bf16.msra.mxu0 %v5830
        %6374 = vmatprep.subr.bf16.mxu0 %v5834
        %6375 = vmatpush1.bf16.msra.mxu0 %v5833
        %6376 = vmatprep.mubr.bf16.mxu0 %v4232
        %6377 = vmatmul.mubr.bf16.gmra.mrb[0].mxu0 %v4231
        %v6378 = vpop.f32.mrb[0].mxu0
        %v6379 = vadd.f32 %v6336, %v6378
        %v6380 = vpop.f32.mrb[0].mxu0
        %v6381 = vadd.f32 %v6338, %v6380
        %v6382 = vpop.f32.mrb[0].mxu0
        %v6383 = vadd.f32 %v6340, %v6382
        %v6384 = vpop.f32.mrb[0].mxu0
        %v6385 = vadd.f32 %v6342, %v6384
        %6386 = vdwg.mxu0
        %6387 = vmatprep.subr.bf16.mxu0 %v5837
        %6388 = vmatpush1.bf16.msra.mxu0 %v5836
        %6389 = vmatprep.subr.bf16.mxu0 %v5840
        %6390 = vmatpush1.bf16.msra.mxu0 %v5839
        %6391 = vmatprep.subr.bf16.mxu0 %v5843
        %6392 = vmatpush1.bf16.msra.mxu0 %v5842
        %6393 = vmatprep.subr.bf16.mxu0 %v5846
        %6394 = vmatpush1.bf16.msra.mxu0 %v5845
        %6395 = vmatprep.subr.bf16.mxu0 %v5849
        %6396 = vmatpush1.bf16.msra.mxu0 %v5848
        %6397 = vmatprep.subr.bf16.mxu0 %v5852
        %6398 = vmatpush1.bf16.msra.mxu0 %v5851
        %6399 = vmatprep.subr.bf16.mxu0 %v5855
        %6400 = vmatpush1.bf16.msra.mxu0 %v5854
        %6401 = vmatprep.subr.bf16.mxu0 %v5858
        %6402 = vmatpush1.bf16.msra.mxu0 %v5857
        %6403 = vmatprep.subr.bf16.mxu0 %v5861
        %6404 = vmatpush1.bf16.msra.mxu0 %v5860
        %6405 = vmatprep.subr.bf16.mxu0 %v5864
        %6406 = vmatpush1.bf16.msra.mxu0 %v5863
        %6407 = vmatprep.subr.bf16.mxu0 %v5867
        %6408 = vmatpush1.bf16.msra.mxu0 %v5866
        %6409 = vmatprep.subr.bf16.mxu0 %v5870
        %6410 = vmatpush1.bf16.msra.mxu0 %v5869
        %6411 = vmatprep.subr.bf16.mxu0 %v5873
        %6412 = vmatpush1.bf16.msra.mxu0 %v5872
        %6413 = vmatprep.subr.bf16.mxu0 %v5876
        %6414 = vmatpush1.bf16.msra.mxu0 %v5875
        %6415 = vmatprep.subr.bf16.mxu0 %v5879
        %6416 = vmatpush1.bf16.msra.mxu0 %v5878
        %6417 = vmatprep.subr.bf16.mxu0 %v5882
        %6418 = vmatpush1.bf16.msra.mxu0 %v5881
        %6419 = vmatprep.mubr.bf16.mxu0 %v4234
        %6420 = vmatmul.mubr.bf16.gmra.mrb[0].mxu0 %v4233
        %v6421 = vpop.f32.mrb[0].mxu0
        %v6422 = vadd.f32 %v6379, %v6421
        %v6423 = vpop.f32.mrb[0].mxu0
        %v6424 = vadd.f32 %v6381, %v6423
        %v6425 = vpop.f32.mrb[0].mxu0
        %v6426 = vadd.f32 %v6383, %v6425
        %v6427 = vpop.f32.mrb[0].mxu0
        %v6428 = vadd.f32 %v6385, %v6427
        %6429 = vdwg.mxu0
        %6430 = vmatprep.subr.bf16.mxu0 0
        %6431 = vmatpush1.bf16.msra.mxu0 %v5598
        %6432 = vmatprep.subr.bf16.mxu0 0
        %6433 = vmatpush1.bf16.msra.mxu0 %v5601
        %6434 = vmatprep.subr.bf16.mxu0 0
        %6435 = vmatpush1.bf16.msra.mxu0 %v5604
        %6436 = vmatprep.subr.bf16.mxu0 0
        %6437 = vmatpush1.bf16.msra.mxu0 %v5607
        %6438 = vmatprep.subr.bf16.mxu0 0
        %6439 = vmatpush1.bf16.msra.mxu0 %v5610
        %6440 = vmatprep.subr.bf16.mxu0 0
        %6441 = vmatpush1.bf16.msra.mxu0 %v5613
        %6442 = vmatprep.subr.bf16.mxu0 0
        %6443 = vmatpush1.bf16.msra.mxu0 %v5616
        %6444 = vmatprep.subr.bf16.mxu0 0
        %6445 = vmatpush1.bf16.msra.mxu0 %v5619
        %6446 = vmatprep.subr.bf16.mxu0 0
        %6447 = vmatpush1.bf16.msra.mxu0 %v5622
        %6448 = vmatprep.subr.bf16.mxu0 0
        %6449 = vmatpush1.bf16.msra.mxu0 %v5625
        %6450 = vmatprep.subr.bf16.mxu0 0
        %6451 = vmatpush1.bf16.msra.mxu0 %v5628
        %6452 = vmatprep.subr.bf16.mxu0 0
        %6453 = vmatpush1.bf16.msra.mxu0 %v5631
        %6454 = vmatprep.subr.bf16.mxu0 0
        %6455 = vmatpush1.bf16.msra.mxu0 %v5634
        %6456 = vmatprep.subr.bf16.mxu0 0
        %6457 = vmatpush1.bf16.msra.mxu0 %v5637
        %6458 = vmatprep.subr.bf16.mxu0 0
        %6459 = vmatpush1.bf16.msra.mxu0 %v5640
        %6460 = vmatprep.subr.bf16.mxu0 0
        %6461 = vmatpush1.bf16.msra.mxu0 %v5643
        %6462 = vmatprep.mubr.bf16.mxu0 %v4224
        %6463 = vmatmul.mubr.bf16.gmra.mrb[0].mxu0 %v4223
        %v6464 = vpop.f32.mrb[0].mxu0
        %v6465 = vadd.f32 %v4632, %v6464
        %v6466 = vpop.f32.mrb[0].mxu0
        %v6467 = vpop.f32.mrb[0].mxu0
        %v6468 = vadd.f32 %v4632, %v6467
        %v6469 = vpop.f32.mrb[0].mxu0
        %6470 = vdwg.mxu0
        %6471 = vmatprep.subr.bf16.mxu0 0
        %6472 = vmatpush1.bf16.msra.mxu0 %v5646
        %6473 = vmatprep.subr.bf16.mxu0 0
        %6474 = vmatpush1.bf16.msra.mxu0 %v5649
        %6475 = vmatprep.subr.bf16.mxu0 0
        %6476 = vmatpush1.bf16.msra.mxu0 %v5652
        %6477 = vmatprep.subr.bf16.mxu0 0
        %6478 = vmatpush1.bf16.msra.mxu0 %v5655
        %6479 = vmatprep.subr.bf16.mxu0 0
        %6480 = vmatpush1.bf16.msra.mxu0 %v5658
        %6481 = vmatprep.subr.bf16.mxu0 0
        %6482 = vmatpush1.bf16.msra.mxu0 %v5661
        %6483 = vmatprep.subr.bf16.mxu0 0
        %6484 = vmatpush1.bf16.msra.mxu0 %v5664
        %6485 = vmatprep.subr.bf16.mxu0 0
        %6486 = vmatpush1.bf16.msra.mxu0 %v5667
        %6487 = vmatprep.subr.bf16.mxu0 0
        %6488 = vmatpush1.bf16.msra.mxu0 %v5670
        %6489 = vmatprep.subr.bf16.mxu0 0
        %6490 = vmatpush1.bf16.msra.mxu0 %v5673
        %6491 = vmatprep.subr.bf16.mxu0 0
        %6492 = vmatpush1.bf16.msra.mxu0 %v5676
        %6493 = vmatprep.subr.bf16.mxu0 0
        %6494 = vmatpush1.bf16.msra.mxu0 %v5679
        %6495 = vmatprep.subr.bf16.mxu0 0
        %6496 = vmatpush1.bf16.msra.mxu0 %v5682
        %6497 = vmatprep.subr.bf16.mxu0 0
        %6498 = vmatpush1.bf16.msra.mxu0 %v5685
        %6499 = vmatprep.subr.bf16.mxu0 0
        %6500 = vmatpush1.bf16.msra.mxu0 %v5688
        %6501 = vmatprep.subr.bf16.mxu0 0
        %6502 = vmatpush1.bf16.msra.mxu0 %v5691
        %6503 = vmatprep.mubr.bf16.mxu0 %v4226
        %6504 = vmatmul.mubr.bf16.gmra.mrb[0].mxu0 %v4225
        %v6505 = vpop.f32.mrb[0].mxu0
        %v6506 = vadd.f32 %v6465, %v6505
        %v6507 = vpop.f32.mrb[0].mxu0
        %v6508 = vpop.f32.mrb[0].mxu0
        %v6509 = vadd.f32 %v6468, %v6508
        %v6510 = vpop.f32.mrb[0].mxu0
        %6511 = vdwg.mxu0
        %6512 = vmatprep.subr.bf16.mxu0 0
        %6513 = vmatpush1.bf16.msra.mxu0 %v5694
        %6514 = vmatprep.subr.bf16.mxu0 0
        %6515 = vmatpush1.bf16.msra.mxu0 %v5697
        %6516 = vmatprep.subr.bf16.mxu0 0
        %6517 = vmatpush1.bf16.msra.mxu0 %v5700
        %6518 = vmatprep.subr.bf16.mxu0 0
        %6519 = vmatpush1.bf16.msra.mxu0 %v5703
        %6520 = vmatprep.subr.bf16.mxu0 0
        %6521 = vmatpush1.bf16.msra.mxu0 %v5706
        %6522 = vmatprep.subr.bf16.mxu0 0
        %6523 = vmatpush1.bf16.msra.mxu0 %v5709
        %6524 = vmatprep.subr.bf16.mxu0 0
        %6525 = vmatpush1.bf16.msra.mxu0 %v5712
        %6526 = vmatprep.subr.bf16.mxu0 0
        %6527 = vmatpush1.bf16.msra.mxu0 %v5715
        %6528 = vmatprep.subr.bf16.mxu0 0
        %6529 = vmatpush1.bf16.msra.mxu0 %v5718
        %6530 = vmatprep.subr.bf16.mxu0 0
        %6531 = vmatpush1.bf16.msra.mxu0 %v5721
        %6532 = vmatprep.subr.bf16.mxu0 0
        %6533 = vmatpush1.bf16.msra.mxu0 %v5724
        %6534 = vmatprep.subr.bf16.mxu0 0
        %6535 = vmatpush1.bf16.msra.mxu0 %v5727
        %6536 = vmatprep.subr.bf16.mxu0 0
        %6537 = vmatpush1.bf16.msra.mxu0 %v5730
        %6538 = vmatprep.subr.bf16.mxu0 0
        %6539 = vmatpush1.bf16.msra.mxu0 %v5733
        %6540 = vmatprep.subr.bf16.mxu0 0
        %6541 = vmatpush1.bf16.msra.mxu0 %v5736
        %6542 = vmatprep.subr.bf16.mxu0 0
        %6543 = vmatpush1.bf16.msra.mxu0 %v5739
        %6544 = vmatprep.mubr.bf16.mxu0 %v4228
        %6545 = vmatmul.mubr.bf16.gmra.mrb[0].mxu0 %v4227
        %v6546 = vpop.f32.mrb[0].mxu0
        %v6547 = vadd.f32 %v6506, %v6546
        %v6548 = vpop.f32.mrb[0].mxu0
        %v6549 = vpop.f32.mrb[0].mxu0
        %v6550 = vadd.f32 %v6509, %v6549
        %v6551 = vpop.f32.mrb[0].mxu0
        %6552 = vdwg.mxu0
        %6553 = vmatprep.subr.bf16.mxu0 0
        %6554 = vmatpush1.bf16.msra.mxu0 %v5742
        %6555 = vmatprep.subr.bf16.mxu0 0
        %6556 = vmatpush1.bf16.msra.mxu0 %v5745
        %6557 = vmatprep.subr.bf16.mxu0 0
        %6558 = vmatpush1.bf16.msra.mxu0 %v5748
        %6559 = vmatprep.subr.bf16.mxu0 0
        %6560 = vmatpush1.bf16.msra.mxu0 %v5751
        %6561 = vmatprep.subr.bf16.mxu0 0
        %6562 = vmatpush1.bf16.msra.mxu0 %v5754
        %6563 = vmatprep.subr.bf16.mxu0 0
        %6564 = vmatpush1.bf16.msra.mxu0 %v5757
        %6565 = vmatprep.subr.bf16.mxu0 0
        %6566 = vmatpush1.bf16.msra.mxu0 %v5760
        %6567 = vmatprep.subr.bf16.mxu0 0
        %6568 = vmatpush1.bf16.msra.mxu0 %v5763
        %6569 = vmatprep.subr.bf16.mxu0 0
        %6570 = vmatpush1.bf16.msra.mxu0 %v5766
        %6571 = vmatprep.subr.bf16.mxu0 0
        %6572 = vmatpush1.bf16.msra.mxu0 %v5769
        %6573 = vmatprep.subr.bf16.mxu0 0
        %6574 = vmatpush1.bf16.msra.mxu0 %v5772
        %6575 = vmatprep.subr.bf16.mxu0 0
        %6576 = vmatpush1.bf16.msra.mxu0 %v5775
        %6577 = vmatprep.subr.bf16.mxu0 0
        %6578 = vmatpush1.bf16.msra.mxu0 %v5778
        %6579 = vmatprep.subr.bf16.mxu0 0
        %6580 = vmatpush1.bf16.msra.mxu0 %v5781
        %6581 = vmatprep.subr.bf16.mxu0 0
        %6582 = vmatpush1.bf16.msra.mxu0 %v5784
        %6583 = vmatprep.subr.bf16.mxu0 0
        %6584 = vmatpush1.bf16.msra.mxu0 %v5787
        %6585 = vmatprep.mubr.bf16.mxu0 %v4230
        %6586 = vmatmul.mubr.bf16.gmra.mrb[0].mxu0 %v4229
        %v6587 = vpop.f32.mrb[0].mxu0
        %v6588 = vadd.f32 %v6547, %v6587
        %v6589 = vpop.f32.mrb[0].mxu0
        %v6590 = vpop.f32.mrb[0].mxu0
        %v6591 = vadd.f32 %v6550, %v6590
        %v6592 = vpop.f32.mrb[0].mxu0
        %6593 = vdwg.mxu0
        %6594 = vmatprep.subr.bf16.mxu0 0
        %6595 = vmatpush1.bf16.msra.mxu0 %v5790
        %6596 = vmatprep.subr.bf16.mxu0 0
        %6597 = vmatpush1.bf16.msra.mxu0 %v5793
        %6598 = vmatprep.subr.bf16.mxu0 0
        %6599 = vmatpush1.bf16.msra.mxu0 %v5796
        %6600 = vmatprep.subr.bf16.mxu0 0
        %6601 = vmatpush1.bf16.msra.mxu0 %v5799
        %6602 = vmatprep.subr.bf16.mxu0 0
        %6603 = vmatpush1.bf16.msra.mxu0 %v5802
        %6604 = vmatprep.subr.bf16.mxu0 0
        %6605 = vmatpush1.bf16.msra.mxu0 %v5805
        %6606 = vmatprep.subr.bf16.mxu0 0
        %6607 = vmatpush1.bf16.msra.mxu0 %v5808
        %6608 = vmatprep.subr.bf16.mxu0 0
        %6609 = vmatpush1.bf16.msra.mxu0 %v5811
        %6610 = vmatprep.subr.bf16.mxu0 0
        %6611 = vmatpush1.bf16.msra.mxu0 %v5814
        %6612 = vmatprep.subr.bf16.mxu0 0
        %6613 = vmatpush1.bf16.msra.mxu0 %v5817
        %6614 = vmatprep.subr.bf16.mxu0 0
        %6615 = vmatpush1.bf16.msra.mxu0 %v5820
        %6616 = vmatprep.subr.bf16.mxu0 0
        %6617 = vmatpush1.bf16.msra.mxu0 %v5823
        %6618 = vmatprep.subr.bf16.mxu0 0
        %6619 = vmatpush1.bf16.msra.mxu0 %v5826
        %6620 = vmatprep.subr.bf16.mxu0 0
        %6621 = vmatpush1.bf16.msra.mxu0 %v5829
        %6622 = vmatprep.subr.bf16.mxu0 0
        %6623 = vmatpush1.bf16.msra.mxu0 %v5832
        %6624 = vmatprep.subr.bf16.mxu0 0
        %6625 = vmatpush1.bf16.msra.mxu0 %v5835
        %6626 = vmatprep.mubr.bf16.mxu0 %v4232
        %6627 = vmatmul.mubr.bf16.gmra.mrb[0].mxu0 %v4231
        %v6628 = vpop.f32.mrb[0].mxu0
        %v6629 = vadd.f32 %v6588, %v6628
        %v6630 = vpop.f32.mrb[0].mxu0
        %v6631 = vpop.f32.mrb[0].mxu0
        %v6632 = vadd.f32 %v6591, %v6631
        %v6633 = vpop.f32.mrb[0].mxu0
        %6634 = vdwg.mxu0
        %6635 = vmatprep.subr.bf16.mxu0 0
        %6636 = vmatpush1.bf16.msra.mxu0 %v5838
        %6637 = vmatprep.subr.bf16.mxu0 0
        %6638 = vmatpush1.bf16.msra.mxu0 %v5841
        %6639 = vmatprep.subr.bf16.mxu0 0
        %6640 = vmatpush1.bf16.msra.mxu0 %v5844
        %6641 = vmatprep.subr.bf16.mxu0 0
        %6642 = vmatpush1.bf16.msra.mxu0 %v5847
        %6643 = vmatprep.subr.bf16.mxu0 0
        %6644 = vmatpush1.bf16.msra.mxu0 %v5850
        %6645 = vmatprep.subr.bf16.mxu0 0
        %6646 = vmatpush1.bf16.msra.mxu0 %v5853
        %6647 = vmatprep.subr.bf16.mxu0 0
        %6648 = vmatpush1.bf16.msra.mxu0 %v5856
        %6649 = vmatprep.subr.bf16.mxu0 0
        %6650 = vmatpush1.bf16.msra.mxu0 %v5859
        %6651 = vmatprep.subr.bf16.mxu0 0
        %6652 = vmatpush1.bf16.msra.mxu0 %v5862
        %6653 = vmatprep.subr.bf16.mxu0 0
        %6654 = vmatpush1.bf16.msra.mxu0 %v5865
        %6655 = vmatprep.subr.bf16.mxu0 0
        %6656 = vmatpush1.bf16.msra.mxu0 %v5868
        %6657 = vmatprep.subr.bf16.mxu0 0
        %6658 = vmatpush1.bf16.msra.mxu0 %v5871
        %6659 = vmatprep.subr.bf16.mxu0 0
        %6660 = vmatpush1.bf16.msra.mxu0 %v5874
        %6661 = vmatprep.subr.bf16.mxu0 0
        %6662 = vmatpush1.bf16.msra.mxu0 %v5877
        %6663 = vmatprep.subr.bf16.mxu0 0
        %6664 = vmatpush1.bf16.msra.mxu0 %v5880
        %6665 = vmatprep.subr.bf16.mxu0 0
        %6666 = vmatpush1.bf16.msra.mxu0 %v5883
        %6667 = vmatprep.mubr.bf16.mxu0 %v4234
        %6668 = vmatmul.mubr.bf16.gmra.mrb[0].mxu0 %v4233
        %v6669 = vpop.f32.mrb[0].mxu0
        %v6670 = vadd.f32 %v6629, %v6669
        %v6671 = vpop.f32.mrb[0].mxu0
        %v6672 = vpop.f32.mrb[0].mxu0
        %v6673 = vadd.f32 %v6632, %v6672
        %v6674 = vpop.f32.mrb[0].mxu0
        %6675 = vdwg.mxu0
        %v6676 = vmax.f32 %v6422, 0.0
        %v6677 = vmax.f32 %v6424, 0.0
        %v6678 = vmax.f32 %v6670, 0.0
        %v6679 = vmax.f32 %v6426, 0.0
        %v6680 = vmax.f32 %v6428, 0.0
        %v6681 = vmax.f32 %v6673, 0.0
        %v6688 = vrot.slane %v6676, 1
        %v6689 = vrot.slane %v6679, 1
        %v6690 = vsel %vm477, %v6688, %v6689
        %v6691 = vrot.slane %v6677, 1
        %v6692 = vrot.slane %v6680, 1
        %v6693 = vsel %vm477, %v6691, %v6692
        %v6694 = vrot.slane %v6678, 1
        %v6695 = vrot.slane %v6681, 1
        %v6696 = vsel %vm477, %v6694, %v6695
        %v6703 = vrot.slane %v6676, 2
        %v6704 = vrot.slane %v6679, 2
        %v6705 = vsel %vm1292, %v6703, %v6704
        %v6706 = vrot.slane %v6677, 2
        %v6707 = vrot.slane %v6680, 2
        %v6708 = vsel %vm1292, %v6706, %v6707
        %v6709 = vrot.slane %v6678, 2
        %v6710 = vrot.slane %v6681, 2
        %v6711 = vsel %vm1292, %v6709, %v6710
        %v6718 = vpack.c.bf16 %v6679, %v6676
        %v6719 = vpack.c.bf16 %v6680, %v6677
        %v6720 = vpack.c.bf16 %v6681, %v6678
        %v6721 = vpack.c.bf16 %v6689, %v6690
        %v6722 = vpack.c.bf16 %v6692, %v6693
        %v6723 = vpack.c.bf16 %v6695, %v6696
        %v6724 = vpack.c.bf16 %v6704, %v6705
        %v6725 = vpack.c.bf16 %v6707, %v6708
        %v6726 = vpack.c.bf16 %v6710, %v6711
        %v6727 = vld [vmem:[#allocation5] sm:$0xff]
        %v6728 = vld [vmem:[#allocation5 + $0x8] sm:$0xf]
        %v6729 = vld [vmem:[#allocation5 + $0xc] sm:$0xff]
        %v6730 = vld [vmem:[#allocation5 + $0x14] sm:$0xf]
        %v6731 = vld [vmem:[#allocation5 + $0x18] sm:$0xff]
        %v6732 = vld [vmem:[#allocation5 + $0x20] sm:$0xf]
        %v6733 = vld [vmem:[#allocation5 + $0x24] sm:$0xff]
        %v6734 = vld [vmem:[#allocation5 + $0x2c] sm:$0xf]
        %v6735 = vld [vmem:[#allocation5 + $0x30] sm:$0xff]
        %v6736 = vld [vmem:[#allocation5 + $0x38] sm:$0xf]
        %v6737 = vld [vmem:[#allocation5 + $0x3c] sm:$0xff]
        %v6738 = vld [vmem:[#allocation5 + $0x44] sm:$0xf]
        %v6739 = vld [vmem:[#allocation5 + $0x48] sm:$0xff]
        %v6740 = vld [vmem:[#allocation5 + $0x50] sm:$0xf]
        %v6741 = vld [vmem:[#allocation5 + $0x54] sm:$0xff]
        %v6742 = vld [vmem:[#allocation5 + $0x5c] sm:$0xf]
        %v6743 = vld [vmem:[#allocation5 + $0x60] sm:$0xff]
        %v6744 = vld [vmem:[#allocation5 + $0x68] sm:$0xf]
        %v6745 = vld [vmem:[#allocation5 + $0x6c] sm:$0xff]
        %v6746 = vld [vmem:[#allocation5 + $0x74] sm:$0xf]
        %v6747 = vld [vmem:[#allocation5 + $0x78] sm:$0xff]
        %v6748 = vld [vmem:[#allocation5 + $0x80] sm:$0xf]
        %v6749 = vld [vmem:[#allocation5 + $0x84] sm:$0xff]
        %v6750 = vld [vmem:[#allocation5 + $0x8c] sm:$0xf]
        %v6751 = vld [vmem:[#allocation5 + $0x90] sm:$0xff]
        %v6752 = vld [vmem:[#allocation5 + $0x98] sm:$0xf]
        %v6753 = vld [vmem:[#allocation5 + $0x9c] sm:$0xff]
        %v6754 = vld [vmem:[#allocation5 + $0xa4] sm:$0xf]
        %v6755 = vld [vmem:[#allocation5 + $0xa8] sm:$0xff]
        %v6756 = vld [vmem:[#allocation5 + $0xb0] sm:$0xf]
        %v6757 = vld [vmem:[#allocation5 + $0xb4] sm:$0xff]
        %v6758 = vld [vmem:[#allocation5 + $0xbc] sm:$0xf]
        %v6759 = vld [vmem:[#allocation5 + $0xc0] sm:$0xff]
        %v6760 = vld [vmem:[#allocation5 + $0xc8] sm:$0xf]
        %v6761 = vld [vmem:[#allocation5 + $0xcc] sm:$0xff]
        %v6762 = vld [vmem:[#allocation5 + $0xd4] sm:$0xf]
        %v6763 = vld [vmem:[#allocation5 + $0xd8] sm:$0xff]
        %v6764 = vld [vmem:[#allocation5 + $0xe0] sm:$0xf]
        %v6765 = vld [vmem:[#allocation5 + $0xe4] sm:$0xff]
        %v6766 = vld [vmem:[#allocation5 + $0xec] sm:$0xf]
        %v6767 = vld [vmem:[#allocation5 + $0xf0] sm:$0xff]
        %v6768 = vld [vmem:[#allocation5 + $0xf8] sm:$0xf]
        %v6769 = vld [vmem:[#allocation5 + $0xfc] sm:$0xff]
        %v6770 = vld [vmem:[#allocation5 + $0x104] sm:$0xf]
        %v6771 = vld [vmem:[#allocation5 + $0x108] sm:$0xff]
        %v6772 = vld [vmem:[#allocation5 + $0x110] sm:$0xf]
        %v6773 = vld [vmem:[#allocation5 + $0x114] sm:$0xff]
        %v6774 = vld [vmem:[#allocation5 + $0x11c] sm:$0xf]
        %v6775 = vld [vmem:[#allocation5 + $0x120] sm:$0xff]
        %v6776 = vld [vmem:[#allocation5 + $0x128] sm:$0xf]
        %v6777 = vld [vmem:[#allocation5 + $0x12c] sm:$0xff]
        %v6778 = vld [vmem:[#allocation5 + $0x134] sm:$0xf]
        %v6779 = vld [vmem:[#allocation5 + $0x138] sm:$0xff]
        %v6780 = vld [vmem:[#allocation5 + $0x140] sm:$0xf]
        %v6781 = vld [vmem:[#allocation5 + $0x144] sm:$0xff]
        %v6782 = vld [vmem:[#allocation5 + $0x14c] sm:$0xf]
        %v6783 = vld [vmem:[#allocation5 + $0x150] sm:$0xff]
        %v6784 = vld [vmem:[#allocation5 + $0x158] sm:$0xf]
        %v6785 = vld [vmem:[#allocation5 + $0x15c] sm:$0xff]
        %v6786 = vld [vmem:[#allocation5 + $0x164] sm:$0xf]
        %v6787 = vld [vmem:[#allocation5 + $0x168] sm:$0xff]
        %v6788 = vld [vmem:[#allocation5 + $0x170] sm:$0xf]
        %v6789 = vld [vmem:[#allocation5 + $0x174] sm:$0xff]
        %v6790 = vld [vmem:[#allocation5 + $0x17c] sm:$0xf]
        %v6791 = vld [vmem:[#allocation5 + $0x180] sm:$0xff]
        %v6792 = vld [vmem:[#allocation5 + $0x188] sm:$0xf]
        %v6793 = vld [vmem:[#allocation5 + $0x18c] sm:$0xff]
        %v6794 = vld [vmem:[#allocation5 + $0x194] sm:$0xf]
        %v6795 = vld [vmem:[#allocation5 + $0x198] sm:$0xff]
        %v6796 = vld [vmem:[#allocation5 + $0x1a0] sm:$0xf]
        %v6797 = vld [vmem:[#allocation5 + $0x1a4] sm:$0xff]
        %v6798 = vld [vmem:[#allocation5 + $0x1ac] sm:$0xf]
        %v6799 = vld [vmem:[#allocation5 + $0x1b0] sm:$0xff]
        %v6800 = vld [vmem:[#allocation5 + $0x1b8] sm:$0xf]
        %v6801 = vld [vmem:[#allocation5 + $0x1bc] sm:$0xff]
        %v6802 = vld [vmem:[#allocation5 + $0x1c4] sm:$0xf]
        %v6803 = vld [vmem:[#allocation5 + $0x1c8] sm:$0xff]
        %v6804 = vld [vmem:[#allocation5 + $0x1d0] sm:$0xf]
        %v6805 = vld [vmem:[#allocation5 + $0x1d4] sm:$0xff]
        %v6806 = vld [vmem:[#allocation5 + $0x1dc] sm:$0xf]
        %v6807 = vld [vmem:[#allocation5 + $0x1e0] sm:$0xff]
        %v6808 = vld [vmem:[#allocation5 + $0x1e8] sm:$0xf]
        %v6809 = vld [vmem:[#allocation5 + $0x1ec] sm:$0xff]
        %v6810 = vld [vmem:[#allocation5 + $0x1f4] sm:$0xf]
        %v6811 = vld [vmem:[#allocation5 + $0x1f8] sm:$0xff]
        %v6812 = vld [vmem:[#allocation5 + $0x200] sm:$0xf]
        %v6813 = vld [vmem:[#allocation5 + $0x204] sm:$0xff]
        %v6814 = vld [vmem:[#allocation5 + $0x20c] sm:$0xf]
        %v6815 = vld [vmem:[#allocation5 + $0x210] sm:$0xff]
        %v6816 = vld [vmem:[#allocation5 + $0x218] sm:$0xf]
        %v6817 = vld [vmem:[#allocation5 + $0x21c] sm:$0xff]
        %v6818 = vld [vmem:[#allocation5 + $0x224] sm:$0xf]
        %v6819 = vld [vmem:[#allocation5 + $0x228] sm:$0xff]
        %v6820 = vld [vmem:[#allocation5 + $0x230] sm:$0xf]
        %v6821 = vld [vmem:[#allocation5 + $0x234] sm:$0xff]
        %v6822 = vld [vmem:[#allocation5 + $0x23c] sm:$0xf]
        %v6823 = vld [vmem:[#allocation5 + $0x240] sm:$0xff]
        %v6824 = vld [vmem:[#allocation5 + $0x248] sm:$0xf]
        %v6825 = vld [vmem:[#allocation5 + $0x24c] sm:$0xff]
        %v6826 = vld [vmem:[#allocation5 + $0x254] sm:$0xf]
        %v6827 = vld [vmem:[#allocation5 + $0x258] sm:$0xff]
        %v6828 = vld [vmem:[#allocation5 + $0x260] sm:$0xf]
        %v6829 = vld [vmem:[#allocation5 + $0x264] sm:$0xff]
        %v6830 = vld [vmem:[#allocation5 + $0x26c] sm:$0xf]
        %v6831 = vld [vmem:[#allocation5 + $0x270] sm:$0xff]
        %v6832 = vld [vmem:[#allocation5 + $0x278] sm:$0xf]
        %v6833 = vld [vmem:[#allocation5 + $0x27c] sm:$0xff]
        %v6834 = vld [vmem:[#allocation5 + $0x284] sm:$0xf]
        %v6835 = vld [vmem:[#allocation5 + $0x288] sm:$0xff]
        %v6836 = vld [vmem:[#allocation5 + $0x290] sm:$0xf]
        %v6837 = vld [vmem:[#allocation5 + $0x294] sm:$0xff]
        %v6838 = vld [vmem:[#allocation5 + $0x29c] sm:$0xf]
        %v6839 = vld [vmem:[#allocation5 + $0x2a0] sm:$0xff]
        %v6840 = vld [vmem:[#allocation5 + $0x2a8] sm:$0xf]
        %v6841 = vld [vmem:[#allocation5 + $0x2ac] sm:$0xff]
        %v6842 = vld [vmem:[#allocation5 + $0x2b4] sm:$0xf]
        %v6843 = vld [vmem:[#allocation5 + $0x2b8] sm:$0xff]
        %v6844 = vld [vmem:[#allocation5 + $0x2c0] sm:$0xf]
        %v6845 = vld [vmem:[#allocation5 + $0x2c4] sm:$0xff]
        %v6846 = vld [vmem:[#allocation5 + $0x2cc] sm:$0xf]
        %v6847 = vld [vmem:[#allocation5 + $0x2d0] sm:$0xff]
        %v6848 = vld [vmem:[#allocation5 + $0x2d8] sm:$0xf]
        %v6849 = vld [vmem:[#allocation5 + $0x2dc] sm:$0xff]
        %v6850 = vld [vmem:[#allocation5 + $0x2e4] sm:$0xf]
        %v6851 = vld [vmem:[#allocation5 + $0x2e8] sm:$0xff]
        %v6852 = vld [vmem:[#allocation5 + $0x2f0] sm:$0xf]
        %v6853 = vld [vmem:[#allocation5 + $0x2f4] sm:$0xff]
        %v6854 = vld [vmem:[#allocation5 + $0x2fc] sm:$0xf]
        %v6855 = vld [vmem:[#allocation5 + $0x300] sm:$0xff]
        %v6856 = vld [vmem:[#allocation5 + $0x308] sm:$0xf]
        %v6857 = vld [vmem:[#allocation5 + $0x30c] sm:$0xff]
        %v6858 = vld [vmem:[#allocation5 + $0x314] sm:$0xf]
        %v6859 = vld [vmem:[#allocation5 + $0x318] sm:$0xff]
        %v6860 = vld [vmem:[#allocation5 + $0x320] sm:$0xf]
        %v6861 = vld [vmem:[#allocation5 + $0x324] sm:$0xff]
        %v6862 = vld [vmem:[#allocation5 + $0x32c] sm:$0xf]
        %v6863 = vld [vmem:[#allocation5 + $0x330] sm:$0xff]
        %v6864 = vld [vmem:[#allocation5 + $0x338] sm:$0xf]
        %v6865 = vld [vmem:[#allocation5 + $0x33c] sm:$0xff]
        %v6866 = vld [vmem:[#allocation5 + $0x344] sm:$0xf]
        %v6867 = vld [vmem:[#allocation5 + $0x348] sm:$0xff]
        %v6868 = vld [vmem:[#allocation5 + $0x350] sm:$0xf]
        %v6869 = vld [vmem:[#allocation5 + $0x354] sm:$0xff]
        %v6870 = vld [vmem:[#allocation5 + $0x35c] sm:$0xf]
        %v6871 = vld [vmem:[#allocation5 + $0x360] sm:$0xff]
        %v6872 = vld [vmem:[#allocation5 + $0x368] sm:$0xf]
        %v6873 = vld [vmem:[#allocation5 + $0x36c] sm:$0xff]
        %v6874 = vld [vmem:[#allocation5 + $0x374] sm:$0xf]
        %v6875 = vld [vmem:[#allocation5 + $0x378] sm:$0xff]
        %v6876 = vld [vmem:[#allocation5 + $0x380] sm:$0xf]
        %v6877 = vld [vmem:[#allocation5 + $0x384] sm:$0xff]
        %v6878 = vld [vmem:[#allocation5 + $0x38c] sm:$0xf]
        %v6879 = vld [vmem:[#allocation5 + $0x390] sm:$0xff]
        %v6880 = vld [vmem:[#allocation5 + $0x398] sm:$0xf]
        %v6881 = vld [vmem:[#allocation5 + $0x39c] sm:$0xff]
        %v6882 = vld [vmem:[#allocation5 + $0x3a4] sm:$0xf]
        %v6883 = vld [vmem:[#allocation5 + $0x3a8] sm:$0xff]
        %v6884 = vld [vmem:[#allocation5 + $0x3b0] sm:$0xf]
        %v6885 = vld [vmem:[#allocation5 + $0x3b4] sm:$0xff]
        %v6886 = vld [vmem:[#allocation5 + $0x3bc] sm:$0xf]
        %v6887 = vld [vmem:[#allocation5 + $0x3c0] sm:$0xff]
        %v6888 = vld [vmem:[#allocation5 + $0x3c8] sm:$0xf]
        %v6889 = vld [vmem:[#allocation5 + $0x3cc] sm:$0xff]
        %v6890 = vld [vmem:[#allocation5 + $0x3d4] sm:$0xf]
        %v6891 = vld [vmem:[#allocation5 + $0x3d8] sm:$0xff]
        %v6892 = vld [vmem:[#allocation5 + $0x3e0] sm:$0xf]
        %v6893 = vld [vmem:[#allocation5 + $0x3e4] sm:$0xff]
        %v6894 = vld [vmem:[#allocation5 + $0x3ec] sm:$0xf]
        %v6895 = vld [vmem:[#allocation5 + $0x3f0] sm:$0xff]
        %v6896 = vld [vmem:[#allocation5 + $0x3f8] sm:$0xf]
        %v6897 = vld [vmem:[#allocation5 + $0x3fc] sm:$0xff]
        %v6898 = vld [vmem:[#allocation5 + $0x404] sm:$0xf]
        %v6899 = vld [vmem:[#allocation5 + $0x408] sm:$0xff]
        %v6900 = vld [vmem:[#allocation5 + $0x410] sm:$0xf]
        %v6901 = vld [vmem:[#allocation5 + $0x414] sm:$0xff]
        %v6902 = vld [vmem:[#allocation5 + $0x41c] sm:$0xf]
        %v6903 = vld [vmem:[#allocation5 + $0x420] sm:$0xff]
        %v6904 = vld [vmem:[#allocation5 + $0x428] sm:$0xf]
        %v6905 = vld [vmem:[#allocation5 + $0x42c] sm:$0xff]
        %v6906 = vld [vmem:[#allocation5 + $0x434] sm:$0xf]
        %v6907 = vld [vmem:[#allocation5 + $0x438] sm:$0xff]
        %v6908 = vld [vmem:[#allocation5 + $0x440] sm:$0xf]
        %v6909 = vld [vmem:[#allocation5 + $0x444] sm:$0xff]
        %v6910 = vld [vmem:[#allocation5 + $0x44c] sm:$0xf]
        %v6911 = vld [vmem:[#allocation5 + $0x450] sm:$0xff]
        %v6912 = vld [vmem:[#allocation5 + $0x458] sm:$0xf]
        %v6913 = vld [vmem:[#allocation5 + $0x45c] sm:$0xff]
        %v6914 = vld [vmem:[#allocation5 + $0x464] sm:$0xf]
        %v6915 = vld [vmem:[#allocation5 + $0x468] sm:$0xff]
        %v6916 = vld [vmem:[#allocation5 + $0x470] sm:$0xf]
        %v6917 = vld [vmem:[#allocation5 + $0x474] sm:$0xff]
        %v6918 = vld [vmem:[#allocation5 + $0x47c] sm:$0xf]
        %v6919 = vld [vmem:[#allocation5 + $0x480] sm:$0xff]
        %v6920 = vld [vmem:[#allocation5 + $0x488] sm:$0xf]
        %v6921 = vld [vmem:[#allocation5 + $0x48c] sm:$0xff]
        %v6922 = vld [vmem:[#allocation5 + $0x494] sm:$0xf]
        %v6923 = vld [vmem:[#allocation5 + $0x498] sm:$0xff]
        %v6924 = vld [vmem:[#allocation5 + $0x4a0] sm:$0xf]
        %v6925 = vld [vmem:[#allocation5 + $0x4a4] sm:$0xff]
        %v6926 = vld [vmem:[#allocation5 + $0x4ac] sm:$0xf]
        %v6927 = vld [vmem:[#allocation5 + $0x4b0] sm:$0xff]
        %v6928 = vld [vmem:[#allocation5 + $0x4b8] sm:$0xf]
        %v6929 = vld [vmem:[#allocation5 + $0x4bc] sm:$0xff]
        %v6930 = vld [vmem:[#allocation5 + $0x4c4] sm:$0xf]
        %v6931 = vld [vmem:[#allocation5 + $0x4c8] sm:$0xff]
        %v6932 = vld [vmem:[#allocation5 + $0x4d0] sm:$0xf]
        %v6933 = vld [vmem:[#allocation5 + $0x4d4] sm:$0xff]
        %v6934 = vld [vmem:[#allocation5 + $0x4dc] sm:$0xf]
        %v6935 = vld [vmem:[#allocation5 + $0x4e0] sm:$0xff]
        %v6936 = vld [vmem:[#allocation5 + $0x4e8] sm:$0xf]
        %v6937 = vld [vmem:[#allocation5 + $0x4ec] sm:$0xff]
        %v6938 = vld [vmem:[#allocation5 + $0x4f4] sm:$0xf]
        %v6939 = vld [vmem:[#allocation5 + $0x4f8] sm:$0xff]
        %v6940 = vld [vmem:[#allocation5 + $0x500] sm:$0xf]
        %v6941 = vld [vmem:[#allocation5 + $0x504] sm:$0xff]
        %v6942 = vld [vmem:[#allocation5 + $0x50c] sm:$0xf]
        %v6943 = vld [vmem:[#allocation5 + $0x510] sm:$0xff]
        %v6944 = vld [vmem:[#allocation5 + $0x518] sm:$0xf]
        %v6945 = vld [vmem:[#allocation5 + $0x51c] sm:$0xff]
        %v6946 = vld [vmem:[#allocation5 + $0x524] sm:$0xf]
        %v6947 = vld [vmem:[#allocation5 + $0x528] sm:$0xff]
        %v6948 = vld [vmem:[#allocation5 + $0x530] sm:$0xf]
        %v6949 = vld [vmem:[#allocation5 + $0x534] sm:$0xff]
        %v6950 = vld [vmem:[#allocation5 + $0x53c] sm:$0xf]
        %v6951 = vld [vmem:[#allocation5 + $0x540] sm:$0xff]
        %v6952 = vld [vmem:[#allocation5 + $0x548] sm:$0xf]
        %v6953 = vld [vmem:[#allocation5 + $0x54c] sm:$0xff]
        %v6954 = vld [vmem:[#allocation5 + $0x554] sm:$0xf]
        %v6955 = vld [vmem:[#allocation5 + $0x558] sm:$0xff]
        %v6956 = vld [vmem:[#allocation5 + $0x560] sm:$0xf]
        %v6957 = vld [vmem:[#allocation5 + $0x564] sm:$0xff]
        %v6958 = vld [vmem:[#allocation5 + $0x56c] sm:$0xf]
        %v6959 = vld [vmem:[#allocation5 + $0x570] sm:$0xff]
        %v6960 = vld [vmem:[#allocation5 + $0x578] sm:$0xf]
        %v6961 = vld [vmem:[#allocation5 + $0x57c] sm:$0xff]
        %v6962 = vld [vmem:[#allocation5 + $0x584] sm:$0xf]
        %v6963 = vld [vmem:[#allocation5 + $0x588] sm:$0xff]
        %v6964 = vld [vmem:[#allocation5 + $0x590] sm:$0xf]
        %v6965 = vld [vmem:[#allocation5 + $0x594] sm:$0xff]
        %v6966 = vld [vmem:[#allocation5 + $0x59c] sm:$0xf]
        %v6967 = vld [vmem:[#allocation5 + $0x5a0] sm:$0xff]
        %v6968 = vld [vmem:[#allocation5 + $0x5a8] sm:$0xf]
        %v6969 = vld [vmem:[#allocation5 + $0x5ac] sm:$0xff]
        %v6970 = vld [vmem:[#allocation5 + $0x5b4] sm:$0xf]
        %v6971 = vld [vmem:[#allocation5 + $0x5b8] sm:$0xff]
        %v6972 = vld [vmem:[#allocation5 + $0x5c0] sm:$0xf]
        %v6973 = vld [vmem:[#allocation5 + $0x5c4] sm:$0xff]
        %v6974 = vld [vmem:[#allocation5 + $0x5cc] sm:$0xf]
        %v6975 = vld [vmem:[#allocation5 + $0x5d0] sm:$0xff]
        %v6976 = vld [vmem:[#allocation5 + $0x5d8] sm:$0xf]
        %v6977 = vld [vmem:[#allocation5 + $0x5dc] sm:$0xff]
        %v6978 = vld [vmem:[#allocation5 + $0x5e4] sm:$0xf]
        %v6979 = vld [vmem:[#allocation5 + $0x5e8] sm:$0xff]
        %v6980 = vld [vmem:[#allocation5 + $0x5f0] sm:$0xf]
        %v6981 = vld [vmem:[#allocation5 + $0x5f4] sm:$0xff]
        %v6982 = vld [vmem:[#allocation5 + $0x5fc] sm:$0xf]
        %v6983 = vld [vmem:[#allocation5 + $0x600] sm:$0xff]
        %v6984 = vld [vmem:[#allocation5 + $0x608] sm:$0xf]
        %v6985 = vld [vmem:[#allocation5 + $0x60c] sm:$0xff]
        %v6986 = vld [vmem:[#allocation5 + $0x614] sm:$0xf]
        %v6987 = vld [vmem:[#allocation5 + $0x618] sm:$0xff]
        %v6988 = vld [vmem:[#allocation5 + $0x620] sm:$0xf]
        %v6989 = vld [vmem:[#allocation5 + $0x624] sm:$0xff]
        %v6990 = vld [vmem:[#allocation5 + $0x62c] sm:$0xf]
        %v6991 = vld [vmem:[#allocation5 + $0x630] sm:$0xff]
        %v6992 = vld [vmem:[#allocation5 + $0x638] sm:$0xf]
        %v6993 = vld [vmem:[#allocation5 + $0x63c] sm:$0xff]
        %v6994 = vld [vmem:[#allocation5 + $0x644] sm:$0xf]
        %v6995 = vld [vmem:[#allocation5 + $0x648] sm:$0xff]
        %v6996 = vld [vmem:[#allocation5 + $0x650] sm:$0xf]
        %v6997 = vld [vmem:[#allocation5 + $0x654] sm:$0xff]
        %v6998 = vld [vmem:[#allocation5 + $0x65c] sm:$0xf]
        %v6999 = vld [vmem:[#allocation5 + $0x660] sm:$0xff]
        %v7000 = vld [vmem:[#allocation5 + $0x668] sm:$0xf]
        %v7001 = vld [vmem:[#allocation5 + $0x66c] sm:$0xff]
        %v7002 = vld [vmem:[#allocation5 + $0x674] sm:$0xf]
        %v7003 = vld [vmem:[#allocation5 + $0x678] sm:$0xff]
        %v7004 = vld [vmem:[#allocation5 + $0x680] sm:$0xf]
        %v7005 = vld [vmem:[#allocation5 + $0x684] sm:$0xff]
        %v7006 = vld [vmem:[#allocation5 + $0x68c] sm:$0xf]
        %v7007 = vld [vmem:[#allocation5 + $0x690] sm:$0xff]
        %v7008 = vld [vmem:[#allocation5 + $0x698] sm:$0xf]
        %v7009 = vld [vmem:[#allocation5 + $0x69c] sm:$0xff]
        %v7010 = vld [vmem:[#allocation5 + $0x6a4] sm:$0xf]
        %v7011 = vld [vmem:[#allocation5 + $0x6a8] sm:$0xff]
        %v7012 = vld [vmem:[#allocation5 + $0x6b0] sm:$0xf]
        %v7013 = vld [vmem:[#allocation5 + $0x6b4] sm:$0xff]
        %v7014 = vld [vmem:[#allocation5 + $0x6bc] sm:$0xf]
        %v7015 = vld [vmem:[%s8] sm:$0x7]
        %v7017 = vlaneseq
        %v7018 = vshrl.u32 %v7017, 7
        %v7019 = vsub.s32 0, %v7018
        %v7020 = vrot.slane %v7015, %v7019
        %v7021 = vlaneseq
        %v7022 = vshrl.u32 %v7021, 7
        %v7023 = vsub.s32 1, %v7022
        %v7024 = vrot.slane %v7015, %v7023
        %v7025 = vlaneseq
        %v7026 = vshrl.u32 %v7025, 7
        %v7027 = vsub.s32 2, %v7026
        %v7028 = vrot.slane %v7015, %v7027
        %v7320 = vunpack.c.l.b16 %v6727
        %v7321 = vunpack.c.h.b16 %v6727
        %v7322 = vunpack.c.l.b16 %v6728
        %v7323 = vunpack.c.l.b16 %v6729
        %v7324 = vunpack.c.h.b16 %v6729
        %v7325 = vunpack.c.l.b16 %v6730
        %v7326 = vunpack.c.l.b16 %v6731
        %v7327 = vunpack.c.h.b16 %v6731
        %v7328 = vunpack.c.l.b16 %v6732
        %v7329 = vunpack.c.l.b16 %v6733
        %v7330 = vunpack.c.h.b16 %v6733
        %v7331 = vunpack.c.l.b16 %v6734
        %v7332 = vunpack.c.l.b16 %v6735
        %v7333 = vunpack.c.h.b16 %v6735
        %v7334 = vunpack.c.l.b16 %v6736
        %v7335 = vunpack.c.l.b16 %v6737
        %v7336 = vunpack.c.h.b16 %v6737
        %v7337 = vunpack.c.l.b16 %v6738
        %v7338 = vunpack.c.l.b16 %v6739
        %v7339 = vunpack.c.h.b16 %v6739
        %v7340 = vunpack.c.l.b16 %v6740
        %v7341 = vunpack.c.l.b16 %v6741
        %v7342 = vunpack.c.h.b16 %v6741
        %v7343 = vunpack.c.l.b16 %v6742
        %v7344 = vunpack.c.l.b16 %v6743
        %v7345 = vunpack.c.h.b16 %v6743
        %v7346 = vunpack.c.l.b16 %v6744
        %v7347 = vunpack.c.l.b16 %v6745
        %v7348 = vunpack.c.h.b16 %v6745
        %v7349 = vunpack.c.l.b16 %v6746
        %v7350 = vunpack.c.l.b16 %v6747
        %v7351 = vunpack.c.h.b16 %v6747
        %v7352 = vunpack.c.l.b16 %v6748
        %v7353 = vunpack.c.l.b16 %v6749
        %v7354 = vunpack.c.h.b16 %v6749
        %v7355 = vunpack.c.l.b16 %v6750
        %v7356 = vunpack.c.l.b16 %v6751
        %v7357 = vunpack.c.h.b16 %v6751
        %v7358 = vunpack.c.l.b16 %v6752
        %v7359 = vunpack.c.l.b16 %v6753
        %v7360 = vunpack.c.h.b16 %v6753
        %v7361 = vunpack.c.l.b16 %v6754
        %v7362 = vunpack.c.l.b16 %v6755
        %v7363 = vunpack.c.h.b16 %v6755
        %v7364 = vunpack.c.l.b16 %v6756
        %v7365 = vunpack.c.l.b16 %v6757
        %v7366 = vunpack.c.h.b16 %v6757
        %v7367 = vunpack.c.l.b16 %v6758
        %v7368 = vunpack.c.l.b16 %v6759
        %v7369 = vunpack.c.h.b16 %v6759
        %v7370 = vunpack.c.l.b16 %v6760
        %v7371 = vunpack.c.l.b16 %v6761
        %v7372 = vunpack.c.h.b16 %v6761
        %v7373 = vunpack.c.l.b16 %v6762
        %v7374 = vunpack.c.l.b16 %v6763
        %v7375 = vunpack.c.h.b16 %v6763
        %v7376 = vunpack.c.l.b16 %v6764
        %v7377 = vunpack.c.l.b16 %v6765
        %v7378 = vunpack.c.h.b16 %v6765
        %v7379 = vunpack.c.l.b16 %v6766
        %v7380 = vunpack.c.l.b16 %v6767
        %v7381 = vunpack.c.h.b16 %v6767
        %v7382 = vunpack.c.l.b16 %v6768
        %v7383 = vunpack.c.l.b16 %v6769
        %v7384 = vunpack.c.h.b16 %v6769
        %v7385 = vunpack.c.l.b16 %v6770
        %v7386 = vunpack.c.l.b16 %v6771
        %v7387 = vunpack.c.h.b16 %v6771
        %v7388 = vunpack.c.l.b16 %v6772
        %v7389 = vunpack.c.l.b16 %v6773
        %v7390 = vunpack.c.h.b16 %v6773
        %v7391 = vunpack.c.l.b16 %v6774
        %v7392 = vunpack.c.l.b16 %v6775
        %v7393 = vunpack.c.h.b16 %v6775
        %v7394 = vunpack.c.l.b16 %v6776
        %v7395 = vunpack.c.l.b16 %v6777
        %v7396 = vunpack.c.h.b16 %v6777
        %v7397 = vunpack.c.l.b16 %v6778
        %v7398 = vunpack.c.l.b16 %v6779
        %v7399 = vunpack.c.h.b16 %v6779
        %v7400 = vunpack.c.l.b16 %v6780
        %v7401 = vunpack.c.l.b16 %v6781
        %v7402 = vunpack.c.h.b16 %v6781
        %v7403 = vunpack.c.l.b16 %v6782
        %v7404 = vunpack.c.l.b16 %v6783
        %v7405 = vunpack.c.h.b16 %v6783
        %v7406 = vunpack.c.l.b16 %v6784
        %v7407 = vunpack.c.l.b16 %v6785
        %v7408 = vunpack.c.h.b16 %v6785
        %v7409 = vunpack.c.l.b16 %v6786
        %v7410 = vunpack.c.l.b16 %v6787
        %v7411 = vunpack.c.h.b16 %v6787
        %v7412 = vunpack.c.l.b16 %v6788
        %v7413 = vunpack.c.l.b16 %v6789
        %v7414 = vunpack.c.h.b16 %v6789
        %v7415 = vunpack.c.l.b16 %v6790
        %v7416 = vunpack.c.l.b16 %v6791
        %v7417 = vunpack.c.h.b16 %v6791
        %v7418 = vunpack.c.l.b16 %v6792
        %v7419 = vunpack.c.l.b16 %v6793
        %v7420 = vunpack.c.h.b16 %v6793
        %v7421 = vunpack.c.l.b16 %v6794
        %v7422 = vunpack.c.l.b16 %v6795
        %v7423 = vunpack.c.h.b16 %v6795
        %v7424 = vunpack.c.l.b16 %v6796
        %v7425 = vunpack.c.l.b16 %v6797
        %v7426 = vunpack.c.h.b16 %v6797
        %v7427 = vunpack.c.l.b16 %v6798
        %v7428 = vunpack.c.l.b16 %v6799
        %v7429 = vunpack.c.h.b16 %v6799
        %v7430 = vunpack.c.l.b16 %v6800
        %v7431 = vunpack.c.l.b16 %v6801
        %v7432 = vunpack.c.h.b16 %v6801
        %v7433 = vunpack.c.l.b16 %v6802
        %v7434 = vunpack.c.l.b16 %v6803
        %v7435 = vunpack.c.h.b16 %v6803
        %v7436 = vunpack.c.l.b16 %v6804
        %v7437 = vunpack.c.l.b16 %v6805
        %v7438 = vunpack.c.h.b16 %v6805
        %v7439 = vunpack.c.l.b16 %v6806
        %v7440 = vunpack.c.l.b16 %v6807
        %v7441 = vunpack.c.h.b16 %v6807
        %v7442 = vunpack.c.l.b16 %v6808
        %v7443 = vunpack.c.l.b16 %v6809
        %v7444 = vunpack.c.h.b16 %v6809
        %v7445 = vunpack.c.l.b16 %v6810
        %v7446 = vunpack.c.l.b16 %v6811
        %v7447 = vunpack.c.h.b16 %v6811
        %v7448 = vunpack.c.l.b16 %v6812
        %v7449 = vunpack.c.l.b16 %v6813
        %v7450 = vunpack.c.h.b16 %v6813
        %v7451 = vunpack.c.l.b16 %v6814
        %v7452 = vunpack.c.l.b16 %v6815
        %v7453 = vunpack.c.h.b16 %v6815
        %v7454 = vunpack.c.l.b16 %v6816
        %v7455 = vunpack.c.l.b16 %v6817
        %v7456 = vunpack.c.h.b16 %v6817
        %v7457 = vunpack.c.l.b16 %v6818
        %v7458 = vunpack.c.l.b16 %v6819
        %v7459 = vunpack.c.h.b16 %v6819
        %v7460 = vunpack.c.l.b16 %v6820
        %v7461 = vunpack.c.l.b16 %v6821
        %v7462 = vunpack.c.h.b16 %v6821
        %v7463 = vunpack.c.l.b16 %v6822
        %v7464 = vunpack.c.l.b16 %v6823
        %v7465 = vunpack.c.h.b16 %v6823
        %v7466 = vunpack.c.l.b16 %v6824
        %v7467 = vunpack.c.l.b16 %v6825
        %v7468 = vunpack.c.h.b16 %v6825
        %v7469 = vunpack.c.l.b16 %v6826
        %v7470 = vunpack.c.l.b16 %v6827
        %v7471 = vunpack.c.h.b16 %v6827
        %v7472 = vunpack.c.l.b16 %v6828
        %v7473 = vunpack.c.l.b16 %v6829
        %v7474 = vunpack.c.h.b16 %v6829
        %v7475 = vunpack.c.l.b16 %v6830
        %v7476 = vunpack.c.l.b16 %v6831
        %v7477 = vunpack.c.h.b16 %v6831
        %v7478 = vunpack.c.l.b16 %v6832
        %v7479 = vunpack.c.l.b16 %v6833
        %v7480 = vunpack.c.h.b16 %v6833
        %v7481 = vunpack.c.l.b16 %v6834
        %v7482 = vunpack.c.l.b16 %v6835
        %v7483 = vunpack.c.h.b16 %v6835
        %v7484 = vunpack.c.l.b16 %v6836
        %v7485 = vunpack.c.l.b16 %v6837
        %v7486 = vunpack.c.h.b16 %v6837
        %v7487 = vunpack.c.l.b16 %v6838
        %v7488 = vunpack.c.l.b16 %v6839
        %v7489 = vunpack.c.h.b16 %v6839
        %v7490 = vunpack.c.l.b16 %v6840
        %v7491 = vunpack.c.l.b16 %v6841
        %v7492 = vunpack.c.h.b16 %v6841
        %v7493 = vunpack.c.l.b16 %v6842
        %v7494 = vunpack.c.l.b16 %v6843
        %v7495 = vunpack.c.h.b16 %v6843
        %v7496 = vunpack.c.l.b16 %v6844
        %v7497 = vunpack.c.l.b16 %v6845
        %v7498 = vunpack.c.h.b16 %v6845
        %v7499 = vunpack.c.l.b16 %v6846
        %v7500 = vunpack.c.l.b16 %v6847
        %v7501 = vunpack.c.h.b16 %v6847
        %v7502 = vunpack.c.l.b16 %v6848
        %v7503 = vunpack.c.l.b16 %v6849
        %v7504 = vunpack.c.h.b16 %v6849
        %v7505 = vunpack.c.l.b16 %v6850
        %v7506 = vunpack.c.l.b16 %v6851
        %v7507 = vunpack.c.h.b16 %v6851
        %v7508 = vunpack.c.l.b16 %v6852
        %v7509 = vunpack.c.l.b16 %v6853
        %v7510 = vunpack.c.h.b16 %v6853
        %v7511 = vunpack.c.l.b16 %v6854
        %v7512 = vunpack.c.l.b16 %v6855
        %v7513 = vunpack.c.h.b16 %v6855
        %v7514 = vunpack.c.l.b16 %v6856
        %v7515 = vunpack.c.l.b16 %v6857
        %v7516 = vunpack.c.h.b16 %v6857
        %v7517 = vunpack.c.l.b16 %v6858
        %v7518 = vunpack.c.l.b16 %v6859
        %v7519 = vunpack.c.h.b16 %v6859
        %v7520 = vunpack.c.l.b16 %v6860
        %v7521 = vunpack.c.l.b16 %v6861
        %v7522 = vunpack.c.h.b16 %v6861
        %v7523 = vunpack.c.l.b16 %v6862
        %v7524 = vunpack.c.l.b16 %v6863
        %v7525 = vunpack.c.h.b16 %v6863
        %v7526 = vunpack.c.l.b16 %v6864
        %v7527 = vunpack.c.l.b16 %v6865
        %v7528 = vunpack.c.h.b16 %v6865
        %v7529 = vunpack.c.l.b16 %v6866
        %v7530 = vunpack.c.l.b16 %v6867
        %v7531 = vunpack.c.h.b16 %v6867
        %v7532 = vunpack.c.l.b16 %v6868
        %v7533 = vunpack.c.l.b16 %v6869
        %v7534 = vunpack.c.h.b16 %v6869
        %v7535 = vunpack.c.l.b16 %v6870
        %v7536 = vunpack.c.l.b16 %v6871
        %v7537 = vunpack.c.h.b16 %v6871
        %v7538 = vunpack.c.l.b16 %v6872
        %v7539 = vunpack.c.l.b16 %v6873
        %v7540 = vunpack.c.h.b16 %v6873
        %v7541 = vunpack.c.l.b16 %v6874
        %v7542 = vunpack.c.l.b16 %v6875
        %v7543 = vunpack.c.h.b16 %v6875
        %v7544 = vunpack.c.l.b16 %v6876
        %v7545 = vunpack.c.l.b16 %v6877
        %v7546 = vunpack.c.h.b16 %v6877
        %v7547 = vunpack.c.l.b16 %v6878
        %v7548 = vunpack.c.l.b16 %v6879
        %v7549 = vunpack.c.h.b16 %v6879
        %v7550 = vunpack.c.l.b16 %v6880
        %v7551 = vunpack.c.l.b16 %v6881
        %v7552 = vunpack.c.h.b16 %v6881
        %v7553 = vunpack.c.l.b16 %v6882
        %v7554 = vunpack.c.l.b16 %v6883
        %v7555 = vunpack.c.h.b16 %v6883
        %v7556 = vunpack.c.l.b16 %v6884
        %v7557 = vunpack.c.l.b16 %v6885
        %v7558 = vunpack.c.h.b16 %v6885
        %v7559 = vunpack.c.l.b16 %v6886
        %v7560 = vunpack.c.l.b16 %v6887
        %v7561 = vunpack.c.h.b16 %v6887
        %v7562 = vunpack.c.l.b16 %v6888
        %v7563 = vunpack.c.l.b16 %v6889
        %v7564 = vunpack.c.h.b16 %v6889
        %v7565 = vunpack.c.l.b16 %v6890
        %v7566 = vunpack.c.l.b16 %v6891
        %v7567 = vunpack.c.h.b16 %v6891
        %v7568 = vunpack.c.l.b16 %v6892
        %v7569 = vunpack.c.l.b16 %v6893
        %v7570 = vunpack.c.h.b16 %v6893
        %v7571 = vunpack.c.l.b16 %v6894
        %v7572 = vunpack.c.l.b16 %v6895
        %v7573 = vunpack.c.h.b16 %v6895
        %v7574 = vunpack.c.l.b16 %v6896
        %v7575 = vunpack.c.l.b16 %v6897
        %v7576 = vunpack.c.h.b16 %v6897
        %v7577 = vunpack.c.l.b16 %v6898
        %v7578 = vunpack.c.l.b16 %v6899
        %v7579 = vunpack.c.h.b16 %v6899
        %v7580 = vunpack.c.l.b16 %v6900
        %v7581 = vunpack.c.l.b16 %v6901
        %v7582 = vunpack.c.h.b16 %v6901
        %v7583 = vunpack.c.l.b16 %v6902
        %v7584 = vunpack.c.l.b16 %v6903
        %v7585 = vunpack.c.h.b16 %v6903
        %v7586 = vunpack.c.l.b16 %v6904
        %v7587 = vunpack.c.l.b16 %v6905
        %v7588 = vunpack.c.h.b16 %v6905
        %v7589 = vunpack.c.l.b16 %v6906
        %v7590 = vunpack.c.l.b16 %v6907
        %v7591 = vunpack.c.h.b16 %v6907
        %v7592 = vunpack.c.l.b16 %v6908
        %v7593 = vunpack.c.l.b16 %v6909
        %v7594 = vunpack.c.h.b16 %v6909
        %v7595 = vunpack.c.l.b16 %v6910
        %v7596 = vunpack.c.l.b16 %v6911
        %v7597 = vunpack.c.h.b16 %v6911
        %v7598 = vunpack.c.l.b16 %v6912
        %v7599 = vunpack.c.l.b16 %v6913
        %v7600 = vunpack.c.h.b16 %v6913
        %v7601 = vunpack.c.l.b16 %v6914
        %v7602 = vunpack.c.l.b16 %v6915
        %v7603 = vunpack.c.h.b16 %v6915
        %v7604 = vunpack.c.l.b16 %v6916
        %v7605 = vunpack.c.l.b16 %v6917
        %v7606 = vunpack.c.h.b16 %v6917
        %v7607 = vunpack.c.l.b16 %v6918
        %v7608 = vunpack.c.l.b16 %v6919
        %v7609 = vunpack.c.h.b16 %v6919
        %v7610 = vunpack.c.l.b16 %v6920
        %v7611 = vunpack.c.l.b16 %v6921
        %v7612 = vunpack.c.h.b16 %v6921
        %v7613 = vunpack.c.l.b16 %v6922
        %v7614 = vunpack.c.l.b16 %v6923
        %v7615 = vunpack.c.h.b16 %v6923
        %v7616 = vunpack.c.l.b16 %v6924
        %v7617 = vunpack.c.l.b16 %v6925
        %v7618 = vunpack.c.h.b16 %v6925
        %v7619 = vunpack.c.l.b16 %v6926
        %v7620 = vunpack.c.l.b16 %v6927
        %v7621 = vunpack.c.h.b16 %v6927
        %v7622 = vunpack.c.l.b16 %v6928
        %v7623 = vunpack.c.l.b16 %v6929
        %v7624 = vunpack.c.h.b16 %v6929
        %v7625 = vunpack.c.l.b16 %v6930
        %v7626 = vunpack.c.l.b16 %v6931
        %v7627 = vunpack.c.h.b16 %v6931
        %v7628 = vunpack.c.l.b16 %v6932
        %v7629 = vunpack.c.l.b16 %v6933
        %v7630 = vunpack.c.h.b16 %v6933
        %v7631 = vunpack.c.l.b16 %v6934
        %v7632 = vunpack.c.l.b16 %v6935
        %v7633 = vunpack.c.h.b16 %v6935
        %v7634 = vunpack.c.l.b16 %v6936
        %v7635 = vunpack.c.l.b16 %v6937
        %v7636 = vunpack.c.h.b16 %v6937
        %v7637 = vunpack.c.l.b16 %v6938
        %v7638 = vunpack.c.l.b16 %v6939
        %v7639 = vunpack.c.h.b16 %v6939
        %v7640 = vunpack.c.l.b16 %v6940
        %v7641 = vunpack.c.l.b16 %v6941
        %v7642 = vunpack.c.h.b16 %v6941
        %v7643 = vunpack.c.l.b16 %v6942
        %v7644 = vunpack.c.l.b16 %v6943
        %v7645 = vunpack.c.h.b16 %v6943
        %v7646 = vunpack.c.l.b16 %v6944
        %v7647 = vunpack.c.l.b16 %v6945
        %v7648 = vunpack.c.h.b16 %v6945
        %v7649 = vunpack.c.l.b16 %v6946
        %v7650 = vunpack.c.l.b16 %v6947
        %v7651 = vunpack.c.h.b16 %v6947
        %v7652 = vunpack.c.l.b16 %v6948
        %v7653 = vunpack.c.l.b16 %v6949
        %v7654 = vunpack.c.h.b16 %v6949
        %v7655 = vunpack.c.l.b16 %v6950
        %v7656 = vunpack.c.l.b16 %v6951
        %v7657 = vunpack.c.h.b16 %v6951
        %v7658 = vunpack.c.l.b16 %v6952
        %v7659 = vunpack.c.l.b16 %v6953
        %v7660 = vunpack.c.h.b16 %v6953
        %v7661 = vunpack.c.l.b16 %v6954
        %v7662 = vunpack.c.l.b16 %v6955
        %v7663 = vunpack.c.h.b16 %v6955
        %v7664 = vunpack.c.l.b16 %v6956
        %v7665 = vunpack.c.l.b16 %v6957
        %v7666 = vunpack.c.h.b16 %v6957
        %v7667 = vunpack.c.l.b16 %v6958
        %v7668 = vunpack.c.l.b16 %v6959
        %v7669 = vunpack.c.h.b16 %v6959
        %v7670 = vunpack.c.l.b16 %v6960
        %v7671 = vunpack.c.l.b16 %v6961
        %v7672 = vunpack.c.h.b16 %v6961
        %v7673 = vunpack.c.l.b16 %v6962
        %v7674 = vunpack.c.l.b16 %v6963
        %v7675 = vunpack.c.h.b16 %v6963
        %v7676 = vunpack.c.l.b16 %v6964
        %v7677 = vunpack.c.l.b16 %v6965
        %v7678 = vunpack.c.h.b16 %v6965
        %v7679 = vunpack.c.l.b16 %v6966
        %v7680 = vunpack.c.l.b16 %v6967
        %v7681 = vunpack.c.h.b16 %v6967
        %v7682 = vunpack.c.l.b16 %v6968
        %v7683 = vunpack.c.l.b16 %v6969
        %v7684 = vunpack.c.h.b16 %v6969
        %v7685 = vunpack.c.l.b16 %v6970
        %v7686 = vunpack.c.l.b16 %v6971
        %v7687 = vunpack.c.h.b16 %v6971
        %v7688 = vunpack.c.l.b16 %v6972
        %v7689 = vunpack.c.l.b16 %v6973
        %v7690 = vunpack.c.h.b16 %v6973
        %v7691 = vunpack.c.l.b16 %v6974
        %v7692 = vunpack.c.l.b16 %v6975
        %v7693 = vunpack.c.h.b16 %v6975
        %v7694 = vunpack.c.l.b16 %v6976
        %v7695 = vunpack.c.l.b16 %v6977
        %v7696 = vunpack.c.h.b16 %v6977
        %v7697 = vunpack.c.l.b16 %v6978
        %v7698 = vunpack.c.l.b16 %v6979
        %v7699 = vunpack.c.h.b16 %v6979
        %v7700 = vunpack.c.l.b16 %v6980
        %v7701 = vunpack.c.l.b16 %v6981
        %v7702 = vunpack.c.h.b16 %v6981
        %v7703 = vunpack.c.l.b16 %v6982
        %v7704 = vunpack.c.l.b16 %v6983
        %v7705 = vunpack.c.h.b16 %v6983
        %v7706 = vunpack.c.l.b16 %v6984
        %v7707 = vunpack.c.l.b16 %v6985
        %v7708 = vunpack.c.h.b16 %v6985
        %v7709 = vunpack.c.l.b16 %v6986
        %v7710 = vunpack.c.l.b16 %v6987
        %v7711 = vunpack.c.h.b16 %v6987
        %v7712 = vunpack.c.l.b16 %v6988
        %v7713 = vunpack.c.l.b16 %v6989
        %v7714 = vunpack.c.h.b16 %v6989
        %v7715 = vunpack.c.l.b16 %v6990
        %v7716 = vunpack.c.l.b16 %v6991
        %v7717 = vunpack.c.h.b16 %v6991
        %v7718 = vunpack.c.l.b16 %v6992
        %v7719 = vunpack.c.l.b16 %v6993
        %v7720 = vunpack.c.h.b16 %v6993
        %v7721 = vunpack.c.l.b16 %v6994
        %v7722 = vunpack.c.l.b16 %v6995
        %v7723 = vunpack.c.h.b16 %v6995
        %v7724 = vunpack.c.l.b16 %v6996
        %v7725 = vunpack.c.l.b16 %v6997
        %v7726 = vunpack.c.h.b16 %v6997
        %v7727 = vunpack.c.l.b16 %v6998
        %v7728 = vunpack.c.l.b16 %v6999
        %v7729 = vunpack.c.h.b16 %v6999
        %v7730 = vunpack.c.l.b16 %v7000
        %v7731 = vunpack.c.l.b16 %v7001
        %v7732 = vunpack.c.h.b16 %v7001
        %v7733 = vunpack.c.l.b16 %v7002
        %v7734 = vunpack.c.l.b16 %v7003
        %v7735 = vunpack.c.h.b16 %v7003
        %v7736 = vunpack.c.l.b16 %v7004
        %v7737 = vunpack.c.l.b16 %v7005
        %v7738 = vunpack.c.h.b16 %v7005
        %v7739 = vunpack.c.l.b16 %v7006
        %v7740 = vunpack.c.l.b16 %v7007
        %v7741 = vunpack.c.h.b16 %v7007
        %v7742 = vunpack.c.l.b16 %v7008
        %v7743 = vunpack.c.l.b16 %v7009
        %v7744 = vunpack.c.h.b16 %v7009
        %v7745 = vunpack.c.l.b16 %v7010
        %v7746 = vunpack.c.l.b16 %v7011
        %v7747 = vunpack.c.h.b16 %v7011
        %v7748 = vunpack.c.l.b16 %v7012
        %v7749 = vunpack.c.l.b16 %v7013
        %v7750 = vunpack.c.h.b16 %v7013
        %v7751 = vunpack.c.l.b16 %v7014
        %v7752 = vpack.c.b16 %v7323, %v7320
        %v7753 = vpack.c.b16 %v7324, %v7321
        %v7754 = vpack.c.b16 %v7325, %v7322
        %v7755 = vpack.c.b16 %v7329, %v7326
        %v7756 = vpack.c.b16 %v7330, %v7327
        %v7757 = vpack.c.b16 %v7331, %v7328
        %v7758 = vpack.c.b16 %v7335, %v7332
        %v7759 = vpack.c.b16 %v7336, %v7333
        %v7760 = vpack.c.b16 %v7337, %v7334
        %v7761 = vpack.c.b16 %v7341, %v7338
        %v7762 = vpack.c.b16 %v7342, %v7339
        %v7763 = vpack.c.b16 %v7343, %v7340
        %v7764 = vpack.c.b16 %v7347, %v7344
        %v7765 = vpack.c.b16 %v7348, %v7345
        %v7766 = vpack.c.b16 %v7349, %v7346
        %v7767 = vpack.c.b16 %v7353, %v7350
        %v7768 = vpack.c.b16 %v7354, %v7351
        %v7769 = vpack.c.b16 %v7355, %v7352
        %v7770 = vpack.c.b16 %v7359, %v7356
        %v7771 = vpack.c.b16 %v7360, %v7357
        %v7772 = vpack.c.b16 %v7361, %v7358
        %v7773 = vpack.c.b16 %v7365, %v7362
        %v7774 = vpack.c.b16 %v7366, %v7363
        %v7775 = vpack.c.b16 %v7367, %v7364
        %v7776 = vpack.c.b16 %v7371, %v7368
        %v7777 = vpack.c.b16 %v7372, %v7369
        %v7778 = vpack.c.b16 %v7373, %v7370
        %v7779 = vpack.c.b16 %v7377, %v7374
        %v7780 = vpack.c.b16 %v7378, %v7375
        %v7781 = vpack.c.b16 %v7379, %v7376
        %v7782 = vpack.c.b16 %v7383, %v7380
        %v7783 = vpack.c.b16 %v7384, %v7381
        %v7784 = vpack.c.b16 %v7385, %v7382
        %v7785 = vpack.c.b16 %v7389, %v7386
        %v7786 = vpack.c.b16 %v7390, %v7387
        %v7787 = vpack.c.b16 %v7391, %v7388
        %v7788 = vpack.c.b16 %v7395, %v7392
        %v7789 = vpack.c.b16 %v7396, %v7393
        %v7790 = vpack.c.b16 %v7397, %v7394
        %v7791 = vpack.c.b16 %v7401, %v7398
        %v7792 = vpack.c.b16 %v7402, %v7399
        %v7793 = vpack.c.b16 %v7403, %v7400
        %v7794 = vpack.c.b16 %v7407, %v7404
        %v7795 = vpack.c.b16 %v7408, %v7405
        %v7796 = vpack.c.b16 %v7409, %v7406
        %v7797 = vpack.c.b16 %v7413, %v7410
        %v7798 = vpack.c.b16 %v7414, %v7411
        %v7799 = vpack.c.b16 %v7415, %v7412
        %v7800 = vpack.c.b16 %v7419, %v7416
        %v7801 = vpack.c.b16 %v7420, %v7417
        %v7802 = vpack.c.b16 %v7421, %v7418
        %v7803 = vpack.c.b16 %v7425, %v7422
        %v7804 = vpack.c.b16 %v7426, %v7423
        %v7805 = vpack.c.b16 %v7427, %v7424
        %v7806 = vpack.c.b16 %v7431, %v7428
        %v7807 = vpack.c.b16 %v7432, %v7429
        %v7808 = vpack.c.b16 %v7433, %v7430
        %v7809 = vpack.c.b16 %v7437, %v7434
        %v7810 = vpack.c.b16 %v7438, %v7435
        %v7811 = vpack.c.b16 %v7439, %v7436
        %v7812 = vpack.c.b16 %v7443, %v7440
        %v7813 = vpack.c.b16 %v7444, %v7441
        %v7814 = vpack.c.b16 %v7445, %v7442
        %v7815 = vpack.c.b16 %v7449, %v7446
        %v7816 = vpack.c.b16 %v7450, %v7447
        %v7817 = vpack.c.b16 %v7451, %v7448
        %v7818 = vpack.c.b16 %v7455, %v7452
        %v7819 = vpack.c.b16 %v7456, %v7453
        %v7820 = vpack.c.b16 %v7457, %v7454
        %v7821 = vpack.c.b16 %v7461, %v7458
        %v7822 = vpack.c.b16 %v7462, %v7459
        %v7823 = vpack.c.b16 %v7463, %v7460
        %v7824 = vpack.c.b16 %v7467, %v7464
        %v7825 = vpack.c.b16 %v7468, %v7465
        %v7826 = vpack.c.b16 %v7469, %v7466
        %v7827 = vpack.c.b16 %v7473, %v7470
        %v7828 = vpack.c.b16 %v7474, %v7471
        %v7829 = vpack.c.b16 %v7475, %v7472
        %v7830 = vpack.c.b16 %v7479, %v7476
        %v7831 = vpack.c.b16 %v7480, %v7477
        %v7832 = vpack.c.b16 %v7481, %v7478
        %v7833 = vpack.c.b16 %v7485, %v7482
        %v7834 = vpack.c.b16 %v7486, %v7483
        %v7835 = vpack.c.b16 %v7487, %v7484
        %v7836 = vpack.c.b16 %v7491, %v7488
        %v7837 = vpack.c.b16 %v7492, %v7489
        %v7838 = vpack.c.b16 %v7493, %v7490
        %v7839 = vpack.c.b16 %v7497, %v7494
        %v7840 = vpack.c.b16 %v7498, %v7495
        %v7841 = vpack.c.b16 %v7499, %v7496
        %v7842 = vpack.c.b16 %v7503, %v7500
        %v7843 = vpack.c.b16 %v7504, %v7501
        %v7844 = vpack.c.b16 %v7505, %v7502
        %v7845 = vpack.c.b16 %v7509, %v7506
        %v7846 = vpack.c.b16 %v7510, %v7507
        %v7847 = vpack.c.b16 %v7511, %v7508
        %v7848 = vpack.c.b16 %v7515, %v7512
        %v7849 = vpack.c.b16 %v7516, %v7513
        %v7850 = vpack.c.b16 %v7517, %v7514
        %v7851 = vpack.c.b16 %v7521, %v7518
        %v7852 = vpack.c.b16 %v7522, %v7519
        %v7853 = vpack.c.b16 %v7523, %v7520
        %v7854 = vpack.c.b16 %v7527, %v7524
        %v7855 = vpack.c.b16 %v7528, %v7525
        %v7856 = vpack.c.b16 %v7529, %v7526
        %v7857 = vpack.c.b16 %v7533, %v7530
        %v7858 = vpack.c.b16 %v7534, %v7531
        %v7859 = vpack.c.b16 %v7535, %v7532
        %v7860 = vpack.c.b16 %v7539, %v7536
        %v7861 = vpack.c.b16 %v7540, %v7537
        %v7862 = vpack.c.b16 %v7541, %v7538
        %v7863 = vpack.c.b16 %v7545, %v7542
        %v7864 = vpack.c.b16 %v7546, %v7543
        %v7865 = vpack.c.b16 %v7547, %v7544
        %v7866 = vpack.c.b16 %v7551, %v7548
        %v7867 = vpack.c.b16 %v7552, %v7549
        %v7868 = vpack.c.b16 %v7553, %v7550
        %v7869 = vpack.c.b16 %v7557, %v7554
        %v7870 = vpack.c.b16 %v7558, %v7555
        %v7871 = vpack.c.b16 %v7559, %v7556
        %v7872 = vpack.c.b16 %v7563, %v7560
        %v7873 = vpack.c.b16 %v7564, %v7561
        %v7874 = vpack.c.b16 %v7565, %v7562
        %v7875 = vpack.c.b16 %v7569, %v7566
        %v7876 = vpack.c.b16 %v7570, %v7567
        %v7877 = vpack.c.b16 %v7571, %v7568
        %v7878 = vpack.c.b16 %v7575, %v7572
        %v7879 = vpack.c.b16 %v7576, %v7573
        %v7880 = vpack.c.b16 %v7577, %v7574
        %v7881 = vpack.c.b16 %v7581, %v7578
        %v7882 = vpack.c.b16 %v7582, %v7579
        %v7883 = vpack.c.b16 %v7583, %v7580
        %v7884 = vpack.c.b16 %v7587, %v7584
        %v7885 = vpack.c.b16 %v7588, %v7585
        %v7886 = vpack.c.b16 %v7589, %v7586
        %v7887 = vpack.c.b16 %v7593, %v7590
        %v7888 = vpack.c.b16 %v7594, %v7591
        %v7889 = vpack.c.b16 %v7595, %v7592
        %v7890 = vpack.c.b16 %v7599, %v7596
        %v7891 = vpack.c.b16 %v7600, %v7597
        %v7892 = vpack.c.b16 %v7601, %v7598
        %v7893 = vpack.c.b16 %v7605, %v7602
        %v7894 = vpack.c.b16 %v7606, %v7603
        %v7895 = vpack.c.b16 %v7607, %v7604
        %v7896 = vpack.c.b16 %v7611, %v7608
        %v7897 = vpack.c.b16 %v7612, %v7609
        %v7898 = vpack.c.b16 %v7613, %v7610
        %v7899 = vpack.c.b16 %v7617, %v7614
        %v7900 = vpack.c.b16 %v7618, %v7615
        %v7901 = vpack.c.b16 %v7619, %v7616
        %v7902 = vpack.c.b16 %v7623, %v7620
        %v7903 = vpack.c.b16 %v7624, %v7621
        %v7904 = vpack.c.b16 %v7625, %v7622
        %v7905 = vpack.c.b16 %v7629, %v7626
        %v7906 = vpack.c.b16 %v7630, %v7627
        %v7907 = vpack.c.b16 %v7631, %v7628
        %v7908 = vpack.c.b16 %v7635, %v7632
        %v7909 = vpack.c.b16 %v7636, %v7633
        %v7910 = vpack.c.b16 %v7637, %v7634
        %v7911 = vpack.c.b16 %v7641, %v7638
        %v7912 = vpack.c.b16 %v7642, %v7639
        %v7913 = vpack.c.b16 %v7643, %v7640
        %v7914 = vpack.c.b16 %v7647, %v7644
        %v7915 = vpack.c.b16 %v7648, %v7645
        %v7916 = vpack.c.b16 %v7649, %v7646
        %v7917 = vpack.c.b16 %v7653, %v7650
        %v7918 = vpack.c.b16 %v7654, %v7651
        %v7919 = vpack.c.b16 %v7655, %v7652
        %v7920 = vpack.c.b16 %v7659, %v7656
        %v7921 = vpack.c.b16 %v7660, %v7657
        %v7922 = vpack.c.b16 %v7661, %v7658
        %v7923 = vpack.c.b16 %v7665, %v7662
        %v7924 = vpack.c.b16 %v7666, %v7663
        %v7925 = vpack.c.b16 %v7667, %v7664
        %v7926 = vpack.c.b16 %v7671, %v7668
        %v7927 = vpack.c.b16 %v7672, %v7669
        %v7928 = vpack.c.b16 %v7673, %v7670
        %v7929 = vpack.c.b16 %v7677, %v7674
        %v7930 = vpack.c.b16 %v7678, %v7675
        %v7931 = vpack.c.b16 %v7679, %v7676
        %v7932 = vpack.c.b16 %v7683, %v7680
        %v7933 = vpack.c.b16 %v7684, %v7681
        %v7934 = vpack.c.b16 %v7685, %v7682
        %v7935 = vpack.c.b16 %v7689, %v7686
        %v7936 = vpack.c.b16 %v7690, %v7687
        %v7937 = vpack.c.b16 %v7691, %v7688
        %v7938 = vpack.c.b16 %v7695, %v7692
        %v7939 = vpack.c.b16 %v7696, %v7693
        %v7940 = vpack.c.b16 %v7697, %v7694
        %v7941 = vpack.c.b16 %v7701, %v7698
        %v7942 = vpack.c.b16 %v7702, %v7699
        %v7943 = vpack.c.b16 %v7703, %v7700
        %v7944 = vpack.c.b16 %v7707, %v7704
        %v7945 = vpack.c.b16 %v7708, %v7705
        %v7946 = vpack.c.b16 %v7709, %v7706
        %v7947 = vpack.c.b16 %v7713, %v7710
        %v7948 = vpack.c.b16 %v7714, %v7711
        %v7949 = vpack.c.b16 %v7715, %v7712
        %v7950 = vpack.c.b16 %v7719, %v7716
        %v7951 = vpack.c.b16 %v7720, %v7717
        %v7952 = vpack.c.b16 %v7721, %v7718
        %v7953 = vpack.c.b16 %v7725, %v7722
        %v7954 = vpack.c.b16 %v7726, %v7723
        %v7955 = vpack.c.b16 %v7727, %v7724
        %v7956 = vpack.c.b16 %v7731, %v7728
        %v7957 = vpack.c.b16 %v7732, %v7729
        %v7958 = vpack.c.b16 %v7733, %v7730
        %v7959 = vpack.c.b16 %v7737, %v7734
        %v7960 = vpack.c.b16 %v7738, %v7735
        %v7961 = vpack.c.b16 %v7739, %v7736
        %v7962 = vpack.c.b16 %v7743, %v7740
        %v7963 = vpack.c.b16 %v7744, %v7741
        %v7964 = vpack.c.b16 %v7745, %v7742
        %v7965 = vpack.c.b16 %v7749, %v7746
        %v7966 = vpack.c.b16 %v7750, %v7747
        %v7967 = vpack.c.b16 %v7751, %v7748
        %8184 = vmatprep.subr.bf16.mxu0 %v7753
        %8185 = vmatpush1.bf16.msra.mxu0 %v7752
        %8186 = vmatprep.subr.bf16.mxu0 %v7756
        %8187 = vmatpush1.bf16.msra.mxu0 %v7755
        %8188 = vmatprep.subr.bf16.mxu0 %v7759
        %8189 = vmatpush1.bf16.msra.mxu0 %v7758
        %8190 = vmatprep.subr.bf16.mxu0 %v7762
        %8191 = vmatpush1.bf16.msra.mxu0 %v7761
        %8192 = vmatprep.subr.bf16.mxu0 %v7765
        %8193 = vmatpush1.bf16.msra.mxu0 %v7764
        %8194 = vmatprep.subr.bf16.mxu0 %v7768
        %8195 = vmatpush1.bf16.msra.mxu0 %v7767
        %8196 = vmatprep.subr.bf16.mxu0 %v7771
        %8197 = vmatpush1.bf16.msra.mxu0 %v7770
        %8198 = vmatprep.subr.bf16.mxu0 %v7774
        %8199 = vmatpush1.bf16.msra.mxu0 %v7773
        %8200 = vmatprep.subr.bf16.mxu0 %v7777
        %8201 = vmatpush1.bf16.msra.mxu0 %v7776
        %8202 = vmatprep.subr.bf16.mxu0 %v7780
        %8203 = vmatpush1.bf16.msra.mxu0 %v7779
        %8204 = vmatprep.subr.bf16.mxu0 %v7783
        %8205 = vmatpush1.bf16.msra.mxu0 %v7782
        %8206 = vmatprep.subr.bf16.mxu0 %v7786
        %8207 = vmatpush1.bf16.msra.mxu0 %v7785
        %8208 = vmatprep.subr.bf16.mxu0 %v7789
        %8209 = vmatpush1.bf16.msra.mxu0 %v7788
        %8210 = vmatprep.subr.bf16.mxu0 %v7792
        %8211 = vmatpush1.bf16.msra.mxu0 %v7791
        %8212 = vmatprep.subr.bf16.mxu0 %v7795
        %8213 = vmatpush1.bf16.msra.mxu0 %v7794
        %8214 = vmatprep.subr.bf16.mxu0 %v7798
        %8215 = vmatpush1.bf16.msra.mxu0 %v7797
        %8216 = vmatprep.mubr.bf16.mxu0 %v6719
        %8217 = vmatmul.mubr.bf16.gmra.mrb[0].mxu0 %v6718
        %v8218 = vpop.f32.mrb[0].mxu0
        %v8219 = vadd.f32 %v7020, %v8218
        %v8220 = vpop.f32.mrb[0].mxu0
        %v8221 = vadd.f32 %v7024, %v8220
        %v8222 = vpop.f32.mrb[0].mxu0
        %v8223 = vadd.f32 %v7020, %v8222
        %v8224 = vpop.f32.mrb[0].mxu0
        %v8225 = vadd.f32 %v7024, %v8224
        %8226 = vdwg.mxu0
        %8227 = vmatprep.subr.bf16.mxu0 %v7801
        %8228 = vmatpush1.bf16.msra.mxu0 %v7800
        %8229 = vmatprep.subr.bf16.mxu0 %v7804
        %8230 = vmatpush1.bf16.msra.mxu0 %v7803
        %8231 = vmatprep.subr.bf16.mxu0 %v7807
        %8232 = vmatpush1.bf16.msra.mxu0 %v7806
        %8233 = vmatprep.subr.bf16.mxu0 %v7810
        %8234 = vmatpush1.bf16.msra.mxu0 %v7809
        %8235 = vmatprep.subr.bf16.mxu0 %v7813
        %8236 = vmatpush1.bf16.msra.mxu0 %v7812
        %8237 = vmatprep.subr.bf16.mxu0 %v7816
        %8238 = vmatpush1.bf16.msra.mxu0 %v7815
        %8239 = vmatprep.subr.bf16.mxu0 %v7819
        %8240 = vmatpush1.bf16.msra.mxu0 %v7818
        %8241 = vmatprep.subr.bf16.mxu0 %v7822
        %8242 = vmatpush1.bf16.msra.mxu0 %v7821
        %8243 = vmatprep.subr.bf16.mxu0 %v7825
        %8244 = vmatpush1.bf16.msra.mxu0 %v7824
        %8245 = vmatprep.subr.bf16.mxu0 %v7828
        %8246 = vmatpush1.bf16.msra.mxu0 %v7827
        %8247 = vmatprep.subr.bf16.mxu0 %v7831
        %8248 = vmatpush1.bf16.msra.mxu0 %v7830
        %8249 = vmatprep.subr.bf16.mxu0 %v7834
        %8250 = vmatpush1.bf16.msra.mxu0 %v7833
        %8251 = vmatprep.subr.bf16.mxu0 %v7837
        %8252 = vmatpush1.bf16.msra.mxu0 %v7836
        %8253 = vmatprep.subr.bf16.mxu0 %v7840
        %8254 = vmatpush1.bf16.msra.mxu0 %v7839
        %8255 = vmatprep.subr.bf16.mxu0 %v7843
        %8256 = vmatpush1.bf16.msra.mxu0 %v7842
        %8257 = vmatprep.subr.bf16.mxu0 %v7846
        %8258 = vmatpush1.bf16.msra.mxu0 %v7845
        %8259 = vmatprep.mubr.bf16.mxu0 %v6721
        %8260 = vmatmul.mubr.bf16.gmra.mrb[0].mxu0 %v6720
        %v8261 = vpop.f32.mrb[0].mxu0
        %v8262 = vadd.f32 %v8219, %v8261
        %v8263 = vpop.f32.mrb[0].mxu0
        %v8264 = vadd.f32 %v8221, %v8263
        %v8265 = vpop.f32.mrb[0].mxu0
        %v8266 = vadd.f32 %v8223, %v8265
        %v8267 = vpop.f32.mrb[0].mxu0
        %v8268 = vadd.f32 %v8225, %v8267
        %8269 = vdwg.mxu0
        %8270 = vmatprep.subr.bf16.mxu0 %v7849
        %8271 = vmatpush1.bf16.msra.mxu0 %v7848
        %8272 = vmatprep.subr.bf16.mxu0 %v7852
        %8273 = vmatpush1.bf16.msra.mxu0 %v7851
        %8274 = vmatprep.subr.bf16.mxu0 %v7855
        %8275 = vmatpush1.bf16.msra.mxu0 %v7854
        %8276 = vmatprep.subr.bf16.mxu0 %v7858
        %8277 = vmatpush1.bf16.msra.mxu0 %v7857
        %8278 = vmatprep.subr.bf16.mxu0 %v7861
        %8279 = vmatpush1.bf16.msra.mxu0 %v7860
        %8280 = vmatprep.subr.bf16.mxu0 %v7864
        %8281 = vmatpush1.bf16.msra.mxu0 %v7863
        %8282 = vmatprep.subr.bf16.mxu0 %v7867
        %8283 = vmatpush1.bf16.msra.mxu0 %v7866
        %8284 = vmatprep.subr.bf16.mxu0 %v7870
        %8285 = vmatpush1.bf16.msra.mxu0 %v7869
        %8286 = vmatprep.subr.bf16.mxu0 %v7873
        %8287 = vmatpush1.bf16.msra.mxu0 %v7872
        %8288 = vmatprep.subr.bf16.mxu0 %v7876
        %8289 = vmatpush1.bf16.msra.mxu0 %v7875
        %8290 = vmatprep.subr.bf16.mxu0 %v7879
        %8291 = vmatpush1.bf16.msra.mxu0 %v7878
        %8292 = vmatprep.subr.bf16.mxu0 %v7882
        %8293 = vmatpush1.bf16.msra.mxu0 %v7881
        %8294 = vmatprep.subr.bf16.mxu0 %v7885
        %8295 = vmatpush1.bf16.msra.mxu0 %v7884
        %8296 = vmatprep.subr.bf16.mxu0 %v7888
        %8297 = vmatpush1.bf16.msra.mxu0 %v7887
        %8298 = vmatprep.subr.bf16.mxu0 %v7891
        %8299 = vmatpush1.bf16.msra.mxu0 %v7890
        %8300 = vmatprep.subr.bf16.mxu0 %v7894
        %8301 = vmatpush1.bf16.msra.mxu0 %v7893
        %8302 = vmatprep.mubr.bf16.mxu0 %v6723
        %8303 = vmatmul.mubr.bf16.gmra.mrb[0].mxu0 %v6722
        %v8304 = vpop.f32.mrb[0].mxu0
        %v8305 = vadd.f32 %v8262, %v8304
        %v8306 = vpop.f32.mrb[0].mxu0
        %v8307 = vadd.f32 %v8264, %v8306
        %v8308 = vpop.f32.mrb[0].mxu0
        %v8309 = vadd.f32 %v8266, %v8308
        %v8310 = vpop.f32.mrb[0].mxu0
        %v8311 = vadd.f32 %v8268, %v8310
        %8312 = vdwg.mxu0
        %8313 = vmatprep.subr.bf16.mxu0 %v7897
        %8314 = vmatpush1.bf16.msra.mxu0 %v7896
        %8315 = vmatprep.subr.bf16.mxu0 %v7900
        %8316 = vmatpush1.bf16.msra.mxu0 %v7899
        %8317 = vmatprep.subr.bf16.mxu0 %v7903
        %8318 = vmatpush1.bf16.msra.mxu0 %v7902
        %8319 = vmatprep.subr.bf16.mxu0 %v7906
        %8320 = vmatpush1.bf16.msra.mxu0 %v7905
        %8321 = vmatprep.subr.bf16.mxu0 %v7909
        %8322 = vmatpush1.bf16.msra.mxu0 %v7908
        %8323 = vmatprep.subr.bf16.mxu0 %v7912
        %8324 = vmatpush1.bf16.msra.mxu0 %v7911
        %8325 = vmatprep.subr.bf16.mxu0 %v7915
        %8326 = vmatpush1.bf16.msra.mxu0 %v7914
        %8327 = vmatprep.subr.bf16.mxu0 %v7918
        %8328 = vmatpush1.bf16.msra.mxu0 %v7917
        %8329 = vmatprep.subr.bf16.mxu0 %v7921
        %8330 = vmatpush1.bf16.msra.mxu0 %v7920
        %8331 = vmatprep.subr.bf16.mxu0 %v7924
        %8332 = vmatpush1.bf16.msra.mxu0 %v7923
        %8333 = vmatprep.subr.bf16.mxu0 %v7927
        %8334 = vmatpush1.bf16.msra.mxu0 %v7926
        %8335 = vmatprep.subr.bf16.mxu0 %v7930
        %8336 = vmatpush1.bf16.msra.mxu0 %v7929
        %8337 = vmatprep.subr.bf16.mxu0 %v7933
        %8338 = vmatpush1.bf16.msra.mxu0 %v7932
        %8339 = vmatprep.subr.bf16.mxu0 %v7936
        %8340 = vmatpush1.bf16.msra.mxu0 %v7935
        %8341 = vmatprep.subr.bf16.mxu0 %v7939
        %8342 = vmatpush1.bf16.msra.mxu0 %v7938
        %8343 = vmatprep.subr.bf16.mxu0 %v7942
        %8344 = vmatpush1.bf16.msra.mxu0 %v7941
        %8345 = vmatprep.mubr.bf16.mxu0 %v6725
        %8346 = vmatmul.mubr.bf16.gmra.mrb[0].mxu0 %v6724
        %v8347 = vpop.f32.mrb[0].mxu0
        %v8348 = vadd.f32 %v8305, %v8347
        %v8349 = vpop.f32.mrb[0].mxu0
        %v8350 = vadd.f32 %v8307, %v8349
        %v8351 = vpop.f32.mrb[0].mxu0
        %v8352 = vadd.f32 %v8309, %v8351
        %v8353 = vpop.f32.mrb[0].mxu0
        %v8354 = vadd.f32 %v8311, %v8353
        %8355 = vdwg.mxu0
        %8356 = vmatprep.subr.bf16.mxu0 %v7945
        %8357 = vmatpush1.bf16.msra.mxu0 %v7944
        %8358 = vmatprep.subr.bf16.mxu0 %v7948
        %8359 = vmatpush1.bf16.msra.mxu0 %v7947
        %8360 = vmatprep.subr.bf16.mxu0 %v7951
        %8361 = vmatpush1.bf16.msra.mxu0 %v7950
        %8362 = vmatprep.subr.bf16.mxu0 %v7954
        %8363 = vmatpush1.bf16.msra.mxu0 %v7953
        %8364 = vmatprep.subr.bf16.mxu0 %v7957
        %8365 = vmatpush1.bf16.msra.mxu0 %v7956
        %8366 = vmatprep.subr.bf16.mxu0 %v7960
        %8367 = vmatpush1.bf16.msra.mxu0 %v7959
        %8368 = vmatprep.subr.bf16.mxu0 %v7963
        %8369 = vmatpush1.bf16.msra.mxu0 %v7962
        %8370 = vmatprep.subr.bf16.mxu0 %v7966
        %8371 = vmatpush1.bf16.msra.mxu0 %v7965
        %8372 = vmatprep.subr.bf16.mxu0 0
        %8373 = vmatpush1.bf16.msra.mxu0 0
        %8374 = vmatprep.subr.bf16.mxu0 0
        %8375 = vmatpush1.bf16.msra.mxu0 0
        %8376 = vmatprep.subr.bf16.mxu0 0
        %8377 = vmatpush1.bf16.msra.mxu0 0
        %8378 = vmatprep.subr.bf16.mxu0 0
        %8379 = vmatpush1.bf16.msra.mxu0 0
        %8380 = vmatprep.subr.bf16.mxu0 0
        %8381 = vmatpush1.bf16.msra.mxu0 0
        %8382 = vmatprep.subr.bf16.mxu0 0
        %8383 = vmatpush1.bf16.msra.mxu0 0
        %8384 = vmatprep.subr.bf16.mxu0 0
        %8385 = vmatpush1.bf16.msra.mxu0 0
        %8386 = vmatprep.subr.bf16.mxu0 0
        %8387 = vmatpush1.bf16.msra.mxu0 0
        %8388 = vmatprep.mubr.bf16.mxu0 0
        %8389 = vmatmul.mubr.bf16.gmra.mrb[0].mxu0 %v6726
        %v8390 = vpop.f32.mrb[0].mxu0
        %v8391 = vadd.f32 %v8348, %v8390
        %v8392 = vpop.f32.mrb[0].mxu0
        %v8393 = vadd.f32 %v8350, %v8392
        %v8394 = vpop.f32.mrb[0].mxu0
        %v8395 = vadd.f32 %v8352, %v8394
        %v8396 = vpop.f32.mrb[0].mxu0
        %v8397 = vadd.f32 %v8354, %v8396
        %8398 = vdwg.mxu0
        %8399 = vmatprep.subr.bf16.mxu0 0
        %8400 = vmatpush1.bf16.msra.mxu0 %v7754
        %8401 = vmatprep.subr.bf16.mxu0 0
        %8402 = vmatpush1.bf16.msra.mxu0 %v7757
        %8403 = vmatprep.subr.bf16.mxu0 0
        %8404 = vmatpush1.bf16.msra.mxu0 %v7760
        %8405 = vmatprep.subr.bf16.mxu0 0
        %8406 = vmatpush1.bf16.msra.mxu0 %v7763
        %8407 = vmatprep.subr.bf16.mxu0 0
        %8408 = vmatpush1.bf16.msra.mxu0 %v7766
        %8409 = vmatprep.subr.bf16.mxu0 0
        %8410 = vmatpush1.bf16.msra.mxu0 %v7769
        %8411 = vmatprep.subr.bf16.mxu0 0
        %8412 = vmatpush1.bf16.msra.mxu0 %v7772
        %8413 = vmatprep.subr.bf16.mxu0 0
        %8414 = vmatpush1.bf16.msra.mxu0 %v7775
        %8415 = vmatprep.subr.bf16.mxu0 0
        %8416 = vmatpush1.bf16.msra.mxu0 %v7778
        %8417 = vmatprep.subr.bf16.mxu0 0
        %8418 = vmatpush1.bf16.msra.mxu0 %v7781
        %8419 = vmatprep.subr.bf16.mxu0 0
        %8420 = vmatpush1.bf16.msra.mxu0 %v7784
        %8421 = vmatprep.subr.bf16.mxu0 0
        %8422 = vmatpush1.bf16.msra.mxu0 %v7787
        %8423 = vmatprep.subr.bf16.mxu0 0
        %8424 = vmatpush1.bf16.msra.mxu0 %v7790
        %8425 = vmatprep.subr.bf16.mxu0 0
        %8426 = vmatpush1.bf16.msra.mxu0 %v7793
        %8427 = vmatprep.subr.bf16.mxu0 0
        %8428 = vmatpush1.bf16.msra.mxu0 %v7796
        %8429 = vmatprep.subr.bf16.mxu0 0
        %8430 = vmatpush1.bf16.msra.mxu0 %v7799
        %8431 = vmatprep.mubr.bf16.mxu0 %v6719
        %8432 = vmatmul.mubr.bf16.gmra.mrb[0].mxu0 %v6718
        %v8433 = vpop.f32.mrb[0].mxu0
        %v8434 = vadd.f32 %v7028, %v8433
        %v8435 = vpop.f32.mrb[0].mxu0
        %v8436 = vpop.f32.mrb[0].mxu0
        %v8437 = vadd.f32 %v7028, %v8436
        %v8438 = vpop.f32.mrb[0].mxu0
        %8439 = vdwg.mxu0
        %8440 = vmatprep.subr.bf16.mxu0 0
        %8441 = vmatpush1.bf16.msra.mxu0 %v7802
        %8442 = vmatprep.subr.bf16.mxu0 0
        %8443 = vmatpush1.bf16.msra.mxu0 %v7805
        %8444 = vmatprep.subr.bf16.mxu0 0
        %8445 = vmatpush1.bf16.msra.mxu0 %v7808
        %8446 = vmatprep.subr.bf16.mxu0 0
        %8447 = vmatpush1.bf16.msra.mxu0 %v7811
        %8448 = vmatprep.subr.bf16.mxu0 0
        %8449 = vmatpush1.bf16.msra.mxu0 %v7814
        %8450 = vmatprep.subr.bf16.mxu0 0
        %8451 = vmatpush1.bf16.msra.mxu0 %v7817
        %8452 = vmatprep.subr.bf16.mxu0 0
        %8453 = vmatpush1.bf16.msra.mxu0 %v7820
        %8454 = vmatprep.subr.bf16.mxu0 0
        %8455 = vmatpush1.bf16.msra.mxu0 %v7823
        %8456 = vmatprep.subr.bf16.mxu0 0
        %8457 = vmatpush1.bf16.msra.mxu0 %v7826
        %8458 = vmatprep.subr.bf16.mxu0 0
        %8459 = vmatpush1.bf16.msra.mxu0 %v7829
        %8460 = vmatprep.subr.bf16.mxu0 0
        %8461 = vmatpush1.bf16.msra.mxu0 %v7832
        %8462 = vmatprep.subr.bf16.mxu0 0
        %8463 = vmatpush1.bf16.msra.mxu0 %v7835
        %8464 = vmatprep.subr.bf16.mxu0 0
        %8465 = vmatpush1.bf16.msra.mxu0 %v7838
        %8466 = vmatprep.subr.bf16.mxu0 0
        %8467 = vmatpush1.bf16.msra.mxu0 %v7841
        %8468 = vmatprep.subr.bf16.mxu0 0
        %8469 = vmatpush1.bf16.msra.mxu0 %v7844
        %8470 = vmatprep.subr.bf16.mxu0 0
        %8471 = vmatpush1.bf16.msra.mxu0 %v7847
        %8472 = vmatprep.mubr.bf16.mxu0 %v6721
        %8473 = vmatmul.mubr.bf16.gmra.mrb[0].mxu0 %v6720
        %v8474 = vpop.f32.mrb[0].mxu0
        %v8475 = vadd.f32 %v8434, %v8474
        %v8476 = vpop.f32.mrb[0].mxu0
        %v8477 = vpop.f32.mrb[0].mxu0
        %v8478 = vadd.f32 %v8437, %v8477
        %v8479 = vpop.f32.mrb[0].mxu0
        %8480 = vdwg.mxu0
        %8481 = vmatprep.subr.bf16.mxu0 0
        %8482 = vmatpush1.bf16.msra.mxu0 %v7850
        %8483 = vmatprep.subr.bf16.mxu0 0
        %8484 = vmatpush1.bf16.msra.mxu0 %v7853
        %8485 = vmatprep.subr.bf16.mxu0 0
        %8486 = vmatpush1.bf16.msra.mxu0 %v7856
        %8487 = vmatprep.subr.bf16.mxu0 0
        %8488 = vmatpush1.bf16.msra.mxu0 %v7859
        %8489 = vmatprep.subr.bf16.mxu0 0
        %8490 = vmatpush1.bf16.msra.mxu0 %v7862
        %8491 = vmatprep.subr.bf16.mxu0 0
        %8492 = vmatpush1.bf16.msra.mxu0 %v7865
        %8493 = vmatprep.subr.bf16.mxu0 0
        %8494 = vmatpush1.bf16.msra.mxu0 %v7868
        %8495 = vmatprep.subr.bf16.mxu0 0
        %8496 = vmatpush1.bf16.msra.mxu0 %v7871
        %8497 = vmatprep.subr.bf16.mxu0 0
        %8498 = vmatpush1.bf16.msra.mxu0 %v7874
        %8499 = vmatprep.subr.bf16.mxu0 0
        %8500 = vmatpush1.bf16.msra.mxu0 %v7877
        %8501 = vmatprep.subr.bf16.mxu0 0
        %8502 = vmatpush1.bf16.msra.mxu0 %v7880
        %8503 = vmatprep.subr.bf16.mxu0 0
        %8504 = vmatpush1.bf16.msra.mxu0 %v7883
        %8505 = vmatprep.subr.bf16.mxu0 0
        %8506 = vmatpush1.bf16.msra.mxu0 %v7886
        %8507 = vmatprep.subr.bf16.mxu0 0
        %8508 = vmatpush1.bf16.msra.mxu0 %v7889
        %8509 = vmatprep.subr.bf16.mxu0 0
        %8510 = vmatpush1.bf16.msra.mxu0 %v7892
        %8511 = vmatprep.subr.bf16.mxu0 0
        %8512 = vmatpush1.bf16.msra.mxu0 %v7895
        %8513 = vmatprep.mubr.bf16.mxu0 %v6723
        %8514 = vmatmul.mubr.bf16.gmra.mrb[0].mxu0 %v6722
        %v8515 = vpop.f32.mrb[0].mxu0
        %v8516 = vadd.f32 %v8475, %v8515
        %v8517 = vpop.f32.mrb[0].mxu0
        %v8518 = vpop.f32.mrb[0].mxu0
        %v8519 = vadd.f32 %v8478, %v8518
        %v8520 = vpop.f32.mrb[0].mxu0
        %8521 = vdwg.mxu0
        %8522 = vmatprep.subr.bf16.mxu0 0
        %8523 = vmatpush1.bf16.msra.mxu0 %v7898
        %8524 = vmatprep.subr.bf16.mxu0 0
        %8525 = vmatpush1.bf16.msra.mxu0 %v7901
        %8526 = vmatprep.subr.bf16.mxu0 0
        %8527 = vmatpush1.bf16.msra.mxu0 %v7904
        %8528 = vmatprep.subr.bf16.mxu0 0
        %8529 = vmatpush1.bf16.msra.mxu0 %v7907
        %8530 = vmatprep.subr.bf16.mxu0 0
        %8531 = vmatpush1.bf16.msra.mxu0 %v7910
        %8532 = vmatprep.subr.bf16.mxu0 0
        %8533 = vmatpush1.bf16.msra.mxu0 %v7913
        %8534 = vmatprep.subr.bf16.mxu0 0
        %8535 = vmatpush1.bf16.msra.mxu0 %v7916
        %8536 = vmatprep.subr.bf16.mxu0 0
        %8537 = vmatpush1.bf16.msra.mxu0 %v7919
        %8538 = vmatprep.subr.bf16.mxu0 0
        %8539 = vmatpush1.bf16.msra.mxu0 %v7922
        %8540 = vmatprep.subr.bf16.mxu0 0
        %8541 = vmatpush1.bf16.msra.mxu0 %v7925
        %8542 = vmatprep.subr.bf16.mxu0 0
        %8543 = vmatpush1.bf16.msra.mxu0 %v7928
        %8544 = vmatprep.subr.bf16.mxu0 0
        %8545 = vmatpush1.bf16.msra.mxu0 %v7931
        %8546 = vmatprep.subr.bf16.mxu0 0
        %8547 = vmatpush1.bf16.msra.mxu0 %v7934
        %8548 = vmatprep.subr.bf16.mxu0 0
        %8549 = vmatpush1.bf16.msra.mxu0 %v7937
        %8550 = vmatprep.subr.bf16.mxu0 0
        %8551 = vmatpush1.bf16.msra.mxu0 %v7940
        %8552 = vmatprep.subr.bf16.mxu0 0
        %8553 = vmatpush1.bf16.msra.mxu0 %v7943
        %8554 = vmatprep.mubr.bf16.mxu0 %v6725
        %8555 = vmatmul.mubr.bf16.gmra.mrb[0].mxu0 %v6724
        %v8556 = vpop.f32.mrb[0].mxu0
        %v8557 = vadd.f32 %v8516, %v8556
        %v8558 = vpop.f32.mrb[0].mxu0
        %v8559 = vpop.f32.mrb[0].mxu0
        %v8560 = vadd.f32 %v8519, %v8559
        %v8561 = vpop.f32.mrb[0].mxu0
        %8562 = vdwg.mxu0
        %8563 = vmatprep.subr.bf16.mxu0 0
        %8564 = vmatpush1.bf16.msra.mxu0 %v7946
        %8565 = vmatprep.subr.bf16.mxu0 0
        %8566 = vmatpush1.bf16.msra.mxu0 %v7949
        %8567 = vmatprep.subr.bf16.mxu0 0
        %8568 = vmatpush1.bf16.msra.mxu0 %v7952
        %8569 = vmatprep.subr.bf16.mxu0 0
        %8570 = vmatpush1.bf16.msra.mxu0 %v7955
        %8571 = vmatprep.subr.bf16.mxu0 0
        %8572 = vmatpush1.bf16.msra.mxu0 %v7958
        %8573 = vmatprep.subr.bf16.mxu0 0
        %8574 = vmatpush1.bf16.msra.mxu0 %v7961
        %8575 = vmatprep.subr.bf16.mxu0 0
        %8576 = vmatpush1.bf16.msra.mxu0 %v7964
        %8577 = vmatprep.subr.bf16.mxu0 0
        %8578 = vmatpush1.bf16.msra.mxu0 %v7967
        %8579 = vmatprep.subr.bf16.mxu0 0
        %8580 = vmatpush1.bf16.msra.mxu0 0
        %8581 = vmatprep.subr.bf16.mxu0 0
        %8582 = vmatpush1.bf16.msra.mxu0 0
        %8583 = vmatprep.subr.bf16.mxu0 0
        %8584 = vmatpush1.bf16.msra.mxu0 0
        %8585 = vmatprep.subr.bf16.mxu0 0
        %8586 = vmatpush1.bf16.msra.mxu0 0
        %8587 = vmatprep.subr.bf16.mxu0 0
        %8588 = vmatpush1.bf16.msra.mxu0 0
        %8589 = vmatprep.subr.bf16.mxu0 0
        %8590 = vmatpush1.bf16.msra.mxu0 0
        %8591 = vmatprep.subr.bf16.mxu0 0
        %8592 = vmatpush1.bf16.msra.mxu0 0
        %8593 = vmatprep.subr.bf16.mxu0 0
        %8594 = vmatpush1.bf16.msra.mxu0 0
        %8595 = vmatprep.mubr.bf16.mxu0 0
        %8596 = vmatmul.mubr.bf16.gmra.mrb[0].mxu0 %v6726
        %v8597 = vpop.f32.mrb[0].mxu0
        %v8598 = vadd.f32 %v8557, %v8597
        %v8599 = vpop.f32.mrb[0].mxu0
        %v8600 = vpop.f32.mrb[0].mxu0
        %v8601 = vadd.f32 %v8560, %v8600
        %v8602 = vpop.f32.mrb[0].mxu0
        %8603 = vdwg.mxu0
        %v8604 = vmax.f32 %v8391, 0.0
        %v8605 = vmax.f32 %v8393, 0.0
        %v8606 = vmax.f32 %v8598, 0.0
        %v8607 = vmax.f32 %v8395, 0.0
        %v8608 = vmax.f32 %v8397, 0.0
        %v8609 = vmax.f32 %v8601, 0.0
        %v8610 = vld [vmem:[%s10] sm:$0x1]
        %v8611 = vld [vmem:[%s9] sm:$0xff]
        %v8612 = vld [vmem:[%s9 + $0x8] sm:$0xff]
        %v8613 = vld [vmem:[%s9 + $0x10] sm:$0xff]
        %v8614 = vld [vmem:[%s9 + $0x18] sm:$0xff]
        %v8615 = vld [vmem:[%s9 + $0x20] sm:$0xff]
        %v8616 = vld [vmem:[%s9 + $0x28] sm:$0xff]
        %v8617 = vld [vmem:[%s9 + $0x30] sm:$0xff]
        %v8618 = vld [vmem:[%s9 + $0x38] sm:$0xff]
        %v8619 = vld [vmem:[%s9 + $0x40] sm:$0xff]
        %v8620 = vld [vmem:[%s9 + $0x48] sm:$0xff]
        %v8621 = vld [vmem:[%s9 + $0x50] sm:$0xff]
        %v8622 = vld [vmem:[%s9 + $0x58] sm:$0xff]
        %v8623 = vld [vmem:[%s9 + $0x60] sm:$0xff]
        %v8624 = vld [vmem:[%s9 + $0x68] sm:$0xff]
        %v8625 = vld [vmem:[%s9 + $0x70] sm:$0xff]
        %v8626 = vld [vmem:[%s9 + $0x78] sm:$0xff]
        %v8627 = vld [vmem:[%s9 + $0x80] sm:$0xff]
        %v8628 = vld [vmem:[%s9 + $0x88] sm:$0xff]
        %v8629 = vld [vmem:[%s9 + $0x90] sm:$0xff]
        %v8630 = vld [vmem:[%s9 + $0x98] sm:$0xff]
        %v8631 = vld [vmem:[%s9 + $0xa0] sm:$0xff]
        %v8632 = vld [vmem:[%s9 + $0xa8] sm:$0xff]
        %v8633 = vld [vmem:[%s9 + $0xb0] sm:$0xff]
        %v8634 = vld [vmem:[%s9 + $0xb8] sm:$0xff]
        %v8635 = vld [vmem:[%s9 + $0xc0] sm:$0xff]
        %v8636 = vld [vmem:[%s9 + $0xc8] sm:$0xff]
        %v8637 = vld [vmem:[%s9 + $0xd0] sm:$0xff]
        %v8638 = vld [vmem:[%s9 + $0xd8] sm:$0xff]
        %v8639 = vld [vmem:[%s9 + $0xe0] sm:$0xff]
        %v8640 = vld [vmem:[%s9 + $0xe8] sm:$0xff]
        %v8641 = vld [vmem:[%s9 + $0xf0] sm:$0xff]
        %v8642 = vld [vmem:[%s9 + $0xf8] sm:$0xff]
        %v8643 = vld [vmem:[%s9 + $0x100] sm:$0xff]
        %v8644 = vld [vmem:[%s9 + $0x108] sm:$0xff]
        %v8645 = vld [vmem:[%s9 + $0x110] sm:$0xff]
        %v8646 = vld [vmem:[%s9 + $0x118] sm:$0xff]
        %v8647 = vld [vmem:[%s9 + $0x120] sm:$0xff]
        %v8648 = vld [vmem:[%s9 + $0x128] sm:$0xff]
        %v8649 = vld [vmem:[%s9 + $0x130] sm:$0xff]
        %v8650 = vld [vmem:[%s9 + $0x138] sm:$0xff]
        %v8651 = vld [vmem:[%s9 + $0x140] sm:$0xff]
        %v8652 = vld [vmem:[%s9 + $0x148] sm:$0xff]
        %v8653 = vld [vmem:[%s9 + $0x150] sm:$0xff]
        %v8654 = vld [vmem:[%s9 + $0x158] sm:$0xff]
        %v8655 = vld [vmem:[%s9 + $0x160] sm:$0xff]
        %v8656 = vld [vmem:[%s9 + $0x168] sm:$0xff]
        %v8657 = vld [vmem:[%s9 + $0x170] sm:$0xff]
        %v8658 = vld [vmem:[%s9 + $0x178] sm:$0xff]
        %8659 = vmatprep.subr.mxu0 0.0
        %8660 = vmatpush1.msra.mxu0 %v8611
        %8661 = vmatprep.subr.mxu0 0.0
        %8662 = vmatpush1.msra.mxu0 %v8612
        %8663 = vmatprep.subr.mxu0 0.0
        %8664 = vmatpush1.msra.mxu0 %v8613
        %8665 = vmatprep.subr.mxu0 0.0
        %8666 = vmatpush1.msra.mxu0 %v8614
        %8667 = vmatprep.subr.mxu0 0.0
        %8668 = vmatpush1.msra.mxu0 %v8615
        %8669 = vmatprep.subr.mxu0 0.0
        %8670 = vmatpush1.msra.mxu0 %v8616
        %8671 = vmatprep.subr.mxu0 0.0
        %8672 = vmatpush1.msra.mxu0 %v8617
        %8673 = vmatprep.subr.mxu0 0.0
        %8674 = vmatpush1.msra.mxu0 %v8618
        %8675 = vmatprep.subr.mxu0 0.0
        %8676 = vmatpush1.msra.mxu0 %v8619
        %8677 = vmatprep.subr.mxu0 0.0
        %8678 = vmatpush1.msra.mxu0 %v8620
        %8679 = vmatprep.subr.mxu0 0.0
        %8680 = vmatpush1.msra.mxu0 %v8621
        %8681 = vmatprep.subr.mxu0 0.0
        %8682 = vmatpush1.msra.mxu0 %v8622
        %8683 = vmatprep.subr.mxu0 0.0
        %8684 = vmatpush1.msra.mxu0 %v8623
        %8685 = vmatprep.subr.mxu0 0.0
        %8686 = vmatpush1.msra.mxu0 %v8624
        %8687 = vmatprep.subr.mxu0 0.0
        %8688 = vmatpush1.msra.mxu0 %v8625
        %8689 = vmatprep.subr.mxu0 0.0
        %8690 = vmatpush1.msra.mxu0 %v8626
        %8691 = vmatprep.subr.mxu0 0.0
        %8692 = vmatpush1.msra.mxu0 %v8627
        %8693 = vmatprep.subr.mxu0 0.0
        %8694 = vmatpush1.msra.mxu0 %v8628
        %8695 = vmatprep.subr.mxu0 0.0
        %8696 = vmatpush1.msra.mxu0 %v8629
        %8697 = vmatprep.subr.mxu0 0.0
        %8698 = vmatpush1.msra.mxu0 %v8630
        %8699 = vmatprep.subr.mxu0 0.0
        %8700 = vmatpush1.msra.mxu0 %v8631
        %8701 = vmatprep.subr.mxu0 0.0
        %8702 = vmatpush1.msra.mxu0 %v8632
        %8703 = vmatprep.subr.mxu0 0.0
        %8704 = vmatpush1.msra.mxu0 %v8633
        %8705 = vmatprep.subr.mxu0 0.0
        %8706 = vmatpush1.msra.mxu0 %v8634
        %8707 = vmatprep.subr.mxu0 0.0
        %8708 = vmatpush1.msra.mxu0 %v8635
        %8709 = vmatprep.subr.mxu0 0.0
        %8710 = vmatpush1.msra.mxu0 %v8636
        %8711 = vmatprep.subr.mxu0 0.0
        %8712 = vmatpush1.msra.mxu0 %v8637
        %8713 = vmatprep.subr.mxu0 0.0
        %8714 = vmatpush1.msra.mxu0 %v8638
        %8715 = vmatprep.subr.mxu0 0.0
        %8716 = vmatpush1.msra.mxu0 %v8639
        %8717 = vmatprep.subr.mxu0 0.0
        %8718 = vmatpush1.msra.mxu0 %v8640
        %8719 = vmatprep.subr.mxu0 0.0
        %8720 = vmatpush1.msra.mxu0 %v8641
        %8721 = vmatprep.subr.mxu0 0.0
        %8722 = vmatpush1.msra.mxu0 %v8642
        %8723 = vmatprep.mubr.f32.mxu0 %v8605
        %8724 = vmatmul.mubr.f32.gmra.mrb[0].mxu0 %v8604
        %v8725 = vpop.f32.mrb[0].mxu0
        %v8726 = vadd.f32 0.0, %v8725
        %v8727 = vpop.f32.mrb[0].mxu0
        %8728 = vdwg.mxu0
        %8729 = vmatprep.subr.mxu0 0.0
        %8730 = vmatpush1.msra.mxu0 %v8643
        %8731 = vmatprep.subr.mxu0 0.0
        %8732 = vmatpush1.msra.mxu0 %v8644
        %8733 = vmatprep.subr.mxu0 0.0
        %8734 = vmatpush1.msra.mxu0 %v8645
        %8735 = vmatprep.subr.mxu0 0.0
        %8736 = vmatpush1.msra.mxu0 %v8646
        %8737 = vmatprep.subr.mxu0 0.0
        %8738 = vmatpush1.msra.mxu0 %v8647
        %8739 = vmatprep.subr.mxu0 0.0
        %8740 = vmatpush1.msra.mxu0 %v8648
        %8741 = vmatprep.subr.mxu0 0.0
        %8742 = vmatpush1.msra.mxu0 %v8649
        %8743 = vmatprep.subr.mxu0 0.0
        %8744 = vmatpush1.msra.mxu0 %v8650
        %8745 = vmatprep.subr.mxu0 0.0
        %8746 = vmatpush1.msra.mxu0 %v8651
        %8747 = vmatprep.subr.mxu0 0.0
        %8748 = vmatpush1.msra.mxu0 %v8652
        %8749 = vmatprep.subr.mxu0 0.0
        %8750 = vmatpush1.msra.mxu0 %v8653
        %8751 = vmatprep.subr.mxu0 0.0
        %8752 = vmatpush1.msra.mxu0 %v8654
        %8753 = vmatprep.subr.mxu0 0.0
        %8754 = vmatpush1.msra.mxu0 %v8655
        %8755 = vmatprep.subr.mxu0 0.0
        %8756 = vmatpush1.msra.mxu0 %v8656
        %8757 = vmatprep.subr.mxu0 0.0
        %8758 = vmatpush1.msra.mxu0 %v8657
        %8759 = vmatprep.subr.mxu0 0.0
        %8760 = vmatpush1.msra.mxu0 %v8658
        %8761 = vmatprep.subr.mxu0 0.0
        %8762 = vmatpush1.msra.mxu0 0.0
        %8763 = vmatprep.subr.mxu0 0.0
        %8764 = vmatpush1.msra.mxu0 0.0
        %8765 = vmatprep.subr.mxu0 0.0
        %8766 = vmatpush1.msra.mxu0 0.0
        %8767 = vmatprep.subr.mxu0 0.0
        %8768 = vmatpush1.msra.mxu0 0.0
        %8769 = vmatprep.subr.mxu0 0.0
        %8770 = vmatpush1.msra.mxu0 0.0
        %8771 = vmatprep.subr.mxu0 0.0
        %8772 = vmatpush1.msra.mxu0 0.0
        %8773 = vmatprep.subr.mxu0 0.0
        %8774 = vmatpush1.msra.mxu0 0.0
        %8775 = vmatprep.subr.mxu0 0.0
        %8776 = vmatpush1.msra.mxu0 0.0
        %8777 = vmatprep.subr.mxu0 0.0
        %8778 = vmatpush1.msra.mxu0 0.0
        %8779 = vmatprep.subr.mxu0 0.0
        %8780 = vmatpush1.msra.mxu0 0.0
        %8781 = vmatprep.subr.mxu0 0.0
        %8782 = vmatpush1.msra.mxu0 0.0
        %8783 = vmatprep.subr.mxu0 0.0
        %8784 = vmatpush1.msra.mxu0 0.0
        %8785 = vmatprep.subr.mxu0 0.0
        %8786 = vmatpush1.msra.mxu0 0.0
        %8787 = vmatprep.subr.mxu0 0.0
        %8788 = vmatpush1.msra.mxu0 0.0
        %8789 = vmatprep.subr.mxu0 0.0
        %8790 = vmatpush1.msra.mxu0 0.0
        %8791 = vmatprep.subr.mxu0 0.0
        %8792 = vmatpush1.msra.mxu0 0.0
        %8793 = vmatprep.mubr.f32.mxu0 0.0
        %8794 = vmatmul.mubr.f32.gmra.mrb[0].mxu0 %v8606
        %v8795 = vpop.f32.mrb[0].mxu0
        %v8796 = vadd.f32 %v8726, %v8795
        %v8797 = vpop.f32.mrb[0].mxu0
        %8798 = vdwg.mxu0
        %v8799 = vadd.f32 %v8610, %v8796
        %s8800 = scalar_lea.vmem %s9, 384
        %v8801 = vld [vmem:[%s8800] sm:$0xff]
        %v8802 = vld [vmem:[%s8800 + $0x8] sm:$0xff]
        %v8803 = vld [vmem:[%s8800 + $0x10] sm:$0xff]
        %v8804 = vld [vmem:[%s8800 + $0x18] sm:$0xff]
        %v8805 = vld [vmem:[%s8800 + $0x20] sm:$0xff]
        %v8806 = vld [vmem:[%s8800 + $0x28] sm:$0xff]
        %v8807 = vld [vmem:[%s8800 + $0x30] sm:$0xff]
        %v8808 = vld [vmem:[%s8800 + $0x38] sm:$0xff]
        %v8809 = vld [vmem:[%s8800 + $0x40] sm:$0xff]
        %v8810 = vld [vmem:[%s8800 + $0x48] sm:$0xff]
        %v8811 = vld [vmem:[%s8800 + $0x50] sm:$0xff]
        %v8812 = vld [vmem:[%s8800 + $0x58] sm:$0xff]
        %v8813 = vld [vmem:[%s8800 + $0x60] sm:$0xff]
        %v8814 = vld [vmem:[%s8800 + $0x68] sm:$0xff]
        %v8815 = vld [vmem:[%s8800 + $0x70] sm:$0xff]
        %v8816 = vld [vmem:[%s8800 + $0x78] sm:$0xff]
        %v8817 = vld [vmem:[%s8800 + $0x80] sm:$0xff]
        %v8818 = vld [vmem:[%s8800 + $0x88] sm:$0xff]
        %v8819 = vld [vmem:[%s8800 + $0x90] sm:$0xff]
        %v8820 = vld [vmem:[%s8800 + $0x98] sm:$0xff]
        %v8821 = vld [vmem:[%s8800 + $0xa0] sm:$0xff]
        %v8822 = vld [vmem:[%s8800 + $0xa8] sm:$0xff]
        %v8823 = vld [vmem:[%s8800 + $0xb0] sm:$0xff]
        %v8824 = vld [vmem:[%s8800 + $0xb8] sm:$0xff]
        %v8825 = vld [vmem:[%s8800 + $0xc0] sm:$0xff]
        %v8826 = vld [vmem:[%s8800 + $0xc8] sm:$0xff]
        %v8827 = vld [vmem:[%s8800 + $0xd0] sm:$0xff]
        %v8828 = vld [vmem:[%s8800 + $0xd8] sm:$0xff]
        %v8829 = vld [vmem:[%s8800 + $0xe0] sm:$0xff]
        %v8830 = vld [vmem:[%s8800 + $0xe8] sm:$0xff]
        %v8831 = vld [vmem:[%s8800 + $0xf0] sm:$0xff]
        %v8832 = vld [vmem:[%s8800 + $0xf8] sm:$0xff]
        %v8833 = vld [vmem:[%s8800 + $0x100] sm:$0xff]
        %v8834 = vld [vmem:[%s8800 + $0x108] sm:$0xff]
        %v8835 = vld [vmem:[%s8800 + $0x110] sm:$0xff]
        %v8836 = vld [vmem:[%s8800 + $0x118] sm:$0xff]
        %v8837 = vld [vmem:[%s8800 + $0x120] sm:$0xff]
        %v8838 = vld [vmem:[%s8800 + $0x128] sm:$0xff]
        %v8839 = vld [vmem:[%s8800 + $0x130] sm:$0xff]
        %v8840 = vld [vmem:[%s8800 + $0x138] sm:$0xff]
        %v8841 = vld [vmem:[%s8800 + $0x140] sm:$0xff]
        %v8842 = vld [vmem:[%s8800 + $0x148] sm:$0xff]
        %v8843 = vld [vmem:[%s8800 + $0x150] sm:$0xff]
        %v8844 = vld [vmem:[%s8800 + $0x158] sm:$0xff]
        %v8845 = vld [vmem:[%s8800 + $0x160] sm:$0xff]
        %v8846 = vld [vmem:[%s8800 + $0x168] sm:$0xff]
        %v8847 = vld [vmem:[%s8800 + $0x170] sm:$0xff]
        %v8848 = vld [vmem:[%s8800 + $0x178] sm:$0xff]
        %v8852 = vrot.slane %v8604, 1
        %v8853 = vrot.slane %v8605, 1
        %v8854 = vrot.slane %v8606, 1
        %8858 = vmatprep.subr.mxu0 0.0
        %8859 = vmatpush1.msra.mxu0 %v8801
        %8860 = vmatprep.subr.mxu0 0.0
        %8861 = vmatpush1.msra.mxu0 %v8802
        %8862 = vmatprep.subr.mxu0 0.0
        %8863 = vmatpush1.msra.mxu0 %v8803
        %8864 = vmatprep.subr.mxu0 0.0
        %8865 = vmatpush1.msra.mxu0 %v8804
        %8866 = vmatprep.subr.mxu0 0.0
        %8867 = vmatpush1.msra.mxu0 %v8805
        %8868 = vmatprep.subr.mxu0 0.0
        %8869 = vmatpush1.msra.mxu0 %v8806
        %8870 = vmatprep.subr.mxu0 0.0
        %8871 = vmatpush1.msra.mxu0 %v8807
        %8872 = vmatprep.subr.mxu0 0.0
        %8873 = vmatpush1.msra.mxu0 %v8808
        %8874 = vmatprep.subr.mxu0 0.0
        %8875 = vmatpush1.msra.mxu0 %v8809
        %8876 = vmatprep.subr.mxu0 0.0
        %8877 = vmatpush1.msra.mxu0 %v8810
        %8878 = vmatprep.subr.mxu0 0.0
        %8879 = vmatpush1.msra.mxu0 %v8811
        %8880 = vmatprep.subr.mxu0 0.0
        %8881 = vmatpush1.msra.mxu0 %v8812
        %8882 = vmatprep.subr.mxu0 0.0
        %8883 = vmatpush1.msra.mxu0 %v8813
        %8884 = vmatprep.subr.mxu0 0.0
        %8885 = vmatpush1.msra.mxu0 %v8814
        %8886 = vmatprep.subr.mxu0 0.0
        %8887 = vmatpush1.msra.mxu0 %v8815
        %8888 = vmatprep.subr.mxu0 0.0
        %8889 = vmatpush1.msra.mxu0 %v8816
        %8890 = vmatprep.subr.mxu0 0.0
        %8891 = vmatpush1.msra.mxu0 %v8817
        %8892 = vmatprep.subr.mxu0 0.0
        %8893 = vmatpush1.msra.mxu0 %v8818
        %8894 = vmatprep.subr.mxu0 0.0
        %8895 = vmatpush1.msra.mxu0 %v8819
        %8896 = vmatprep.subr.mxu0 0.0
        %8897 = vmatpush1.msra.mxu0 %v8820
        %8898 = vmatprep.subr.mxu0 0.0
        %8899 = vmatpush1.msra.mxu0 %v8821
        %8900 = vmatprep.subr.mxu0 0.0
        %8901 = vmatpush1.msra.mxu0 %v8822
        %8902 = vmatprep.subr.mxu0 0.0
        %8903 = vmatpush1.msra.mxu0 %v8823
        %8904 = vmatprep.subr.mxu0 0.0
        %8905 = vmatpush1.msra.mxu0 %v8824
        %8906 = vmatprep.subr.mxu0 0.0
        %8907 = vmatpush1.msra.mxu0 %v8825
        %8908 = vmatprep.subr.mxu0 0.0
        %8909 = vmatpush1.msra.mxu0 %v8826
        %8910 = vmatprep.subr.mxu0 0.0
        %8911 = vmatpush1.msra.mxu0 %v8827
        %8912 = vmatprep.subr.mxu0 0.0
        %8913 = vmatpush1.msra.mxu0 %v8828
        %8914 = vmatprep.subr.mxu0 0.0
        %8915 = vmatpush1.msra.mxu0 %v8829
        %8916 = vmatprep.subr.mxu0 0.0
        %8917 = vmatpush1.msra.mxu0 %v8830
        %8918 = vmatprep.subr.mxu0 0.0
        %8919 = vmatpush1.msra.mxu0 %v8831
        %8920 = vmatprep.subr.mxu0 0.0
        %8921 = vmatpush1.msra.mxu0 %v8832
        %8922 = vmatprep.mubr.f32.mxu0 %v8853
        %8923 = vmatmul.mubr.f32.gmra.mrb[0].mxu0 %v8852
        %v8924 = vpop.f32.mrb[0].mxu0
        %v8925 = vadd.f32 0.0, %v8924
        %v8926 = vpop.f32.mrb[0].mxu0
        %8927 = vdwg.mxu0
        %8928 = vmatprep.subr.mxu0 0.0
        %8929 = vmatpush1.msra.mxu0 %v8833
        %8930 = vmatprep.subr.mxu0 0.0
        %8931 = vmatpush1.msra.mxu0 %v8834
        %8932 = vmatprep.subr.mxu0 0.0
        %8933 = vmatpush1.msra.mxu0 %v8835
        %8934 = vmatprep.subr.mxu0 0.0
        %8935 = vmatpush1.msra.mxu0 %v8836
        %8936 = vmatprep.subr.mxu0 0.0
        %8937 = vmatpush1.msra.mxu0 %v8837
        %8938 = vmatprep.subr.mxu0 0.0
        %8939 = vmatpush1.msra.mxu0 %v8838
        %8940 = vmatprep.subr.mxu0 0.0
        %8941 = vmatpush1.msra.mxu0 %v8839
        %8942 = vmatprep.subr.mxu0 0.0
        %8943 = vmatpush1.msra.mxu0 %v8840
        %8944 = vmatprep.subr.mxu0 0.0
        %8945 = vmatpush1.msra.mxu0 %v8841
        %8946 = vmatprep.subr.mxu0 0.0
        %8947 = vmatpush1.msra.mxu0 %v8842
        %8948 = vmatprep.subr.mxu0 0.0
        %8949 = vmatpush1.msra.mxu0 %v8843
        %8950 = vmatprep.subr.mxu0 0.0
        %8951 = vmatpush1.msra.mxu0 %v8844
        %8952 = vmatprep.subr.mxu0 0.0
        %8953 = vmatpush1.msra.mxu0 %v8845
        %8954 = vmatprep.subr.mxu0 0.0
        %8955 = vmatpush1.msra.mxu0 %v8846
        %8956 = vmatprep.subr.mxu0 0.0
        %8957 = vmatpush1.msra.mxu0 %v8847
        %8958 = vmatprep.subr.mxu0 0.0
        %8959 = vmatpush1.msra.mxu0 %v8848
        %8960 = vmatprep.subr.mxu0 0.0
        %8961 = vmatpush1.msra.mxu0 0.0
        %8962 = vmatprep.subr.mxu0 0.0
        %8963 = vmatpush1.msra.mxu0 0.0
        %8964 = vmatprep.subr.mxu0 0.0
        %8965 = vmatpush1.msra.mxu0 0.0
        %8966 = vmatprep.subr.mxu0 0.0
        %8967 = vmatpush1.msra.mxu0 0.0
        %8968 = vmatprep.subr.mxu0 0.0
        %8969 = vmatpush1.msra.mxu0 0.0
        %8970 = vmatprep.subr.mxu0 0.0
        %8971 = vmatpush1.msra.mxu0 0.0
        %8972 = vmatprep.subr.mxu0 0.0
        %8973 = vmatpush1.msra.mxu0 0.0
        %8974 = vmatprep.subr.mxu0 0.0
        %8975 = vmatpush1.msra.mxu0 0.0
        %8976 = vmatprep.subr.mxu0 0.0
        %8977 = vmatpush1.msra.mxu0 0.0
        %8978 = vmatprep.subr.mxu0 0.0
        %8979 = vmatpush1.msra.mxu0 0.0
        %8980 = vmatprep.subr.mxu0 0.0
        %8981 = vmatpush1.msra.mxu0 0.0
        %8982 = vmatprep.subr.mxu0 0.0
        %8983 = vmatpush1.msra.mxu0 0.0
        %8984 = vmatprep.subr.mxu0 0.0
        %8985 = vmatpush1.msra.mxu0 0.0
        %8986 = vmatprep.subr.mxu0 0.0
        %8987 = vmatpush1.msra.mxu0 0.0
        %8988 = vmatprep.subr.mxu0 0.0
        %8989 = vmatpush1.msra.mxu0 0.0
        %8990 = vmatprep.subr.mxu0 0.0
        %8991 = vmatpush1.msra.mxu0 0.0
        %8992 = vmatprep.mubr.f32.mxu0 0.0
        %8993 = vmatmul.mubr.f32.gmra.mrb[0].mxu0 %v8854
        %v8994 = vpop.f32.mrb[0].mxu0
        %v8995 = vadd.f32 %v8925, %v8994
        %v8996 = vpop.f32.mrb[0].mxu0
        %8997 = vdwg.mxu0
        %v8998 = vadd.f32 %v8799, %v8995
        %s8999 = scalar_lea.vmem %s9, 768
        %v9000 = vld [vmem:[%s8999] sm:$0xff]
        %v9001 = vld [vmem:[%s8999 + $0x8] sm:$0xff]
        %v9002 = vld [vmem:[%s8999 + $0x10] sm:$0xff]
        %v9003 = vld [vmem:[%s8999 + $0x18] sm:$0xff]
        %v9004 = vld [vmem:[%s8999 + $0x20] sm:$0xff]
        %v9005 = vld [vmem:[%s8999 + $0x28] sm:$0xff]
        %v9006 = vld [vmem:[%s8999 + $0x30] sm:$0xff]
        %v9007 = vld [vmem:[%s8999 + $0x38] sm:$0xff]
        %v9008 = vld [vmem:[%s8999 + $0x40] sm:$0xff]
        %v9009 = vld [vmem:[%s8999 + $0x48] sm:$0xff]
        %v9010 = vld [vmem:[%s8999 + $0x50] sm:$0xff]
        %v9011 = vld [vmem:[%s8999 + $0x58] sm:$0xff]
        %v9012 = vld [vmem:[%s8999 + $0x60] sm:$0xff]
        %v9013 = vld [vmem:[%s8999 + $0x68] sm:$0xff]
        %v9014 = vld [vmem:[%s8999 + $0x70] sm:$0xff]
        %v9015 = vld [vmem:[%s8999 + $0x78] sm:$0xff]
        %v9016 = vld [vmem:[%s8999 + $0x80] sm:$0xff]
        %v9017 = vld [vmem:[%s8999 + $0x88] sm:$0xff]
        %v9018 = vld [vmem:[%s8999 + $0x90] sm:$0xff]
        %v9019 = vld [vmem:[%s8999 + $0x98] sm:$0xff]
        %v9020 = vld [vmem:[%s8999 + $0xa0] sm:$0xff]
        %v9021 = vld [vmem:[%s8999 + $0xa8] sm:$0xff]
        %v9022 = vld [vmem:[%s8999 + $0xb0] sm:$0xff]
        %v9023 = vld [vmem:[%s8999 + $0xb8] sm:$0xff]
        %v9024 = vld [vmem:[%s8999 + $0xc0] sm:$0xff]
        %v9025 = vld [vmem:[%s8999 + $0xc8] sm:$0xff]
        %v9026 = vld [vmem:[%s8999 + $0xd0] sm:$0xff]
        %v9027 = vld [vmem:[%s8999 + $0xd8] sm:$0xff]
        %v9028 = vld [vmem:[%s8999 + $0xe0] sm:$0xff]
        %v9029 = vld [vmem:[%s8999 + $0xe8] sm:$0xff]
        %v9030 = vld [vmem:[%s8999 + $0xf0] sm:$0xff]
        %v9031 = vld [vmem:[%s8999 + $0xf8] sm:$0xff]
        %v9032 = vld [vmem:[%s8999 + $0x100] sm:$0xff]
        %v9033 = vld [vmem:[%s8999 + $0x108] sm:$0xff]
        %v9034 = vld [vmem:[%s8999 + $0x110] sm:$0xff]
        %v9035 = vld [vmem:[%s8999 + $0x118] sm:$0xff]
        %v9036 = vld [vmem:[%s8999 + $0x120] sm:$0xff]
        %v9037 = vld [vmem:[%s8999 + $0x128] sm:$0xff]
        %v9038 = vld [vmem:[%s8999 + $0x130] sm:$0xff]
        %v9039 = vld [vmem:[%s8999 + $0x138] sm:$0xff]
        %v9040 = vld [vmem:[%s8999 + $0x140] sm:$0xff]
        %v9041 = vld [vmem:[%s8999 + $0x148] sm:$0xff]
        %v9042 = vld [vmem:[%s8999 + $0x150] sm:$0xff]
        %v9043 = vld [vmem:[%s8999 + $0x158] sm:$0xff]
        %v9044 = vld [vmem:[%s8999 + $0x160] sm:$0xff]
        %v9045 = vld [vmem:[%s8999 + $0x168] sm:$0xff]
        %v9046 = vld [vmem:[%s8999 + $0x170] sm:$0xff]
        %v9047 = vld [vmem:[%s8999 + $0x178] sm:$0xff]
        %v9048 = vrot.slane %v8604, 2
        %v9049 = vrot.slane %v8605, 2
        %v9050 = vrot.slane %v8606, 2
        %9054 = vmatprep.subr.mxu0 0.0
        %9055 = vmatpush1.msra.mxu0 %v9000
        %9056 = vmatprep.subr.mxu0 0.0
        %9057 = vmatpush1.msra.mxu0 %v9001
        %9058 = vmatprep.subr.mxu0 0.0
        %9059 = vmatpush1.msra.mxu0 %v9002
        %9060 = vmatprep.subr.mxu0 0.0
        %9061 = vmatpush1.msra.mxu0 %v9003
        %9062 = vmatprep.subr.mxu0 0.0
        %9063 = vmatpush1.msra.mxu0 %v9004
        %9064 = vmatprep.subr.mxu0 0.0
        %9065 = vmatpush1.msra.mxu0 %v9005
        %9066 = vmatprep.subr.mxu0 0.0
        %9067 = vmatpush1.msra.mxu0 %v9006
        %9068 = vmatprep.subr.mxu0 0.0
        %9069 = vmatpush1.msra.mxu0 %v9007
        %9070 = vmatprep.subr.mxu0 0.0
        %9071 = vmatpush1.msra.mxu0 %v9008
        %9072 = vmatprep.subr.mxu0 0.0
        %9073 = vmatpush1.msra.mxu0 %v9009
        %9074 = vmatprep.subr.mxu0 0.0
        %9075 = vmatpush1.msra.mxu0 %v9010
        %9076 = vmatprep.subr.mxu0 0.0
        %9077 = vmatpush1.msra.mxu0 %v9011
        %9078 = vmatprep.subr.mxu0 0.0
        %9079 = vmatpush1.msra.mxu0 %v9012
        %9080 = vmatprep.subr.mxu0 0.0
        %9081 = vmatpush1.msra.mxu0 %v9013
        %9082 = vmatprep.subr.mxu0 0.0
        %9083 = vmatpush1.msra.mxu0 %v9014
        %9084 = vmatprep.subr.mxu0 0.0
        %9085 = vmatpush1.msra.mxu0 %v9015
        %9086 = vmatprep.subr.mxu0 0.0
        %9087 = vmatpush1.msra.mxu0 %v9016
        %9088 = vmatprep.subr.mxu0 0.0
        %9089 = vmatpush1.msra.mxu0 %v9017
        %9090 = vmatprep.subr.mxu0 0.0
        %9091 = vmatpush1.msra.mxu0 %v9018
        %9092 = vmatprep.subr.mxu0 0.0
        %9093 = vmatpush1.msra.mxu0 %v9019
        %9094 = vmatprep.subr.mxu0 0.0
        %9095 = vmatpush1.msra.mxu0 %v9020
        %9096 = vmatprep.subr.mxu0 0.0
        %9097 = vmatpush1.msra.mxu0 %v9021
        %9098 = vmatprep.subr.mxu0 0.0
        %9099 = vmatpush1.msra.mxu0 %v9022
        %9100 = vmatprep.subr.mxu0 0.0
        %9101 = vmatpush1.msra.mxu0 %v9023
        %9102 = vmatprep.subr.mxu0 0.0
        %9103 = vmatpush1.msra.mxu0 %v9024
        %9104 = vmatprep.subr.mxu0 0.0
        %9105 = vmatpush1.msra.mxu0 %v9025
        %9106 = vmatprep.subr.mxu0 0.0
        %9107 = vmatpush1.msra.mxu0 %v9026
        %9108 = vmatprep.subr.mxu0 0.0
        %9109 = vmatpush1.msra.mxu0 %v9027
        %9110 = vmatprep.subr.mxu0 0.0
        %9111 = vmatpush1.msra.mxu0 %v9028
        %9112 = vmatprep.subr.mxu0 0.0
        %9113 = vmatpush1.msra.mxu0 %v9029
        %9114 = vmatprep.subr.mxu0 0.0
        %9115 = vmatpush1.msra.mxu0 %v9030
        %9116 = vmatprep.subr.mxu0 0.0
        %9117 = vmatpush1.msra.mxu0 %v9031
        %9118 = vmatprep.mubr.f32.mxu0 %v9049
        %9119 = vmatmul.mubr.f32.gmra.mrb[0].mxu0 %v9048
        %v9120 = vpop.f32.mrb[0].mxu0
        %v9121 = vadd.f32 0.0, %v9120
        %v9122 = vpop.f32.mrb[0].mxu0
        %9123 = vdwg.mxu0
        %9124 = vmatprep.subr.mxu0 0.0
        %9125 = vmatpush1.msra.mxu0 %v9032
        %9126 = vmatprep.subr.mxu0 0.0
        %9127 = vmatpush1.msra.mxu0 %v9033
        %9128 = vmatprep.subr.mxu0 0.0
        %9129 = vmatpush1.msra.mxu0 %v9034
        %9130 = vmatprep.subr.mxu0 0.0
        %9131 = vmatpush1.msra.mxu0 %v9035
        %9132 = vmatprep.subr.mxu0 0.0
        %9133 = vmatpush1.msra.mxu0 %v9036
        %9134 = vmatprep.subr.mxu0 0.0
        %9135 = vmatpush1.msra.mxu0 %v9037
        %9136 = vmatprep.subr.mxu0 0.0
        %9137 = vmatpush1.msra.mxu0 %v9038
        %9138 = vmatprep.subr.mxu0 0.0
        %9139 = vmatpush1.msra.mxu0 %v9039
        %9140 = vmatprep.subr.mxu0 0.0
        %9141 = vmatpush1.msra.mxu0 %v9040
        %9142 = vmatprep.subr.mxu0 0.0
        %9143 = vmatpush1.msra.mxu0 %v9041
        %9144 = vmatprep.subr.mxu0 0.0
        %9145 = vmatpush1.msra.mxu0 %v9042
        %9146 = vmatprep.subr.mxu0 0.0
        %9147 = vmatpush1.msra.mxu0 %v9043
        %9148 = vmatprep.subr.mxu0 0.0
        %9149 = vmatpush1.msra.mxu0 %v9044
        %9150 = vmatprep.subr.mxu0 0.0
        %9151 = vmatpush1.msra.mxu0 %v9045
        %9152 = vmatprep.subr.mxu0 0.0
        %9153 = vmatpush1.msra.mxu0 %v9046
        %9154 = vmatprep.subr.mxu0 0.0
        %9155 = vmatpush1.msra.mxu0 %v9047
        %9156 = vmatprep.subr.mxu0 0.0
        %9157 = vmatpush1.msra.mxu0 0.0
        %9158 = vmatprep.subr.mxu0 0.0
        %9159 = vmatpush1.msra.mxu0 0.0
        %9160 = vmatprep.subr.mxu0 0.0
        %9161 = vmatpush1.msra.mxu0 0.0
        %9162 = vmatprep.subr.mxu0 0.0
        %9163 = vmatpush1.msra.mxu0 0.0
        %9164 = vmatprep.subr.mxu0 0.0
        %9165 = vmatpush1.msra.mxu0 0.0
        %9166 = vmatprep.subr.mxu0 0.0
        %9167 = vmatpush1.msra.mxu0 0.0
        %9168 = vmatprep.subr.mxu0 0.0
        %9169 = vmatpush1.msra.mxu0 0.0
        %9170 = vmatprep.subr.mxu0 0.0
        %9171 = vmatpush1.msra.mxu0 0.0
        %9172 = vmatprep.subr.mxu0 0.0
        %9173 = vmatpush1.msra.mxu0 0.0
        %9174 = vmatprep.subr.mxu0 0.0
        %9175 = vmatpush1.msra.mxu0 0.0
        %9176 = vmatprep.subr.mxu0 0.0
        %9177 = vmatpush1.msra.mxu0 0.0
        %9178 = vmatprep.subr.mxu0 0.0
        %9179 = vmatpush1.msra.mxu0 0.0
        %9180 = vmatprep.subr.mxu0 0.0
        %9181 = vmatpush1.msra.mxu0 0.0
        %9182 = vmatprep.subr.mxu0 0.0
        %9183 = vmatpush1.msra.mxu0 0.0
        %9184 = vmatprep.subr.mxu0 0.0
        %9185 = vmatpush1.msra.mxu0 0.0
        %9186 = vmatprep.subr.mxu0 0.0
        %9187 = vmatpush1.msra.mxu0 0.0
        %9188 = vmatprep.mubr.f32.mxu0 0.0
        %9189 = vmatmul.mubr.f32.gmra.mrb[0].mxu0 %v9050
        %v9190 = vpop.f32.mrb[0].mxu0
        %v9191 = vadd.f32 %v9121, %v9190
        %v9192 = vpop.f32.mrb[0].mxu0
        %9193 = vdwg.mxu0
        %v9194 = vadd.f32 %v8998, %v9191
        %s9195 = scalar_lea.vmem %s9, 1152
        %v9196 = vld [vmem:[%s9195] sm:$0xff]
        %v9197 = vld [vmem:[%s9195 + $0x8] sm:$0xff]
        %v9198 = vld [vmem:[%s9195 + $0x10] sm:$0xff]
        %v9199 = vld [vmem:[%s9195 + $0x18] sm:$0xff]
        %v9200 = vld [vmem:[%s9195 + $0x20] sm:$0xff]
        %v9201 = vld [vmem:[%s9195 + $0x28] sm:$0xff]
        %v9202 = vld [vmem:[%s9195 + $0x30] sm:$0xff]
        %v9203 = vld [vmem:[%s9195 + $0x38] sm:$0xff]
        %v9204 = vld [vmem:[%s9195 + $0x40] sm:$0xff]
        %v9205 = vld [vmem:[%s9195 + $0x48] sm:$0xff]
        %v9206 = vld [vmem:[%s9195 + $0x50] sm:$0xff]
        %v9207 = vld [vmem:[%s9195 + $0x58] sm:$0xff]
        %v9208 = vld [vmem:[%s9195 + $0x60] sm:$0xff]
        %v9209 = vld [vmem:[%s9195 + $0x68] sm:$0xff]
        %v9210 = vld [vmem:[%s9195 + $0x70] sm:$0xff]
        %v9211 = vld [vmem:[%s9195 + $0x78] sm:$0xff]
        %v9212 = vld [vmem:[%s9195 + $0x80] sm:$0xff]
        %v9213 = vld [vmem:[%s9195 + $0x88] sm:$0xff]
        %v9214 = vld [vmem:[%s9195 + $0x90] sm:$0xff]
        %v9215 = vld [vmem:[%s9195 + $0x98] sm:$0xff]
        %v9216 = vld [vmem:[%s9195 + $0xa0] sm:$0xff]
        %v9217 = vld [vmem:[%s9195 + $0xa8] sm:$0xff]
        %v9218 = vld [vmem:[%s9195 + $0xb0] sm:$0xff]
        %v9219 = vld [vmem:[%s9195 + $0xb8] sm:$0xff]
        %v9220 = vld [vmem:[%s9195 + $0xc0] sm:$0xff]
        %v9221 = vld [vmem:[%s9195 + $0xc8] sm:$0xff]
        %v9222 = vld [vmem:[%s9195 + $0xd0] sm:$0xff]
        %v9223 = vld [vmem:[%s9195 + $0xd8] sm:$0xff]
        %v9224 = vld [vmem:[%s9195 + $0xe0] sm:$0xff]
        %v9225 = vld [vmem:[%s9195 + $0xe8] sm:$0xff]
        %v9226 = vld [vmem:[%s9195 + $0xf0] sm:$0xff]
        %v9227 = vld [vmem:[%s9195 + $0xf8] sm:$0xff]
        %v9228 = vld [vmem:[%s9195 + $0x100] sm:$0xff]
        %v9229 = vld [vmem:[%s9195 + $0x108] sm:$0xff]
        %v9230 = vld [vmem:[%s9195 + $0x110] sm:$0xff]
        %v9231 = vld [vmem:[%s9195 + $0x118] sm:$0xff]
        %v9232 = vld [vmem:[%s9195 + $0x120] sm:$0xff]
        %v9233 = vld [vmem:[%s9195 + $0x128] sm:$0xff]
        %v9234 = vld [vmem:[%s9195 + $0x130] sm:$0xff]
        %v9235 = vld [vmem:[%s9195 + $0x138] sm:$0xff]
        %v9236 = vld [vmem:[%s9195 + $0x140] sm:$0xff]
        %v9237 = vld [vmem:[%s9195 + $0x148] sm:$0xff]
        %v9238 = vld [vmem:[%s9195 + $0x150] sm:$0xff]
        %v9239 = vld [vmem:[%s9195 + $0x158] sm:$0xff]
        %v9240 = vld [vmem:[%s9195 + $0x160] sm:$0xff]
        %v9241 = vld [vmem:[%s9195 + $0x168] sm:$0xff]
        %v9242 = vld [vmem:[%s9195 + $0x170] sm:$0xff]
        %v9243 = vld [vmem:[%s9195 + $0x178] sm:$0xff]
        %v9244 = vrot.slane %v8604, 3
        %v9245 = vrot.slane %v8605, 3
        %v9246 = vrot.slane %v8606, 3
        %9250 = vmatprep.subr.mxu0 0.0
        %9251 = vmatpush1.msra.mxu0 %v9196
        %9252 = vmatprep.subr.mxu0 0.0
        %9253 = vmatpush1.msra.mxu0 %v9197
        %9254 = vmatprep.subr.mxu0 0.0
        %9255 = vmatpush1.msra.mxu0 %v9198
        %9256 = vmatprep.subr.mxu0 0.0
        %9257 = vmatpush1.msra.mxu0 %v9199
        %9258 = vmatprep.subr.mxu0 0.0
        %9259 = vmatpush1.msra.mxu0 %v9200
        %9260 = vmatprep.subr.mxu0 0.0
        %9261 = vmatpush1.msra.mxu0 %v9201
        %9262 = vmatprep.subr.mxu0 0.0
        %9263 = vmatpush1.msra.mxu0 %v9202
        %9264 = vmatprep.subr.mxu0 0.0
        %9265 = vmatpush1.msra.mxu0 %v9203
        %9266 = vmatprep.subr.mxu0 0.0
        %9267 = vmatpush1.msra.mxu0 %v9204
        %9268 = vmatprep.subr.mxu0 0.0
        %9269 = vmatpush1.msra.mxu0 %v9205
        %9270 = vmatprep.subr.mxu0 0.0
        %9271 = vmatpush1.msra.mxu0 %v9206
        %9272 = vmatprep.subr.mxu0 0.0
        %9273 = vmatpush1.msra.mxu0 %v9207
        %9274 = vmatprep.subr.mxu0 0.0
        %9275 = vmatpush1.msra.mxu0 %v9208
        %9276 = vmatprep.subr.mxu0 0.0
        %9277 = vmatpush1.msra.mxu0 %v9209
        %9278 = vmatprep.subr.mxu0 0.0
        %9279 = vmatpush1.msra.mxu0 %v9210
        %9280 = vmatprep.subr.mxu0 0.0
        %9281 = vmatpush1.msra.mxu0 %v9211
        %9282 = vmatprep.subr.mxu0 0.0
        %9283 = vmatpush1.msra.mxu0 %v9212
        %9284 = vmatprep.subr.mxu0 0.0
        %9285 = vmatpush1.msra.mxu0 %v9213
        %9286 = vmatprep.subr.mxu0 0.0
        %9287 = vmatpush1.msra.mxu0 %v9214
        %9288 = vmatprep.subr.mxu0 0.0
        %9289 = vmatpush1.msra.mxu0 %v9215
        %9290 = vmatprep.subr.mxu0 0.0
        %9291 = vmatpush1.msra.mxu0 %v9216
        %9292 = vmatprep.subr.mxu0 0.0
        %9293 = vmatpush1.msra.mxu0 %v9217
        %9294 = vmatprep.subr.mxu0 0.0
        %9295 = vmatpush1.msra.mxu0 %v9218
        %9296 = vmatprep.subr.mxu0 0.0
        %9297 = vmatpush1.msra.mxu0 %v9219
        %9298 = vmatprep.subr.mxu0 0.0
        %9299 = vmatpush1.msra.mxu0 %v9220
        %9300 = vmatprep.subr.mxu0 0.0
        %9301 = vmatpush1.msra.mxu0 %v9221
        %9302 = vmatprep.subr.mxu0 0.0
        %9303 = vmatpush1.msra.mxu0 %v9222
        %9304 = vmatprep.subr.mxu0 0.0
        %9305 = vmatpush1.msra.mxu0 %v9223
        %9306 = vmatprep.subr.mxu0 0.0
        %9307 = vmatpush1.msra.mxu0 %v9224
        %9308 = vmatprep.subr.mxu0 0.0
        %9309 = vmatpush1.msra.mxu0 %v9225
        %9310 = vmatprep.subr.mxu0 0.0
        %9311 = vmatpush1.msra.mxu0 %v9226
        %9312 = vmatprep.subr.mxu0 0.0
        %9313 = vmatpush1.msra.mxu0 %v9227
        %9314 = vmatprep.mubr.f32.mxu0 %v9245
        %9315 = vmatmul.mubr.f32.gmra.mrb[0].mxu0 %v9244
        %v9316 = vpop.f32.mrb[0].mxu0
        %v9317 = vadd.f32 0.0, %v9316
        %v9318 = vpop.f32.mrb[0].mxu0
        %9319 = vdwg.mxu0
        %9320 = vmatprep.subr.mxu0 0.0
        %9321 = vmatpush1.msra.mxu0 %v9228
        %9322 = vmatprep.subr.mxu0 0.0
        %9323 = vmatpush1.msra.mxu0 %v9229
        %9324 = vmatprep.subr.mxu0 0.0
        %9325 = vmatpush1.msra.mxu0 %v9230
        %9326 = vmatprep.subr.mxu0 0.0
        %9327 = vmatpush1.msra.mxu0 %v9231
        %9328 = vmatprep.subr.mxu0 0.0
        %9329 = vmatpush1.msra.mxu0 %v9232
        %9330 = vmatprep.subr.mxu0 0.0
        %9331 = vmatpush1.msra.mxu0 %v9233
        %9332 = vmatprep.subr.mxu0 0.0
        %9333 = vmatpush1.msra.mxu0 %v9234
        %9334 = vmatprep.subr.mxu0 0.0
        %9335 = vmatpush1.msra.mxu0 %v9235
        %9336 = vmatprep.subr.mxu0 0.0
        %9337 = vmatpush1.msra.mxu0 %v9236
        %9338 = vmatprep.subr.mxu0 0.0
        %9339 = vmatpush1.msra.mxu0 %v9237
        %9340 = vmatprep.subr.mxu0 0.0
        %9341 = vmatpush1.msra.mxu0 %v9238
        %9342 = vmatprep.subr.mxu0 0.0
        %9343 = vmatpush1.msra.mxu0 %v9239
        %9344 = vmatprep.subr.mxu0 0.0
        %9345 = vmatpush1.msra.mxu0 %v9240
        %9346 = vmatprep.subr.mxu0 0.0
        %9347 = vmatpush1.msra.mxu0 %v9241
        %9348 = vmatprep.subr.mxu0 0.0
        %9349 = vmatpush1.msra.mxu0 %v9242
        %9350 = vmatprep.subr.mxu0 0.0
        %9351 = vmatpush1.msra.mxu0 %v9243
        %9352 = vmatprep.subr.mxu0 0.0
        %9353 = vmatpush1.msra.mxu0 0.0
        %9354 = vmatprep.subr.mxu0 0.0
        %9355 = vmatpush1.msra.mxu0 0.0
        %9356 = vmatprep.subr.mxu0 0.0
        %9357 = vmatpush1.msra.mxu0 0.0
        %9358 = vmatprep.subr.mxu0 0.0
        %9359 = vmatpush1.msra.mxu0 0.0
        %9360 = vmatprep.subr.mxu0 0.0
        %9361 = vmatpush1.msra.mxu0 0.0
        %9362 = vmatprep.subr.mxu0 0.0
        %9363 = vmatpush1.msra.mxu0 0.0
        %9364 = vmatprep.subr.mxu0 0.0
        %9365 = vmatpush1.msra.mxu0 0.0
        %9366 = vmatprep.subr.mxu0 0.0
        %9367 = vmatpush1.msra.mxu0 0.0
        %9368 = vmatprep.subr.mxu0 0.0
        %9369 = vmatpush1.msra.mxu0 0.0
        %9370 = vmatprep.subr.mxu0 0.0
        %9371 = vmatpush1.msra.mxu0 0.0
        %9372 = vmatprep.subr.mxu0 0.0
        %9373 = vmatpush1.msra.mxu0 0.0
        %9374 = vmatprep.subr.mxu0 0.0
        %9375 = vmatpush1.msra.mxu0 0.0
        %9376 = vmatprep.subr.mxu0 0.0
        %9377 = vmatpush1.msra.mxu0 0.0
        %9378 = vmatprep.subr.mxu0 0.0
        %9379 = vmatpush1.msra.mxu0 0.0
        %9380 = vmatprep.subr.mxu0 0.0
        %9381 = vmatpush1.msra.mxu0 0.0
        %9382 = vmatprep.subr.mxu0 0.0
        %9383 = vmatpush1.msra.mxu0 0.0
        %9384 = vmatprep.mubr.f32.mxu0 0.0
        %9385 = vmatmul.mubr.f32.gmra.mrb[0].mxu0 %v9246
        %v9386 = vpop.f32.mrb[0].mxu0
        %v9387 = vadd.f32 %v9317, %v9386
        %v9388 = vpop.f32.mrb[0].mxu0
        %9389 = vdwg.mxu0
        %v9390 = vadd.f32 %v9194, %v9387
        %s9391 = scalar_lea.vmem %s9, 1536
        %v9392 = vld [vmem:[%s9391] sm:$0xff]
        %v9393 = vld [vmem:[%s9391 + $0x8] sm:$0xff]
        %v9394 = vld [vmem:[%s9391 + $0x10] sm:$0xff]
        %v9395 = vld [vmem:[%s9391 + $0x18] sm:$0xff]
        %v9396 = vld [vmem:[%s9391 + $0x20] sm:$0xff]
        %v9397 = vld [vmem:[%s9391 + $0x28] sm:$0xff]
        %v9398 = vld [vmem:[%s9391 + $0x30] sm:$0xff]
        %v9399 = vld [vmem:[%s9391 + $0x38] sm:$0xff]
        %v9400 = vld [vmem:[%s9391 + $0x40] sm:$0xff]
        %v9401 = vld [vmem:[%s9391 + $0x48] sm:$0xff]
        %v9402 = vld [vmem:[%s9391 + $0x50] sm:$0xff]
        %v9403 = vld [vmem:[%s9391 + $0x58] sm:$0xff]
        %v9404 = vld [vmem:[%s9391 + $0x60] sm:$0xff]
        %v9405 = vld [vmem:[%s9391 + $0x68] sm:$0xff]
        %v9406 = vld [vmem:[%s9391 + $0x70] sm:$0xff]
        %v9407 = vld [vmem:[%s9391 + $0x78] sm:$0xff]
        %v9408 = vld [vmem:[%s9391 + $0x80] sm:$0xff]
        %v9409 = vld [vmem:[%s9391 + $0x88] sm:$0xff]
        %v9410 = vld [vmem:[%s9391 + $0x90] sm:$0xff]
        %v9411 = vld [vmem:[%s9391 + $0x98] sm:$0xff]
        %v9412 = vld [vmem:[%s9391 + $0xa0] sm:$0xff]
        %v9413 = vld [vmem:[%s9391 + $0xa8] sm:$0xff]
        %v9414 = vld [vmem:[%s9391 + $0xb0] sm:$0xff]
        %v9415 = vld [vmem:[%s9391 + $0xb8] sm:$0xff]
        %v9416 = vld [vmem:[%s9391 + $0xc0] sm:$0xff]
        %v9417 = vld [vmem:[%s9391 + $0xc8] sm:$0xff]
        %v9418 = vld [vmem:[%s9391 + $0xd0] sm:$0xff]
        %v9419 = vld [vmem:[%s9391 + $0xd8] sm:$0xff]
        %v9420 = vld [vmem:[%s9391 + $0xe0] sm:$0xff]
        %v9421 = vld [vmem:[%s9391 + $0xe8] sm:$0xff]
        %v9422 = vld [vmem:[%s9391 + $0xf0] sm:$0xff]
        %v9423 = vld [vmem:[%s9391 + $0xf8] sm:$0xff]
        %v9424 = vld [vmem:[%s9391 + $0x100] sm:$0xff]
        %v9425 = vld [vmem:[%s9391 + $0x108] sm:$0xff]
        %v9426 = vld [vmem:[%s9391 + $0x110] sm:$0xff]
        %v9427 = vld [vmem:[%s9391 + $0x118] sm:$0xff]
        %v9428 = vld [vmem:[%s9391 + $0x120] sm:$0xff]
        %v9429 = vld [vmem:[%s9391 + $0x128] sm:$0xff]
        %v9430 = vld [vmem:[%s9391 + $0x130] sm:$0xff]
        %v9431 = vld [vmem:[%s9391 + $0x138] sm:$0xff]
        %v9432 = vld [vmem:[%s9391 + $0x140] sm:$0xff]
        %v9433 = vld [vmem:[%s9391 + $0x148] sm:$0xff]
        %v9434 = vld [vmem:[%s9391 + $0x150] sm:$0xff]
        %v9435 = vld [vmem:[%s9391 + $0x158] sm:$0xff]
        %v9436 = vld [vmem:[%s9391 + $0x160] sm:$0xff]
        %v9437 = vld [vmem:[%s9391 + $0x168] sm:$0xff]
        %v9438 = vld [vmem:[%s9391 + $0x170] sm:$0xff]
        %v9439 = vld [vmem:[%s9391 + $0x178] sm:$0xff]
        %v9440 = vrot.slane %v8604, 4
        %v9441 = vrot.slane %v8605, 4
        %v9442 = vrot.slane %v8606, 4
        %9446 = vmatprep.subr.mxu0 0.0
        %9447 = vmatpush1.msra.mxu0 %v9392
        %9448 = vmatprep.subr.mxu0 0.0
        %9449 = vmatpush1.msra.mxu0 %v9393
        %9450 = vmatprep.subr.mxu0 0.0
        %9451 = vmatpush1.msra.mxu0 %v9394
        %9452 = vmatprep.subr.mxu0 0.0
        %9453 = vmatpush1.msra.mxu0 %v9395
        %9454 = vmatprep.subr.mxu0 0.0
        %9455 = vmatpush1.msra.mxu0 %v9396
        %9456 = vmatprep.subr.mxu0 0.0
        %9457 = vmatpush1.msra.mxu0 %v9397
        %9458 = vmatprep.subr.mxu0 0.0
        %9459 = vmatpush1.msra.mxu0 %v9398
        %9460 = vmatprep.subr.mxu0 0.0
        %9461 = vmatpush1.msra.mxu0 %v9399
        %9462 = vmatprep.subr.mxu0 0.0
        %9463 = vmatpush1.msra.mxu0 %v9400
        %9464 = vmatprep.subr.mxu0 0.0
        %9465 = vmatpush1.msra.mxu0 %v9401
        %9466 = vmatprep.subr.mxu0 0.0
        %9467 = vmatpush1.msra.mxu0 %v9402
        %9468 = vmatprep.subr.mxu0 0.0
        %9469 = vmatpush1.msra.mxu0 %v9403
        %9470 = vmatprep.subr.mxu0 0.0
        %9471 = vmatpush1.msra.mxu0 %v9404
        %9472 = vmatprep.subr.mxu0 0.0
        %9473 = vmatpush1.msra.mxu0 %v9405
        %9474 = vmatprep.subr.mxu0 0.0
        %9475 = vmatpush1.msra.mxu0 %v9406
        %9476 = vmatprep.subr.mxu0 0.0
        %9477 = vmatpush1.msra.mxu0 %v9407
        %9478 = vmatprep.subr.mxu0 0.0
        %9479 = vmatpush1.msra.mxu0 %v9408
        %9480 = vmatprep.subr.mxu0 0.0
        %9481 = vmatpush1.msra.mxu0 %v9409
        %9482 = vmatprep.subr.mxu0 0.0
        %9483 = vmatpush1.msra.mxu0 %v9410
        %9484 = vmatprep.subr.mxu0 0.0
        %9485 = vmatpush1.msra.mxu0 %v9411
        %9486 = vmatprep.subr.mxu0 0.0
        %9487 = vmatpush1.msra.mxu0 %v9412
        %9488 = vmatprep.subr.mxu0 0.0
        %9489 = vmatpush1.msra.mxu0 %v9413
        %9490 = vmatprep.subr.mxu0 0.0
        %9491 = vmatpush1.msra.mxu0 %v9414
        %9492 = vmatprep.subr.mxu0 0.0
        %9493 = vmatpush1.msra.mxu0 %v9415
        %9494 = vmatprep.subr.mxu0 0.0
        %9495 = vmatpush1.msra.mxu0 %v9416
        %9496 = vmatprep.subr.mxu0 0.0
        %9497 = vmatpush1.msra.mxu0 %v9417
        %9498 = vmatprep.subr.mxu0 0.0
        %9499 = vmatpush1.msra.mxu0 %v9418
        %9500 = vmatprep.subr.mxu0 0.0
        %9501 = vmatpush1.msra.mxu0 %v9419
        %9502 = vmatprep.subr.mxu0 0.0
        %9503 = vmatpush1.msra.mxu0 %v9420
        %9504 = vmatprep.subr.mxu0 0.0
        %9505 = vmatpush1.msra.mxu0 %v9421
        %9506 = vmatprep.subr.mxu0 0.0
        %9507 = vmatpush1.msra.mxu0 %v9422
        %9508 = vmatprep.subr.mxu0 0.0
        %9509 = vmatpush1.msra.mxu0 %v9423
        %9510 = vmatprep.mubr.f32.mxu0 %v9441
        %9511 = vmatmul.mubr.f32.gmra.mrb[0].mxu0 %v9440
        %v9512 = vpop.f32.mrb[0].mxu0
        %v9513 = vadd.f32 0.0, %v9512
        %v9514 = vpop.f32.mrb[0].mxu0
        %9515 = vdwg.mxu0
        %9516 = vmatprep.subr.mxu0 0.0
        %9517 = vmatpush1.msra.mxu0 %v9424
        %9518 = vmatprep.subr.mxu0 0.0
        %9519 = vmatpush1.msra.mxu0 %v9425
        %9520 = vmatprep.subr.mxu0 0.0
        %9521 = vmatpush1.msra.mxu0 %v9426
        %9522 = vmatprep.subr.mxu0 0.0
        %9523 = vmatpush1.msra.mxu0 %v9427
        %9524 = vmatprep.subr.mxu0 0.0
        %9525 = vmatpush1.msra.mxu0 %v9428
        %9526 = vmatprep.subr.mxu0 0.0
        %9527 = vmatpush1.msra.mxu0 %v9429
        %9528 = vmatprep.subr.mxu0 0.0
        %9529 = vmatpush1.msra.mxu0 %v9430
        %9530 = vmatprep.subr.mxu0 0.0
        %9531 = vmatpush1.msra.mxu0 %v9431
        %9532 = vmatprep.subr.mxu0 0.0
        %9533 = vmatpush1.msra.mxu0 %v9432
        %9534 = vmatprep.subr.mxu0 0.0
        %9535 = vmatpush1.msra.mxu0 %v9433
        %9536 = vmatprep.subr.mxu0 0.0
        %9537 = vmatpush1.msra.mxu0 %v9434
        %9538 = vmatprep.subr.mxu0 0.0
        %9539 = vmatpush1.msra.mxu0 %v9435
        %9540 = vmatprep.subr.mxu0 0.0
        %9541 = vmatpush1.msra.mxu0 %v9436
        %9542 = vmatprep.subr.mxu0 0.0
        %9543 = vmatpush1.msra.mxu0 %v9437
        %9544 = vmatprep.subr.mxu0 0.0
        %9545 = vmatpush1.msra.mxu0 %v9438
        %9546 = vmatprep.subr.mxu0 0.0
        %9547 = vmatpush1.msra.mxu0 %v9439
        %9548 = vmatprep.subr.mxu0 0.0
        %9549 = vmatpush1.msra.mxu0 0.0
        %9550 = vmatprep.subr.mxu0 0.0
        %9551 = vmatpush1.msra.mxu0 0.0
        %9552 = vmatprep.subr.mxu0 0.0
        %9553 = vmatpush1.msra.mxu0 0.0
        %9554 = vmatprep.subr.mxu0 0.0
        %9555 = vmatpush1.msra.mxu0 0.0
        %9556 = vmatprep.subr.mxu0 0.0
        %9557 = vmatpush1.msra.mxu0 0.0
        %9558 = vmatprep.subr.mxu0 0.0
        %9559 = vmatpush1.msra.mxu0 0.0
        %9560 = vmatprep.subr.mxu0 0.0
        %9561 = vmatpush1.msra.mxu0 0.0
        %9562 = vmatprep.subr.mxu0 0.0
        %9563 = vmatpush1.msra.mxu0 0.0
        %9564 = vmatprep.subr.mxu0 0.0
        %9565 = vmatpush1.msra.mxu0 0.0
        %9566 = vmatprep.subr.mxu0 0.0
        %9567 = vmatpush1.msra.mxu0 0.0
        %9568 = vmatprep.subr.mxu0 0.0
        %9569 = vmatpush1.msra.mxu0 0.0
        %9570 = vmatprep.subr.mxu0 0.0
        %9571 = vmatpush1.msra.mxu0 0.0
        %9572 = vmatprep.subr.mxu0 0.0
        %9573 = vmatpush1.msra.mxu0 0.0
        %9574 = vmatprep.subr.mxu0 0.0
        %9575 = vmatpush1.msra.mxu0 0.0
        %9576 = vmatprep.subr.mxu0 0.0
        %9577 = vmatpush1.msra.mxu0 0.0
        %9578 = vmatprep.subr.mxu0 0.0
        %9579 = vmatpush1.msra.mxu0 0.0
        %9580 = vmatprep.mubr.f32.mxu0 0.0
        %9581 = vmatmul.mubr.f32.gmra.mrb[0].mxu0 %v9442
        %v9582 = vpop.f32.mrb[0].mxu0
        %v9583 = vadd.f32 %v9513, %v9582
        %v9584 = vpop.f32.mrb[0].mxu0
        %9585 = vdwg.mxu0
        %v9586 = vadd.f32 %v9390, %v9583
        %s9587 = scalar_lea.vmem %s9, 1920
        %v9588 = vld [vmem:[%s9587] sm:$0xff]
        %v9589 = vld [vmem:[%s9587 + $0x8] sm:$0xff]
        %v9590 = vld [vmem:[%s9587 + $0x10] sm:$0xff]
        %v9591 = vld [vmem:[%s9587 + $0x18] sm:$0xff]
        %v9592 = vld [vmem:[%s9587 + $0x20] sm:$0xff]
        %v9593 = vld [vmem:[%s9587 + $0x28] sm:$0xff]
        %v9594 = vld [vmem:[%s9587 + $0x30] sm:$0xff]
        %v9595 = vld [vmem:[%s9587 + $0x38] sm:$0xff]
        %v9596 = vld [vmem:[%s9587 + $0x40] sm:$0xff]
        %v9597 = vld [vmem:[%s9587 + $0x48] sm:$0xff]
        %v9598 = vld [vmem:[%s9587 + $0x50] sm:$0xff]
        %v9599 = vld [vmem:[%s9587 + $0x58] sm:$0xff]
        %v9600 = vld [vmem:[%s9587 + $0x60] sm:$0xff]
        %v9601 = vld [vmem:[%s9587 + $0x68] sm:$0xff]
        %v9602 = vld [vmem:[%s9587 + $0x70] sm:$0xff]
        %v9603 = vld [vmem:[%s9587 + $0x78] sm:$0xff]
        %v9604 = vld [vmem:[%s9587 + $0x80] sm:$0xff]
        %v9605 = vld [vmem:[%s9587 + $0x88] sm:$0xff]
        %v9606 = vld [vmem:[%s9587 + $0x90] sm:$0xff]
        %v9607 = vld [vmem:[%s9587 + $0x98] sm:$0xff]
        %v9608 = vld [vmem:[%s9587 + $0xa0] sm:$0xff]
        %v9609 = vld [vmem:[%s9587 + $0xa8] sm:$0xff]
        %v9610 = vld [vmem:[%s9587 + $0xb0] sm:$0xff]
        %v9611 = vld [vmem:[%s9587 + $0xb8] sm:$0xff]
        %v9612 = vld [vmem:[%s9587 + $0xc0] sm:$0xff]
        %v9613 = vld [vmem:[%s9587 + $0xc8] sm:$0xff]
        %v9614 = vld [vmem:[%s9587 + $0xd0] sm:$0xff]
        %v9615 = vld [vmem:[%s9587 + $0xd8] sm:$0xff]
        %v9616 = vld [vmem:[%s9587 + $0xe0] sm:$0xff]
        %v9617 = vld [vmem:[%s9587 + $0xe8] sm:$0xff]
        %v9618 = vld [vmem:[%s9587 + $0xf0] sm:$0xff]
        %v9619 = vld [vmem:[%s9587 + $0xf8] sm:$0xff]
        %v9620 = vld [vmem:[%s9587 + $0x100] sm:$0xff]
        %v9621 = vld [vmem:[%s9587 + $0x108] sm:$0xff]
        %v9622 = vld [vmem:[%s9587 + $0x110] sm:$0xff]
        %v9623 = vld [vmem:[%s9587 + $0x118] sm:$0xff]
        %v9624 = vld [vmem:[%s9587 + $0x120] sm:$0xff]
        %v9625 = vld [vmem:[%s9587 + $0x128] sm:$0xff]
        %v9626 = vld [vmem:[%s9587 + $0x130] sm:$0xff]
        %v9627 = vld [vmem:[%s9587 + $0x138] sm:$0xff]
        %v9628 = vld [vmem:[%s9587 + $0x140] sm:$0xff]
        %v9629 = vld [vmem:[%s9587 + $0x148] sm:$0xff]
        %v9630 = vld [vmem:[%s9587 + $0x150] sm:$0xff]
        %v9631 = vld [vmem:[%s9587 + $0x158] sm:$0xff]
        %v9632 = vld [vmem:[%s9587 + $0x160] sm:$0xff]
        %v9633 = vld [vmem:[%s9587 + $0x168] sm:$0xff]
        %v9634 = vld [vmem:[%s9587 + $0x170] sm:$0xff]
        %v9635 = vld [vmem:[%s9587 + $0x178] sm:$0xff]
        %v9636 = vrot.slane %v8604, 5
        %v9637 = vrot.slane %v8605, 5
        %v9638 = vrot.slane %v8606, 5
        %9642 = vmatprep.subr.mxu0 0.0
        %9643 = vmatpush1.msra.mxu0 %v9588
        %9644 = vmatprep.subr.mxu0 0.0
        %9645 = vmatpush1.msra.mxu0 %v9589
        %9646 = vmatprep.subr.mxu0 0.0
        %9647 = vmatpush1.msra.mxu0 %v9590
        %9648 = vmatprep.subr.mxu0 0.0
        %9649 = vmatpush1.msra.mxu0 %v9591
        %9650 = vmatprep.subr.mxu0 0.0
        %9651 = vmatpush1.msra.mxu0 %v9592
        %9652 = vmatprep.subr.mxu0 0.0
        %9653 = vmatpush1.msra.mxu0 %v9593
        %9654 = vmatprep.subr.mxu0 0.0
        %9655 = vmatpush1.msra.mxu0 %v9594
        %9656 = vmatprep.subr.mxu0 0.0
        %9657 = vmatpush1.msra.mxu0 %v9595
        %9658 = vmatprep.subr.mxu0 0.0
        %9659 = vmatpush1.msra.mxu0 %v9596
        %9660 = vmatprep.subr.mxu0 0.0
        %9661 = vmatpush1.msra.mxu0 %v9597
        %9662 = vmatprep.subr.mxu0 0.0
        %9663 = vmatpush1.msra.mxu0 %v9598
        %9664 = vmatprep.subr.mxu0 0.0
        %9665 = vmatpush1.msra.mxu0 %v9599
        %9666 = vmatprep.subr.mxu0 0.0
        %9667 = vmatpush1.msra.mxu0 %v9600
        %9668 = vmatprep.subr.mxu0 0.0
        %9669 = vmatpush1.msra.mxu0 %v9601
        %9670 = vmatprep.subr.mxu0 0.0
        %9671 = vmatpush1.msra.mxu0 %v9602
        %9672 = vmatprep.subr.mxu0 0.0
        %9673 = vmatpush1.msra.mxu0 %v9603
        %9674 = vmatprep.subr.mxu0 0.0
        %9675 = vmatpush1.msra.mxu0 %v9604
        %9676 = vmatprep.subr.mxu0 0.0
        %9677 = vmatpush1.msra.mxu0 %v9605
        %9678 = vmatprep.subr.mxu0 0.0
        %9679 = vmatpush1.msra.mxu0 %v9606
        %9680 = vmatprep.subr.mxu0 0.0
        %9681 = vmatpush1.msra.mxu0 %v9607
        %9682 = vmatprep.subr.mxu0 0.0
        %9683 = vmatpush1.msra.mxu0 %v9608
        %9684 = vmatprep.subr.mxu0 0.0
        %9685 = vmatpush1.msra.mxu0 %v9609
        %9686 = vmatprep.subr.mxu0 0.0
        %9687 = vmatpush1.msra.mxu0 %v9610
        %9688 = vmatprep.subr.mxu0 0.0
        %9689 = vmatpush1.msra.mxu0 %v9611
        %9690 = vmatprep.subr.mxu0 0.0
        %9691 = vmatpush1.msra.mxu0 %v9612
        %9692 = vmatprep.subr.mxu0 0.0
        %9693 = vmatpush1.msra.mxu0 %v9613
        %9694 = vmatprep.subr.mxu0 0.0
        %9695 = vmatpush1.msra.mxu0 %v9614
        %9696 = vmatprep.subr.mxu0 0.0
        %9697 = vmatpush1.msra.mxu0 %v9615
        %9698 = vmatprep.subr.mxu0 0.0
        %9699 = vmatpush1.msra.mxu0 %v9616
        %9700 = vmatprep.subr.mxu0 0.0
        %9701 = vmatpush1.msra.mxu0 %v9617
        %9702 = vmatprep.subr.mxu0 0.0
        %9703 = vmatpush1.msra.mxu0 %v9618
        %9704 = vmatprep.subr.mxu0 0.0
        %9705 = vmatpush1.msra.mxu0 %v9619
        %9706 = vmatprep.mubr.f32.mxu0 %v9637
        %9707 = vmatmul.mubr.f32.gmra.mrb[0].mxu0 %v9636
        %v9708 = vpop.f32.mrb[0].mxu0
        %v9709 = vadd.f32 0.0, %v9708
        %v9710 = vpop.f32.mrb[0].mxu0
        %9711 = vdwg.mxu0
        %9712 = vmatprep.subr.mxu0 0.0
        %9713 = vmatpush1.msra.mxu0 %v9620
        %9714 = vmatprep.subr.mxu0 0.0
        %9715 = vmatpush1.msra.mxu0 %v9621
        %9716 = vmatprep.subr.mxu0 0.0
        %9717 = vmatpush1.msra.mxu0 %v9622
        %9718 = vmatprep.subr.mxu0 0.0
        %9719 = vmatpush1.msra.mxu0 %v9623
        %9720 = vmatprep.subr.mxu0 0.0
        %9721 = vmatpush1.msra.mxu0 %v9624
        %9722 = vmatprep.subr.mxu0 0.0
        %9723 = vmatpush1.msra.mxu0 %v9625
        %9724 = vmatprep.subr.mxu0 0.0
        %9725 = vmatpush1.msra.mxu0 %v9626
        %9726 = vmatprep.subr.mxu0 0.0
        %9727 = vmatpush1.msra.mxu0 %v9627
        %9728 = vmatprep.subr.mxu0 0.0
        %9729 = vmatpush1.msra.mxu0 %v9628
        %9730 = vmatprep.subr.mxu0 0.0
        %9731 = vmatpush1.msra.mxu0 %v9629
        %9732 = vmatprep.subr.mxu0 0.0
        %9733 = vmatpush1.msra.mxu0 %v9630
        %9734 = vmatprep.subr.mxu0 0.0
        %9735 = vmatpush1.msra.mxu0 %v9631
        %9736 = vmatprep.subr.mxu0 0.0
        %9737 = vmatpush1.msra.mxu0 %v9632
        %9738 = vmatprep.subr.mxu0 0.0
        %9739 = vmatpush1.msra.mxu0 %v9633
        %9740 = vmatprep.subr.mxu0 0.0
        %9741 = vmatpush1.msra.mxu0 %v9634
        %9742 = vmatprep.subr.mxu0 0.0
        %9743 = vmatpush1.msra.mxu0 %v9635
        %9744 = vmatprep.subr.mxu0 0.0
        %9745 = vmatpush1.msra.mxu0 0.0
        %9746 = vmatprep.subr.mxu0 0.0
        %9747 = vmatpush1.msra.mxu0 0.0
        %9748 = vmatprep.subr.mxu0 0.0
        %9749 = vmatpush1.msra.mxu0 0.0
        %9750 = vmatprep.subr.mxu0 0.0
        %9751 = vmatpush1.msra.mxu0 0.0
        %9752 = vmatprep.subr.mxu0 0.0
        %9753 = vmatpush1.msra.mxu0 0.0
        %9754 = vmatprep.subr.mxu0 0.0
        %9755 = vmatpush1.msra.mxu0 0.0
        %9756 = vmatprep.subr.mxu0 0.0
        %9757 = vmatpush1.msra.mxu0 0.0
        %9758 = vmatprep.subr.mxu0 0.0
        %9759 = vmatpush1.msra.mxu0 0.0
        %9760 = vmatprep.subr.mxu0 0.0
        %9761 = vmatpush1.msra.mxu0 0.0
        %9762 = vmatprep.subr.mxu0 0.0
        %9763 = vmatpush1.msra.mxu0 0.0
        %9764 = vmatprep.subr.mxu0 0.0
        %9765 = vmatpush1.msra.mxu0 0.0
        %9766 = vmatprep.subr.mxu0 0.0
        %9767 = vmatpush1.msra.mxu0 0.0
        %9768 = vmatprep.subr.mxu0 0.0
        %9769 = vmatpush1.msra.mxu0 0.0
        %9770 = vmatprep.subr.mxu0 0.0
        %9771 = vmatpush1.msra.mxu0 0.0
        %9772 = vmatprep.subr.mxu0 0.0
        %9773 = vmatpush1.msra.mxu0 0.0
        %9774 = vmatprep.subr.mxu0 0.0
        %9775 = vmatpush1.msra.mxu0 0.0
        %9776 = vmatprep.mubr.f32.mxu0 0.0
        %9777 = vmatmul.mubr.f32.gmra.mrb[0].mxu0 %v9638
        %v9778 = vpop.f32.mrb[0].mxu0
        %v9779 = vadd.f32 %v9709, %v9778
        %v9780 = vpop.f32.mrb[0].mxu0
        %9781 = vdwg.mxu0
        %v9782 = vadd.f32 %v9586, %v9779
        %s9783 = scalar_lea.vmem %s9, 2304
        %v9784 = vld [vmem:[%s9783] sm:$0xff]
        %v9785 = vld [vmem:[%s9783 + $0x8] sm:$0xff]
        %v9786 = vld [vmem:[%s9783 + $0x10] sm:$0xff]
        %v9787 = vld [vmem:[%s9783 + $0x18] sm:$0xff]
        %v9788 = vld [vmem:[%s9783 + $0x20] sm:$0xff]
        %v9789 = vld [vmem:[%s9783 + $0x28] sm:$0xff]
        %v9790 = vld [vmem:[%s9783 + $0x30] sm:$0xff]
        %v9791 = vld [vmem:[%s9783 + $0x38] sm:$0xff]
        %v9792 = vld [vmem:[%s9783 + $0x40] sm:$0xff]
        %v9793 = vld [vmem:[%s9783 + $0x48] sm:$0xff]
        %v9794 = vld [vmem:[%s9783 + $0x50] sm:$0xff]
        %v9795 = vld [vmem:[%s9783 + $0x58] sm:$0xff]
        %v9796 = vld [vmem:[%s9783 + $0x60] sm:$0xff]
        %v9797 = vld [vmem:[%s9783 + $0x68] sm:$0xff]
        %v9798 = vld [vmem:[%s9783 + $0x70] sm:$0xff]
        %v9799 = vld [vmem:[%s9783 + $0x78] sm:$0xff]
        %v9800 = vld [vmem:[%s9783 + $0x80] sm:$0xff]
        %v9801 = vld [vmem:[%s9783 + $0x88] sm:$0xff]
        %v9802 = vld [vmem:[%s9783 + $0x90] sm:$0xff]
        %v9803 = vld [vmem:[%s9783 + $0x98] sm:$0xff]
        %v9804 = vld [vmem:[%s9783 + $0xa0] sm:$0xff]
        %v9805 = vld [vmem:[%s9783 + $0xa8] sm:$0xff]
        %v9806 = vld [vmem:[%s9783 + $0xb0] sm:$0xff]
        %v9807 = vld [vmem:[%s9783 + $0xb8] sm:$0xff]
        %v9808 = vld [vmem:[%s9783 + $0xc0] sm:$0xff]
        %v9809 = vld [vmem:[%s9783 + $0xc8] sm:$0xff]
        %v9810 = vld [vmem:[%s9783 + $0xd0] sm:$0xff]
        %v9811 = vld [vmem:[%s9783 + $0xd8] sm:$0xff]
        %v9812 = vld [vmem:[%s9783 + $0xe0] sm:$0xff]
        %v9813 = vld [vmem:[%s9783 + $0xe8] sm:$0xff]
        %v9814 = vld [vmem:[%s9783 + $0xf0] sm:$0xff]
        %v9815 = vld [vmem:[%s9783 + $0xf8] sm:$0xff]
        %v9816 = vld [vmem:[%s9783 + $0x100] sm:$0xff]
        %v9817 = vld [vmem:[%s9783 + $0x108] sm:$0xff]
        %v9818 = vld [vmem:[%s9783 + $0x110] sm:$0xff]
        %v9819 = vld [vmem:[%s9783 + $0x118] sm:$0xff]
        %v9820 = vld [vmem:[%s9783 + $0x120] sm:$0xff]
        %v9821 = vld [vmem:[%s9783 + $0x128] sm:$0xff]
        %v9822 = vld [vmem:[%s9783 + $0x130] sm:$0xff]
        %v9823 = vld [vmem:[%s9783 + $0x138] sm:$0xff]
        %v9824 = vld [vmem:[%s9783 + $0x140] sm:$0xff]
        %v9825 = vld [vmem:[%s9783 + $0x148] sm:$0xff]
        %v9826 = vld [vmem:[%s9783 + $0x150] sm:$0xff]
        %v9827 = vld [vmem:[%s9783 + $0x158] sm:$0xff]
        %v9828 = vld [vmem:[%s9783 + $0x160] sm:$0xff]
        %v9829 = vld [vmem:[%s9783 + $0x168] sm:$0xff]
        %v9830 = vld [vmem:[%s9783 + $0x170] sm:$0xff]
        %v9831 = vld [vmem:[%s9783 + $0x178] sm:$0xff]
        %v9832 = vrot.slane %v8604, 6
        %v9833 = vrot.slane %v8605, 6
        %v9834 = vrot.slane %v8606, 6
        %9838 = vmatprep.subr.mxu0 0.0
        %9839 = vmatpush1.msra.mxu0 %v9784
        %9840 = vmatprep.subr.mxu0 0.0
        %9841 = vmatpush1.msra.mxu0 %v9785
        %9842 = vmatprep.subr.mxu0 0.0
        %9843 = vmatpush1.msra.mxu0 %v9786
        %9844 = vmatprep.subr.mxu0 0.0
        %9845 = vmatpush1.msra.mxu0 %v9787
        %9846 = vmatprep.subr.mxu0 0.0
        %9847 = vmatpush1.msra.mxu0 %v9788
        %9848 = vmatprep.subr.mxu0 0.0
        %9849 = vmatpush1.msra.mxu0 %v9789
        %9850 = vmatprep.subr.mxu0 0.0
        %9851 = vmatpush1.msra.mxu0 %v9790
        %9852 = vmatprep.subr.mxu0 0.0
        %9853 = vmatpush1.msra.mxu0 %v9791
        %9854 = vmatprep.subr.mxu0 0.0
        %9855 = vmatpush1.msra.mxu0 %v9792
        %9856 = vmatprep.subr.mxu0 0.0
        %9857 = vmatpush1.msra.mxu0 %v9793
        %9858 = vmatprep.subr.mxu0 0.0
        %9859 = vmatpush1.msra.mxu0 %v9794
        %9860 = vmatprep.subr.mxu0 0.0
        %9861 = vmatpush1.msra.mxu0 %v9795
        %9862 = vmatprep.subr.mxu0 0.0
        %9863 = vmatpush1.msra.mxu0 %v9796
        %9864 = vmatprep.subr.mxu0 0.0
        %9865 = vmatpush1.msra.mxu0 %v9797
        %9866 = vmatprep.subr.mxu0 0.0
        %9867 = vmatpush1.msra.mxu0 %v9798
        %9868 = vmatprep.subr.mxu0 0.0
        %9869 = vmatpush1.msra.mxu0 %v9799
        %9870 = vmatprep.subr.mxu0 0.0
        %9871 = vmatpush1.msra.mxu0 %v9800
        %9872 = vmatprep.subr.mxu0 0.0
        %9873 = vmatpush1.msra.mxu0 %v9801
        %9874 = vmatprep.subr.mxu0 0.0
        %9875 = vmatpush1.msra.mxu0 %v9802
        %9876 = vmatprep.subr.mxu0 0.0
        %9877 = vmatpush1.msra.mxu0 %v9803
        %9878 = vmatprep.subr.mxu0 0.0
        %9879 = vmatpush1.msra.mxu0 %v9804
        %9880 = vmatprep.subr.mxu0 0.0
        %9881 = vmatpush1.msra.mxu0 %v9805
        %9882 = vmatprep.subr.mxu0 0.0
        %9883 = vmatpush1.msra.mxu0 %v9806
        %9884 = vmatprep.subr.mxu0 0.0
        %9885 = vmatpush1.msra.mxu0 %v9807
        %9886 = vmatprep.subr.mxu0 0.0
        %9887 = vmatpush1.msra.mxu0 %v9808
        %9888 = vmatprep.subr.mxu0 0.0
        %9889 = vmatpush1.msra.mxu0 %v9809
        %9890 = vmatprep.subr.mxu0 0.0
        %9891 = vmatpush1.msra.mxu0 %v9810
        %9892 = vmatprep.subr.mxu0 0.0
        %9893 = vmatpush1.msra.mxu0 %v9811
        %9894 = vmatprep.subr.mxu0 0.0
        %9895 = vmatpush1.msra.mxu0 %v9812
        %9896 = vmatprep.subr.mxu0 0.0
        %9897 = vmatpush1.msra.mxu0 %v9813
        %9898 = vmatprep.subr.mxu0 0.0
        %9899 = vmatpush1.msra.mxu0 %v9814
        %9900 = vmatprep.subr.mxu0 0.0
        %9901 = vmatpush1.msra.mxu0 %v9815
        %9902 = vmatprep.mubr.f32.mxu0 %v9833
        %9903 = vmatmul.mubr.f32.gmra.mrb[0].mxu0 %v9832
        %v9904 = vpop.f32.mrb[0].mxu0
        %v9905 = vadd.f32 0.0, %v9904
        %v9906 = vpop.f32.mrb[0].mxu0
        %9907 = vdwg.mxu0
        %9908 = vmatprep.subr.mxu0 0.0
        %9909 = vmatpush1.msra.mxu0 %v9816
        %9910 = vmatprep.subr.mxu0 0.0
        %9911 = vmatpush1.msra.mxu0 %v9817
        %9912 = vmatprep.subr.mxu0 0.0
        %9913 = vmatpush1.msra.mxu0 %v9818
        %9914 = vmatprep.subr.mxu0 0.0
        %9915 = vmatpush1.msra.mxu0 %v9819
        %9916 = vmatprep.subr.mxu0 0.0
        %9917 = vmatpush1.msra.mxu0 %v9820
        %9918 = vmatprep.subr.mxu0 0.0
        %9919 = vmatpush1.msra.mxu0 %v9821
        %9920 = vmatprep.subr.mxu0 0.0
        %9921 = vmatpush1.msra.mxu0 %v9822
        %9922 = vmatprep.subr.mxu0 0.0
        %9923 = vmatpush1.msra.mxu0 %v9823
        %9924 = vmatprep.subr.mxu0 0.0
        %9925 = vmatpush1.msra.mxu0 %v9824
        %9926 = vmatprep.subr.mxu0 0.0
        %9927 = vmatpush1.msra.mxu0 %v9825
        %9928 = vmatprep.subr.mxu0 0.0
        %9929 = vmatpush1.msra.mxu0 %v9826
        %9930 = vmatprep.subr.mxu0 0.0
        %9931 = vmatpush1.msra.mxu0 %v9827
        %9932 = vmatprep.subr.mxu0 0.0
        %9933 = vmatpush1.msra.mxu0 %v9828
        %9934 = vmatprep.subr.mxu0 0.0
        %9935 = vmatpush1.msra.mxu0 %v9829
        %9936 = vmatprep.subr.mxu0 0.0
        %9937 = vmatpush1.msra.mxu0 %v9830
        %9938 = vmatprep.subr.mxu0 0.0
        %9939 = vmatpush1.msra.mxu0 %v9831
        %9940 = vmatprep.subr.mxu0 0.0
        %9941 = vmatpush1.msra.mxu0 0.0
        %9942 = vmatprep.subr.mxu0 0.0
        %9943 = vmatpush1.msra.mxu0 0.0
        %9944 = vmatprep.subr.mxu0 0.0
        %9945 = vmatpush1.msra.mxu0 0.0
        %9946 = vmatprep.subr.mxu0 0.0
        %9947 = vmatpush1.msra.mxu0 0.0
        %9948 = vmatprep.subr.mxu0 0.0
        %9949 = vmatpush1.msra.mxu0 0.0
        %9950 = vmatprep.subr.mxu0 0.0
        %9951 = vmatpush1.msra.mxu0 0.0
        %9952 = vmatprep.subr.mxu0 0.0
        %9953 = vmatpush1.msra.mxu0 0.0
        %9954 = vmatprep.subr.mxu0 0.0
        %9955 = vmatpush1.msra.mxu0 0.0
        %9956 = vmatprep.subr.mxu0 0.0
        %9957 = vmatpush1.msra.mxu0 0.0
        %9958 = vmatprep.subr.mxu0 0.0
        %9959 = vmatpush1.msra.mxu0 0.0
        %9960 = vmatprep.subr.mxu0 0.0
        %9961 = vmatpush1.msra.mxu0 0.0
        %9962 = vmatprep.subr.mxu0 0.0
        %9963 = vmatpush1.msra.mxu0 0.0
        %9964 = vmatprep.subr.mxu0 0.0
        %9965 = vmatpush1.msra.mxu0 0.0
        %9966 = vmatprep.subr.mxu0 0.0
        %9967 = vmatpush1.msra.mxu0 0.0
        %9968 = vmatprep.subr.mxu0 0.0
        %9969 = vmatpush1.msra.mxu0 0.0
        %9970 = vmatprep.subr.mxu0 0.0
        %9971 = vmatpush1.msra.mxu0 0.0
        %9972 = vmatprep.mubr.f32.mxu0 0.0
        %9973 = vmatmul.mubr.f32.gmra.mrb[0].mxu0 %v9834
        %v9974 = vpop.f32.mrb[0].mxu0
        %v9975 = vadd.f32 %v9905, %v9974
        %v9976 = vpop.f32.mrb[0].mxu0
        %9977 = vdwg.mxu0
        %v9978 = vadd.f32 %v9782, %v9975
        %s9979 = scalar_lea.vmem %s9, 2688
        %v9980 = vld [vmem:[%s9979] sm:$0xff]
        %v9981 = vld [vmem:[%s9979 + $0x8] sm:$0xff]
        %v9982 = vld [vmem:[%s9979 + $0x10] sm:$0xff]
        %v9983 = vld [vmem:[%s9979 + $0x18] sm:$0xff]
        %v9984 = vld [vmem:[%s9979 + $0x20] sm:$0xff]
        %v9985 = vld [vmem:[%s9979 + $0x28] sm:$0xff]
        %v9986 = vld [vmem:[%s9979 + $0x30] sm:$0xff]
        %v9987 = vld [vmem:[%s9979 + $0x38] sm:$0xff]
        %v9988 = vld [vmem:[%s9979 + $0x40] sm:$0xff]
        %v9989 = vld [vmem:[%s9979 + $0x48] sm:$0xff]
        %v9990 = vld [vmem:[%s9979 + $0x50] sm:$0xff]
        %v9991 = vld [vmem:[%s9979 + $0x58] sm:$0xff]
        %v9992 = vld [vmem:[%s9979 + $0x60] sm:$0xff]
        %v9993 = vld [vmem:[%s9979 + $0x68] sm:$0xff]
        %v9994 = vld [vmem:[%s9979 + $0x70] sm:$0xff]
        %v9995 = vld [vmem:[%s9979 + $0x78] sm:$0xff]
        %v9996 = vld [vmem:[%s9979 + $0x80] sm:$0xff]
        %v9997 = vld [vmem:[%s9979 + $0x88] sm:$0xff]
        %v9998 = vld [vmem:[%s9979 + $0x90] sm:$0xff]
        %v9999 = vld [vmem:[%s9979 + $0x98] sm:$0xff]
        %v10000 = vld [vmem:[%s9979 + $0xa0] sm:$0xff]
        %v10001 = vld [vmem:[%s9979 + $0xa8] sm:$0xff]
        %v10002 = vld [vmem:[%s9979 + $0xb0] sm:$0xff]
        %v10003 = vld [vmem:[%s9979 + $0xb8] sm:$0xff]
        %v10004 = vld [vmem:[%s9979 + $0xc0] sm:$0xff]
        %v10005 = vld [vmem:[%s9979 + $0xc8] sm:$0xff]
        %v10006 = vld [vmem:[%s9979 + $0xd0] sm:$0xff]
        %v10007 = vld [vmem:[%s9979 + $0xd8] sm:$0xff]
        %v10008 = vld [vmem:[%s9979 + $0xe0] sm:$0xff]
        %v10009 = vld [vmem:[%s9979 + $0xe8] sm:$0xff]
        %v10010 = vld [vmem:[%s9979 + $0xf0] sm:$0xff]
        %v10011 = vld [vmem:[%s9979 + $0xf8] sm:$0xff]
        %v10012 = vld [vmem:[%s9979 + $0x100] sm:$0xff]
        %v10013 = vld [vmem:[%s9979 + $0x108] sm:$0xff]
        %v10014 = vld [vmem:[%s9979 + $0x110] sm:$0xff]
        %v10015 = vld [vmem:[%s9979 + $0x118] sm:$0xff]
        %v10016 = vld [vmem:[%s9979 + $0x120] sm:$0xff]
        %v10017 = vld [vmem:[%s9979 + $0x128] sm:$0xff]
        %v10018 = vld [vmem:[%s9979 + $0x130] sm:$0xff]
        %v10019 = vld [vmem:[%s9979 + $0x138] sm:$0xff]
        %v10020 = vld [vmem:[%s9979 + $0x140] sm:$0xff]
        %v10021 = vld [vmem:[%s9979 + $0x148] sm:$0xff]
        %v10022 = vld [vmem:[%s9979 + $0x150] sm:$0xff]
        %v10023 = vld [vmem:[%s9979 + $0x158] sm:$0xff]
        %v10024 = vld [vmem:[%s9979 + $0x160] sm:$0xff]
        %v10025 = vld [vmem:[%s9979 + $0x168] sm:$0xff]
        %v10026 = vld [vmem:[%s9979 + $0x170] sm:$0xff]
        %v10027 = vld [vmem:[%s9979 + $0x178] sm:$0xff]
        %v10028 = vrot.slane %v8604, 7
        %v10029 = vrot.slane %v8605, 7
        %v10030 = vrot.slane %v8606, 7
        %10034 = vmatprep.subr.mxu0 0.0
        %10035 = vmatpush1.msra.mxu0 %v9980
        %10036 = vmatprep.subr.mxu0 0.0
        %10037 = vmatpush1.msra.mxu0 %v9981
        %10038 = vmatprep.subr.mxu0 0.0
        %10039 = vmatpush1.msra.mxu0 %v9982
        %10040 = vmatprep.subr.mxu0 0.0
        %10041 = vmatpush1.msra.mxu0 %v9983
        %10042 = vmatprep.subr.mxu0 0.0
        %10043 = vmatpush1.msra.mxu0 %v9984
        %10044 = vmatprep.subr.mxu0 0.0
        %10045 = vmatpush1.msra.mxu0 %v9985
        %10046 = vmatprep.subr.mxu0 0.0
        %10047 = vmatpush1.msra.mxu0 %v9986
        %10048 = vmatprep.subr.mxu0 0.0
        %10049 = vmatpush1.msra.mxu0 %v9987
        %10050 = vmatprep.subr.mxu0 0.0
        %10051 = vmatpush1.msra.mxu0 %v9988
        %10052 = vmatprep.subr.mxu0 0.0
        %10053 = vmatpush1.msra.mxu0 %v9989
        %10054 = vmatprep.subr.mxu0 0.0
        %10055 = vmatpush1.msra.mxu0 %v9990
        %10056 = vmatprep.subr.mxu0 0.0
        %10057 = vmatpush1.msra.mxu0 %v9991
        %10058 = vmatprep.subr.mxu0 0.0
        %10059 = vmatpush1.msra.mxu0 %v9992
        %10060 = vmatprep.subr.mxu0 0.0
        %10061 = vmatpush1.msra.mxu0 %v9993
        %10062 = vmatprep.subr.mxu0 0.0
        %10063 = vmatpush1.msra.mxu0 %v9994
        %10064 = vmatprep.subr.mxu0 0.0
        %10065 = vmatpush1.msra.mxu0 %v9995
        %10066 = vmatprep.subr.mxu0 0.0
        %10067 = vmatpush1.msra.mxu0 %v9996
        %10068 = vmatprep.subr.mxu0 0.0
        %10069 = vmatpush1.msra.mxu0 %v9997
        %10070 = vmatprep.subr.mxu0 0.0
        %10071 = vmatpush1.msra.mxu0 %v9998
        %10072 = vmatprep.subr.mxu0 0.0
        %10073 = vmatpush1.msra.mxu0 %v9999
        %10074 = vmatprep.subr.mxu0 0.0
        %10075 = vmatpush1.msra.mxu0 %v10000
        %10076 = vmatprep.subr.mxu0 0.0
        %10077 = vmatpush1.msra.mxu0 %v10001
        %10078 = vmatprep.subr.mxu0 0.0
        %10079 = vmatpush1.msra.mxu0 %v10002
        %10080 = vmatprep.subr.mxu0 0.0
        %10081 = vmatpush1.msra.mxu0 %v10003
        %10082 = vmatprep.subr.mxu0 0.0
        %10083 = vmatpush1.msra.mxu0 %v10004
        %10084 = vmatprep.subr.mxu0 0.0
        %10085 = vmatpush1.msra.mxu0 %v10005
        %10086 = vmatprep.subr.mxu0 0.0
        %10087 = vmatpush1.msra.mxu0 %v10006
        %10088 = vmatprep.subr.mxu0 0.0
        %10089 = vmatpush1.msra.mxu0 %v10007
        %10090 = vmatprep.subr.mxu0 0.0
        %10091 = vmatpush1.msra.mxu0 %v10008
        %10092 = vmatprep.subr.mxu0 0.0
        %10093 = vmatpush1.msra.mxu0 %v10009
        %10094 = vmatprep.subr.mxu0 0.0
        %10095 = vmatpush1.msra.mxu0 %v10010
        %10096 = vmatprep.subr.mxu0 0.0
        %10097 = vmatpush1.msra.mxu0 %v10011
        %10098 = vmatprep.mubr.f32.mxu0 %v10029
        %10099 = vmatmul.mubr.f32.gmra.mrb[0].mxu0 %v10028
        %v10100 = vpop.f32.mrb[0].mxu0
        %v10101 = vadd.f32 0.0, %v10100
        %v10102 = vpop.f32.mrb[0].mxu0
        %10103 = vdwg.mxu0
        %10104 = vmatprep.subr.mxu0 0.0
        %10105 = vmatpush1.msra.mxu0 %v10012
        %10106 = vmatprep.subr.mxu0 0.0
        %10107 = vmatpush1.msra.mxu0 %v10013
        %10108 = vmatprep.subr.mxu0 0.0
        %10109 = vmatpush1.msra.mxu0 %v10014
        %10110 = vmatprep.subr.mxu0 0.0
        %10111 = vmatpush1.msra.mxu0 %v10015
        %10112 = vmatprep.subr.mxu0 0.0
        %10113 = vmatpush1.msra.mxu0 %v10016
        %10114 = vmatprep.subr.mxu0 0.0
        %10115 = vmatpush1.msra.mxu0 %v10017
        %10116 = vmatprep.subr.mxu0 0.0
        %10117 = vmatpush1.msra.mxu0 %v10018
        %10118 = vmatprep.subr.mxu0 0.0
        %10119 = vmatpush1.msra.mxu0 %v10019
        %10120 = vmatprep.subr.mxu0 0.0
        %10121 = vmatpush1.msra.mxu0 %v10020
        %10122 = vmatprep.subr.mxu0 0.0
        %10123 = vmatpush1.msra.mxu0 %v10021
        %10124 = vmatprep.subr.mxu0 0.0
        %10125 = vmatpush1.msra.mxu0 %v10022
        %10126 = vmatprep.subr.mxu0 0.0
        %10127 = vmatpush1.msra.mxu0 %v10023
        %10128 = vmatprep.subr.mxu0 0.0
        %10129 = vmatpush1.msra.mxu0 %v10024
        %10130 = vmatprep.subr.mxu0 0.0
        %10131 = vmatpush1.msra.mxu0 %v10025
        %10132 = vmatprep.subr.mxu0 0.0
        %10133 = vmatpush1.msra.mxu0 %v10026
        %10134 = vmatprep.subr.mxu0 0.0
        %10135 = vmatpush1.msra.mxu0 %v10027
        %10136 = vmatprep.subr.mxu0 0.0
        %10137 = vmatpush1.msra.mxu0 0.0
        %10138 = vmatprep.subr.mxu0 0.0
        %10139 = vmatpush1.msra.mxu0 0.0
        %10140 = vmatprep.subr.mxu0 0.0
        %10141 = vmatpush1.msra.mxu0 0.0
        %10142 = vmatprep.subr.mxu0 0.0
        %10143 = vmatpush1.msra.mxu0 0.0
        %10144 = vmatprep.subr.mxu0 0.0
        %10145 = vmatpush1.msra.mxu0 0.0
        %10146 = vmatprep.subr.mxu0 0.0
        %10147 = vmatpush1.msra.mxu0 0.0
        %10148 = vmatprep.subr.mxu0 0.0
        %10149 = vmatpush1.msra.mxu0 0.0
        %10150 = vmatprep.subr.mxu0 0.0
        %10151 = vmatpush1.msra.mxu0 0.0
        %10152 = vmatprep.subr.mxu0 0.0
        %10153 = vmatpush1.msra.mxu0 0.0
        %10154 = vmatprep.subr.mxu0 0.0
        %10155 = vmatpush1.msra.mxu0 0.0
        %10156 = vmatprep.subr.mxu0 0.0
        %10157 = vmatpush1.msra.mxu0 0.0
        %10158 = vmatprep.subr.mxu0 0.0
        %10159 = vmatpush1.msra.mxu0 0.0
        %10160 = vmatprep.subr.mxu0 0.0
        %10161 = vmatpush1.msra.mxu0 0.0
        %10162 = vmatprep.subr.mxu0 0.0
        %10163 = vmatpush1.msra.mxu0 0.0
        %10164 = vmatprep.subr.mxu0 0.0
        %10165 = vmatpush1.msra.mxu0 0.0
        %10166 = vmatprep.subr.mxu0 0.0
        %10167 = vmatpush1.msra.mxu0 0.0
        %10168 = vmatprep.mubr.f32.mxu0 0.0
        %10169 = vmatmul.mubr.f32.gmra.mrb[0].mxu0 %v10030
        %v10170 = vpop.f32.mrb[0].mxu0
        %v10171 = vadd.f32 %v10101, %v10170
        %v10172 = vpop.f32.mrb[0].mxu0
        %10173 = vdwg.mxu0
        %v10174 = vadd.f32 %v9978, %v10171
        %s10175 = scalar_lea.vmem %s9, 3072
        %v10176 = vld [vmem:[%s10175] sm:$0xff]
        %v10177 = vld [vmem:[%s10175 + $0x8] sm:$0xff]
        %v10178 = vld [vmem:[%s10175 + $0x10] sm:$0xff]
        %v10179 = vld [vmem:[%s10175 + $0x18] sm:$0xff]
        %v10180 = vld [vmem:[%s10175 + $0x20] sm:$0xff]
        %v10181 = vld [vmem:[%s10175 + $0x28] sm:$0xff]
        %v10182 = vld [vmem:[%s10175 + $0x30] sm:$0xff]
        %v10183 = vld [vmem:[%s10175 + $0x38] sm:$0xff]
        %v10184 = vld [vmem:[%s10175 + $0x40] sm:$0xff]
        %v10185 = vld [vmem:[%s10175 + $0x48] sm:$0xff]
        %v10186 = vld [vmem:[%s10175 + $0x50] sm:$0xff]
        %v10187 = vld [vmem:[%s10175 + $0x58] sm:$0xff]
        %v10188 = vld [vmem:[%s10175 + $0x60] sm:$0xff]
        %v10189 = vld [vmem:[%s10175 + $0x68] sm:$0xff]
        %v10190 = vld [vmem:[%s10175 + $0x70] sm:$0xff]
        %v10191 = vld [vmem:[%s10175 + $0x78] sm:$0xff]
        %v10192 = vld [vmem:[%s10175 + $0x80] sm:$0xff]
        %v10193 = vld [vmem:[%s10175 + $0x88] sm:$0xff]
        %v10194 = vld [vmem:[%s10175 + $0x90] sm:$0xff]
        %v10195 = vld [vmem:[%s10175 + $0x98] sm:$0xff]
        %v10196 = vld [vmem:[%s10175 + $0xa0] sm:$0xff]
        %v10197 = vld [vmem:[%s10175 + $0xa8] sm:$0xff]
        %v10198 = vld [vmem:[%s10175 + $0xb0] sm:$0xff]
        %v10199 = vld [vmem:[%s10175 + $0xb8] sm:$0xff]
        %v10200 = vld [vmem:[%s10175 + $0xc0] sm:$0xff]
        %v10201 = vld [vmem:[%s10175 + $0xc8] sm:$0xff]
        %v10202 = vld [vmem:[%s10175 + $0xd0] sm:$0xff]
        %v10203 = vld [vmem:[%s10175 + $0xd8] sm:$0xff]
        %v10204 = vld [vmem:[%s10175 + $0xe0] sm:$0xff]
        %v10205 = vld [vmem:[%s10175 + $0xe8] sm:$0xff]
        %v10206 = vld [vmem:[%s10175 + $0xf0] sm:$0xff]
        %v10207 = vld [vmem:[%s10175 + $0xf8] sm:$0xff]
        %v10208 = vld [vmem:[%s10175 + $0x100] sm:$0xff]
        %v10209 = vld [vmem:[%s10175 + $0x108] sm:$0xff]
        %v10210 = vld [vmem:[%s10175 + $0x110] sm:$0xff]
        %v10211 = vld [vmem:[%s10175 + $0x118] sm:$0xff]
        %v10212 = vld [vmem:[%s10175 + $0x120] sm:$0xff]
        %v10213 = vld [vmem:[%s10175 + $0x128] sm:$0xff]
        %v10214 = vld [vmem:[%s10175 + $0x130] sm:$0xff]
        %v10215 = vld [vmem:[%s10175 + $0x138] sm:$0xff]
        %v10216 = vld [vmem:[%s10175 + $0x140] sm:$0xff]
        %v10217 = vld [vmem:[%s10175 + $0x148] sm:$0xff]
        %v10218 = vld [vmem:[%s10175 + $0x150] sm:$0xff]
        %v10219 = vld [vmem:[%s10175 + $0x158] sm:$0xff]
        %v10220 = vld [vmem:[%s10175 + $0x160] sm:$0xff]
        %v10221 = vld [vmem:[%s10175 + $0x168] sm:$0xff]
        %v10222 = vld [vmem:[%s10175 + $0x170] sm:$0xff]
        %v10223 = vld [vmem:[%s10175 + $0x178] sm:$0xff]
        %10224 = vmatprep.subr.mxu0 0.0
        %10225 = vmatpush1.msra.mxu0 %v10176
        %10226 = vmatprep.subr.mxu0 0.0
        %10227 = vmatpush1.msra.mxu0 %v10177
        %10228 = vmatprep.subr.mxu0 0.0
        %10229 = vmatpush1.msra.mxu0 %v10178
        %10230 = vmatprep.subr.mxu0 0.0
        %10231 = vmatpush1.msra.mxu0 %v10179
        %10232 = vmatprep.subr.mxu0 0.0
        %10233 = vmatpush1.msra.mxu0 %v10180
        %10234 = vmatprep.subr.mxu0 0.0
        %10235 = vmatpush1.msra.mxu0 %v10181
        %10236 = vmatprep.subr.mxu0 0.0
        %10237 = vmatpush1.msra.mxu0 %v10182
        %10238 = vmatprep.subr.mxu0 0.0
        %10239 = vmatpush1.msra.mxu0 %v10183
        %10240 = vmatprep.subr.mxu0 0.0
        %10241 = vmatpush1.msra.mxu0 %v10184
        %10242 = vmatprep.subr.mxu0 0.0
        %10243 = vmatpush1.msra.mxu0 %v10185
        %10244 = vmatprep.subr.mxu0 0.0
        %10245 = vmatpush1.msra.mxu0 %v10186
        %10246 = vmatprep.subr.mxu0 0.0
        %10247 = vmatpush1.msra.mxu0 %v10187
        %10248 = vmatprep.subr.mxu0 0.0
        %10249 = vmatpush1.msra.mxu0 %v10188
        %10250 = vmatprep.subr.mxu0 0.0
        %10251 = vmatpush1.msra.mxu0 %v10189
        %10252 = vmatprep.subr.mxu0 0.0
        %10253 = vmatpush1.msra.mxu0 %v10190
        %10254 = vmatprep.subr.mxu0 0.0
        %10255 = vmatpush1.msra.mxu0 %v10191
        %10256 = vmatprep.subr.mxu0 0.0
        %10257 = vmatpush1.msra.mxu0 %v10192
        %10258 = vmatprep.subr.mxu0 0.0
        %10259 = vmatpush1.msra.mxu0 %v10193
        %10260 = vmatprep.subr.mxu0 0.0
        %10261 = vmatpush1.msra.mxu0 %v10194
        %10262 = vmatprep.subr.mxu0 0.0
        %10263 = vmatpush1.msra.mxu0 %v10195
        %10264 = vmatprep.subr.mxu0 0.0
        %10265 = vmatpush1.msra.mxu0 %v10196
        %10266 = vmatprep.subr.mxu0 0.0
        %10267 = vmatpush1.msra.mxu0 %v10197
        %10268 = vmatprep.subr.mxu0 0.0
        %10269 = vmatpush1.msra.mxu0 %v10198
        %10270 = vmatprep.subr.mxu0 0.0
        %10271 = vmatpush1.msra.mxu0 %v10199
        %10272 = vmatprep.subr.mxu0 0.0
        %10273 = vmatpush1.msra.mxu0 %v10200
        %10274 = vmatprep.subr.mxu0 0.0
        %10275 = vmatpush1.msra.mxu0 %v10201
        %10276 = vmatprep.subr.mxu0 0.0
        %10277 = vmatpush1.msra.mxu0 %v10202
        %10278 = vmatprep.subr.mxu0 0.0
        %10279 = vmatpush1.msra.mxu0 %v10203
        %10280 = vmatprep.subr.mxu0 0.0
        %10281 = vmatpush1.msra.mxu0 %v10204
        %10282 = vmatprep.subr.mxu0 0.0
        %10283 = vmatpush1.msra.mxu0 %v10205
        %10284 = vmatprep.subr.mxu0 0.0
        %10285 = vmatpush1.msra.mxu0 %v10206
        %10286 = vmatprep.subr.mxu0 0.0
        %10287 = vmatpush1.msra.mxu0 %v10207
        %10288 = vmatprep.mubr.f32.mxu0 %v8608
        %10289 = vmatmul.mubr.f32.gmra.mrb[0].mxu0 %v8607
        %v10290 = vpop.f32.mrb[0].mxu0
        %v10291 = vadd.f32 0.0, %v10290
        %v10292 = vpop.f32.mrb[0].mxu0
        %10293 = vdwg.mxu0
        %10294 = vmatprep.subr.mxu0 0.0
        %10295 = vmatpush1.msra.mxu0 %v10208
        %10296 = vmatprep.subr.mxu0 0.0
        %10297 = vmatpush1.msra.mxu0 %v10209
        %10298 = vmatprep.subr.mxu0 0.0
        %10299 = vmatpush1.msra.mxu0 %v10210
        %10300 = vmatprep.subr.mxu0 0.0
        %10301 = vmatpush1.msra.mxu0 %v10211
        %10302 = vmatprep.subr.mxu0 0.0
        %10303 = vmatpush1.msra.mxu0 %v10212
        %10304 = vmatprep.subr.mxu0 0.0
        %10305 = vmatpush1.msra.mxu0 %v10213
        %10306 = vmatprep.subr.mxu0 0.0
        %10307 = vmatpush1.msra.mxu0 %v10214
        %10308 = vmatprep.subr.mxu0 0.0
        %10309 = vmatpush1.msra.mxu0 %v10215
        %10310 = vmatprep.subr.mxu0 0.0
        %10311 = vmatpush1.msra.mxu0 %v10216
        %10312 = vmatprep.subr.mxu0 0.0
        %10313 = vmatpush1.msra.mxu0 %v10217
        %10314 = vmatprep.subr.mxu0 0.0
        %10315 = vmatpush1.msra.mxu0 %v10218
        %10316 = vmatprep.subr.mxu0 0.0
        %10317 = vmatpush1.msra.mxu0 %v10219
        %10318 = vmatprep.subr.mxu0 0.0
        %10319 = vmatpush1.msra.mxu0 %v10220
        %10320 = vmatprep.subr.mxu0 0.0
        %10321 = vmatpush1.msra.mxu0 %v10221
        %10322 = vmatprep.subr.mxu0 0.0
        %10323 = vmatpush1.msra.mxu0 %v10222
        %10324 = vmatprep.subr.mxu0 0.0
        %10325 = vmatpush1.msra.mxu0 %v10223
        %10326 = vmatprep.subr.mxu0 0.0
        %10327 = vmatpush1.msra.mxu0 0.0
        %10328 = vmatprep.subr.mxu0 0.0
        %10329 = vmatpush1.msra.mxu0 0.0
        %10330 = vmatprep.subr.mxu0 0.0
        %10331 = vmatpush1.msra.mxu0 0.0
        %10332 = vmatprep.subr.mxu0 0.0
        %10333 = vmatpush1.msra.mxu0 0.0
        %10334 = vmatprep.subr.mxu0 0.0
        %10335 = vmatpush1.msra.mxu0 0.0
        %10336 = vmatprep.subr.mxu0 0.0
        %10337 = vmatpush1.msra.mxu0 0.0
        %10338 = vmatprep.subr.mxu0 0.0
        %10339 = vmatpush1.msra.mxu0 0.0
        %10340 = vmatprep.subr.mxu0 0.0
        %10341 = vmatpush1.msra.mxu0 0.0
        %10342 = vmatprep.subr.mxu0 0.0
        %10343 = vmatpush1.msra.mxu0 0.0
        %10344 = vmatprep.subr.mxu0 0.0
        %10345 = vmatpush1.msra.mxu0 0.0
        %10346 = vmatprep.subr.mxu0 0.0
        %10347 = vmatpush1.msra.mxu0 0.0
        %10348 = vmatprep.subr.mxu0 0.0
        %10349 = vmatpush1.msra.mxu0 0.0
        %10350 = vmatprep.subr.mxu0 0.0
        %10351 = vmatpush1.msra.mxu0 0.0
        %10352 = vmatprep.subr.mxu0 0.0
        %10353 = vmatpush1.msra.mxu0 0.0
        %10354 = vmatprep.subr.mxu0 0.0
        %10355 = vmatpush1.msra.mxu0 0.0
        %10356 = vmatprep.subr.mxu0 0.0
        %10357 = vmatpush1.msra.mxu0 0.0
        %10358 = vmatprep.mubr.f32.mxu0 0.0
        %10359 = vmatmul.mubr.f32.gmra.mrb[0].mxu0 %v8609
        %v10360 = vpop.f32.mrb[0].mxu0
        %v10361 = vadd.f32 %v10291, %v10360
        %v10362 = vpop.f32.mrb[0].mxu0
        %10363 = vdwg.mxu0
        %v10364 = vadd.f32 %v10174, %v10361
        %vm10365 = vcmask 253952
        %v10366 = vsel %vm10365, %v10364, 0.0
        %10367 = vadd.xlane.f32.xlu0 %v10366
        %v10368 = vpop.xlane.xlu0 %10367
        %v10369 = vrcp.pop 32.0
        %v10370 = vmul.f32 %v10368, %v10369
        %v10371 = vsub.f32 %v10364, %v10370
        %v10372 = vmul.f32 %v10371, %v10371
        %v10373 = vsel %vm10365, %v10372, 0.0
        %10374 = vadd.xlane.f32.xlu0 %v10373
        %v10375 = vpop.xlane.xlu0 %10374
        %v10376 = vmul.f32 %v10375, %v10369
        %v10377 = vadd.f32 %v10376, 1e-05
        %v10378 = vrsqrt.pop %v10377
        %v10379 = vmul.f32 %v10371, %v10378
        %v10380 = vld [vmem:[%s11] sm:$0x1]
        %v10381 = vmul.f32 %v10379, %v10380
        %v10382 = vld [vmem:[%s12] sm:$0x1]
        %v10383 = vadd.f32 %v10381, %v10382
        %v10384 = vtanh.pop %v10383
        %10385 = vst.msk [vmem:[%s462] sm:$0x1] %vm10365, %v10384
        %s10386 = sand.u32 %s315, 1
        %s10387 = scalar_lea.sflag [#allocation4], %s10386
        %s10388 = sand.u32 %s315, 1
        %s10389 = scalar_lea.vmem [#allocation7], %s10388
        // Predicated region
        $region81: #{tpu_custom_call.1} parent=71 // pred_check
          %p10390 = pneg %p325
        $region82: #{tpu_custom_call.1} parent=71 // pred_check_branch
          %10392 = sbr.rel (%p10390) target = $region84
        $region83: #{tpu_custom_call.1} parent=71 // pred_region
          %s10394 = ssub.s32 16, 16
          %10395 = vsyncadd %s10387, %s10394
          %s10396 = smul.addr %s29, 16
          %s10397 = scalar_lea.hbm %s13, %s10396
          %s10399 = sshll.u32 %s10389, 4
          %s10400 = int_to_ptr.vmem [resolvable:$true] %s10399
          %10402 = dma.vmem_to_hbm [thread:$0]  %s10400, 16, %s10397, %s10387
        $region84: #{tpu_custom_call.1} parent=71 // pred_fallthru
          _
      $region72: #{tpu_custom_call.1} parent=5 // pred_fallthru
        _
      %p10403 = scmp.le.s32.totalorder 2, %s24
      // Predicated region
      $region85: #{tpu_custom_call.1} parent=5 // pred_check
        %p10404 = pneg %p10403
      $region86: #{tpu_custom_call.1} parent=5 // pred_check_branch
        %10406 = sbr.rel (%p10404) target = $region88
      $region87: #{tpu_custom_call.1} parent=5 // pred_region
        %s10407 = ssub.s32 %s24, 2
        // Predicated region
        $region89: #{tpu_custom_call.1} parent=87 // pred_check
          %p10408 = pneg %p331
        $region90: #{tpu_custom_call.1} parent=87 // pred_check_branch
          %10410 = sbr.rel (%p10408) target = $region92
        $region91: #{tpu_custom_call.1} parent=87 // pred_region
          %s10411 = sand.u32 %s316, 1
          %s10412 = scalar_lea.sflag [#allocation4], %s10411
          %s10413 = sand.u32 %s316, 1
          %s10414 = scalar_lea.vmem [#allocation7], %s10413
          %10415 = dma.done %s10412, 16
        $region92: #{tpu_custom_call.1} parent=87 // pred_fallthru
          _
      $region88: #{tpu_custom_call.1} parent=5 // pred_fallthru
        _
    $region6: #{tpu_custom_call.1} parent=1 // loop_footer
      %s28 = sadd.s32 1, %s24
    $region7: #{tpu_custom_call.1} parent=1 // loop_footer_branch
      %23 = sbr.rel target = $region3
    $region8: #{tpu_custom_call.1} parent=1 // loop_exit
      _
    %10416 = vsyncpa [#allocation3], 1
    %s10417 = scalar_lea.sflag [#allocation3], 1
    %10418 = vsyncpa %s10417, 1
    %10419 = vsyncpa [#allocation6], 1
    %10420 = vsyncpa [#allocation4], 1
    %s10421 = scalar_lea.sflag [#allocation4], 1
    %10422 = vsyncpa %s10421, 1

</llo_original>
